<compile_context>
chip_gen: v6e
topology: v6e:2x2x1
jax: 0.10.0
libtpu: 0.0.40
codegen_flags: <defaults>
</compile_context>

<pallas_src>
import math
import functools

import jax
import jax.numpy as jnp
from jax.experimental import pallas as pl
from jax.experimental.pallas import tpu as pltpu


# ----------------------------- Pallas kernels ------------------------------

def _self_attn_layer_kernel(x_ref, wqkv_ref, bqkv_ref, wo_ref, bo_ref, o_ref,
                            *, n_heads, head_dim):
    """Fused MultiHeadAlibiSelfAttentionLayer for one batch element.

    x_ref:    (1, T, Din)
    wqkv_ref: (3*hid, Din)   bqkv_ref: (1, 3*hid)
    wo_ref:   (hid, hid)     bo_ref:   (1, hid)
    o_ref:    (1, T, hid)
    """
    T = x_ref.shape[1]
    hid = wo_ref.shape[0]
    inv_scale = 1.0 / math.sqrt(head_dim)

    x = x_ref[0].astype(jnp.float32)                 # (T, Din)
    wqkv = wqkv_ref[...].astype(jnp.float32)         # (3h, Din)

    # Fused q/k/v projection: x @ wqkv^T + b  (contract on Din, no transpose copy).
    qkv = jax.lax.dot_general(
        x, wqkv, (((1,), (1,)), ((), ())),
        preferred_element_type=jnp.float32) + bqkv_ref[...].astype(jnp.float32)   # (T, 3h)

    # ALiBi |i - j| position matrix, generated in-kernel (no HBM bias tensor).
    row = jax.lax.broadcasted_iota(jnp.int32, (T, T), 0)
    col = jax.lax.broadcasted_iota(jnp.int32, (T, T), 1)
    pos = jnp.abs(row - col).astype(jnp.float32)     # (T, T)

    step = 8.0 / n_heads
    outs = []
    for h in range(n_heads):                          # static loop, H small
        lo = h * head_dim
        q_h = qkv[:, lo:lo + head_dim]
        k_h = qkv[:, hid + lo:hid + lo + head_dim]
        v_h = qkv[:, 2 * hid + lo:2 * hid + lo + head_dim]
        m_h = 2.0 ** (-(h + 1) * step)                # ALiBi slope for this head

        # (q k^T - m_h * |i-j|) / sqrt(head_dim)
        logits = jax.lax.dot_general(
            q_h, k_h, (((1,), (1,)), ((), ())),
            preferred_element_type=jnp.float32)
        logits = (logits - m_h * pos) * inv_scale

        mx = jnp.max(logits, axis=-1, keepdims=True)
        p = jnp.exp(logits - mx)
        denom = jnp.sum(p, axis=-1, keepdims=True)
        attn = p * pl.reciprocal(denom, approx=True)
        outs.append(jnp.dot(attn, v_h, preferred_element_type=jnp.float32))

    concat = jnp.concatenate(outs, axis=-1)           # (T, hid), heads merged on lanes

    wo = wo_ref[...].astype(jnp.float32)
    y = jax.lax.dot_general(
        concat, wo, (((1,), (1,)), ((), ())),
        preferred_element_type=jnp.float32) + bo_ref[...].astype(jnp.float32)
    o_ref[0] = y.astype(o_ref.dtype)


def _cross_attn_layer_kernel(audio_ref, score_ref, maskb_ref, w_ref, b_ref, o_ref,
                             *, n_heads, head_dim):
    """Fused CrossAttentionAlignerLayer for one batch element.

    audio_ref: (1, Tq, hid)     score_ref: (1, E, hid)
    maskb_ref: (1, 1, E)        additive key bias (0 or -1e30)
    w_ref:     (7, hid, hid)    [q_emb, k_emb, v_emb, q_in, k_in, v_in, out_proj]
    b_ref:     (7, 1, hid)
    o_ref:     (1, Tq, hid)
    """
    inv_scale = 1.0 / math.sqrt(head_dim)

    audio = audio_ref[0].astype(jnp.float32)          # (Tq, hid)
    score = score_ref[0].astype(jnp.float32)          # (E, hid)
    maskb = maskb_ref[0].astype(jnp.float32)          # (1, E)

    def lin(x, idx):
        w = w_ref[idx].astype(jnp.float32)            # (hid, hid)
        b = b_ref[idx].astype(jnp.float32)            # (1, hid)
        return jax.lax.dot_general(
            x, w, (((1,), (1,)), ((), ())),
            preferred_element_type=jnp.float32) + b

    # outer q/k/v embeddings, then nn.MultiheadAttention in_proj
    q = lin(lin(audio, 0), 3)                         # (Tq, hid)
    k = lin(lin(score, 1), 4)                         # (E, hid)
    v = lin(lin(score, 2), 5)                         # (E, hid)

    outs = []
    for h in range(n_heads):
        lo = h * head_dim
        q_h = q[:, lo:lo + head_dim] * inv_scale      # fold 1/sqrt(d) into q
        k_h = k[:, lo:lo + head_dim]
        v_h = v[:, lo:lo + head_dim]

        logits = jax.lax.dot_general(
            q_h, k_h, (((1,), (1,)), ((), ())),
            preferred_element_type=jnp.float32)       # (Tq, E)
        logits = logits + maskb                       # broadcast key-padding bias

        mx = jnp.max(logits, axis=-1, keepdims=True)
        p = jnp.exp(logits - mx)
        denom = jnp.sum(p, axis=-1, keepdims=True)
        attn = p * pl.reciprocal(denom, approx=True)
        outs.append(jnp.dot(attn, v_h, preferred_element_type=jnp.float32))

    concat = jnp.concatenate(outs, axis=-1)           # (Tq, hid)
    y = lin(concat, 6)                                # out_proj
    o_ref[0] = y.astype(o_ref.dtype)


# --------------------------- layer wrappers ---------------------------------

def self_attn_layer(x, wqkv, bqkv, wo, bo, n_heads):
    B, T, Din = x.shape
    hid = wo.shape[0]
    head_dim = hid // n_heads
    kernel = functools.partial(_self_attn_layer_kernel, n_heads=n_heads, head_dim=head_dim)
    return pl.pallas_call(
        kernel,
        out_shape=jax.ShapeDtypeStruct((B, T, hid), x.dtype),
        grid=(B,),
        in_specs=[
            pl.BlockSpec((1, T, Din), lambda i: (i, 0, 0)),
            pl.BlockSpec((3 * hid, Din), lambda i: (0, 0)),
            pl.BlockSpec((1, 3 * hid), lambda i: (0, 0)),
            pl.BlockSpec((hid, hid), lambda i: (0, 0)),
            pl.BlockSpec((1, hid), lambda i: (0, 0)),
        ],
        out_specs=pl.BlockSpec((1, T, hid), lambda i: (i, 0, 0)),
        compiler_params=pltpu.CompilerParams(dimension_semantics=("parallel",)),
    )(x, wqkv, bqkv, wo, bo)


def cross_attn_layer(score_embs, audio_embs, mask_bias, w_stack, b_stack, n_heads):
    B, Tq, hid = audio_embs.shape
    E = score_embs.shape[1]
    head_dim = hid // n_heads
    kernel = functools.partial(_cross_attn_layer_kernel, n_heads=n_heads, head_dim=head_dim)
    return pl.pallas_call(
        kernel,
        out_shape=jax.ShapeDtypeStruct((B, Tq, hid), audio_embs.dtype),
        grid=(B,),
        in_specs=[
            pl.BlockSpec((1, Tq, hid), lambda i: (i, 0, 0)),
            pl.BlockSpec((1, E, hid), lambda i: (i, 0, 0)),
            pl.BlockSpec((1, 1, E), lambda i: (i, 0, 0)),
            pl.BlockSpec((7, hid, hid), lambda i: (0, 0, 0)),
            pl.BlockSpec((7, 1, hid), lambda i: (0, 0, 0)),
        ],
        out_specs=pl.BlockSpec((1, Tq, hid), lambda i: (i, 0, 0)),
        compiler_params=pltpu.CompilerParams(dimension_semantics=("parallel",)),
    )(audio_embs, score_embs, mask_bias, w_stack, b_stack)


def spectrogram_aligner_forward(audio_embs, score_embs, params, n_heads, x_attn_mask=None):
    """SpectrogramAlignerLayer.forward (eval mode)."""
    B, E = score_embs.shape[0], score_embs.shape[1]
    if x_attn_mask is not None:
        # torch key_padding_mask semantics: True => ignore key position.
        # Use -1e30 (not -inf) so an all-masked row cannot produce NaN.
        mask_bias = jnp.where(x_attn_mask, -1e30, 0.0).astype(jnp.float32).reshape(B, 1, E)
    else:
        mask_bias = jnp.zeros((B, 1, E), jnp.float32)

    tmp = audio_embs
    for layer in params["layers"]:
        s = layer["self"]
        tmp = self_attn_layer(tmp, s["wqkv"], s["bqkv"], s["wo"], s["bo"], n_heads)
        c = layer["cross"]
        tmp = cross_attn_layer(score_embs, tmp, mask_bias, c["w_stack"], c["b_stack"], n_heads)
    return tmp


# --------------------------- deterministic params ---------------------------

def _init_linear(key, out_dim, in_dim):
    kw, kb = jax.random.split(key)
    w = 0.05 * jax.random.normal(kw, (out_dim, in_dim), jnp.float32)
    b = 0.01 * jax.random.normal(kb, (out_dim,), jnp.float32)
    return w, b


def init_params(key, input_dim, hid_dim, num_layers):
    layers = []
    for _ in range(num_layers):
        key, *ks = jax.random.split(key, 10)
        # self-attention layer (fused q/k/v weights)
        wq, bq = _init_linear(ks[0], hid_dim, input_dim)
        wk, bk = _init_linear(ks[1], hid_dim, input_dim)
        wv, bv = _init_linear(ks[2], hid_dim, input_dim)
        wo, bo = _init_linear(ks[3], hid_dim, hid_dim)
        self_p = dict(
            wqkv=jnp.concatenate([wq, wk, wv], axis=0),                 # (3h, Din)
            bqkv=jnp.concatenate([bq, bk, bv]).reshape(1, 3 * hid_dim),  # (1, 3h)
            wo=wo, bo=bo.reshape(1, hid_dim))

        # cross-attention layer: stack all 7 (h,h) weights / (h,) biases
        wqe, bqe = _init_linear(ks[4], hid_dim, hid_dim)
        wke, bke = _init_linear(ks[5], hid_dim, hid_dim)
        wve, bve = _init_linear(ks[6], hid_dim, hid_dim)
        in_proj_w, in_proj_b = _init_linear(ks[7], 3 * hid_dim, hid_dim)
        out_w, out_b = _init_linear(ks[8], hid_dim, hid_dim)
        wqi, wki, wvi = jnp.split(in_proj_w, 3, axis=0)
        bqi, bki, bvi = jnp.split(in_proj_b, 3)
        w_stack = jnp.stack([wqe, wke, wve, wqi, wki, wvi, out_w], axis=0)          # (7, h, h)
        b_stack = jnp.stack([bqe, bke, bve, bqi, bki, bvi, out_b], axis=0)
        b_stack = b_stack.reshape(7, 1, hid_dim)                                    # (7, 1, h)
        cross_p = dict(w_stack=w_stack, b_stack=b_stack)
        layers.append(dict(self=self_p, cross=cross_p))
    return dict(layers=layers)


# --------------------------------- main -------------------------------------

if __name__ == "__main__":
    B = 2
    num_frames = 16          # audio length
    max_num_events = 8       # score length
    input_dim = 32           # must equal hid_dim for the layer stack to compose
    hid_dim = 32
    n_heads = 4
    num_layers = 2           # small stack for the demo (module default is 5)

    key = jax.random.PRNGKey(0)
    k_a, k_s, k_p = jax.random.split(key, 3)

    audio_embs = jax.random.normal(k_a, (B, num_frames, input_dim), jnp.float32)
    score_embs = jax.random.normal(k_s, (B, max_num_events, hid_dim), jnp.float32)
    # key_padding_mask: True => masked event (last two events of batch 0 are padding)
    x_attn_mask = jnp.zeros((B, max_num_events), jnp.bool_).at[0, -2:].set(True)

    params = init_params(k_p, input_dim, hid_dim, num_layers)

    # TODO(synk): dropout (p=0.5 on attention weights in training mode) is stochastic;
    #             this implements the deterministic eval-mode forward (dropout = identity).
    fwd = jax.jit(lambda a, s, p, m: spectrogram_aligner_forward(a, s, p, n_heads, m))
    out = fwd(audio_embs, score_embs, params, x_attn_mask)
    out = jax.block_until_ready(out)

    assert out.shape == (B, num_frames, hid_dim)
    assert bool(jnp.all(jnp.isfinite(out)))
    print("KERNEL_OK")
</pallas_src>

<mosaic_0001>
module attributes {stable_mosaic.version = 11 : i64} {
  func.func @_self_attn_layer_kernel(%arg0: i32, %arg1: memref<1x16x32xf32, #tpu.memory_space<vmem>>, %arg2: memref<96x32xf32, #tpu.memory_space<vmem>>, %arg3: memref<1x96xf32, #tpu.memory_space<vmem>>, %arg4: memref<32x32xf32, #tpu.memory_space<vmem>>, %arg5: memref<1x32xf32, #tpu.memory_space<vmem>>, %arg6: memref<1x16x32xf32, #tpu.memory_space<vmem>>) attributes {dimension_semantics = [#tpu.dimension_semantics<parallel>], iteration_bounds = array<i64: 2>, scalar_prefetch = 0 : i64, scratch_operands = 0 : i64, tpu.core_type = #tpu.core_type<tc>, window_params = [{transform_indices = @transform_0, window_bounds = array<i64: 1, 16, 32>}, {pipeline_mode = #tpu.pipeline_mode<synchronous>, transform_indices = @transform_1, window_bounds = array<i64: 96, 32>}, {pipeline_mode = #tpu.pipeline_mode<synchronous>, transform_indices = @transform_2, window_bounds = array<i64: 1, 96>}, {pipeline_mode = #tpu.pipeline_mode<synchronous>, transform_indices = @transform_3, window_bounds = array<i64: 32, 32>}, {pipeline_mode = #tpu.pipeline_mode<synchronous>, transform_indices = @transform_4, window_bounds = array<i64: 1, 32>}, {transform_indices = @transform_5, window_bounds = array<i64: 1, 16, 32>}]} {
    %c0 = arith.constant 0 : index
    %c0_0 = arith.constant 0 : index
    %c0_1 = arith.constant 0 : index
    %0 = vector.load %arg1[%c0, %c0_0, %c0_1] : memref<1x16x32xf32, #tpu.memory_space<vmem>>, vector<1x16x32xf32>
    %1 = vector.shape_cast %0 : vector<1x16x32xf32> to vector<16x32xf32>
    %c0_2 = arith.constant 0 : index
    %c0_3 = arith.constant 0 : index
    %2 = vector.load %arg2[%c0_2, %c0_3] : memref<96x32xf32, #tpu.memory_space<vmem>>, vector<96x32xf32>
    %cst = arith.constant dense<0.000000e+00> : vector<16x96xf32>
    %3 = tpu.matmul %1, %2, %cst {dimension_numbers = #tpu.dot_dimension_numbers<[1], [1], [0], [0], [0, 0, 1, 0], [], []>} : vector<16x32xf32>, vector<96x32xf32>, vector<16x96xf32> -> vector<16x96xf32>
    %c0_4 = arith.constant 0 : index
    %c0_5 = arith.constant 0 : index
    %4 = vector.load %arg3[%c0_4, %c0_5] : memref<1x96xf32, #tpu.memory_space<vmem>>, vector<1x96xf32>
    %5 = vector.broadcast %4 : vector<1x96xf32> to vector<16x96xf32>
    %6 = arith.addf %3, %5 : vector<16x96xf32>
    %7 = tpu.iota {dimensions = array<i32: 0>} : vector<16x16xi32>
    %8 = tpu.iota {dimensions = array<i32: 1>} : vector<16x16xi32>
    %9 = arith.subi %7, %8 : vector<16x16xi32>
    %10 = math.absi %9 : vector<16x16xi32>
    %11 = arith.sitofp %10 : vector<16x16xi32> to vector<16x16xf32>
    %12 = vector.extract_strided_slice %6 {offsets = [0, 0], sizes = [16, 8], strides = [1, 1]} : vector<16x96xf32> to vector<16x8xf32>
    %13 = vector.extract_strided_slice %6 {offsets = [0, 32], sizes = [16, 8], strides = [1, 1]} : vector<16x96xf32> to vector<16x8xf32>
    %14 = vector.extract_strided_slice %6 {offsets = [0, 64], sizes = [16, 8], strides = [1, 1]} : vector<16x96xf32> to vector<16x8xf32>
    %cst_6 = arith.constant dense<0.000000e+00> : vector<16x16xf32>
    %15 = tpu.matmul %12, %13, %cst_6 {dimension_numbers = #tpu.dot_dimension_numbers<[1], [1], [0], [0], [0, 0, 1, 0], [], []>} : vector<16x8xf32>, vector<16x8xf32>, vector<16x16xf32> -> vector<16x16xf32>
    %cst_7 = arith.constant 2.500000e-01 : f32
    %16 = vector.broadcast %cst_7 : f32 to vector<16x16xf32>
    %17 = arith.mulf %16, %11 : vector<16x16xf32>
    %18 = arith.subf %15, %17 : vector<16x16xf32>
    %cst_8 = arith.constant 0.353553385 : f32
    %19 = vector.broadcast %cst_8 : f32 to vector<16x16xf32>
    %20 = arith.mulf %18, %19 : vector<16x16xf32>
    %cst_9 = arith.constant dense<0xFF800000> : vector<16xf32>
    %21 = vector.multi_reduction <maximumf>, %20, %cst_9 [1] : vector<16x16xf32> to vector<16xf32>
    %22 = vector.shape_cast %21 : vector<16xf32> to vector<16x1xf32>
    %23 = vector.broadcast %22 : vector<16x1xf32> to vector<16x16xf32>
    %24 = arith.subf %20, %23 : vector<16x16xf32>
    %25 = math.exp %24 : vector<16x16xf32>
    %cst_10 = arith.constant dense<0.000000e+00> : vector<16xf32>
    %26 = vector.multi_reduction <add>, %25, %cst_10 [1] : vector<16x16xf32> to vector<16xf32>
    %27 = vector.shape_cast %26 : vector<16xf32> to vector<16x1xf32>
    %28 = tpu.reciprocal %27 {approx = true} : vector<16x1xf32> -> vector<16x1xf32>
    %29 = vector.broadcast %28 : vector<16x1xf32> to vector<16x16xf32>
    %30 = arith.mulf %25, %29 : vector<16x16xf32>
    %cst_11 = arith.constant dense<0.000000e+00> : vector<16x8xf32>
    %31 = tpu.matmul %30, %14, %cst_11 {dimension_numbers = #tpu.dot_dimension_numbers<[1], [0], [0], [1], [0, 0, 1, 1], [], []>} : vector<16x16xf32>, vector<16x8xf32>, vector<16x8xf32> -> vector<16x8xf32>
    %32 = vector.extract_strided_slice %6 {offsets = [0, 8], sizes = [16, 8], strides = [1, 1]} : vector<16x96xf32> to vector<16x8xf32>
    %33 = vector.extract_strided_slice %6 {offsets = [0, 40], sizes = [16, 8], strides = [1, 1]} : vector<16x96xf32> to vector<16x8xf32>
    %34 = vector.extract_strided_slice %6 {offsets = [0, 72], sizes = [16, 8], strides = [1, 1]} : vector<16x96xf32> to vector<16x8xf32>
    %cst_12 = arith.constant dense<0.000000e+00> : vector<16x16xf32>
    %35 = tpu.matmul %32, %33, %cst_12 {dimension_numbers = #tpu.dot_dimension_numbers<[1], [1], [0], [0], [0, 0, 1, 0], [], []>} : vector<16x8xf32>, vector<16x8xf32>, vector<16x16xf32> -> vector<16x16xf32>
    %cst_13 = arith.constant 6.250000e-02 : f32
    %36 = vector.broadcast %cst_13 : f32 to vector<16x16xf32>
    %37 = arith.mulf %36, %11 : vector<16x16xf32>
    %38 = arith.subf %35, %37 : vector<16x16xf32>
    %cst_14 = arith.constant 0.353553385 : f32
    %39 = vector.broadcast %cst_14 : f32 to vector<16x16xf32>
    %40 = arith.mulf %38, %39 : vector<16x16xf32>
    %cst_15 = arith.constant dense<0xFF800000> : vector<16xf32>
    %41 = vector.multi_reduction <maximumf>, %40, %cst_15 [1] : vector<16x16xf32> to vector<16xf32>
    %42 = vector.shape_cast %41 : vector<16xf32> to vector<16x1xf32>
    %43 = vector.broadcast %42 : vector<16x1xf32> to vector<16x16xf32>
    %44 = arith.subf %40, %43 : vector<16x16xf32>
    %45 = math.exp %44 : vector<16x16xf32>
    %cst_16 = arith.constant dense<0.000000e+00> : vector<16xf32>
    %46 = vector.multi_reduction <add>, %45, %cst_16 [1] : vector<16x16xf32> to vector<16xf32>
    %47 = vector.shape_cast %46 : vector<16xf32> to vector<16x1xf32>
    %48 = tpu.reciprocal %47 {approx = true} : vector<16x1xf32> -> vector<16x1xf32>
    %49 = vector.broadcast %48 : vector<16x1xf32> to vector<16x16xf32>
    %50 = arith.mulf %45, %49 : vector<16x16xf32>
    %cst_17 = arith.constant dense<0.000000e+00> : vector<16x8xf32>
    %51 = tpu.matmul %50, %34, %cst_17 {dimension_numbers = #tpu.dot_dimension_numbers<[1], [0], [0], [1], [0, 0, 1, 1], [], []>} : vector<16x16xf32>, vector<16x8xf32>, vector<16x8xf32> -> vector<16x8xf32>
    %52 = vector.extract_strided_slice %6 {offsets = [0, 16], sizes = [16, 8], strides = [1, 1]} : vector<16x96xf32> to vector<16x8xf32>
    %53 = vector.extract_strided_slice %6 {offsets = [0, 48], sizes = [16, 8], strides = [1, 1]} : vector<16x96xf32> to vector<16x8xf32>
    %54 = vector.extract_strided_slice %6 {offsets = [0, 80], sizes = [16, 8], strides = [1, 1]} : vector<16x96xf32> to vector<16x8xf32>
    %cst_18 = arith.constant dense<0.000000e+00> : vector<16x16xf32>
    %55 = tpu.matmul %52, %53, %cst_18 {dimension_numbers = #tpu.dot_dimension_numbers<[1], [1], [0], [0], [0, 0, 1, 0], [], []>} : vector<16x8xf32>, vector<16x8xf32>, vector<16x16xf32> -> vector<16x16xf32>
    %cst_19 = arith.constant 1.562500e-02 : f32
    %56 = vector.broadcast %cst_19 : f32 to vector<16x16xf32>
    %57 = arith.mulf %56, %11 : vector<16x16xf32>
    %58 = arith.subf %55, %57 : vector<16x16xf32>
    %cst_20 = arith.constant 0.353553385 : f32
    %59 = vector.broadcast %cst_20 : f32 to vector<16x16xf32>
    %60 = arith.mulf %58, %59 : vector<16x16xf32>
    %cst_21 = arith.constant dense<0xFF800000> : vector<16xf32>
    %61 = vector.multi_reduction <maximumf>, %60, %cst_21 [1] : vector<16x16xf32> to vector<16xf32>
    %62 = vector.shape_cast %61 : vector<16xf32> to vector<16x1xf32>
    %63 = vector.broadcast %62 : vector<16x1xf32> to vector<16x16xf32>
    %64 = arith.subf %60, %63 : vector<16x16xf32>
    %65 = math.exp %64 : vector<16x16xf32>
    %cst_22 = arith.constant dense<0.000000e+00> : vector<16xf32>
    %66 = vector.multi_reduction <add>, %65, %cst_22 [1] : vector<16x16xf32> to vector<16xf32>
    %67 = vector.shape_cast %66 : vector<16xf32> to vector<16x1xf32>
    %68 = tpu.reciprocal %67 {approx = true} : vector<16x1xf32> -> vector<16x1xf32>
    %69 = vector.broadcast %68 : vector<16x1xf32> to vector<16x16xf32>
    %70 = arith.mulf %65, %69 : vector<16x16xf32>
    %cst_23 = arith.constant dense<0.000000e+00> : vector<16x8xf32>
    %71 = tpu.matmul %70, %54, %cst_23 {dimension_numbers = #tpu.dot_dimension_numbers<[1], [0], [0], [1], [0, 0, 1, 1], [], []>} : vector<16x16xf32>, vector<16x8xf32>, vector<16x8xf32> -> vector<16x8xf32>
    %72 = vector.extract_strided_slice %6 {offsets = [0, 24], sizes = [16, 8], strides = [1, 1]} : vector<16x96xf32> to vector<16x8xf32>
    %73 = vector.extract_strided_slice %6 {offsets = [0, 56], sizes = [16, 8], strides = [1, 1]} : vector<16x96xf32> to vector<16x8xf32>
    %74 = vector.extract_strided_slice %6 {offsets = [0, 88], sizes = [16, 8], strides = [1, 1]} : vector<16x96xf32> to vector<16x8xf32>
    %cst_24 = arith.constant dense<0.000000e+00> : vector<16x16xf32>
    %75 = tpu.matmul %72, %73, %cst_24 {dimension_numbers = #tpu.dot_dimension_numbers<[1], [1], [0], [0], [0, 0, 1, 0], [], []>} : vector<16x8xf32>, vector<16x8xf32>, vector<16x16xf32> -> vector<16x16xf32>
    %cst_25 = arith.constant 3.906250e-03 : f32
    %76 = vector.broadcast %cst_25 : f32 to vector<16x16xf32>
    %77 = arith.mulf %76, %11 : vector<16x16xf32>
    %78 = arith.subf %75, %77 : vector<16x16xf32>
    %cst_26 = arith.constant 0.353553385 : f32
    %79 = vector.broadcast %cst_26 : f32 to vector<16x16xf32>
    %80 = arith.mulf %78, %79 : vector<16x16xf32>
    %cst_27 = arith.constant dense<0xFF800000> : vector<16xf32>
    %81 = vector.multi_reduction <maximumf>, %80, %cst_27 [1] : vector<16x16xf32> to vector<16xf32>
    %82 = vector.shape_cast %81 : vector<16xf32> to vector<16x1xf32>
    %83 = vector.broadcast %82 : vector<16x1xf32> to vector<16x16xf32>
    %84 = arith.subf %80, %83 : vector<16x16xf32>
    %85 = math.exp %84 : vector<16x16xf32>
    %cst_28 = arith.constant dense<0.000000e+00> : vector<16xf32>
    %86 = vector.multi_reduction <add>, %85, %cst_28 [1] : vector<16x16xf32> to vector<16xf32>
    %87 = vector.shape_cast %86 : vector<16xf32> to vector<16x1xf32>
    %88 = tpu.reciprocal %87 {approx = true} : vector<16x1xf32> -> vector<16x1xf32>
    %89 = vector.broadcast %88 : vector<16x1xf32> to vector<16x16xf32>
    %90 = arith.mulf %85, %89 : vector<16x16xf32>
    %cst_29 = arith.constant dense<0.000000e+00> : vector<16x8xf32>
    %91 = tpu.matmul %90, %74, %cst_29 {dimension_numbers = #tpu.dot_dimension_numbers<[1], [0], [0], [1], [0, 0, 1, 1], [], []>} : vector<16x16xf32>, vector<16x8xf32>, vector<16x8xf32> -> vector<16x8xf32>
    %92 = tpu.concatenate %31, %51, %71, %91 in 1 : vector<16x8xf32>, vector<16x8xf32>, vector<16x8xf32>, vector<16x8xf32> -> vector<16x32xf32>
    %c0_30 = arith.constant 0 : index
    %c0_31 = arith.constant 0 : index
    %93 = vector.load %arg4[%c0_30, %c0_31] : memref<32x32xf32, #tpu.memory_space<vmem>>, vector<32x32xf32>
    %cst_32 = arith.constant dense<0.000000e+00> : vector<16x32xf32>
    %94 = tpu.matmul %92, %93, %cst_32 {dimension_numbers = #tpu.dot_dimension_numbers<[1], [1], [0], [0], [0, 0, 1, 0], [], []>} : vector<16x32xf32>, vector<32x32xf32>, vector<16x32xf32> -> vector<16x32xf32>
    %c0_33 = arith.constant 0 : index
    %c0_34 = arith.constant 0 : index
    %95 = vector.load %arg5[%c0_33, %c0_34] : memref<1x32xf32, #tpu.memory_space<vmem>>, vector<1x32xf32>
    %96 = vector.broadcast %95 : vector<1x32xf32> to vector<16x32xf32>
    %97 = arith.addf %94, %96 : vector<16x32xf32>
    %c0_35 = arith.constant 0 : index
    %c0_36 = arith.constant 0 : index
    %c0_37 = arith.constant 0 : index
    %98 = vector.load %arg6[%c0_35, %c0_36, %c0_37] : memref<1x16x32xf32, #tpu.memory_space<vmem>>, vector<1x16x32xf32>
    %99 = vector.shape_cast %98 : vector<1x16x32xf32> to vector<16x32xf32>
    %100 = vector.shape_cast %97 : vector<16x32xf32> to vector<1x16x32xf32>
    tpu.vector_store %arg6[%c0_35, %c0_36, %c0_37], %100 {strides = array<i32>} : memref<1x16x32xf32, #tpu.memory_space<vmem>>, vector<1x16x32xf32>,
    return
  }
  func.func @transform_0(%arg0: i32) -> (i32, i32, i32) {
    %c0_i32 = arith.constant 0 : i32
    %c0_i32_0 = arith.constant 0 : i32
    %c0_i32_1 = arith.constant 0 : i32
    return %arg0, %c0_i32, %c0_i32_0 : i32, i32, i32
  }
  func.func @transform_1(%arg0: i32) -> (i32, i32) {
    %c0_i32 = arith.constant 0 : i32
    %c0_i32_0 = arith.constant 0 : i32
    %c0_i32_1 = arith.constant 0 : i32
    return %c0_i32, %c0_i32_0 : i32, i32
  }
  func.func @transform_2(%arg0: i32) -> (i32, i32) {
    %c0_i32 = arith.constant 0 : i32
    %c0_i32_0 = arith.constant 0 : i32
    %c0_i32_1 = arith.constant 0 : i32
    return %c0_i32, %c0_i32_0 : i32, i32
  }
  func.func @transform_3(%arg0: i32) -> (i32, i32) {
    %c0_i32 = arith.constant 0 : i32
    %c0_i32_0 = arith.constant 0 : i32
    %c0_i32_1 = arith.constant 0 : i32
    return %c0_i32, %c0_i32_0 : i32, i32
  }
  func.func @transform_4(%arg0: i32) -> (i32, i32) {
    %c0_i32 = arith.constant 0 : i32
    %c0_i32_0 = arith.constant 0 : i32
    %c0_i32_1 = arith.constant 0 : i32
    return %c0_i32, %c0_i32_0 : i32, i32
  }
  func.func @transform_5(%arg0: i32) -> (i32, i32, i32) {
    %c0_i32 = arith.constant 0 : i32
    %c0_i32_0 = arith.constant 0 : i32
    %c0_i32_1 = arith.constant 0 : i32
    return %arg0, %c0_i32, %c0_i32_0 : i32, i32, i32
  }
}

module attributes {stable_mosaic.version = 11 : i64} {
  func.func @_cross_attn_layer_kernel(%arg0: i32, %arg1: memref<1x16x32xf32, #tpu.memory_space<vmem>>, %arg2: memref<1x8x32xf32, #tpu.memory_space<vmem>>, %arg3: memref<1x1x8xf32, #tpu.memory_space<vmem>>, %arg4: memref<7x32x32xf32, #tpu.memory_space<vmem>>, %arg5: memref<7x1x32xf32, #tpu.memory_space<vmem>>, %arg6: memref<1x16x32xf32, #tpu.memory_space<vmem>>) attributes {dimension_semantics = [#tpu.dimension_semantics<parallel>], iteration_bounds = array<i64: 2>, scalar_prefetch = 0 : i64, scratch_operands = 0 : i64, tpu.core_type = #tpu.core_type<tc>, window_params = [{transform_indices = @transform_0, window_bounds = array<i64: 1, 16, 32>}, {transform_indices = @transform_1, window_bounds = array<i64: 1, 8, 32>}, {transform_indices = @transform_2, window_bounds = array<i64: 1, 1, 8>}, {pipeline_mode = #tpu.pipeline_mode<synchronous>, transform_indices = @transform_3, window_bounds = array<i64: 7, 32, 32>}, {pipeline_mode = #tpu.pipeline_mode<synchronous>, transform_indices = @transform_4, window_bounds = array<i64: 7, 1, 32>}, {transform_indices = @transform_5, window_bounds = array<i64: 1, 16, 32>}]} {
    %c0 = arith.constant 0 : index
    %c0_0 = arith.constant 0 : index
    %c0_1 = arith.constant 0 : index
    %0 = vector.load %arg1[%c0, %c0_0, %c0_1] : memref<1x16x32xf32, #tpu.memory_space<vmem>>, vector<1x16x32xf32>
    %1 = vector.shape_cast %0 : vector<1x16x32xf32> to vector<16x32xf32>
    %c0_2 = arith.constant 0 : index
    %c0_3 = arith.constant 0 : index
    %c0_4 = arith.constant 0 : index
    %2 = vector.load %arg2[%c0_2, %c0_3, %c0_4] : memref<1x8x32xf32, #tpu.memory_space<vmem>>, vector<1x8x32xf32>
    %3 = vector.shape_cast %2 : vector<1x8x32xf32> to vector<8x32xf32>
    %c0_5 = arith.constant 0 : index
    %c0_6 = arith.constant 0 : index
    %c0_7 = arith.constant 0 : index
    %4 = vector.load %arg3[%c0_5, %c0_6, %c0_7] : memref<1x1x8xf32, #tpu.memory_space<vmem>>, vector<1x1x8xf32>
    %5 = vector.shape_cast %4 : vector<1x1x8xf32> to vector<1x8xf32>
    %c0_8 = arith.constant 0 : index
    %c0_9 = arith.constant 0 : index
    %c0_10 = arith.constant 0 : index
    %6 = vector.load %arg4[%c0_8, %c0_9, %c0_10] : memref<7x32x32xf32, #tpu.memory_space<vmem>>, vector<1x32x32xf32>
    %7 = vector.shape_cast %6 : vector<1x32x32xf32> to vector<32x32xf32>
    %c0_11 = arith.constant 0 : index
    %c0_12 = arith.constant 0 : index
    %c0_13 = arith.constant 0 : index
    %8 = vector.load %arg5[%c0_11, %c0_12, %c0_13] : memref<7x1x32xf32, #tpu.memory_space<vmem>>, vector<1x1x32xf32>
    %9 = vector.shape_cast %8 : vector<1x1x32xf32> to vector<1x32xf32>
    %cst = arith.constant dense<0.000000e+00> : vector<16x32xf32>
    %10 = tpu.matmul %1, %7, %cst {dimension_numbers = #tpu.dot_dimension_numbers<[1], [1], [0], [0], [0, 0, 1, 0], [], []>} : vector<16x32xf32>, vector<32x32xf32>, vector<16x32xf32> -> vector<16x32xf32>
    %11 = vector.broadcast %9 : vector<1x32xf32> to vector<16x32xf32>
    %12 = arith.addf %10, %11 : vector<16x32xf32>
    %c3 = arith.constant 3 : index
    %c0_14 = arith.constant 0 : index
    %c0_15 = arith.constant 0 : index
    %13 = vector.load %arg4[%c3, %c0_14, %c0_15] : memref<7x32x32xf32, #tpu.memory_space<vmem>>, vector<1x32x32xf32>
    %14 = vector.shape_cast %13 : vector<1x32x32xf32> to vector<32x32xf32>
    %c3_16 = arith.constant 3 : index
    %c0_17 = arith.constant 0 : index
    %c0_18 = arith.constant 0 : index
    %15 = vector.load %arg5[%c3_16, %c0_17, %c0_18] : memref<7x1x32xf32, #tpu.memory_space<vmem>>, vector<1x1x32xf32>
    %16 = vector.shape_cast %15 : vector<1x1x32xf32> to vector<1x32xf32>
    %cst_19 = arith.constant dense<0.000000e+00> : vector<16x32xf32>
    %17 = tpu.matmul %12, %14, %cst_19 {dimension_numbers = #tpu.dot_dimension_numbers<[1], [1], [0], [0], [0, 0, 1, 0], [], []>} : vector<16x32xf32>, vector<32x32xf32>, vector<16x32xf32> -> vector<16x32xf32>
    %18 = vector.broadcast %16 : vector<1x32xf32> to vector<16x32xf32>
    %19 = arith.addf %17, %18 : vector<16x32xf32>
    %c1 = arith.constant 1 : index
    %c0_20 = arith.constant 0 : index
    %c0_21 = arith.constant 0 : index
    %20 = vector.load %arg4[%c1, %c0_20, %c0_21] : memref<7x32x32xf32, #tpu.memory_space<vmem>>, vector<1x32x32xf32>
    %21 = vector.shape_cast %20 : vector<1x32x32xf32> to vector<32x32xf32>
    %c1_22 = arith.constant 1 : index
    %c0_23 = arith.constant 0 : index
    %c0_24 = arith.constant 0 : index
    %22 = vector.load %arg5[%c1_22, %c0_23, %c0_24] : memref<7x1x32xf32, #tpu.memory_space<vmem>>, vector<1x1x32xf32>
    %23 = vector.shape_cast %22 : vector<1x1x32xf32> to vector<1x32xf32>
    %cst_25 = arith.constant dense<0.000000e+00> : vector<8x32xf32>
    %24 = tpu.matmul %3, %21, %cst_25 {dimension_numbers = #tpu.dot_dimension_numbers<[1], [1], [0], [0], [0, 0, 1, 0], [], []>} : vector<8x32xf32>, vector<32x32xf32>, vector<8x32xf32> -> vector<8x32xf32>
    %25 = vector.broadcast %23 : vector<1x32xf32> to vector<8x32xf32>
    %26 = arith.addf %24, %25 : vector<8x32xf32>
    %c4 = arith.constant 4 : index
    %c0_26 = arith.constant 0 : index
    %c0_27 = arith.constant 0 : index
    %27 = vector.load %arg4[%c4, %c0_26, %c0_27] : memref<7x32x32xf32, #tpu.memory_space<vmem>>, vector<1x32x32xf32>
    %28 = vector.shape_cast %27 : vector<1x32x32xf32> to vector<32x32xf32>
    %c4_28 = arith.constant 4 : index
    %c0_29 = arith.constant 0 : index
    %c0_30 = arith.constant 0 : index
    %29 = vector.load %arg5[%c4_28, %c0_29, %c0_30] : memref<7x1x32xf32, #tpu.memory_space<vmem>>, vector<1x1x32xf32>
    %30 = vector.shape_cast %29 : vector<1x1x32xf32> to vector<1x32xf32>
    %cst_31 = arith.constant dense<0.000000e+00> : vector<8x32xf32>
    %31 = tpu.matmul %26, %28, %cst_31 {dimension_numbers = #tpu.dot_dimension_numbers<[1], [1], [0], [0], [0, 0, 1, 0], [], []>} : vector<8x32xf32>, vector<32x32xf32>, vector<8x32xf32> -> vector<8x32xf32>
    %32 = vector.broadcast %30 : vector<1x32xf32> to vector<8x32xf32>
    %33 = arith.addf %31, %32 : vector<8x32xf32>
    %c2 = arith.constant 2 : index
    %c0_32 = arith.constant 0 : index
    %c0_33 = arith.constant 0 : index
    %34 = vector.load %arg4[%c2, %c0_32, %c0_33] : memref<7x32x32xf32, #tpu.memory_space<vmem>>, vector<1x32x32xf32>
    %35 = vector.shape_cast %34 : vector<1x32x32xf32> to vector<32x32xf32>
    %c2_34 = arith.constant 2 : index
    %c0_35 = arith.constant 0 : index
    %c0_36 = arith.constant 0 : index
    %36 = vector.load %arg5[%c2_34, %c0_35, %c0_36] : memref<7x1x32xf32, #tpu.memory_space<vmem>>, vector<1x1x32xf32>
    %37 = vector.shape_cast %36 : vector<1x1x32xf32> to vector<1x32xf32>
    %cst_37 = arith.constant dense<0.000000e+00> : vector<8x32xf32>
    %38 = tpu.matmul %3, %35, %cst_37 {dimension_numbers = #tpu.dot_dimension_numbers<[1], [1], [0], [0], [0, 0, 1, 0], [], []>} : vector<8x32xf32>, vector<32x32xf32>, vector<8x32xf32> -> vector<8x32xf32>
    %39 = vector.broadcast %37 : vector<1x32xf32> to vector<8x32xf32>
    %40 = arith.addf %38, %39 : vector<8x32xf32>
    %c5 = arith.constant 5 : index
    %c0_38 = arith.constant 0 : index
    %c0_39 = arith.constant 0 : index
    %41 = vector.load %arg4[%c5, %c0_38, %c0_39] : memref<7x32x32xf32, #tpu.memory_space<vmem>>, vector<1x32x32xf32>
    %42 = vector.shape_cast %41 : vector<1x32x32xf32> to vector<32x32xf32>
    %c5_40 = arith.constant 5 : index
    %c0_41 = arith.constant 0 : index
    %c0_42 = arith.constant 0 : index
    %43 = vector.load %arg5[%c5_40, %c0_41, %c0_42] : memref<7x1x32xf32, #tpu.memory_space<vmem>>, vector<1x1x32xf32>
    %44 = vector.shape_cast %43 : vector<1x1x32xf32> to vector<1x32xf32>
    %cst_43 = arith.constant dense<0.000000e+00> : vector<8x32xf32>
    %45 = tpu.matmul %40, %42, %cst_43 {dimension_numbers = #tpu.dot_dimension_numbers<[1], [1], [0], [0], [0, 0, 1, 0], [], []>} : vector<8x32xf32>, vector<32x32xf32>, vector<8x32xf32> -> vector<8x32xf32>
    %46 = vector.broadcast %44 : vector<1x32xf32> to vector<8x32xf32>
    %47 = arith.addf %45, %46 : vector<8x32xf32>
    %48 = vector.extract_strided_slice %19 {offsets = [0, 0], sizes = [16, 8], strides = [1, 1]} : vector<16x32xf32> to vector<16x8xf32>
    %cst_44 = arith.constant 0.353553385 : f32
    %49 = vector.broadcast %cst_44 : f32 to vector<16x8xf32>
    %50 = arith.mulf %48, %49 : vector<16x8xf32>
    %51 = vector.extract_strided_slice %33 {offsets = [0, 0], sizes = [8, 8], strides = [1, 1]} : vector<8x32xf32> to vector<8x8xf32>
    %52 = vector.extract_strided_slice %47 {offsets = [0, 0], sizes = [8, 8], strides = [1, 1]} : vector<8x32xf32> to vector<8x8xf32>
    %cst_45 = arith.constant dense<0.000000e+00> : vector<16x8xf32>
    %53 = tpu.matmul %50, %51, %cst_45 {dimension_numbers = #tpu.dot_dimension_numbers<[1], [1], [0], [0], [0, 0, 1, 0], [], []>} : vector<16x8xf32>, vector<8x8xf32>, vector<16x8xf32> -> vector<16x8xf32>
    %54 = vector.broadcast %5 : vector<1x8xf32> to vector<16x8xf32>
    %55 = arith.addf %53, %54 : vector<16x8xf32>
    %cst_46 = arith.constant dense<0xFF800000> : vector<16xf32>
    %56 = vector.multi_reduction <maximumf>, %55, %cst_46 [1] : vector<16x8xf32> to vector<16xf32>
    %57 = vector.shape_cast %56 : vector<16xf32> to vector<16x1xf32>
    %58 = vector.broadcast %57 : vector<16x1xf32> to vector<16x8xf32>
    %59 = arith.subf %55, %58 : vector<16x8xf32>
    %60 = math.exp %59 : vector<16x8xf32>
    %cst_47 = arith.constant dense<0.000000e+00> : vector<16xf32>
    %61 = vector.multi_reduction <add>, %60, %cst_47 [1] : vector<16x8xf32> to vector<16xf32>
    %62 = vector.shape_cast %61 : vector<16xf32> to vector<16x1xf32>
    %63 = tpu.reciprocal %62 {approx = true} : vector<16x1xf32> -> vector<16x1xf32>
    %64 = vector.broadcast %63 : vector<16x1xf32> to vector<16x8xf32>
    %65 = arith.mulf %60, %64 : vector<16x8xf32>
    %cst_48 = arith.constant dense<0.000000e+00> : vector<16x8xf32>
    %66 = tpu.matmul %65, %52, %cst_48 {dimension_numbers = #tpu.dot_dimension_numbers<[1], [0], [0], [1], [0, 0, 1, 1], [], []>} : vector<16x8xf32>, vector<8x8xf32>, vector<16x8xf32> -> vector<16x8xf32>
    %67 = vector.extract_strided_slice %19 {offsets = [0, 8], sizes = [16, 8], strides = [1, 1]} : vector<16x32xf32> to vector<16x8xf32>
    %cst_49 = arith.constant 0.353553385 : f32
    %68 = vector.broadcast %cst_49 : f32 to vector<16x8xf32>
    %69 = arith.mulf %67, %68 : vector<16x8xf32>
    %70 = vector.extract_strided_slice %33 {offsets = [0, 8], sizes = [8, 8], strides = [1, 1]} : vector<8x32xf32> to vector<8x8xf32>
    %71 = vector.extract_strided_slice %47 {offsets = [0, 8], sizes = [8, 8], strides = [1, 1]} : vector<8x32xf32> to vector<8x8xf32>
    %cst_50 = arith.constant dense<0.000000e+00> : vector<16x8xf32>
    %72 = tpu.matmul %69, %70, %cst_50 {dimension_numbers = #tpu.dot_dimension_numbers<[1], [1], [0], [0], [0, 0, 1, 0], [], []>} : vector<16x8xf32>, vector<8x8xf32>, vector<16x8xf32> -> vector<16x8xf32>
    %73 = vector.broadcast %5 : vector<1x8xf32> to vector<16x8xf32>
    %74 = arith.addf %72, %73 : vector<16x8xf32>
    %cst_51 = arith.constant dense<0xFF800000> : vector<16xf32>
    %75 = vector.multi_reduction <maximumf>, %74, %cst_51 [1] : vector<16x8xf32> to vector<16xf32>
    %76 = vector.shape_cast %75 : vector<16xf32> to vector<16x1xf32>
    %77 = vector.broadcast %76 : vector<16x1xf32> to vector<16x8xf32>
    %78 = arith.subf %74, %77 : vector<16x8xf32>
    %79 = math.exp %78 : vector<16x8xf32>
    %cst_52 = arith.constant dense<0.000000e+00> : vector<16xf32>
    %80 = vector.multi_reduction <add>, %79, %cst_52 [1] : vector<16x8xf32> to vector<16xf32>
    %81 = vector.shape_cast %80 : vector<16xf32> to vector<16x1xf32>
    %82 = tpu.reciprocal %81 {approx = true} : vector<16x1xf32> -> vector<16x1xf32>
    %83 = vector.broadcast %82 : vector<16x1xf32> to vector<16x8xf32>
    %84 = arith.mulf %79, %83 : vector<16x8xf32>
    %cst_53 = arith.constant dense<0.000000e+00> : vector<16x8xf32>
    %85 = tpu.matmul %84, %71, %cst_53 {dimension_numbers = #tpu.dot_dimension_numbers<[1], [0], [0], [1], [0, 0, 1, 1], [], []>} : vector<16x8xf32>, vector<8x8xf32>, vector<16x8xf32> -> vector<16x8xf32>
    %86 = vector.extract_strided_slice %19 {offsets = [0, 16], sizes = [16, 8], strides = [1, 1]} : vector<16x32xf32> to vector<16x8xf32>
    %cst_54 = arith.constant 0.353553385 : f32
    %87 = vector.broadcast %cst_54 : f32 to vector<16x8xf32>
    %88 = arith.mulf %86, %87 : vector<16x8xf32>
    %89 = vector.extract_strided_slice %33 {offsets = [0, 16], sizes = [8, 8], strides = [1, 1]} : vector<8x32xf32> to vector<8x8xf32>
    %90 = vector.extract_strided_slice %47 {offsets = [0, 16], sizes = [8, 8], strides = [1, 1]} : vector<8x32xf32> to vector<8x8xf32>
    %cst_55 = arith.constant dense<0.000000e+00> : vector<16x8xf32>
    %91 = tpu.matmul %88, %89, %cst_55 {dimension_numbers = #tpu.dot_dimension_numbers<[1], [1], [0], [0], [0, 0, 1, 0], [], []>} : vector<16x8xf32>, vector<8x8xf32>, vector<16x8xf32> -> vector<16x8xf32>
    %92 = vector.broadcast %5 : vector<1x8xf32> to vector<16x8xf32>
    %93 = arith.addf %91, %92 : vector<16x8xf32>
    %cst_56 = arith.constant dense<0xFF800000> : vector<16xf32>
    %94 = vector.multi_reduction <maximumf>, %93, %cst_56 [1] : vector<16x8xf32> to vector<16xf32>
    %95 = vector.shape_cast %94 : vector<16xf32> to vector<16x1xf32>
    %96 = vector.broadcast %95 : vector<16x1xf32> to vector<16x8xf32>
    %97 = arith.subf %93, %96 : vector<16x8xf32>
    %98 = math.exp %97 : vector<16x8xf32>
    %cst_57 = arith.constant dense<0.000000e+00> : vector<16xf32>
    %99 = vector.multi_reduction <add>, %98, %cst_57 [1] : vector<16x8xf32> to vector<16xf32>
    %100 = vector.shape_cast %99 : vector<16xf32> to vector<16x1xf32>
    %101 = tpu.reciprocal %100 {approx = true} : vector<16x1xf32> -> vector<16x1xf32>
    %102 = vector.broadcast %101 : vector<16x1xf32> to vector<16x8xf32>
    %103 = arith.mulf %98, %102 : vector<16x8xf32>
    %cst_58 = arith.constant dense<0.000000e+00> : vector<16x8xf32>
    %104 = tpu.matmul %103, %90, %cst_58 {dimension_numbers = #tpu.dot_dimension_numbers<[1], [0], [0], [1], [0, 0, 1, 1], [], []>} : vector<16x8xf32>, vector<8x8xf32>, vector<16x8xf32> -> vector<16x8xf32>
    %105 = vector.extract_strided_slice %19 {offsets = [0, 24], sizes = [16, 8], strides = [1, 1]} : vector<16x32xf32> to vector<16x8xf32>
    %cst_59 = arith.constant 0.353553385 : f32
    %106 = vector.broadcast %cst_59 : f32 to vector<16x8xf32>
    %107 = arith.mulf %105, %106 : vector<16x8xf32>
    %108 = vector.extract_strided_slice %33 {offsets = [0, 24], sizes = [8, 8], strides = [1, 1]} : vector<8x32xf32> to vector<8x8xf32>
    %109 = vector.extract_strided_slice %47 {offsets = [0, 24], sizes = [8, 8], strides = [1, 1]} : vector<8x32xf32> to vector<8x8xf32>
    %cst_60 = arith.constant dense<0.000000e+00> : vector<16x8xf32>
    %110 = tpu.matmul %107, %108, %cst_60 {dimension_numbers = #tpu.dot_dimension_numbers<[1], [1], [0], [0], [0, 0, 1, 0], [], []>} : vector<16x8xf32>, vector<8x8xf32>, vector<16x8xf32> -> vector<16x8xf32>
    %111 = vector.broadcast %5 : vector<1x8xf32> to vector<16x8xf32>
    %112 = arith.addf %110, %111 : vector<16x8xf32>
    %cst_61 = arith.constant dense<0xFF800000> : vector<16xf32>
    %113 = vector.multi_reduction <maximumf>, %112, %cst_61 [1] : vector<16x8xf32> to vector<16xf32>
    %114 = vector.shape_cast %113 : vector<16xf32> to vector<16x1xf32>
    %115 = vector.broadcast %114 : vector<16x1xf32> to vector<16x8xf32>
    %116 = arith.subf %112, %115 : vector<16x8xf32>
    %117 = math.exp %116 : vector<16x8xf32>
    %cst_62 = arith.constant dense<0.000000e+00> : vector<16xf32>
    %118 = vector.multi_reduction <add>, %117, %cst_62 [1] : vector<16x8xf32> to vector<16xf32>
    %119 = vector.shape_cast %118 : vector<16xf32> to vector<16x1xf32>
    %120 = tpu.reciprocal %119 {approx = true} : vector<16x1xf32> -> vector<16x1xf32>
    %121 = vector.broadcast %120 : vector<16x1xf32> to vector<16x8xf32>
    %122 = arith.mulf %117, %121 : vector<16x8xf32>
    %cst_63 = arith.constant dense<0.000000e+00> : vector<16x8xf32>
    %123 = tpu.matmul %122, %109, %cst_63 {dimension_numbers = #tpu.dot_dimension_numbers<[1], [0], [0], [1], [0, 0, 1, 1], [], []>} : vector<16x8xf32>, vector<8x8xf32>, vector<16x8xf32> -> vector<16x8xf32>
    %124 = tpu.concatenate %66, %85, %104, %123 in 1 : vector<16x8xf32>, vector<16x8xf32>, vector<16x8xf32>, vector<16x8xf32> -> vector<16x32xf32>
    %c6 = arith.constant 6 : index
    %c0_64 = arith.constant 0 : index
    %c0_65 = arith.constant 0 : index
    %125 = vector.load %arg4[%c6, %c0_64, %c0_65] : memref<7x32x32xf32, #tpu.memory_space<vmem>>, vector<1x32x32xf32>
    %126 = vector.shape_cast %125 : vector<1x32x32xf32> to vector<32x32xf32>
    %c6_66 = arith.constant 6 : index
    %c0_67 = arith.constant 0 : index
    %c0_68 = arith.constant 0 : index
    %127 = vector.load %arg5[%c6_66, %c0_67, %c0_68] : memref<7x1x32xf32, #tpu.memory_space<vmem>>, vector<1x1x32xf32>
    %128 = vector.shape_cast %127 : vector<1x1x32xf32> to vector<1x32xf32>
    %cst_69 = arith.constant dense<0.000000e+00> : vector<16x32xf32>
    %129 = tpu.matmul %124, %126, %cst_69 {dimension_numbers = #tpu.dot_dimension_numbers<[1], [1], [0], [0], [0, 0, 1, 0], [], []>} : vector<16x32xf32>, vector<32x32xf32>, vector<16x32xf32> -> vector<16x32xf32>
    %130 = vector.broadcast %128 : vector<1x32xf32> to vector<16x32xf32>
    %131 = arith.addf %129, %130 : vector<16x32xf32>
    %c0_70 = arith.constant 0 : index
    %c0_71 = arith.constant 0 : index
    %c0_72 = arith.constant 0 : index
    %132 = vector.load %arg6[%c0_70, %c0_71, %c0_72] : memref<1x16x32xf32, #tpu.memory_space<vmem>>, vector<1x16x32xf32>
    %133 = vector.shape_cast %132 : vector<1x16x32xf32> to vector<16x32xf32>
    %134 = vector.shape_cast %131 : vector<16x32xf32> to vector<1x16x32xf32>
    tpu.vector_store %arg6[%c0_70, %c0_71, %c0_72], %134 {strides = array<i32>} : memref<1x16x32xf32, #tpu.memory_space<vmem>>, vector<1x16x32xf32>,
    return
  }
  func.func @transform_0(%arg0: i32) -> (i32, i32, i32) {
    %c0_i32 = arith.constant 0 : i32
    %c0_i32_0 = arith.constant 0 : i32
    %c0_i32_1 = arith.constant 0 : i32
    return %arg0, %c0_i32, %c0_i32_0 : i32, i32, i32
  }
  func.func @transform_1(%arg0: i32) -> (i32, i32, i32) {
    %c0_i32 = arith.constant 0 : i32
    %c0_i32_0 = arith.constant 0 : i32
    %c0_i32_1 = arith.constant 0 : i32
    return %arg0, %c0_i32, %c0_i32_0 : i32, i32, i32
  }
  func.func @transform_2(%arg0: i32) -> (i32, i32, i32) {
    %c0_i32 = arith.constant 0 : i32
    %c0_i32_0 = arith.constant 0 : i32
    %c0_i32_1 = arith.constant 0 : i32
    return %arg0, %c0_i32, %c0_i32_0 : i32, i32, i32
  }
  func.func @transform_3(%arg0: i32) -> (i32, i32, i32) {
    %c0_i32 = arith.constant 0 : i32
    %c0_i32_0 = arith.constant 0 : i32
    %c0_i32_1 = arith.constant 0 : i32
    %c0_i32_2 = arith.constant 0 : i32
    return %c0_i32, %c0_i32_0, %c0_i32_1 : i32, i32, i32
  }
  func.func @transform_4(%arg0: i32) -> (i32, i32, i32) {
    %c0_i32 = arith.constant 0 : i32
    %c0_i32_0 = arith.constant 0 : i32
    %c0_i32_1 = arith.constant 0 : i32
    %c0_i32_2 = arith.constant 0 : i32
    return %c0_i32, %c0_i32_0, %c0_i32_1 : i32, i32, i32
  }
  func.func @transform_5(%arg0: i32) -> (i32, i32, i32) {
    %c0_i32 = arith.constant 0 : i32
    %c0_i32_0 = arith.constant 0 : i32
    %c0_i32_1 = arith.constant 0 : i32
    return %arg0, %c0_i32, %c0_i32_0 : i32, i32, i32
  }
}

module attributes {stable_mosaic.version = 11 : i64} {
  func.func @_cross_attn_layer_kernel(%arg0: i32, %arg1: memref<1x16x32xf32, #tpu.memory_space<vmem>>, %arg2: memref<1x8x32xf32, #tpu.memory_space<vmem>>, %arg3: memref<1x1x8xf32, #tpu.memory_space<vmem>>, %arg4: memref<7x32x32xf32, #tpu.memory_space<vmem>>, %arg5: memref<7x1x32xf32, #tpu.memory_space<vmem>>, %arg6: memref<1x16x32xf32, #tpu.memory_space<vmem>>) attributes {dimension_semantics = [#tpu.dimension_semantics<parallel>], iteration_bounds = array<i64: 2>, scalar_prefetch = 0 : i64, scratch_operands = 0 : i64, tpu.core_type = #tpu.core_type<tc>, window_params = [{transform_indices = @transform_0, window_bounds = array<i64: 1, 16, 32>}, {transform_indices = @transform_1, window_bounds = array<i64: 1, 8, 32>}, {transform_indices = @transform_2, window_bounds = array<i64: 1, 1, 8>}, {pipeline_mode = #tpu.pipeline_mode<synchronous>, transform_indices = @transform_3, window_bounds = array<i64: 7, 32, 32>}, {pipeline_mode = #tpu.pipeline_mode<synchronous>, transform_indices = @transform_4, window_bounds = array<i64: 7, 1, 32>}, {transform_indices = @transform_5, window_bounds = array<i64: 1, 16, 32>}]} {
    %c0 = arith.constant 0 : index
    %c0_0 = arith.constant 0 : index
    %c0_1 = arith.constant 0 : index
    %0 = vector.load %arg1[%c0, %c0_0, %c0_1] : memref<1x16x32xf32, #tpu.memory_space<vmem>>, vector<1x16x32xf32>
    %1 = vector.shape_cast %0 : vector<1x16x32xf32> to vector<16x32xf32>
    %c0_2 = arith.constant 0 : index
    %c0_3 = arith.constant 0 : index
    %c0_4 = arith.constant 0 : index
    %2 = vector.load %arg2[%c0_2, %c0_3, %c0_4] : memref<1x8x32xf32, #tpu.memory_space<vmem>>, vector<1x8x32xf32>
    %3 = vector.shape_cast %2 : vector<1x8x32xf32> to vector<8x32xf32>
    %c0_5 = arith.constant 0 : index
    %c0_6 = arith.constant 0 : index
    %c0_7 = arith.constant 0 : index
    %4 = vector.load %arg3[%c0_5, %c0_6, %c0_7] : memref<1x1x8xf32, #tpu.memory_space<vmem>>, vector<1x1x8xf32>
    %5 = vector.shape_cast %4 : vector<1x1x8xf32> to vector<1x8xf32>
    %c0_8 = arith.constant 0 : index
    %c0_9 = arith.constant 0 : index
    %c0_10 = arith.constant 0 : index
    %6 = vector.load %arg4[%c0_8, %c0_9, %c0_10] : memref<7x32x32xf32, #tpu.memory_space<vmem>>, vector<1x32x32xf32>
    %7 = vector.shape_cast %6 : vector<1x32x32xf32> to vector<32x32xf32>
    %c0_11 = arith.constant 0 : index
    %c0_12 = arith.constant 0 : index
    %c0_13 = arith.constant 0 : index
    %8 = vector.load %arg5[%c0_11, %c0_12, %c0_13] : memref<7x1x32xf32, #tpu.memory_space<vmem>>, vector<1x1x32xf32>
    %9 = vector.shape_cast %8 : vector<1x1x32xf32> to vector<1x32xf32>
    %cst = arith.constant dense<0.000000e+00> : vector<16x32xf32>
    %10 = tpu.matmul %1, %7, %cst {dimension_numbers = #tpu.dot_dimension_numbers<[1], [1], [0], [0], [0, 0, 1, 0], [], []>} : vector<16x32xf32>, vector<32x32xf32>, vector<16x32xf32> -> vector<16x32xf32>
    %11 = vector.broadcast %9 : vector<1x32xf32> to vector<16x32xf32>
    %12 = arith.addf %10, %11 : vector<16x32xf32>
    %c3 = arith.constant 3 : index
    %c0_14 = arith.constant 0 : index
    %c0_15 = arith.constant 0 : index
    %13 = vector.load %arg4[%c3, %c0_14, %c0_15] : memref<7x32x32xf32, #tpu.memory_space<vmem>>, vector<1x32x32xf32>
    %14 = vector.shape_cast %13 : vector<1x32x32xf32> to vector<32x32xf32>
    %c3_16 = arith.constant 3 : index
    %c0_17 = arith.constant 0 : index
    %c0_18 = arith.constant 0 : index
    %15 = vector.load %arg5[%c3_16, %c0_17, %c0_18] : memref<7x1x32xf32, #tpu.memory_space<vmem>>, vector<1x1x32xf32>
    %16 = vector.shape_cast %15 : vector<1x1x32xf32> to vector<1x32xf32>
    %cst_19 = arith.constant dense<0.000000e+00> : vector<16x32xf32>
    %17 = tpu.matmul %12, %14, %cst_19 {dimension_numbers = #tpu.dot_dimension_numbers<[1], [1], [0], [0], [0, 0, 1, 0], [], []>} : vector<16x32xf32>, vector<32x32xf32>, vector<16x32xf32> -> vector<16x32xf32>
    %18 = vector.broadcast %16 : vector<1x32xf32> to vector<16x32xf32>
    %19 = arith.addf %17, %18 : vector<16x32xf32>
    %c1 = arith.constant 1 : index
    %c0_20 = arith.constant 0 : index
    %c0_21 = arith.constant 0 : index
    %20 = vector.load %arg4[%c1, %c0_20, %c0_21] : memref<7x32x32xf32, #tpu.memory_space<vmem>>, vector<1x32x32xf32>
    %21 = vector.shape_cast %20 : vector<1x32x32xf32> to vector<32x32xf32>
    %c1_22 = arith.constant 1 : index
    %c0_23 = arith.constant 0 : index
    %c0_24 = arith.constant 0 : index
    %22 = vector.load %arg5[%c1_22, %c0_23, %c0_24] : memref<7x1x32xf32, #tpu.memory_space<vmem>>, vector<1x1x32xf32>
    %23 = vector.shape_cast %22 : vector<1x1x32xf32> to vector<1x32xf32>
    %cst_25 = arith.constant dense<0.000000e+00> : vector<8x32xf32>
    %24 = tpu.matmul %3, %21, %cst_25 {dimension_numbers = #tpu.dot_dimension_numbers<[1], [1], [0], [0], [0, 0, 1, 0], [], []>} : vector<8x32xf32>, vector<32x32xf32>, vector<8x32xf32> -> vector<8x32xf32>
    %25 = vector.broadcast %23 : vector<1x32xf32> to vector<8x32xf32>
    %26 = arith.addf %24, %25 : vector<8x32xf32>
    %c4 = arith.constant 4 : index
    %c0_26 = arith.constant 0 : index
    %c0_27 = arith.constant 0 : index
    %27 = vector.load %arg4[%c4, %c0_26, %c0_27] : memref<7x32x32xf32, #tpu.memory_space<vmem>>, vector<1x32x32xf32>
    %28 = vector.shape_cast %27 : vector<1x32x32xf32> to vector<32x32xf32>
    %c4_28 = arith.constant 4 : index
    %c0_29 = arith.constant 0 : index
    %c0_30 = arith.constant 0 : index
    %29 = vector.load %arg5[%c4_28, %c0_29, %c0_30] : memref<7x1x32xf32, #tpu.memory_space<vmem>>, vector<1x1x32xf32>
    %30 = vector.shape_cast %29 : vector<1x1x32xf32> to vector<1x32xf32>
    %cst_31 = arith.constant dense<0.000000e+00> : vector<8x32xf32>
    %31 = tpu.matmul %26, %28, %cst_31 {dimension_numbers = #tpu.dot_dimension_numbers<[1], [1], [0], [0], [0, 0, 1, 0], [], []>} : vector<8x32xf32>, vector<32x32xf32>, vector<8x32xf32> -> vector<8x32xf32>
    %32 = vector.broadcast %30 : vector<1x32xf32> to vector<8x32xf32>
    %33 = arith.addf %31, %32 : vector<8x32xf32>
    %c2 = arith.constant 2 : index
    %c0_32 = arith.constant 0 : index
    %c0_33 = arith.constant 0 : index
    %34 = vector.load %arg4[%c2, %c0_32, %c0_33] : memref<7x32x32xf32, #tpu.memory_space<vmem>>, vector<1x32x32xf32>
    %35 = vector.shape_cast %34 : vector<1x32x32xf32> to vector<32x32xf32>
    %c2_34 = arith.constant 2 : index
    %c0_35 = arith.constant 0 : index
    %c0_36 = arith.constant 0 : index
    %36 = vector.load %arg5[%c2_34, %c0_35, %c0_36] : memref<7x1x32xf32, #tpu.memory_space<vmem>>, vector<1x1x32xf32>
    %37 = vector.shape_cast %36 : vector<1x1x32xf32> to vector<1x32xf32>
    %cst_37 = arith.constant dense<0.000000e+00> : vector<8x32xf32>
    %38 = tpu.matmul %3, %35, %cst_37 {dimension_numbers = #tpu.dot_dimension_numbers<[1], [1], [0], [0], [0, 0, 1, 0], [], []>} : vector<8x32xf32>, vector<32x32xf32>, vector<8x32xf32> -> vector<8x32xf32>
    %39 = vector.broadcast %37 : vector<1x32xf32> to vector<8x32xf32>
    %40 = arith.addf %38, %39 : vector<8x32xf32>
    %c5 = arith.constant 5 : index
    %c0_38 = arith.constant 0 : index
    %c0_39 = arith.constant 0 : index
    %41 = vector.load %arg4[%c5, %c0_38, %c0_39] : memref<7x32x32xf32, #tpu.memory_space<vmem>>, vector<1x32x32xf32>
    %42 = vector.shape_cast %41 : vector<1x32x32xf32> to vector<32x32xf32>
    %c5_40 = arith.constant 5 : index
    %c0_41 = arith.constant 0 : index
    %c0_42 = arith.constant 0 : index
    %43 = vector.load %arg5[%c5_40, %c0_41, %c0_42] : memref<7x1x32xf32, #tpu.memory_space<vmem>>, vector<1x1x32xf32>
    %44 = vector.shape_cast %43 : vector<1x1x32xf32> to vector<1x32xf32>
    %cst_43 = arith.constant dense<0.000000e+00> : vector<8x32xf32>
    %45 = tpu.matmul %40, %42, %cst_43 {dimension_numbers = #tpu.dot_dimension_numbers<[1], [1], [0], [0], [0, 0, 1, 0], [], []>} : vector<8x32xf32>, vector<32x32xf32>, vector<8x32xf32> -> vector<8x32xf32>
    %46 = vector.broadcast %44 : vector<1x32xf32> to vector<8x32xf32>
    %47 = arith.addf %45, %46 : vector<8x32xf32>
    %48 = vector.extract_strided_slice %19 {offsets = [0, 0], sizes = [16, 8], strides = [1, 1]} : vector<16x32xf32> to vector<16x8xf32>
    %cst_44 = arith.constant 0.353553385 : f32
    %49 = vector.broadcast %cst_44 : f32 to vector<16x8xf32>
    %50 = arith.mulf %48, %49 : vector<16x8xf32>
    %51 = vector.extract_strided_slice %33 {offsets = [0, 0], sizes = [8, 8], strides = [1, 1]} : vector<8x32xf32> to vector<8x8xf32>
    %52 = vector.extract_strided_slice %47 {offsets = [0, 0], sizes = [8, 8], strides = [1, 1]} : vector<8x32xf32> to vector<8x8xf32>
    %cst_45 = arith.constant dense<0.000000e+00> : vector<16x8xf32>
    %53 = tpu.matmul %50, %51, %cst_45 {dimension_numbers = #tpu.dot_dimension_numbers<[1], [1], [0], [0], [0, 0, 1, 0], [], []>} : vector<16x8xf32>, vector<8x8xf32>, vector<16x8xf32> -> vector<16x8xf32>
    %54 = vector.broadcast %5 : vector<1x8xf32> to vector<16x8xf32>
    %55 = arith.addf %53, %54 : vector<16x8xf32>
    %cst_46 = arith.constant dense<0xFF800000> : vector<16xf32>
    %56 = vector.multi_reduction <maximumf>, %55, %cst_46 [1] : vector<16x8xf32> to vector<16xf32>
    %57 = vector.shape_cast %56 : vector<16xf32> to vector<16x1xf32>
    %58 = vector.broadcast %57 : vector<16x1xf32> to vector<16x8xf32>
    %59 = arith.subf %55, %58 : vector<16x8xf32>
    %60 = math.exp %59 : vector<16x8xf32>
    %cst_47 = arith.constant dense<0.000000e+00> : vector<16xf32>
    %61 = vector.multi_reduction <add>, %60, %cst_47 [1] : vector<16x8xf32> to vector<16xf32>
    %62 = vector.shape_cast %61 : vector<16xf32> to vector<16x1xf32>
    %63 = tpu.reciprocal %62 {approx = true} : vector<16x1xf32> -> vector<16x1xf32>
    %64 = vector.broadcast %63 : vector<16x1xf32> to vector<16x8xf32>
    %65 = arith.mulf %60, %64 : vector<16x8xf32>
    %cst_48 = arith.constant dense<0.000000e+00> : vector<16x8xf32>
    %66 = tpu.matmul %65, %52, %cst_48 {dimension_numbers = #tpu.dot_dimension_numbers<[1], [0], [0], [1], [0, 0, 1, 1], [], []>} : vector<16x8xf32>, vector<8x8xf32>, vector<16x8xf32> -> vector<16x8xf32>
    %67 = vector.extract_strided_slice %19 {offsets = [0, 8], sizes = [16, 8], strides = [1, 1]} : vector<16x32xf32> to vector<16x8xf32>
    %cst_49 = arith.constant 0.353553385 : f32
    %68 = vector.broadcast %cst_49 : f32 to vector<16x8xf32>
    %69 = arith.mulf %67, %68 : vector<16x8xf32>
    %70 = vector.extract_strided_slice %33 {offsets = [0, 8], sizes = [8, 8], strides = [1, 1]} : vector<8x32xf32> to vector<8x8xf32>
    %71 = vector.extract_strided_slice %47 {offsets = [0, 8], sizes = [8, 8], strides = [1, 1]} : vector<8x32xf32> to vector<8x8xf32>
    %cst_50 = arith.constant dense<0.000000e+00> : vector<16x8xf32>
    %72 = tpu.matmul %69, %70, %cst_50 {dimension_numbers = #tpu.dot_dimension_numbers<[1], [1], [0], [0], [0, 0, 1, 0], [], []>} : vector<16x8xf32>, vector<8x8xf32>, vector<16x8xf32> -> vector<16x8xf32>
    %73 = vector.broadcast %5 : vector<1x8xf32> to vector<16x8xf32>
    %74 = arith.addf %72, %73 : vector<16x8xf32>
    %cst_51 = arith.constant dense<0xFF800000> : vector<16xf32>
    %75 = vector.multi_reduction <maximumf>, %74, %cst_51 [1] : vector<16x8xf32> to vector<16xf32>
    %76 = vector.shape_cast %75 : vector<16xf32> to vector<16x1xf32>
    %77 = vector.broadcast %76 : vector<16x1xf32> to vector<16x8xf32>
    %78 = arith.subf %74, %77 : vector<16x8xf32>
    %79 = math.exp %78 : vector<16x8xf32>
    %cst_52 = arith.constant dense<0.000000e+00> : vector<16xf32>
    %80 = vector.multi_reduction <add>, %79, %cst_52 [1] : vector<16x8xf32> to vector<16xf32>
    %81 = vector.shape_cast %80 : vector<16xf32> to vector<16x1xf32>
    %82 = tpu.reciprocal %81 {approx = true} : vector<16x1xf32> -> vector<16x1xf32>
    %83 = vector.broadcast %82 : vector<16x1xf32> to vector<16x8xf32>
    %84 = arith.mulf %79, %83 : vector<16x8xf32>
    %cst_53 = arith.constant dense<0.000000e+00> : vector<16x8xf32>
    %85 = tpu.matmul %84, %71, %cst_53 {dimension_numbers = #tpu.dot_dimension_numbers<[1], [0], [0], [1], [0, 0, 1, 1], [], []>} : vector<16x8xf32>, vector<8x8xf32>, vector<16x8xf32> -> vector<16x8xf32>
    %86 = vector.extract_strided_slice %19 {offsets = [0, 16], sizes = [16, 8], strides = [1, 1]} : vector<16x32xf32> to vector<16x8xf32>
    %cst_54 = arith.constant 0.353553385 : f32
    %87 = vector.broadcast %cst_54 : f32 to vector<16x8xf32>
    %88 = arith.mulf %86, %87 : vector<16x8xf32>
    %89 = vector.extract_strided_slice %33 {offsets = [0, 16], sizes = [8, 8], strides = [1, 1]} : vector<8x32xf32> to vector<8x8xf32>
    %90 = vector.extract_strided_slice %47 {offsets = [0, 16], sizes = [8, 8], strides = [1, 1]} : vector<8x32xf32> to vector<8x8xf32>
    %cst_55 = arith.constant dense<0.000000e+00> : vector<16x8xf32>
    %91 = tpu.matmul %88, %89, %cst_55 {dimension_numbers = #tpu.dot_dimension_numbers<[1], [1], [0], [0], [0, 0, 1, 0], [], []>} : vector<16x8xf32>, vector<8x8xf32>, vector<16x8xf32> -> vector<16x8xf32>
    %92 = vector.broadcast %5 : vector<1x8xf32> to vector<16x8xf32>
    %93 = arith.addf %91, %92 : vector<16x8xf32>
    %cst_56 = arith.constant dense<0xFF800000> : vector<16xf32>
    %94 = vector.multi_reduction <maximumf>, %93, %cst_56 [1] : vector<16x8xf32> to vector<16xf32>
    %95 = vector.shape_cast %94 : vector<16xf32> to vector<16x1xf32>
    %96 = vector.broadcast %95 : vector<16x1xf32> to vector<16x8xf32>
    %97 = arith.subf %93, %96 : vector<16x8xf32>
    %98 = math.exp %97 : vector<16x8xf32>
    %cst_57 = arith.constant dense<0.000000e+00> : vector<16xf32>
    %99 = vector.multi_reduction <add>, %98, %cst_57 [1] : vector<16x8xf32> to vector<16xf32>
    %100 = vector.shape_cast %99 : vector<16xf32> to vector<16x1xf32>
    %101 = tpu.reciprocal %100 {approx = true} : vector<16x1xf32> -> vector<16x1xf32>
    %102 = vector.broadcast %101 : vector<16x1xf32> to vector<16x8xf32>
    %103 = arith.mulf %98, %102 : vector<16x8xf32>
    %cst_58 = arith.constant dense<0.000000e+00> : vector<16x8xf32>
    %104 = tpu.matmul %103, %90, %cst_58 {dimension_numbers = #tpu.dot_dimension_numbers<[1], [0], [0], [1], [0, 0, 1, 1], [], []>} : vector<16x8xf32>, vector<8x8xf32>, vector<16x8xf32> -> vector<16x8xf32>
    %105 = vector.extract_strided_slice %19 {offsets = [0, 24], sizes = [16, 8], strides = [1, 1]} : vector<16x32xf32> to vector<16x8xf32>
    %cst_59 = arith.constant 0.353553385 : f32
    %106 = vector.broadcast %cst_59 : f32 to vector<16x8xf32>
    %107 = arith.mulf %105, %106 : vector<16x8xf32>
    %108 = vector.extract_strided_slice %33 {offsets = [0, 24], sizes = [8, 8], strides = [1, 1]} : vector<8x32xf32> to vector<8x8xf32>
    %109 = vector.extract_strided_slice %47 {offsets = [0, 24], sizes = [8, 8], strides = [1, 1]} : vector<8x32xf32> to vector<8x8xf32>
    %cst_60 = arith.constant dense<0.000000e+00> : vector<16x8xf32>
    %110 = tpu.matmul %107, %108, %cst_60 {dimension_numbers = #tpu.dot_dimension_numbers<[1], [1], [0], [0], [0, 0, 1, 0], [], []>} : vector<16x8xf32>, vector<8x8xf32>, vector<16x8xf32> -> vector<16x8xf32>
    %111 = vector.broadcast %5 : vector<1x8xf32> to vector<16x8xf32>
    %112 = arith.addf %110, %111 : vector<16x8xf32>
    %cst_61 = arith.constant dense<0xFF800000> : vector<16xf32>
    %113 = vector.multi_reduction <maximumf>, %112, %cst_61 [1] : vector<16x8xf32> to vector<16xf32>
    %114 = vector.shape_cast %113 : vector<16xf32> to vector<16x1xf32>
    %115 = vector.broadcast %114 : vector<16x1xf32> to vector<16x8xf32>
    %116 = arith.subf %112, %115 : vector<16x8xf32>
    %117 = math.exp %116 : vector<16x8xf32>
    %cst_62 = arith.constant dense<0.000000e+00> : vector<16xf32>
    %118 = vector.multi_reduction <add>, %117, %cst_62 [1] : vector<16x8xf32> to vector<16xf32>
    %119 = vector.shape_cast %118 : vector<16xf32> to vector<16x1xf32>
    %120 = tpu.reciprocal %119 {approx = true} : vector<16x1xf32> -> vector<16x1xf32>
    %121 = vector.broadcast %120 : vector<16x1xf32> to vector<16x8xf32>
    %122 = arith.mulf %117, %121 : vector<16x8xf32>
    %cst_63 = arith.constant dense<0.000000e+00> : vector<16x8xf32>
    %123 = tpu.matmul %122, %109, %cst_63 {dimension_numbers = #tpu.dot_dimension_numbers<[1], [0], [0], [1], [0, 0, 1, 1], [], []>} : vector<16x8xf32>, vector<8x8xf32>, vector<16x8xf32> -> vector<16x8xf32>
    %124 = tpu.concatenate %66, %85, %104, %123 in 1 : vector<16x8xf32>, vector<16x8xf32>, vector<16x8xf32>, vector<16x8xf32> -> vector<16x32xf32>
    %c6 = arith.constant 6 : index
    %c0_64 = arith.constant 0 : index
    %c0_65 = arith.constant 0 : index
    %125 = vector.load %arg4[%c6, %c0_64, %c0_65] : memref<7x32x32xf32, #tpu.memory_space<vmem>>, vector<1x32x32xf32>
    %126 = vector.shape_cast %125 : vector<1x32x32xf32> to vector<32x32xf32>
    %c6_66 = arith.constant 6 : index
    %c0_67 = arith.constant 0 : index
    %c0_68 = arith.constant 0 : index
    %127 = vector.load %arg5[%c6_66, %c0_67, %c0_68] : memref<7x1x32xf32, #tpu.memory_space<vmem>>, vector<1x1x32xf32>
    %128 = vector.shape_cast %127 : vector<1x1x32xf32> to vector<1x32xf32>
    %cst_69 = arith.constant dense<0.000000e+00> : vector<16x32xf32>
    %129 = tpu.matmul %124, %126, %cst_69 {dimension_numbers = #tpu.dot_dimension_numbers<[1], [1], [0], [0], [0, 0, 1, 0], [], []>} : vector<16x32xf32>, vector<32x32xf32>, vector<16x32xf32> -> vector<16x32xf32>
    %130 = vector.broadcast %128 : vector<1x32xf32> to vector<16x32xf32>
    %131 = arith.addf %129, %130 : vector<16x32xf32>
    %c0_70 = arith.constant 0 : index
    %c0_71 = arith.constant 0 : index
    %c0_72 = arith.constant 0 : index
    %132 = vector.load %arg6[%c0_70, %c0_71, %c0_72] : memref<1x16x32xf32, #tpu.memory_space<vmem>>, vector<1x16x32xf32>
    %133 = vector.shape_cast %132 : vector<1x16x32xf32> to vector<16x32xf32>
    %134 = vector.shape_cast %131 : vector<16x32xf32> to vector<1x16x32xf32>
    tpu.vector_store %arg6[%c0_70, %c0_71, %c0_72], %134 {strides = array<i32>} : memref<1x16x32xf32, #tpu.memory_space<vmem>>, vector<1x16x32xf32>,
    return
  }
  func.func @transform_0(%arg0: i32) -> (i32, i32, i32) {
    %c0_i32 = arith.constant 0 : i32
    %c0_i32_0 = arith.constant 0 : i32
    %c0_i32_1 = arith.constant 0 : i32
    return %arg0, %c0_i32, %c0_i32_0 : i32, i32, i32
  }
  func.func @transform_1(%arg0: i32) -> (i32, i32, i32) {
    %c0_i32 = arith.constant 0 : i32
    %c0_i32_0 = arith.constant 0 : i32
    %c0_i32_1 = arith.constant 0 : i32
    return %arg0, %c0_i32, %c0_i32_0 : i32, i32, i32
  }
  func.func @transform_2(%arg0: i32) -> (i32, i32, i32) {
    %c0_i32 = arith.constant 0 : i32
    %c0_i32_0 = arith.constant 0 : i32
    %c0_i32_1 = arith.constant 0 : i32
    return %arg0, %c0_i32, %c0_i32_0 : i32, i32, i32
  }
  func.func @transform_3(%arg0: i32) -> (i32, i32, i32) {
    %c0_i32 = arith.constant 0 : i32
    %c0_i32_0 = arith.constant 0 : i32
    %c0_i32_1 = arith.constant 0 : i32
    %c0_i32_2 = arith.constant 0 : i32
    return %c0_i32, %c0_i32_0, %c0_i32_1 : i32, i32, i32
  }
  func.func @transform_4(%arg0: i32) -> (i32, i32, i32) {
    %c0_i32 = arith.constant 0 : i32
    %c0_i32_0 = arith.constant 0 : i32
    %c0_i32_1 = arith.constant 0 : i32
    %c0_i32_2 = arith.constant 0 : i32
    return %c0_i32, %c0_i32_0, %c0_i32_1 : i32, i32, i32
  }
  func.func @transform_5(%arg0: i32) -> (i32, i32, i32) {
    %c0_i32 = arith.constant 0 : i32
    %c0_i32_0 = arith.constant 0 : i32
    %c0_i32_1 = arith.constant 0 : i32
    return %arg0, %c0_i32, %c0_i32_0 : i32, i32, i32
  }
}

module attributes {stable_mosaic.version = 11 : i64} {
  func.func @_self_attn_layer_kernel(%arg0: i32, %arg1: memref<1x16x32xf32, #tpu.memory_space<vmem>>, %arg2: memref<96x32xf32, #tpu.memory_space<vmem>>, %arg3: memref<1x96xf32, #tpu.memory_space<vmem>>, %arg4: memref<32x32xf32, #tpu.memory_space<vmem>>, %arg5: memref<1x32xf32, #tpu.memory_space<vmem>>, %arg6: memref<1x16x32xf32, #tpu.memory_space<vmem>>) attributes {dimension_semantics = [#tpu.dimension_semantics<parallel>], iteration_bounds = array<i64: 2>, scalar_prefetch = 0 : i64, scratch_operands = 0 : i64, tpu.core_type = #tpu.core_type<tc>, window_params = [{transform_indices = @transform_0, window_bounds = array<i64: 1, 16, 32>}, {pipeline_mode = #tpu.pipeline_mode<synchronous>, transform_indices = @transform_1, window_bounds = array<i64: 96, 32>}, {pipeline_mode = #tpu.pipeline_mode<synchronous>, transform_indices = @transform_2, window_bounds = array<i64: 1, 96>}, {pipeline_mode = #tpu.pipeline_mode<synchronous>, transform_indices = @transform_3, window_bounds = array<i64: 32, 32>}, {pipeline_mode = #tpu.pipeline_mode<synchronous>, transform_indices = @transform_4, window_bounds = array<i64: 1, 32>}, {transform_indices = @transform_5, window_bounds = array<i64: 1, 16, 32>}]} {
    %c0 = arith.constant 0 : index
    %c0_0 = arith.constant 0 : index
    %c0_1 = arith.constant 0 : index
    %0 = vector.load %arg1[%c0, %c0_0, %c0_1] : memref<1x16x32xf32, #tpu.memory_space<vmem>>, vector<1x16x32xf32>
    %1 = vector.shape_cast %0 : vector<1x16x32xf32> to vector<16x32xf32>
    %c0_2 = arith.constant 0 : index
    %c0_3 = arith.constant 0 : index
    %2 = vector.load %arg2[%c0_2, %c0_3] : memref<96x32xf32, #tpu.memory_space<vmem>>, vector<96x32xf32>
    %cst = arith.constant dense<0.000000e+00> : vector<16x96xf32>
    %3 = tpu.matmul %1, %2, %cst {dimension_numbers = #tpu.dot_dimension_numbers<[1], [1], [0], [0], [0, 0, 1, 0], [], []>} : vector<16x32xf32>, vector<96x32xf32>, vector<16x96xf32> -> vector<16x96xf32>
    %c0_4 = arith.constant 0 : index
    %c0_5 = arith.constant 0 : index
    %4 = vector.load %arg3[%c0_4, %c0_5] : memref<1x96xf32, #tpu.memory_space<vmem>>, vector<1x96xf32>
    %5 = vector.broadcast %4 : vector<1x96xf32> to vector<16x96xf32>
    %6 = arith.addf %3, %5 : vector<16x96xf32>
    %7 = tpu.iota {dimensions = array<i32: 0>} : vector<16x16xi32>
    %8 = tpu.iota {dimensions = array<i32: 1>} : vector<16x16xi32>
    %9 = arith.subi %7, %8 : vector<16x16xi32>
    %10 = math.absi %9 : vector<16x16xi32>
    %11 = arith.sitofp %10 : vector<16x16xi32> to vector<16x16xf32>
    %12 = vector.extract_strided_slice %6 {offsets = [0, 0], sizes = [16, 8], strides = [1, 1]} : vector<16x96xf32> to vector<16x8xf32>
    %13 = vector.extract_strided_slice %6 {offsets = [0, 32], sizes = [16, 8], strides = [1, 1]} : vector<16x96xf32> to vector<16x8xf32>
    %14 = vector.extract_strided_slice %6 {offsets = [0, 64], sizes = [16, 8], strides = [1, 1]} : vector<16x96xf32> to vector<16x8xf32>
    %cst_6 = arith.constant dense<0.000000e+00> : vector<16x16xf32>
    %15 = tpu.matmul %12, %13, %cst_6 {dimension_numbers = #tpu.dot_dimension_numbers<[1], [1], [0], [0], [0, 0, 1, 0], [], []>} : vector<16x8xf32>, vector<16x8xf32>, vector<16x16xf32> -> vector<16x16xf32>
    %cst_7 = arith.constant 2.500000e-01 : f32
    %16 = vector.broadcast %cst_7 : f32 to vector<16x16xf32>
    %17 = arith.mulf %16, %11 : vector<16x16xf32>
    %18 = arith.subf %15, %17 : vector<16x16xf32>
    %cst_8 = arith.constant 0.353553385 : f32
    %19 = vector.broadcast %cst_8 : f32 to vector<16x16xf32>
    %20 = arith.mulf %18, %19 : vector<16x16xf32>
    %cst_9 = arith.constant dense<0xFF800000> : vector<16xf32>
    %21 = vector.multi_reduction <maximumf>, %20, %cst_9 [1] : vector<16x16xf32> to vector<16xf32>
    %22 = vector.shape_cast %21 : vector<16xf32> to vector<16x1xf32>
    %23 = vector.broadcast %22 : vector<16x1xf32> to vector<16x16xf32>
    %24 = arith.subf %20, %23 : vector<16x16xf32>
    %25 = math.exp %24 : vector<16x16xf32>
    %cst_10 = arith.constant dense<0.000000e+00> : vector<16xf32>
    %26 = vector.multi_reduction <add>, %25, %cst_10 [1] : vector<16x16xf32> to vector<16xf32>
    %27 = vector.shape_cast %26 : vector<16xf32> to vector<16x1xf32>
    %28 = tpu.reciprocal %27 {approx = true} : vector<16x1xf32> -> vector<16x1xf32>
    %29 = vector.broadcast %28 : vector<16x1xf32> to vector<16x16xf32>
    %30 = arith.mulf %25, %29 : vector<16x16xf32>
    %cst_11 = arith.constant dense<0.000000e+00> : vector<16x8xf32>
    %31 = tpu.matmul %30, %14, %cst_11 {dimension_numbers = #tpu.dot_dimension_numbers<[1], [0], [0], [1], [0, 0, 1, 1], [], []>} : vector<16x16xf32>, vector<16x8xf32>, vector<16x8xf32> -> vector<16x8xf32>
    %32 = vector.extract_strided_slice %6 {offsets = [0, 8], sizes = [16, 8], strides = [1, 1]} : vector<16x96xf32> to vector<16x8xf32>
    %33 = vector.extract_strided_slice %6 {offsets = [0, 40], sizes = [16, 8], strides = [1, 1]} : vector<16x96xf32> to vector<16x8xf32>
    %34 = vector.extract_strided_slice %6 {offsets = [0, 72], sizes = [16, 8], strides = [1, 1]} : vector<16x96xf32> to vector<16x8xf32>
    %cst_12 = arith.constant dense<0.000000e+00> : vector<16x16xf32>
    %35 = tpu.matmul %32, %33, %cst_12 {dimension_numbers = #tpu.dot_dimension_numbers<[1], [1], [0], [0], [0, 0, 1, 0], [], []>} : vector<16x8xf32>, vector<16x8xf32>, vector<16x16xf32> -> vector<16x16xf32>
    %cst_13 = arith.constant 6.250000e-02 : f32
    %36 = vector.broadcast %cst_13 : f32 to vector<16x16xf32>
    %37 = arith.mulf %36, %11 : vector<16x16xf32>
    %38 = arith.subf %35, %37 : vector<16x16xf32>
    %cst_14 = arith.constant 0.353553385 : f32
    %39 = vector.broadcast %cst_14 : f32 to vector<16x16xf32>
    %40 = arith.mulf %38, %39 : vector<16x16xf32>
    %cst_15 = arith.constant dense<0xFF800000> : vector<16xf32>
    %41 = vector.multi_reduction <maximumf>, %40, %cst_15 [1] : vector<16x16xf32> to vector<16xf32>
    %42 = vector.shape_cast %41 : vector<16xf32> to vector<16x1xf32>
    %43 = vector.broadcast %42 : vector<16x1xf32> to vector<16x16xf32>
    %44 = arith.subf %40, %43 : vector<16x16xf32>
    %45 = math.exp %44 : vector<16x16xf32>
    %cst_16 = arith.constant dense<0.000000e+00> : vector<16xf32>
    %46 = vector.multi_reduction <add>, %45, %cst_16 [1] : vector<16x16xf32> to vector<16xf32>
    %47 = vector.shape_cast %46 : vector<16xf32> to vector<16x1xf32>
    %48 = tpu.reciprocal %47 {approx = true} : vector<16x1xf32> -> vector<16x1xf32>
    %49 = vector.broadcast %48 : vector<16x1xf32> to vector<16x16xf32>
    %50 = arith.mulf %45, %49 : vector<16x16xf32>
    %cst_17 = arith.constant dense<0.000000e+00> : vector<16x8xf32>
    %51 = tpu.matmul %50, %34, %cst_17 {dimension_numbers = #tpu.dot_dimension_numbers<[1], [0], [0], [1], [0, 0, 1, 1], [], []>} : vector<16x16xf32>, vector<16x8xf32>, vector<16x8xf32> -> vector<16x8xf32>
    %52 = vector.extract_strided_slice %6 {offsets = [0, 16], sizes = [16, 8], strides = [1, 1]} : vector<16x96xf32> to vector<16x8xf32>
    %53 = vector.extract_strided_slice %6 {offsets = [0, 48], sizes = [16, 8], strides = [1, 1]} : vector<16x96xf32> to vector<16x8xf32>
    %54 = vector.extract_strided_slice %6 {offsets = [0, 80], sizes = [16, 8], strides = [1, 1]} : vector<16x96xf32> to vector<16x8xf32>
    %cst_18 = arith.constant dense<0.000000e+00> : vector<16x16xf32>
    %55 = tpu.matmul %52, %53, %cst_18 {dimension_numbers = #tpu.dot_dimension_numbers<[1], [1], [0], [0], [0, 0, 1, 0], [], []>} : vector<16x8xf32>, vector<16x8xf32>, vector<16x16xf32> -> vector<16x16xf32>
    %cst_19 = arith.constant 1.562500e-02 : f32
    %56 = vector.broadcast %cst_19 : f32 to vector<16x16xf32>
    %57 = arith.mulf %56, %11 : vector<16x16xf32>
    %58 = arith.subf %55, %57 : vector<16x16xf32>
    %cst_20 = arith.constant 0.353553385 : f32
    %59 = vector.broadcast %cst_20 : f32 to vector<16x16xf32>
    %60 = arith.mulf %58, %59 : vector<16x16xf32>
    %cst_21 = arith.constant dense<0xFF800000> : vector<16xf32>
    %61 = vector.multi_reduction <maximumf>, %60, %cst_21 [1] : vector<16x16xf32> to vector<16xf32>
    %62 = vector.shape_cast %61 : vector<16xf32> to vector<16x1xf32>
    %63 = vector.broadcast %62 : vector<16x1xf32> to vector<16x16xf32>
    %64 = arith.subf %60, %63 : vector<16x16xf32>
    %65 = math.exp %64 : vector<16x16xf32>
    %cst_22 = arith.constant dense<0.000000e+00> : vector<16xf32>
    %66 = vector.multi_reduction <add>, %65, %cst_22 [1] : vector<16x16xf32> to vector<16xf32>
    %67 = vector.shape_cast %66 : vector<16xf32> to vector<16x1xf32>
    %68 = tpu.reciprocal %67 {approx = true} : vector<16x1xf32> -> vector<16x1xf32>
    %69 = vector.broadcast %68 : vector<16x1xf32> to vector<16x16xf32>
    %70 = arith.mulf %65, %69 : vector<16x16xf32>
    %cst_23 = arith.constant dense<0.000000e+00> : vector<16x8xf32>
    %71 = tpu.matmul %70, %54, %cst_23 {dimension_numbers = #tpu.dot_dimension_numbers<[1], [0], [0], [1], [0, 0, 1, 1], [], []>} : vector<16x16xf32>, vector<16x8xf32>, vector<16x8xf32> -> vector<16x8xf32>
    %72 = vector.extract_strided_slice %6 {offsets = [0, 24], sizes = [16, 8], strides = [1, 1]} : vector<16x96xf32> to vector<16x8xf32>
    %73 = vector.extract_strided_slice %6 {offsets = [0, 56], sizes = [16, 8], strides = [1, 1]} : vector<16x96xf32> to vector<16x8xf32>
    %74 = vector.extract_strided_slice %6 {offsets = [0, 88], sizes = [16, 8], strides = [1, 1]} : vector<16x96xf32> to vector<16x8xf32>
    %cst_24 = arith.constant dense<0.000000e+00> : vector<16x16xf32>
    %75 = tpu.matmul %72, %73, %cst_24 {dimension_numbers = #tpu.dot_dimension_numbers<[1], [1], [0], [0], [0, 0, 1, 0], [], []>} : vector<16x8xf32>, vector<16x8xf32>, vector<16x16xf32> -> vector<16x16xf32>
    %cst_25 = arith.constant 3.906250e-03 : f32
    %76 = vector.broadcast %cst_25 : f32 to vector<16x16xf32>
    %77 = arith.mulf %76, %11 : vector<16x16xf32>
    %78 = arith.subf %75, %77 : vector<16x16xf32>
    %cst_26 = arith.constant 0.353553385 : f32
    %79 = vector.broadcast %cst_26 : f32 to vector<16x16xf32>
    %80 = arith.mulf %78, %79 : vector<16x16xf32>
    %cst_27 = arith.constant dense<0xFF800000> : vector<16xf32>
    %81 = vector.multi_reduction <maximumf>, %80, %cst_27 [1] : vector<16x16xf32> to vector<16xf32>
    %82 = vector.shape_cast %81 : vector<16xf32> to vector<16x1xf32>
    %83 = vector.broadcast %82 : vector<16x1xf32> to vector<16x16xf32>
    %84 = arith.subf %80, %83 : vector<16x16xf32>
    %85 = math.exp %84 : vector<16x16xf32>
    %cst_28 = arith.constant dense<0.000000e+00> : vector<16xf32>
    %86 = vector.multi_reduction <add>, %85, %cst_28 [1] : vector<16x16xf32> to vector<16xf32>
    %87 = vector.shape_cast %86 : vector<16xf32> to vector<16x1xf32>
    %88 = tpu.reciprocal %87 {approx = true} : vector<16x1xf32> -> vector<16x1xf32>
    %89 = vector.broadcast %88 : vector<16x1xf32> to vector<16x16xf32>
    %90 = arith.mulf %85, %89 : vector<16x16xf32>
    %cst_29 = arith.constant dense<0.000000e+00> : vector<16x8xf32>
    %91 = tpu.matmul %90, %74, %cst_29 {dimension_numbers = #tpu.dot_dimension_numbers<[1], [0], [0], [1], [0, 0, 1, 1], [], []>} : vector<16x16xf32>, vector<16x8xf32>, vector<16x8xf32> -> vector<16x8xf32>
    %92 = tpu.concatenate %31, %51, %71, %91 in 1 : vector<16x8xf32>, vector<16x8xf32>, vector<16x8xf32>, vector<16x8xf32> -> vector<16x32xf32>
    %c0_30 = arith.constant 0 : index
    %c0_31 = arith.constant 0 : index
    %93 = vector.load %arg4[%c0_30, %c0_31] : memref<32x32xf32, #tpu.memory_space<vmem>>, vector<32x32xf32>
    %cst_32 = arith.constant dense<0.000000e+00> : vector<16x32xf32>
    %94 = tpu.matmul %92, %93, %cst_32 {dimension_numbers = #tpu.dot_dimension_numbers<[1], [1], [0], [0], [0, 0, 1, 0], [], []>} : vector<16x32xf32>, vector<32x32xf32>, vector<16x32xf32> -> vector<16x32xf32>
    %c0_33 = arith.constant 0 : index
    %c0_34 = arith.constant 0 : index
    %95 = vector.load %arg5[%c0_33, %c0_34] : memref<1x32xf32, #tpu.memory_space<vmem>>, vector<1x32xf32>
    %96 = vector.broadcast %95 : vector<1x32xf32> to vector<16x32xf32>
    %97 = arith.addf %94, %96 : vector<16x32xf32>
    %c0_35 = arith.constant 0 : index
    %c0_36 = arith.constant 0 : index
    %c0_37 = arith.constant 0 : index
    %98 = vector.load %arg6[%c0_35, %c0_36, %c0_37] : memref<1x16x32xf32, #tpu.memory_space<vmem>>, vector<1x16x32xf32>
    %99 = vector.shape_cast %98 : vector<1x16x32xf32> to vector<16x32xf32>
    %100 = vector.shape_cast %97 : vector<16x32xf32> to vector<1x16x32xf32>
    tpu.vector_store %arg6[%c0_35, %c0_36, %c0_37], %100 {strides = array<i32>} : memref<1x16x32xf32, #tpu.memory_space<vmem>>, vector<1x16x32xf32>,
    return
  }
  func.func @transform_0(%arg0: i32) -> (i32, i32, i32) {
    %c0_i32 = arith.constant 0 : i32
    %c0_i32_0 = arith.constant 0 : i32
    %c0_i32_1 = arith.constant 0 : i32
    return %arg0, %c0_i32, %c0_i32_0 : i32, i32, i32
  }
  func.func @transform_1(%arg0: i32) -> (i32, i32) {
    %c0_i32 = arith.constant 0 : i32
    %c0_i32_0 = arith.constant 0 : i32
    %c0_i32_1 = arith.constant 0 : i32
    return %c0_i32, %c0_i32_0 : i32, i32
  }
  func.func @transform_2(%arg0: i32) -> (i32, i32) {
    %c0_i32 = arith.constant 0 : i32
    %c0_i32_0 = arith.constant 0 : i32
    %c0_i32_1 = arith.constant 0 : i32
    return %c0_i32, %c0_i32_0 : i32, i32
  }
  func.func @transform_3(%arg0: i32) -> (i32, i32) {
    %c0_i32 = arith.constant 0 : i32
    %c0_i32_0 = arith.constant 0 : i32
    %c0_i32_1 = arith.constant 0 : i32
    return %c0_i32, %c0_i32_0 : i32, i32
  }
  func.func @transform_4(%arg0: i32) -> (i32, i32) {
    %c0_i32 = arith.constant 0 : i32
    %c0_i32_0 = arith.constant 0 : i32
    %c0_i32_1 = arith.constant 0 : i32
    return %c0_i32, %c0_i32_0 : i32, i32
  }
  func.func @transform_5(%arg0: i32) -> (i32, i32, i32) {
    %c0_i32 = arith.constant 0 : i32
    %c0_i32_0 = arith.constant 0 : i32
    %c0_i32_1 = arith.constant 0 : i32
    return %arg0, %c0_i32, %c0_i32_0 : i32, i32, i32
  }
}

</mosaic_0001>

<llo_original>
// kernel: _lambda_.4
$region0: #{_lambda_.4}
  #allocation0 [shape = 'u32[]', space=smem, size = 0x4, offset = 0x4, fixed_abs, tag = 'smem constant byte address 0x4 - core index']
  #allocation1 [shape = 'u32[144,128]{1,0:T(1,128)}', space=vmem, size = 0x12000, scoped, tag = 'internal scratch']
  %s0 = inlined_call_operand.hbm [shape: f32[2,16,32], index: 0, kind: input, shape index: {}]
  %s1 = inlined_call_operand.vmem [shape: f32[96,32], index: 1, kind: input, shape index: {}]
  %s2 = inlined_call_operand.vmem [shape: f32[1,96], index: 2, kind: input, shape index: {}]
  %s3 = inlined_call_operand.vmem [shape: f32[32,32], index: 3, kind: input, shape index: {}]
  %s4 = inlined_call_operand.vmem [shape: f32[1,32], index: 4, kind: input, shape index: {}]
  %s5 = inlined_call_operand.vmem [shape: f32[2,16,32], index: 5, kind: output, shape index: {}]
  %s6 = sld [smem:[#allocation0]]
  $region57: #{_lambda_.4} parent=0
    _
  %s8 = ssub.s32 1, %s6
  %s9 = scalar_select 0, %s8, %s6
  $region1: #{_lambda_.4} parent=0
    #allocation2 [shape = 'u8[16384]{0}', space=vmem, size = 0x4000, scoped, tag = 'input window, operand 0']
    #allocation3 [shape = 's32[2]{0}', space=sflag, size = 0x8, scoped, tag = 'scoped memory for _lambda_.4']
    %10 = vsyncpa [#allocation3], 0
    %s11 = scalar_lea.sflag [#allocation3], 1
    %12 = vsyncpa %s11, 0
    loop: start=0, step=1, limit=4
    $region2: #{_lambda_.4} parent=1 // loop_pre_header
      _
    $region3: #{_lambda_.4} parent=1 // loop_header
      %s14 = sphi 0, %s18
      %p15 = scmp.ge.s32.totalorder %s14, 4
      %s24 = sphi 0, %s26
      %s27 = sphi 0, %s24
      %s28 = sphi 0, %s27
      %s44 = sphi 0, %s28
      %s48 = sphi 0, %s48
      %s50 = sphi 0, %s48
      %s51 = sphi 0, %s50
      %s65 = sphi 0, %s51
      %s69 = sphi 0, %s69
      %s71 = sphi 0, %s69
      %s72 = sphi 0, %s71
      %s86 = sphi 0, %s72
      %s90 = sphi 0, %s90
      %s92 = sphi 0, %s90
      %s93 = sphi 0, %s92
      %s107 = sphi 0, %s93
      %s111 = sphi 0, %s111
      %s113 = sphi 0, %s111
      %s114 = sphi 0, %s113
      %s128 = sphi 0, %s114
      %s134 = sphi 0, %s136
      %s137 = sphi 0, %s134
      %s138 = sphi 0, %s137
      %s154 = sphi 0, %s138
    $region4: #{_lambda_.4} parent=1 // loop_header_branch
      %17 = sbr.rel (%p15) target = $region8
    $region5: #{_lambda_.4} parent=1 // loop_body
      %s19 = ssub.s32 %s14, 1
      %s20 = ssub.s32 %s14, 2
      %s21 = sadd.s32 %s14, 1
      %s22 = ssub.s32 %s14, %s21
      %p23 = scmp.eq.s32.totalorder %s22, 0
      %s25 = sadd.s32 %s24, 1
      %s26 = scalar_select %p23, %s24, %s25
      %p29 = pneg %p23
      %p30 = scmp.eq.s32.totalorder %s14, 1
      %p31 = por %p29, %p30
      %p32 = scmp.ne.s32.totalorder %s24, %s27
      %p33 = scmp.eq.s32.totalorder %s14, 0
      %p34 = por %p32, %p33
      %p35 = scmp.ne.s32.totalorder %s24, %s27
      %p36 = scmp.eq.s32.totalorder %s19, 1
      %p37 = por %p35, %p36
      %p38 = scmp.ne.s32.totalorder %s27, %s28
      %p39 = scmp.eq.s32.totalorder %s19, 0
      %p40 = por %p38, %p39
      %p41 = scmp.ne.s32.totalorder %s27, %s28
      %p42 = scmp.eq.s32.totalorder %s20, 1
      %p43 = por %p41, %p42
      %p45 = scmp.ne.s32.totalorder %s28, %s44
      %p46 = scmp.eq.s32.totalorder %s20, 0
      %p47 = por %p45, %p46
      %s49 = sadd.s32 %s48, 1
      %p52 = scmp.eq.s32.totalorder %s14, 1
      %p53 = scmp.ne.s32.totalorder %s48, %s50
      %p54 = scmp.eq.s32.totalorder %s14, 0
      %p55 = por %p53, %p54
      %p56 = scmp.ne.s32.totalorder %s48, %s50
      %p57 = scmp.eq.s32.totalorder %s19, 1
      %p58 = por %p56, %p57
      %p59 = scmp.ne.s32.totalorder %s50, %s51
      %p60 = scmp.eq.s32.totalorder %s19, 0
      %p61 = por %p59, %p60
      %p62 = scmp.ne.s32.totalorder %s50, %s51
      %p63 = scmp.eq.s32.totalorder %s20, 1
      %p64 = por %p62, %p63
      %p66 = scmp.ne.s32.totalorder %s51, %s65
      %p67 = scmp.eq.s32.totalorder %s20, 0
      %p68 = por %p66, %p67
      %s70 = sadd.s32 %s69, 1
      %p73 = scmp.eq.s32.totalorder %s14, 1
      %p74 = scmp.ne.s32.totalorder %s69, %s71
      %p75 = scmp.eq.s32.totalorder %s14, 0
      %p76 = por %p74, %p75
      %p77 = scmp.ne.s32.totalorder %s69, %s71
      %p78 = scmp.eq.s32.totalorder %s19, 1
      %p79 = por %p77, %p78
      %p80 = scmp.ne.s32.totalorder %s71, %s72
      %p81 = scmp.eq.s32.totalorder %s19, 0
      %p82 = por %p80, %p81
      %p83 = scmp.ne.s32.totalorder %s71, %s72
      %p84 = scmp.eq.s32.totalorder %s20, 1
      %p85 = por %p83, %p84
      %p87 = scmp.ne.s32.totalorder %s72, %s86
      %p88 = scmp.eq.s32.totalorder %s20, 0
      %p89 = por %p87, %p88
      %s91 = sadd.s32 %s90, 1
      %p94 = scmp.eq.s32.totalorder %s14, 1
      %p95 = scmp.ne.s32.totalorder %s90, %s92
      %p96 = scmp.eq.s32.totalorder %s14, 0
      %p97 = por %p95, %p96
      %p98 = scmp.ne.s32.totalorder %s90, %s92
      %p99 = scmp.eq.s32.totalorder %s19, 1
      %p100 = por %p98, %p99
      %p101 = scmp.ne.s32.totalorder %s92, %s93
      %p102 = scmp.eq.s32.totalorder %s19, 0
      %p103 = por %p101, %p102
      %p104 = scmp.ne.s32.totalorder %s92, %s93
      %p105 = scmp.eq.s32.totalorder %s20, 1
      %p106 = por %p104, %p105
      %p108 = scmp.ne.s32.totalorder %s93, %s107
      %p109 = scmp.eq.s32.totalorder %s20, 0
      %p110 = por %p108, %p109
      %s112 = sadd.s32 %s111, 1
      %p115 = scmp.eq.s32.totalorder %s14, 1
      %p116 = scmp.ne.s32.totalorder %s111, %s113
      %p117 = scmp.eq.s32.totalorder %s14, 0
      %p118 = por %p116, %p117
      %p119 = scmp.ne.s32.totalorder %s111, %s113
      %p120 = scmp.eq.s32.totalorder %s19, 1
      %p121 = por %p119, %p120
      %p122 = scmp.ne.s32.totalorder %s113, %s114
      %p123 = scmp.eq.s32.totalorder %s19, 0
      %p124 = por %p122, %p123
      %p125 = scmp.ne.s32.totalorder %s113, %s114
      %p126 = scmp.eq.s32.totalorder %s20, 1
      %p127 = por %p125, %p126
      %p129 = scmp.ne.s32.totalorder %s114, %s128
      %p130 = scmp.eq.s32.totalorder %s20, 0
      %p131 = por %p129, %p130
      %s132 = ssub.s32 %s14, %s21
      %p133 = scmp.eq.s32.totalorder %s132, 0
      %s135 = sadd.s32 %s134, 1
      %s136 = scalar_select %p133, %s134, %s135
      %p139 = pneg %p133
      %p140 = scmp.eq.s32.totalorder %s14, 1
      %p141 = por %p139, %p140
      %p142 = scmp.ne.s32.totalorder %s134, %s137
      %p143 = scmp.eq.s32.totalorder %s14, 0
      %p144 = por %p142, %p143
      %p145 = scmp.ne.s32.totalorder %s134, %s137
      %p146 = scmp.eq.s32.totalorder %s19, 1
      %p147 = por %p145, %p146
      %p148 = scmp.ne.s32.totalorder %s137, %s138
      %p149 = scmp.eq.s32.totalorder %s19, 0
      %p150 = por %p148, %p149
      %p151 = scmp.ne.s32.totalorder %s137, %s138
      %p152 = scmp.eq.s32.totalorder %s20, 1
      %p153 = por %p151, %p152
      %p155 = scmp.ne.s32.totalorder %s138, %s154
      %p156 = scmp.eq.s32.totalorder %s20, 0
      %p157 = por %p155, %p156
      %p158 = scmp.le.s32.totalorder 1, %s14
      %p159 = scmp.lt.s32.totalorder %s14, 3
      %p160 = pnand %p158, %p159
      %p161 = pneg %p160
      // Predicated region
      $region9: #{_lambda_.4} parent=5 // pred_check
        _
      $region10: #{_lambda_.4} parent=5 // pred_check_branch
        %163 = sbr.rel (%p160) target = $region12
      $region11: #{_lambda_.4} parent=5 // pred_region
        %s164 = ssub.s32 %s14, 1
        // Predicated region
        $region13: #{_lambda_.4} parent=11 // pred_check
          %p165 = pneg %p61
        $region14: #{_lambda_.4} parent=11 // pred_check_branch
          %167 = sbr.rel (%p165) target = $region16
        $region15: #{_lambda_.4} parent=11 // pred_region
          _
        $region16: #{_lambda_.4} parent=11 // pred_fallthru
          _
        // Predicated region
        $region17: #{_lambda_.4} parent=11 // pred_check
          %p168 = pneg %p82
        $region18: #{_lambda_.4} parent=11 // pred_check_branch
          %170 = sbr.rel (%p168) target = $region20
        $region19: #{_lambda_.4} parent=11 // pred_region
          _
        $region20: #{_lambda_.4} parent=11 // pred_fallthru
          _
        // Predicated region
        $region21: #{_lambda_.4} parent=11 // pred_check
          %p171 = pneg %p103
        $region22: #{_lambda_.4} parent=11 // pred_check_branch
          %173 = sbr.rel (%p171) target = $region24
        $region23: #{_lambda_.4} parent=11 // pred_region
          _
        $region24: #{_lambda_.4} parent=11 // pred_fallthru
          _
        // Predicated region
        $region25: #{_lambda_.4} parent=11 // pred_check
          %p174 = pneg %p124
        $region26: #{_lambda_.4} parent=11 // pred_check_branch
          %176 = sbr.rel (%p174) target = $region28
        $region27: #{_lambda_.4} parent=11 // pred_region
          _
        $region28: #{_lambda_.4} parent=11 // pred_fallthru
          _
      $region12: #{_lambda_.4} parent=5 // pred_fallthru
        _
      %p177 = scmp.lt.s32.totalorder %s14, 2
      // Predicated region
      $region29: #{_lambda_.4} parent=5 // pred_check
        %p178 = pneg %p177
      $region30: #{_lambda_.4} parent=5 // pred_check_branch
        %180 = sbr.rel (%p178) target = $region32
      $region31: #{_lambda_.4} parent=5 // pred_region
        // Predicated region
        $region33: #{_lambda_.4} parent=31 // pred_check
          %p181 = pneg %p34
        $region34: #{_lambda_.4} parent=31 // pred_check_branch
          %183 = sbr.rel (%p181) target = $region36
        $region35: #{_lambda_.4} parent=31 // pred_region
          %s184 = sand.u32 %s24, 1
          %s185 = scalar_lea.sflag [#allocation3], %s184
          %s186 = sand.u32 %s24, 1
          %s187 = smul.addr %s186, 16
          %s188 = scalar_lea.vmem [#allocation2], %s187
          %s190 = ssub.s32 256, 256
          %191 = vsyncadd %s185, %s190
          %s192 = smul.addr %s14, 2
          %s193 = smul.addr %s192, 128
          %s194 = scalar_lea.hbm %s0, %s193
          %s195 = sshll.u32 %s188, 4
          %s196 = int_to_ptr.vmem [resolvable:$true] %s195
          %201 = dma.hbm_to_vmem [thread:$0]  %s194, 256, %s196, %s185, 128, 128, 8
        $region36: #{_lambda_.4} parent=31 // pred_fallthru
          _
      $region32: #{_lambda_.4} parent=5 // pred_fallthru
        _
      %p202 = scmp.le.s32.totalorder 1, %s14
      %p203 = scmp.lt.s32.totalorder %s14, 3
      %p204 = pnand %p202, %p203
      %p205 = pneg %p204
      // Predicated region
      $region37: #{_lambda_.4} parent=5 // pred_check
        _
      $region38: #{_lambda_.4} parent=5 // pred_check_branch
        %207 = sbr.rel (%p204) target = $region40
      $region39: #{_lambda_.4} parent=5 // pred_region
        %s208 = ssub.s32 %s14, 1
        %s209 = sand.u32 %s27, 1
        %s210 = scalar_lea.sflag [#allocation3], %s209
        %s211 = sand.u32 %s27, 1
        %s212 = smul.addr %s211, 16
        %s213 = scalar_lea.vmem [#allocation2], %s212
        // Predicated region
        $region41: #{_lambda_.4} parent=39 // pred_check
          %p214 = pneg %p40
        $region42: #{_lambda_.4} parent=39 // pred_check_branch
          %216 = sbr.rel (%p214) target = $region44
        $region43: #{_lambda_.4} parent=39 // pred_region
          %217 = dma.done %s210, 256
        $region44: #{_lambda_.4} parent=39 // pred_fallthru
          _
        %s218 = sand.u32 %s27, 1
        %s219 = scalar_lea.sflag [#allocation3], %s218
        %s220 = sand.u32 %s27, 1
        %s221 = smul.addr %s220, 16
        %s222 = scalar_lea.vmem [#allocation2], %s221
        %p223 = pneg %p40
        %p224 = pneg %p37
        %p225 = pneg %p61
        %p226 = pneg %p58
        %p227 = pneg %p82
        %p228 = pneg %p79
        %p229 = pneg %p103
        %p230 = pneg %p100
        %p231 = pneg %p124
        %p232 = pneg %p121
        %p233 = pneg %p150
        %p234 = pneg %p147
        %p235 = scmp.lt.s32.totalorder %s19, 1
        %s236 = scalar_select %p235, %s19, 1
        %s237 = smul.addr %s236, 2
        %s238 = smul.addr %s237, 8
        %s239 = scalar_lea.vmem %s5, %s238
        %p240 = scmp.lt.s32.totalorder %s19, 1
        %s241 = scalar_select %p240, %s19, 1
        %s242 = smul.addr %s241, 2
        %s243 = smul.addr %s242, 8
        %s244 = scalar_lea.vmem %s5, %s243
        %v245 = vld [vmem:[%s213] sm:$0xff]
        %v246 = vld [vmem:[%s213 + $0x8] sm:$0xff]
        %v247 = vld [vmem:[%s1] sm:$0xff]
        %v248 = vld [vmem:[%s1 + $0x8] sm:$0xff]
        %v249 = vld [vmem:[%s1 + $0x10] sm:$0xff]
        %v250 = vld [vmem:[%s1 + $0x18] sm:$0xff]
        %v251 = vld [vmem:[%s1 + $0x20] sm:$0xff]
        %v252 = vld [vmem:[%s1 + $0x28] sm:$0xff]
        %v253 = vld [vmem:[%s1 + $0x30] sm:$0xff]
        %v254 = vld [vmem:[%s1 + $0x38] sm:$0xff]
        %v255 = vld [vmem:[%s1 + $0x40] sm:$0xff]
        %v256 = vld [vmem:[%s1 + $0x48] sm:$0xff]
        %v257 = vld [vmem:[%s1 + $0x50] sm:$0xff]
        %v258 = vld [vmem:[%s1 + $0x58] sm:$0xff]
        %v259 = vld [vmem:[%s2] sm:$0x1]
        %v261 = vlaneseq
        %v262 = vshrl.u32 %v261, 7
        %v263 = vsub.s32 0, %v262
        %v264 = vrot.slane %v259, %v263
        %vm266 = vcmask 261120
        %v268 = vsel %vm266, %v245, 0
        %v271 = vsel %vm266, %v246, 0
        %v274 = vsel %vm266, %v247, 0
        %v277 = vsel %vm266, %v248, 0
        %v280 = vsel %vm266, %v249, 0
        %v283 = vsel %vm266, %v250, 0
        %v286 = vsel %vm266, %v251, 0
        %v289 = vsel %vm266, %v252, 0
        %v292 = vsel %vm266, %v253, 0
        %v295 = vsel %vm266, %v254, 0
        %v298 = vsel %vm266, %v255, 0
        %v301 = vsel %vm266, %v256, 0
        %v304 = vsel %vm266, %v257, 0
        %v307 = vsel %vm266, %v258, 0
        %309 = vmatprep.subr.mxu0 0.0
        %310 = vmatpush1.xpose.msra.mxu0 0.0
        %311 = vmatprep.subr.mxu0 0.0
        %312 = vmatpush1.xpose.msra.mxu0 0.0
        %313 = vmatprep.subr.mxu0 0.0
        %314 = vmatpush1.xpose.msra.mxu0 0.0
        %315 = vmatprep.subr.mxu0 0.0
        %316 = vmatpush1.xpose.msra.mxu0 0.0
        %317 = vmatprep.subr.mxu0 0.0
        %318 = vmatpush1.xpose.msra.mxu0 %v307
        %319 = vmatprep.subr.mxu0 0.0
        %320 = vmatpush1.xpose.msra.mxu0 %v304
        %321 = vmatprep.subr.mxu0 0.0
        %322 = vmatpush1.xpose.msra.mxu0 %v301
        %323 = vmatprep.subr.mxu0 0.0
        %324 = vmatpush1.xpose.msra.mxu0 %v298
        %325 = vmatprep.subr.mxu0 0.0
        %326 = vmatpush1.xpose.msra.mxu0 %v295
        %327 = vmatprep.subr.mxu0 0.0
        %328 = vmatpush1.xpose.msra.mxu0 %v292
        %329 = vmatprep.subr.mxu0 0.0
        %330 = vmatpush1.xpose.msra.mxu0 %v289
        %331 = vmatprep.subr.mxu0 0.0
        %332 = vmatpush1.xpose.msra.mxu0 %v286
        %333 = vmatprep.subr.mxu0 0.0
        %334 = vmatpush1.xpose.msra.mxu0 %v283
        %335 = vmatprep.subr.mxu0 0.0
        %336 = vmatpush1.xpose.msra.mxu0 %v280
        %337 = vmatprep.subr.mxu0 0.0
        %338 = vmatpush1.xpose.msra.mxu0 %v277
        %339 = vmatprep.subr.mxu0 0.0
        %340 = vmatpush1.xpose.msra.mxu0 %v274
        %341 = vmatprep.subr.mxu0 0.0
        %342 = vmatpush2.xpose.msra.mxu0 0.0
        %343 = vmatprep.subr.mxu0 0.0
        %344 = vmatpush2.xpose.msra.mxu0 0.0
        %345 = vmatprep.subr.mxu0 0.0
        %346 = vmatpush2.xpose.msra.mxu0 0.0
        %347 = vmatprep.subr.mxu0 0.0
        %348 = vmatpush2.xpose.msra.mxu0 0.0
        %349 = vmatprep.subr.mxu0 0.0
        %350 = vmatpush2.xpose.msra.mxu0 0.0
        %351 = vmatprep.subr.mxu0 0.0
        %352 = vmatpush2.xpose.msra.mxu0 0.0
        %353 = vmatprep.subr.mxu0 0.0
        %354 = vmatpush2.xpose.msra.mxu0 0.0
        %355 = vmatprep.subr.mxu0 0.0
        %356 = vmatpush2.xpose.msra.mxu0 0.0
        %357 = vmatprep.subr.mxu0 0.0
        %358 = vmatpush2.xpose.msra.mxu0 0.0
        %359 = vmatprep.subr.mxu0 0.0
        %360 = vmatpush2.xpose.msra.mxu0 0.0
        %361 = vmatprep.subr.mxu0 0.0
        %362 = vmatpush2.xpose.msra.mxu0 0.0
        %363 = vmatprep.subr.mxu0 0.0
        %364 = vmatpush2.xpose.msra.mxu0 0.0
        %365 = vmatprep.subr.mxu0 0.0
        %366 = vmatpush2.xpose.msra.mxu0 0.0
        %367 = vmatprep.subr.mxu0 0.0
        %368 = vmatpush2.xpose.msra.mxu0 0.0
        %369 = vmatprep.subr.mxu0 0.0
        %370 = vmatpush2.xpose.msra.mxu0 0.0
        %371 = vmatprep.subr.mxu0 0.0
        %372 = vmatpush2.xpose.msra.mxu0 0.0
        %373 = vmatprep.mubr.f32.mxu0 0.0
        %374 = vmatmul.mubr.f32.gmra.mxu0 %v268
        %v375 = vpop.f32.mrf.mxu0
        %v376 = vadd.f32 %v264, %v375
        %v377 = vpop.f32.mrf.mxu0
        %378 = vmatprep.mubr.f32.mxu0 0.0
        %379 = vmatmul.mubr.f32.gmra.mxu0 %v271
        %v380 = vpop.f32.mrf.mxu0
        %v381 = vadd.f32 %v264, %v380
        %v382 = vpop.f32.mrf.mxu0
        %383 = vdwg.mxu0
        %v384 = vlaneseq
        %v385 = vshrl.u32 %v384, 7
        %v386 = vadd.s32 %v385, 8
        %v387 = vlaneseq
        %v388 = vand.u32 %v387, 127
        %v389 = vsub.s32 %v385, %v388
        %v390 = vsub.s32 %v386, %v388
        %vm391 = vcmp.lt.s32.totalorder %v389, 0
        %v392 = vsub.s32 0, %v389
        %v393 = vsel %vm391, %v392, %v389
        %vm394 = vcmp.lt.s32.totalorder %v390, 0
        %v395 = vsub.s32 0, %v390
        %v396 = vsel %vm394, %v395, %v390
        %v397 = vcvt.s32.f32 %v393
        %v398 = vcvt.s32.f32 %v396
        %401 = vrot.lane.b32.xlu0 %v376, 96
        %v402 = vpop.permute.xlu0 %401
        %403 = vrot.lane.b32.xlu0 %v381, 96
        %v404 = vpop.permute.xlu0 %403
        %vm405 = vcmask 64512
        %v406 = vsel %vm405, %v376, 0
        %v408 = vsel %vm405, %v381, 0
        %v410 = vsel %vm405, %v402, 0
        %v412 = vsel %vm405, %v404, 0
        %414 = vmatprep.subr.mxu0 0.0
        %415 = vmatpush1.xpose.msra.mxu0 0.0
        %416 = vmatprep.subr.mxu0 0.0
        %417 = vmatpush1.xpose.msra.mxu0 0.0
        %418 = vmatprep.subr.mxu0 0.0
        %419 = vmatpush1.xpose.msra.mxu0 0.0
        %420 = vmatprep.subr.mxu0 0.0
        %421 = vmatpush1.xpose.msra.mxu0 0.0
        %422 = vmatprep.subr.mxu0 0.0
        %423 = vmatpush1.xpose.msra.mxu0 0.0
        %424 = vmatprep.subr.mxu0 0.0
        %425 = vmatpush1.xpose.msra.mxu0 0.0
        %426 = vmatprep.subr.mxu0 0.0
        %427 = vmatpush1.xpose.msra.mxu0 0.0
        %428 = vmatprep.subr.mxu0 0.0
        %429 = vmatpush1.xpose.msra.mxu0 0.0
        %430 = vmatprep.subr.mxu0 0.0
        %431 = vmatpush1.xpose.msra.mxu0 0.0
        %432 = vmatprep.subr.mxu0 0.0
        %433 = vmatpush1.xpose.msra.mxu0 0.0
        %434 = vmatprep.subr.mxu0 0.0
        %435 = vmatpush1.xpose.msra.mxu0 0.0
        %436 = vmatprep.subr.mxu0 0.0
        %437 = vmatpush1.xpose.msra.mxu0 0.0
        %438 = vmatprep.subr.mxu0 0.0
        %439 = vmatpush1.xpose.msra.mxu0 0.0
        %440 = vmatprep.subr.mxu0 0.0
        %441 = vmatpush1.xpose.msra.mxu0 0.0
        %442 = vmatprep.subr.mxu0 0.0
        %443 = vmatpush1.xpose.msra.mxu0 %v412
        %444 = vmatprep.subr.mxu0 0.0
        %445 = vmatpush1.xpose.msra.mxu0 %v410
        %446 = vmatprep.subr.mxu0 0.0
        %447 = vmatpush2.xpose.msra.mxu0 0.0
        %448 = vmatprep.subr.mxu0 0.0
        %449 = vmatpush2.xpose.msra.mxu0 0.0
        %450 = vmatprep.subr.mxu0 0.0
        %451 = vmatpush2.xpose.msra.mxu0 0.0
        %452 = vmatprep.subr.mxu0 0.0
        %453 = vmatpush2.xpose.msra.mxu0 0.0
        %454 = vmatprep.subr.mxu0 0.0
        %455 = vmatpush2.xpose.msra.mxu0 0.0
        %456 = vmatprep.subr.mxu0 0.0
        %457 = vmatpush2.xpose.msra.mxu0 0.0
        %458 = vmatprep.subr.mxu0 0.0
        %459 = vmatpush2.xpose.msra.mxu0 0.0
        %460 = vmatprep.subr.mxu0 0.0
        %461 = vmatpush2.xpose.msra.mxu0 0.0
        %462 = vmatprep.subr.mxu0 0.0
        %463 = vmatpush2.xpose.msra.mxu0 0.0
        %464 = vmatprep.subr.mxu0 0.0
        %465 = vmatpush2.xpose.msra.mxu0 0.0
        %466 = vmatprep.subr.mxu0 0.0
        %467 = vmatpush2.xpose.msra.mxu0 0.0
        %468 = vmatprep.subr.mxu0 0.0
        %469 = vmatpush2.xpose.msra.mxu0 0.0
        %470 = vmatprep.subr.mxu0 0.0
        %471 = vmatpush2.xpose.msra.mxu0 0.0
        %472 = vmatprep.subr.mxu0 0.0
        %473 = vmatpush2.xpose.msra.mxu0 0.0
        %474 = vmatprep.subr.mxu0 0.0
        %475 = vmatpush2.xpose.msra.mxu0 0.0
        %476 = vmatprep.subr.mxu0 0.0
        %477 = vmatpush2.xpose.msra.mxu0 0.0
        %478 = vmatprep.mubr.f32.mxu0 0.0
        %479 = vmatmul.mubr.f32.gmra.mxu0 %v406
        %v480 = vpop.f32.mrf.mxu0
        %v481 = vadd.f32 0.0, %v480
        %v482 = vpop.f32.mrf.mxu0
        %483 = vmatprep.mubr.f32.mxu0 0.0
        %484 = vmatmul.mubr.f32.gmra.mxu0 %v408
        %v485 = vpop.f32.mrf.mxu0
        %v486 = vadd.f32 0.0, %v485
        %v487 = vpop.f32.mrf.mxu0
        %488 = vdwg.mxu0
        %v489 = vmul.f32 %v397, 0.25
        %v490 = vmul.f32 %v398, 0.25
        %v491 = vsub.f32 %v481, %v489
        %v492 = vsub.f32 %v486, %v490
        %v493 = vmul.f32 %v491, 0.35355338
        %v494 = vmul.f32 %v492, 0.35355338
        %vm495 = vcmask 130048
        %v496 = vsel %vm495, %v493, -inf
        %497 = vmax.xlane.f32.xlu0 %v496
        %v498 = vpop.xlane.xlu0 %497
        %v499 = vsel %vm495, %v494, -inf
        %500 = vmax.xlane.f32.xlu0 %v499
        %v501 = vpop.xlane.xlu0 %500
        %v502 = vsub.f32 %v493, %v498
        %v503 = vsub.f32 %v494, %v501
        %v504 = vmul.f32 %v502, 1.442695
        %v505 = vpow.pop %v504
        %v506 = vmul.f32 %v503, 1.442695
        %v507 = vpow.pop %v506
        %v508 = vsel %vm495, %v505, 0.0
        %509 = vadd.xlane.f32.xlu0 %v508
        %v510 = vpop.xlane.xlu0 %509
        %v511 = vsel %vm495, %v507, 0.0
        %512 = vadd.xlane.f32.xlu0 %v511
        %v513 = vpop.xlane.xlu0 %512
        %v514 = vrcp.pop %v510
        %v515 = vrcp.pop %v513
        %v516 = vmul.f32 %v505, %v514
        %v517 = vmul.f32 %v507, %v515
        %518 = vrot.lane.b32.xlu0 %v376, 64
        %v519 = vpop.permute.xlu0 %518
        %520 = vrot.lane.b32.xlu0 %v381, 64
        %v521 = vpop.permute.xlu0 %520
        %v525 = vsel %vm495, %v516, 0
        %v528 = vsel %vm495, %v517, 0
        %530 = vmatprep.subr.mxu0 0.0
        %531 = vmatpush1.msra.mxu0 0.0
        %532 = vmatprep.subr.mxu0 0.0
        %533 = vmatpush1.msra.mxu0 0.0
        %534 = vmatprep.subr.mxu0 0.0
        %535 = vmatpush1.msra.mxu0 0.0
        %536 = vmatprep.subr.mxu0 0.0
        %537 = vmatpush1.msra.mxu0 0.0
        %538 = vmatprep.subr.mxu0 0.0
        %539 = vmatpush1.msra.mxu0 0.0
        %540 = vmatprep.subr.mxu0 0.0
        %541 = vmatpush1.msra.mxu0 0.0
        %542 = vmatprep.subr.mxu0 0.0
        %543 = vmatpush1.msra.mxu0 0.0
        %544 = vmatprep.subr.mxu0 0.0
        %545 = vmatpush1.msra.mxu0 0.0
        %546 = vmatprep.subr.mxu0 0.0
        %547 = vmatpush1.msra.mxu0 0.0
        %548 = vmatprep.subr.mxu0 0.0
        %549 = vmatpush1.msra.mxu0 0.0
        %550 = vmatprep.subr.mxu0 0.0
        %551 = vmatpush1.msra.mxu0 0.0
        %552 = vmatprep.subr.mxu0 0.0
        %553 = vmatpush1.msra.mxu0 0.0
        %554 = vmatprep.subr.mxu0 0.0
        %555 = vmatpush1.msra.mxu0 0.0
        %556 = vmatprep.subr.mxu0 0.0
        %557 = vmatpush1.msra.mxu0 0.0
        %558 = vmatprep.subr.mxu0 0.0
        %559 = vmatpush1.msra.mxu0 %v521
        %560 = vmatprep.subr.mxu0 0.0
        %561 = vmatpush1.msra.mxu0 %v519
        %562 = vmatprep.subr.mxu0 0.0
        %563 = vmatpush2.msra.mxu0 0.0
        %564 = vmatprep.subr.mxu0 0.0
        %565 = vmatpush2.msra.mxu0 0.0
        %566 = vmatprep.subr.mxu0 0.0
        %567 = vmatpush2.msra.mxu0 0.0
        %568 = vmatprep.subr.mxu0 0.0
        %569 = vmatpush2.msra.mxu0 0.0
        %570 = vmatprep.subr.mxu0 0.0
        %571 = vmatpush2.msra.mxu0 0.0
        %572 = vmatprep.subr.mxu0 0.0
        %573 = vmatpush2.msra.mxu0 0.0
        %574 = vmatprep.subr.mxu0 0.0
        %575 = vmatpush2.msra.mxu0 0.0
        %576 = vmatprep.subr.mxu0 0.0
        %577 = vmatpush2.msra.mxu0 0.0
        %578 = vmatprep.subr.mxu0 0.0
        %579 = vmatpush2.msra.mxu0 0.0
        %580 = vmatprep.subr.mxu0 0.0
        %581 = vmatpush2.msra.mxu0 0.0
        %582 = vmatprep.subr.mxu0 0.0
        %583 = vmatpush2.msra.mxu0 0.0
        %584 = vmatprep.subr.mxu0 0.0
        %585 = vmatpush2.msra.mxu0 0.0
        %586 = vmatprep.subr.mxu0 0.0
        %587 = vmatpush2.msra.mxu0 0.0
        %588 = vmatprep.subr.mxu0 0.0
        %589 = vmatpush2.msra.mxu0 0.0
        %590 = vmatprep.subr.mxu0 0.0
        %591 = vmatpush2.msra.mxu0 0.0
        %592 = vmatprep.subr.mxu0 0.0
        %593 = vmatpush2.msra.mxu0 0.0
        %594 = vmatprep.mubr.f32.mxu0 0.0
        %595 = vmatmul.mubr.f32.gmra.mxu0 %v525
        %v596 = vpop.f32.mrf.mxu0
        %v597 = vadd.f32 0.0, %v596
        %v598 = vpop.f32.mrf.mxu0
        %599 = vmatprep.mubr.f32.mxu0 0.0
        %600 = vmatmul.mubr.f32.gmra.mxu0 %v528
        %v601 = vpop.f32.mrf.mxu0
        %v602 = vadd.f32 0.0, %v601
        %v603 = vpop.f32.mrf.mxu0
        %604 = vdwg.mxu0
        %605 = vrot.lane.b32.xlu0 %v376, 120
        %v606 = vpop.permute.xlu0 %605
        %607 = vrot.lane.b32.xlu0 %v381, 120
        %v608 = vpop.permute.xlu0 %607
        %609 = vrot.lane.b32.xlu0 %v376, 88
        %v610 = vpop.permute.xlu0 %609
        %611 = vrot.lane.b32.xlu0 %v381, 88
        %v612 = vpop.permute.xlu0 %611
        %v613 = vsel %vm405, %v606, 0
        %v615 = vsel %vm405, %v608, 0
        %v617 = vsel %vm405, %v610, 0
        %v619 = vsel %vm405, %v612, 0
        %621 = vmatprep.subr.mxu0 0.0
        %622 = vmatpush1.xpose.msra.mxu0 0.0
        %623 = vmatprep.subr.mxu0 0.0
        %624 = vmatpush1.xpose.msra.mxu0 0.0
        %625 = vmatprep.subr.mxu0 0.0
        %626 = vmatpush1.xpose.msra.mxu0 0.0
        %627 = vmatprep.subr.mxu0 0.0
        %628 = vmatpush1.xpose.msra.mxu0 0.0
        %629 = vmatprep.subr.mxu0 0.0
        %630 = vmatpush1.xpose.msra.mxu0 0.0
        %631 = vmatprep.subr.mxu0 0.0
        %632 = vmatpush1.xpose.msra.mxu0 0.0
        %633 = vmatprep.subr.mxu0 0.0
        %634 = vmatpush1.xpose.msra.mxu0 0.0
        %635 = vmatprep.subr.mxu0 0.0
        %636 = vmatpush1.xpose.msra.mxu0 0.0
        %637 = vmatprep.subr.mxu0 0.0
        %638 = vmatpush1.xpose.msra.mxu0 0.0
        %639 = vmatprep.subr.mxu0 0.0
        %640 = vmatpush1.xpose.msra.mxu0 0.0
        %641 = vmatprep.subr.mxu0 0.0
        %642 = vmatpush1.xpose.msra.mxu0 0.0
        %643 = vmatprep.subr.mxu0 0.0
        %644 = vmatpush1.xpose.msra.mxu0 0.0
        %645 = vmatprep.subr.mxu0 0.0
        %646 = vmatpush1.xpose.msra.mxu0 0.0
        %647 = vmatprep.subr.mxu0 0.0
        %648 = vmatpush1.xpose.msra.mxu0 0.0
        %649 = vmatprep.subr.mxu0 0.0
        %650 = vmatpush1.xpose.msra.mxu0 %v619
        %651 = vmatprep.subr.mxu0 0.0
        %652 = vmatpush1.xpose.msra.mxu0 %v617
        %653 = vmatprep.subr.mxu0 0.0
        %654 = vmatpush2.xpose.msra.mxu0 0.0
        %655 = vmatprep.subr.mxu0 0.0
        %656 = vmatpush2.xpose.msra.mxu0 0.0
        %657 = vmatprep.subr.mxu0 0.0
        %658 = vmatpush2.xpose.msra.mxu0 0.0
        %659 = vmatprep.subr.mxu0 0.0
        %660 = vmatpush2.xpose.msra.mxu0 0.0
        %661 = vmatprep.subr.mxu0 0.0
        %662 = vmatpush2.xpose.msra.mxu0 0.0
        %663 = vmatprep.subr.mxu0 0.0
        %664 = vmatpush2.xpose.msra.mxu0 0.0
        %665 = vmatprep.subr.mxu0 0.0
        %666 = vmatpush2.xpose.msra.mxu0 0.0
        %667 = vmatprep.subr.mxu0 0.0
        %668 = vmatpush2.xpose.msra.mxu0 0.0
        %669 = vmatprep.subr.mxu0 0.0
        %670 = vmatpush2.xpose.msra.mxu0 0.0
        %671 = vmatprep.subr.mxu0 0.0
        %672 = vmatpush2.xpose.msra.mxu0 0.0
        %673 = vmatprep.subr.mxu0 0.0
        %674 = vmatpush2.xpose.msra.mxu0 0.0
        %675 = vmatprep.subr.mxu0 0.0
        %676 = vmatpush2.xpose.msra.mxu0 0.0
        %677 = vmatprep.subr.mxu0 0.0
        %678 = vmatpush2.xpose.msra.mxu0 0.0
        %679 = vmatprep.subr.mxu0 0.0
        %680 = vmatpush2.xpose.msra.mxu0 0.0
        %681 = vmatprep.subr.mxu0 0.0
        %682 = vmatpush2.xpose.msra.mxu0 0.0
        %683 = vmatprep.subr.mxu0 0.0
        %684 = vmatpush2.xpose.msra.mxu0 0.0
        %685 = vmatprep.mubr.f32.mxu0 0.0
        %686 = vmatmul.mubr.f32.gmra.mxu0 %v613
        %v687 = vpop.f32.mrf.mxu0
        %v688 = vadd.f32 0.0, %v687
        %v689 = vpop.f32.mrf.mxu0
        %690 = vmatprep.mubr.f32.mxu0 0.0
        %691 = vmatmul.mubr.f32.gmra.mxu0 %v615
        %v692 = vpop.f32.mrf.mxu0
        %v693 = vadd.f32 0.0, %v692
        %v694 = vpop.f32.mrf.mxu0
        %695 = vdwg.mxu0
        %v696 = vmul.f32 %v397, 0.0625
        %v697 = vmul.f32 %v398, 0.0625
        %v698 = vsub.f32 %v688, %v696
        %v699 = vsub.f32 %v693, %v697
        %v700 = vmul.f32 %v698, 0.35355338
        %v701 = vmul.f32 %v699, 0.35355338
        %v702 = vsel %vm495, %v700, -inf
        %703 = vmax.xlane.f32.xlu0 %v702
        %v704 = vpop.xlane.xlu0 %703
        %v705 = vsel %vm495, %v701, -inf
        %706 = vmax.xlane.f32.xlu0 %v705
        %v707 = vpop.xlane.xlu0 %706
        %v708 = vsub.f32 %v700, %v704
        %v709 = vsub.f32 %v701, %v707
        %v710 = vmul.f32 %v708, 1.442695
        %v711 = vpow.pop %v710
        %v712 = vmul.f32 %v709, 1.442695
        %v713 = vpow.pop %v712
        %v714 = vsel %vm495, %v711, 0.0
        %715 = vadd.xlane.f32.xlu0 %v714
        %v716 = vpop.xlane.xlu0 %715
        %v717 = vsel %vm495, %v713, 0.0
        %718 = vadd.xlane.f32.xlu0 %v717
        %v719 = vpop.xlane.xlu0 %718
        %v720 = vrcp.pop %v716
        %v721 = vrcp.pop %v719
        %v722 = vmul.f32 %v711, %v720
        %v723 = vmul.f32 %v713, %v721
        %724 = vrot.lane.b32.xlu0 %v376, 56
        %v725 = vpop.permute.xlu0 %724
        %726 = vrot.lane.b32.xlu0 %v381, 56
        %v727 = vpop.permute.xlu0 %726
        %v731 = vsel %vm495, %v722, 0
        %v734 = vsel %vm495, %v723, 0
        %736 = vmatprep.subr.mxu0 0.0
        %737 = vmatpush1.msra.mxu0 0.0
        %738 = vmatprep.subr.mxu0 0.0
        %739 = vmatpush1.msra.mxu0 0.0
        %740 = vmatprep.subr.mxu0 0.0
        %741 = vmatpush1.msra.mxu0 0.0
        %742 = vmatprep.subr.mxu0 0.0
        %743 = vmatpush1.msra.mxu0 0.0
        %744 = vmatprep.subr.mxu0 0.0
        %745 = vmatpush1.msra.mxu0 0.0
        %746 = vmatprep.subr.mxu0 0.0
        %747 = vmatpush1.msra.mxu0 0.0
        %748 = vmatprep.subr.mxu0 0.0
        %749 = vmatpush1.msra.mxu0 0.0
        %750 = vmatprep.subr.mxu0 0.0
        %751 = vmatpush1.msra.mxu0 0.0
        %752 = vmatprep.subr.mxu0 0.0
        %753 = vmatpush1.msra.mxu0 0.0
        %754 = vmatprep.subr.mxu0 0.0
        %755 = vmatpush1.msra.mxu0 0.0
        %756 = vmatprep.subr.mxu0 0.0
        %757 = vmatpush1.msra.mxu0 0.0
        %758 = vmatprep.subr.mxu0 0.0
        %759 = vmatpush1.msra.mxu0 0.0
        %760 = vmatprep.subr.mxu0 0.0
        %761 = vmatpush1.msra.mxu0 0.0
        %762 = vmatprep.subr.mxu0 0.0
        %763 = vmatpush1.msra.mxu0 0.0
        %764 = vmatprep.subr.mxu0 0.0
        %765 = vmatpush1.msra.mxu0 %v727
        %766 = vmatprep.subr.mxu0 0.0
        %767 = vmatpush1.msra.mxu0 %v725
        %768 = vmatprep.subr.mxu0 0.0
        %769 = vmatpush2.msra.mxu0 0.0
        %770 = vmatprep.subr.mxu0 0.0
        %771 = vmatpush2.msra.mxu0 0.0
        %772 = vmatprep.subr.mxu0 0.0
        %773 = vmatpush2.msra.mxu0 0.0
        %774 = vmatprep.subr.mxu0 0.0
        %775 = vmatpush2.msra.mxu0 0.0
        %776 = vmatprep.subr.mxu0 0.0
        %777 = vmatpush2.msra.mxu0 0.0
        %778 = vmatprep.subr.mxu0 0.0
        %779 = vmatpush2.msra.mxu0 0.0
        %780 = vmatprep.subr.mxu0 0.0
        %781 = vmatpush2.msra.mxu0 0.0
        %782 = vmatprep.subr.mxu0 0.0
        %783 = vmatpush2.msra.mxu0 0.0
        %784 = vmatprep.subr.mxu0 0.0
        %785 = vmatpush2.msra.mxu0 0.0
        %786 = vmatprep.subr.mxu0 0.0
        %787 = vmatpush2.msra.mxu0 0.0
        %788 = vmatprep.subr.mxu0 0.0
        %789 = vmatpush2.msra.mxu0 0.0
        %790 = vmatprep.subr.mxu0 0.0
        %791 = vmatpush2.msra.mxu0 0.0
        %792 = vmatprep.subr.mxu0 0.0
        %793 = vmatpush2.msra.mxu0 0.0
        %794 = vmatprep.subr.mxu0 0.0
        %795 = vmatpush2.msra.mxu0 0.0
        %796 = vmatprep.subr.mxu0 0.0
        %797 = vmatpush2.msra.mxu0 0.0
        %798 = vmatprep.subr.mxu0 0.0
        %799 = vmatpush2.msra.mxu0 0.0
        %800 = vmatprep.mubr.f32.mxu0 0.0
        %801 = vmatmul.mubr.f32.gmra.mxu0 %v731
        %v802 = vpop.f32.mrf.mxu0
        %v803 = vadd.f32 0.0, %v802
        %v804 = vpop.f32.mrf.mxu0
        %805 = vmatprep.mubr.f32.mxu0 0.0
        %806 = vmatmul.mubr.f32.gmra.mxu0 %v734
        %v807 = vpop.f32.mrf.mxu0
        %v808 = vadd.f32 0.0, %v807
        %v809 = vpop.f32.mrf.mxu0
        %810 = vdwg.mxu0
        %811 = vrot.lane.b32.xlu0 %v376, 112
        %v812 = vpop.permute.xlu0 %811
        %813 = vrot.lane.b32.xlu0 %v381, 112
        %v814 = vpop.permute.xlu0 %813
        %815 = vrot.lane.b32.xlu0 %v376, 80
        %v816 = vpop.permute.xlu0 %815
        %817 = vrot.lane.b32.xlu0 %v381, 80
        %v818 = vpop.permute.xlu0 %817
        %v819 = vsel %vm405, %v812, 0
        %v821 = vsel %vm405, %v814, 0
        %v823 = vsel %vm405, %v816, 0
        %v825 = vsel %vm405, %v818, 0
        %827 = vmatprep.subr.mxu0 0.0
        %828 = vmatpush1.xpose.msra.mxu0 0.0
        %829 = vmatprep.subr.mxu0 0.0
        %830 = vmatpush1.xpose.msra.mxu0 0.0
        %831 = vmatprep.subr.mxu0 0.0
        %832 = vmatpush1.xpose.msra.mxu0 0.0
        %833 = vmatprep.subr.mxu0 0.0
        %834 = vmatpush1.xpose.msra.mxu0 0.0
        %835 = vmatprep.subr.mxu0 0.0
        %836 = vmatpush1.xpose.msra.mxu0 0.0
        %837 = vmatprep.subr.mxu0 0.0
        %838 = vmatpush1.xpose.msra.mxu0 0.0
        %839 = vmatprep.subr.mxu0 0.0
        %840 = vmatpush1.xpose.msra.mxu0 0.0
        %841 = vmatprep.subr.mxu0 0.0
        %842 = vmatpush1.xpose.msra.mxu0 0.0
        %843 = vmatprep.subr.mxu0 0.0
        %844 = vmatpush1.xpose.msra.mxu0 0.0
        %845 = vmatprep.subr.mxu0 0.0
        %846 = vmatpush1.xpose.msra.mxu0 0.0
        %847 = vmatprep.subr.mxu0 0.0
        %848 = vmatpush1.xpose.msra.mxu0 0.0
        %849 = vmatprep.subr.mxu0 0.0
        %850 = vmatpush1.xpose.msra.mxu0 0.0
        %851 = vmatprep.subr.mxu0 0.0
        %852 = vmatpush1.xpose.msra.mxu0 0.0
        %853 = vmatprep.subr.mxu0 0.0
        %854 = vmatpush1.xpose.msra.mxu0 0.0
        %855 = vmatprep.subr.mxu0 0.0
        %856 = vmatpush1.xpose.msra.mxu0 %v825
        %857 = vmatprep.subr.mxu0 0.0
        %858 = vmatpush1.xpose.msra.mxu0 %v823
        %859 = vmatprep.subr.mxu0 0.0
        %860 = vmatpush2.xpose.msra.mxu0 0.0
        %861 = vmatprep.subr.mxu0 0.0
        %862 = vmatpush2.xpose.msra.mxu0 0.0
        %863 = vmatprep.subr.mxu0 0.0
        %864 = vmatpush2.xpose.msra.mxu0 0.0
        %865 = vmatprep.subr.mxu0 0.0
        %866 = vmatpush2.xpose.msra.mxu0 0.0
        %867 = vmatprep.subr.mxu0 0.0
        %868 = vmatpush2.xpose.msra.mxu0 0.0
        %869 = vmatprep.subr.mxu0 0.0
        %870 = vmatpush2.xpose.msra.mxu0 0.0
        %871 = vmatprep.subr.mxu0 0.0
        %872 = vmatpush2.xpose.msra.mxu0 0.0
        %873 = vmatprep.subr.mxu0 0.0
        %874 = vmatpush2.xpose.msra.mxu0 0.0
        %875 = vmatprep.subr.mxu0 0.0
        %876 = vmatpush2.xpose.msra.mxu0 0.0
        %877 = vmatprep.subr.mxu0 0.0
        %878 = vmatpush2.xpose.msra.mxu0 0.0
        %879 = vmatprep.subr.mxu0 0.0
        %880 = vmatpush2.xpose.msra.mxu0 0.0
        %881 = vmatprep.subr.mxu0 0.0
        %882 = vmatpush2.xpose.msra.mxu0 0.0
        %883 = vmatprep.subr.mxu0 0.0
        %884 = vmatpush2.xpose.msra.mxu0 0.0
        %885 = vmatprep.subr.mxu0 0.0
        %886 = vmatpush2.xpose.msra.mxu0 0.0
        %887 = vmatprep.subr.mxu0 0.0
        %888 = vmatpush2.xpose.msra.mxu0 0.0
        %889 = vmatprep.subr.mxu0 0.0
        %890 = vmatpush2.xpose.msra.mxu0 0.0
        %891 = vmatprep.mubr.f32.mxu0 0.0
        %892 = vmatmul.mubr.f32.gmra.mxu0 %v819
        %v893 = vpop.f32.mrf.mxu0
        %v894 = vadd.f32 0.0, %v893
        %v895 = vpop.f32.mrf.mxu0
        %896 = vmatprep.mubr.f32.mxu0 0.0
        %897 = vmatmul.mubr.f32.gmra.mxu0 %v821
        %v898 = vpop.f32.mrf.mxu0
        %v899 = vadd.f32 0.0, %v898
        %v900 = vpop.f32.mrf.mxu0
        %901 = vdwg.mxu0
        %v902 = vmul.f32 %v397, 0.015625
        %v903 = vmul.f32 %v398, 0.015625
        %v904 = vsub.f32 %v894, %v902
        %v905 = vsub.f32 %v899, %v903
        %v906 = vmul.f32 %v904, 0.35355338
        %v907 = vmul.f32 %v905, 0.35355338
        %v908 = vsel %vm495, %v906, -inf
        %909 = vmax.xlane.f32.xlu0 %v908
        %v910 = vpop.xlane.xlu0 %909
        %v911 = vsel %vm495, %v907, -inf
        %912 = vmax.xlane.f32.xlu0 %v911
        %v913 = vpop.xlane.xlu0 %912
        %v914 = vsub.f32 %v906, %v910
        %v915 = vsub.f32 %v907, %v913
        %v916 = vmul.f32 %v914, 1.442695
        %v917 = vpow.pop %v916
        %v918 = vmul.f32 %v915, 1.442695
        %v919 = vpow.pop %v918
        %v920 = vsel %vm495, %v917, 0.0
        %921 = vadd.xlane.f32.xlu0 %v920
        %v922 = vpop.xlane.xlu0 %921
        %v923 = vsel %vm495, %v919, 0.0
        %924 = vadd.xlane.f32.xlu0 %v923
        %v925 = vpop.xlane.xlu0 %924
        %v926 = vrcp.pop %v922
        %v927 = vrcp.pop %v925
        %v928 = vmul.f32 %v917, %v926
        %v929 = vmul.f32 %v919, %v927
        %930 = vrot.lane.b32.xlu0 %v376, 48
        %v931 = vpop.permute.xlu0 %930
        %932 = vrot.lane.b32.xlu0 %v381, 48
        %v933 = vpop.permute.xlu0 %932
        %v937 = vsel %vm495, %v928, 0
        %v940 = vsel %vm495, %v929, 0
        %942 = vmatprep.subr.mxu0 0.0
        %943 = vmatpush1.msra.mxu0 0.0
        %944 = vmatprep.subr.mxu0 0.0
        %945 = vmatpush1.msra.mxu0 0.0
        %946 = vmatprep.subr.mxu0 0.0
        %947 = vmatpush1.msra.mxu0 0.0
        %948 = vmatprep.subr.mxu0 0.0
        %949 = vmatpush1.msra.mxu0 0.0
        %950 = vmatprep.subr.mxu0 0.0
        %951 = vmatpush1.msra.mxu0 0.0
        %952 = vmatprep.subr.mxu0 0.0
        %953 = vmatpush1.msra.mxu0 0.0
        %954 = vmatprep.subr.mxu0 0.0
        %955 = vmatpush1.msra.mxu0 0.0
        %956 = vmatprep.subr.mxu0 0.0
        %957 = vmatpush1.msra.mxu0 0.0
        %958 = vmatprep.subr.mxu0 0.0
        %959 = vmatpush1.msra.mxu0 0.0
        %960 = vmatprep.subr.mxu0 0.0
        %961 = vmatpush1.msra.mxu0 0.0
        %962 = vmatprep.subr.mxu0 0.0
        %963 = vmatpush1.msra.mxu0 0.0
        %964 = vmatprep.subr.mxu0 0.0
        %965 = vmatpush1.msra.mxu0 0.0
        %966 = vmatprep.subr.mxu0 0.0
        %967 = vmatpush1.msra.mxu0 0.0
        %968 = vmatprep.subr.mxu0 0.0
        %969 = vmatpush1.msra.mxu0 0.0
        %970 = vmatprep.subr.mxu0 0.0
        %971 = vmatpush1.msra.mxu0 %v933
        %972 = vmatprep.subr.mxu0 0.0
        %973 = vmatpush1.msra.mxu0 %v931
        %974 = vmatprep.subr.mxu0 0.0
        %975 = vmatpush2.msra.mxu0 0.0
        %976 = vmatprep.subr.mxu0 0.0
        %977 = vmatpush2.msra.mxu0 0.0
        %978 = vmatprep.subr.mxu0 0.0
        %979 = vmatpush2.msra.mxu0 0.0
        %980 = vmatprep.subr.mxu0 0.0
        %981 = vmatpush2.msra.mxu0 0.0
        %982 = vmatprep.subr.mxu0 0.0
        %983 = vmatpush2.msra.mxu0 0.0
        %984 = vmatprep.subr.mxu0 0.0
        %985 = vmatpush2.msra.mxu0 0.0
        %986 = vmatprep.subr.mxu0 0.0
        %987 = vmatpush2.msra.mxu0 0.0
        %988 = vmatprep.subr.mxu0 0.0
        %989 = vmatpush2.msra.mxu0 0.0
        %990 = vmatprep.subr.mxu0 0.0
        %991 = vmatpush2.msra.mxu0 0.0
        %992 = vmatprep.subr.mxu0 0.0
        %993 = vmatpush2.msra.mxu0 0.0
        %994 = vmatprep.subr.mxu0 0.0
        %995 = vmatpush2.msra.mxu0 0.0
        %996 = vmatprep.subr.mxu0 0.0
        %997 = vmatpush2.msra.mxu0 0.0
        %998 = vmatprep.subr.mxu0 0.0
        %999 = vmatpush2.msra.mxu0 0.0
        %1000 = vmatprep.subr.mxu0 0.0
        %1001 = vmatpush2.msra.mxu0 0.0
        %1002 = vmatprep.subr.mxu0 0.0
        %1003 = vmatpush2.msra.mxu0 0.0
        %1004 = vmatprep.subr.mxu0 0.0
        %1005 = vmatpush2.msra.mxu0 0.0
        %1006 = vmatprep.mubr.f32.mxu0 0.0
        %1007 = vmatmul.mubr.f32.gmra.mxu0 %v937
        %v1008 = vpop.f32.mrf.mxu0
        %v1009 = vadd.f32 0.0, %v1008
        %v1010 = vpop.f32.mrf.mxu0
        %1011 = vmatprep.mubr.f32.mxu0 0.0
        %1012 = vmatmul.mubr.f32.gmra.mxu0 %v940
        %v1013 = vpop.f32.mrf.mxu0
        %v1014 = vadd.f32 0.0, %v1013
        %v1015 = vpop.f32.mrf.mxu0
        %1016 = vdwg.mxu0
        %1017 = vrot.lane.b32.xlu0 %v376, 104
        %v1018 = vpop.permute.xlu0 %1017
        %1019 = vrot.lane.b32.xlu0 %v381, 104
        %v1020 = vpop.permute.xlu0 %1019
        %1021 = vrot.lane.b32.xlu0 %v376, 72
        %v1022 = vpop.permute.xlu0 %1021
        %1023 = vrot.lane.b32.xlu0 %v381, 72
        %v1024 = vpop.permute.xlu0 %1023
        %v1025 = vsel %vm405, %v1018, 0
        %v1027 = vsel %vm405, %v1020, 0
        %v1029 = vsel %vm405, %v1022, 0
        %v1031 = vsel %vm405, %v1024, 0
        %1033 = vmatprep.subr.mxu0 0.0
        %1034 = vmatpush1.xpose.msra.mxu0 0.0
        %1035 = vmatprep.subr.mxu0 0.0
        %1036 = vmatpush1.xpose.msra.mxu0 0.0
        %1037 = vmatprep.subr.mxu0 0.0
        %1038 = vmatpush1.xpose.msra.mxu0 0.0
        %1039 = vmatprep.subr.mxu0 0.0
        %1040 = vmatpush1.xpose.msra.mxu0 0.0
        %1041 = vmatprep.subr.mxu0 0.0
        %1042 = vmatpush1.xpose.msra.mxu0 0.0
        %1043 = vmatprep.subr.mxu0 0.0
        %1044 = vmatpush1.xpose.msra.mxu0 0.0
        %1045 = vmatprep.subr.mxu0 0.0
        %1046 = vmatpush1.xpose.msra.mxu0 0.0
        %1047 = vmatprep.subr.mxu0 0.0
        %1048 = vmatpush1.xpose.msra.mxu0 0.0
        %1049 = vmatprep.subr.mxu0 0.0
        %1050 = vmatpush1.xpose.msra.mxu0 0.0
        %1051 = vmatprep.subr.mxu0 0.0
        %1052 = vmatpush1.xpose.msra.mxu0 0.0
        %1053 = vmatprep.subr.mxu0 0.0
        %1054 = vmatpush1.xpose.msra.mxu0 0.0
        %1055 = vmatprep.subr.mxu0 0.0
        %1056 = vmatpush1.xpose.msra.mxu0 0.0
        %1057 = vmatprep.subr.mxu0 0.0
        %1058 = vmatpush1.xpose.msra.mxu0 0.0
        %1059 = vmatprep.subr.mxu0 0.0
        %1060 = vmatpush1.xpose.msra.mxu0 0.0
        %1061 = vmatprep.subr.mxu0 0.0
        %1062 = vmatpush1.xpose.msra.mxu0 %v1031
        %1063 = vmatprep.subr.mxu0 0.0
        %1064 = vmatpush1.xpose.msra.mxu0 %v1029
        %1065 = vmatprep.subr.mxu0 0.0
        %1066 = vmatpush2.xpose.msra.mxu0 0.0
        %1067 = vmatprep.subr.mxu0 0.0
        %1068 = vmatpush2.xpose.msra.mxu0 0.0
        %1069 = vmatprep.subr.mxu0 0.0
        %1070 = vmatpush2.xpose.msra.mxu0 0.0
        %1071 = vmatprep.subr.mxu0 0.0
        %1072 = vmatpush2.xpose.msra.mxu0 0.0
        %1073 = vmatprep.subr.mxu0 0.0
        %1074 = vmatpush2.xpose.msra.mxu0 0.0
        %1075 = vmatprep.subr.mxu0 0.0
        %1076 = vmatpush2.xpose.msra.mxu0 0.0
        %1077 = vmatprep.subr.mxu0 0.0
        %1078 = vmatpush2.xpose.msra.mxu0 0.0
        %1079 = vmatprep.subr.mxu0 0.0
        %1080 = vmatpush2.xpose.msra.mxu0 0.0
        %1081 = vmatprep.subr.mxu0 0.0
        %1082 = vmatpush2.xpose.msra.mxu0 0.0
        %1083 = vmatprep.subr.mxu0 0.0
        %1084 = vmatpush2.xpose.msra.mxu0 0.0
        %1085 = vmatprep.subr.mxu0 0.0
        %1086 = vmatpush2.xpose.msra.mxu0 0.0
        %1087 = vmatprep.subr.mxu0 0.0
        %1088 = vmatpush2.xpose.msra.mxu0 0.0
        %1089 = vmatprep.subr.mxu0 0.0
        %1090 = vmatpush2.xpose.msra.mxu0 0.0
        %1091 = vmatprep.subr.mxu0 0.0
        %1092 = vmatpush2.xpose.msra.mxu0 0.0
        %1093 = vmatprep.subr.mxu0 0.0
        %1094 = vmatpush2.xpose.msra.mxu0 0.0
        %1095 = vmatprep.subr.mxu0 0.0
        %1096 = vmatpush2.xpose.msra.mxu0 0.0
        %1097 = vmatprep.mubr.f32.mxu0 0.0
        %1098 = vmatmul.mubr.f32.gmra.mxu0 %v1025
        %v1099 = vpop.f32.mrf.mxu0
        %v1100 = vadd.f32 0.0, %v1099
        %v1101 = vpop.f32.mrf.mxu0
        %1102 = vmatprep.mubr.f32.mxu0 0.0
        %1103 = vmatmul.mubr.f32.gmra.mxu0 %v1027
        %v1104 = vpop.f32.mrf.mxu0
        %v1105 = vadd.f32 0.0, %v1104
        %v1106 = vpop.f32.mrf.mxu0
        %1107 = vdwg.mxu0
        %v1108 = vmul.f32 %v397, 0.00390625
        %v1109 = vmul.f32 %v398, 0.00390625
        %v1110 = vsub.f32 %v1100, %v1108
        %v1111 = vsub.f32 %v1105, %v1109
        %v1112 = vmul.f32 %v1110, 0.35355338
        %v1113 = vmul.f32 %v1111, 0.35355338
        %v1114 = vsel %vm495, %v1112, -inf
        %1115 = vmax.xlane.f32.xlu0 %v1114
        %v1116 = vpop.xlane.xlu0 %1115
        %v1117 = vsel %vm495, %v1113, -inf
        %1118 = vmax.xlane.f32.xlu0 %v1117
        %v1119 = vpop.xlane.xlu0 %1118
        %v1120 = vsub.f32 %v1112, %v1116
        %v1121 = vsub.f32 %v1113, %v1119
        %v1122 = vmul.f32 %v1120, 1.442695
        %v1123 = vpow.pop %v1122
        %v1124 = vmul.f32 %v1121, 1.442695
        %v1125 = vpow.pop %v1124
        %v1126 = vsel %vm495, %v1123, 0.0
        %1127 = vadd.xlane.f32.xlu0 %v1126
        %v1128 = vpop.xlane.xlu0 %1127
        %v1129 = vsel %vm495, %v1125, 0.0
        %1130 = vadd.xlane.f32.xlu0 %v1129
        %v1131 = vpop.xlane.xlu0 %1130
        %v1132 = vrcp.pop %v1128
        %v1133 = vrcp.pop %v1131
        %v1134 = vmul.f32 %v1123, %v1132
        %v1135 = vmul.f32 %v1125, %v1133
        %1136 = vrot.lane.b32.xlu0 %v376, 40
        %v1137 = vpop.permute.xlu0 %1136
        %1138 = vrot.lane.b32.xlu0 %v381, 40
        %v1139 = vpop.permute.xlu0 %1138
        %v1143 = vsel %vm495, %v1134, 0
        %v1146 = vsel %vm495, %v1135, 0
        %1148 = vmatprep.subr.mxu0 0.0
        %1149 = vmatpush1.msra.mxu0 0.0
        %1150 = vmatprep.subr.mxu0 0.0
        %1151 = vmatpush1.msra.mxu0 0.0
        %1152 = vmatprep.subr.mxu0 0.0
        %1153 = vmatpush1.msra.mxu0 0.0
        %1154 = vmatprep.subr.mxu0 0.0
        %1155 = vmatpush1.msra.mxu0 0.0
        %1156 = vmatprep.subr.mxu0 0.0
        %1157 = vmatpush1.msra.mxu0 0.0
        %1158 = vmatprep.subr.mxu0 0.0
        %1159 = vmatpush1.msra.mxu0 0.0
        %1160 = vmatprep.subr.mxu0 0.0
        %1161 = vmatpush1.msra.mxu0 0.0
        %1162 = vmatprep.subr.mxu0 0.0
        %1163 = vmatpush1.msra.mxu0 0.0
        %1164 = vmatprep.subr.mxu0 0.0
        %1165 = vmatpush1.msra.mxu0 0.0
        %1166 = vmatprep.subr.mxu0 0.0
        %1167 = vmatpush1.msra.mxu0 0.0
        %1168 = vmatprep.subr.mxu0 0.0
        %1169 = vmatpush1.msra.mxu0 0.0
        %1170 = vmatprep.subr.mxu0 0.0
        %1171 = vmatpush1.msra.mxu0 0.0
        %1172 = vmatprep.subr.mxu0 0.0
        %1173 = vmatpush1.msra.mxu0 0.0
        %1174 = vmatprep.subr.mxu0 0.0
        %1175 = vmatpush1.msra.mxu0 0.0
        %1176 = vmatprep.subr.mxu0 0.0
        %1177 = vmatpush1.msra.mxu0 %v1139
        %1178 = vmatprep.subr.mxu0 0.0
        %1179 = vmatpush1.msra.mxu0 %v1137
        %1180 = vmatprep.subr.mxu0 0.0
        %1181 = vmatpush2.msra.mxu0 0.0
        %1182 = vmatprep.subr.mxu0 0.0
        %1183 = vmatpush2.msra.mxu0 0.0
        %1184 = vmatprep.subr.mxu0 0.0
        %1185 = vmatpush2.msra.mxu0 0.0
        %1186 = vmatprep.subr.mxu0 0.0
        %1187 = vmatpush2.msra.mxu0 0.0
        %1188 = vmatprep.subr.mxu0 0.0
        %1189 = vmatpush2.msra.mxu0 0.0
        %1190 = vmatprep.subr.mxu0 0.0
        %1191 = vmatpush2.msra.mxu0 0.0
        %1192 = vmatprep.subr.mxu0 0.0
        %1193 = vmatpush2.msra.mxu0 0.0
        %1194 = vmatprep.subr.mxu0 0.0
        %1195 = vmatpush2.msra.mxu0 0.0
        %1196 = vmatprep.subr.mxu0 0.0
        %1197 = vmatpush2.msra.mxu0 0.0
        %1198 = vmatprep.subr.mxu0 0.0
        %1199 = vmatpush2.msra.mxu0 0.0
        %1200 = vmatprep.subr.mxu0 0.0
        %1201 = vmatpush2.msra.mxu0 0.0
        %1202 = vmatprep.subr.mxu0 0.0
        %1203 = vmatpush2.msra.mxu0 0.0
        %1204 = vmatprep.subr.mxu0 0.0
        %1205 = vmatpush2.msra.mxu0 0.0
        %1206 = vmatprep.subr.mxu0 0.0
        %1207 = vmatpush2.msra.mxu0 0.0
        %1208 = vmatprep.subr.mxu0 0.0
        %1209 = vmatpush2.msra.mxu0 0.0
        %1210 = vmatprep.subr.mxu0 0.0
        %1211 = vmatpush2.msra.mxu0 0.0
        %1212 = vmatprep.mubr.f32.mxu0 0.0
        %1213 = vmatmul.mubr.f32.gmra.mxu0 %v1143
        %v1214 = vpop.f32.mrf.mxu0
        %v1215 = vadd.f32 0.0, %v1214
        %v1216 = vpop.f32.mrf.mxu0
        %1217 = vmatprep.mubr.f32.mxu0 0.0
        %1218 = vmatmul.mubr.f32.gmra.mxu0 %v1146
        %v1219 = vpop.f32.mrf.mxu0
        %v1220 = vadd.f32 0.0, %v1219
        %v1221 = vpop.f32.mrf.mxu0
        %1222 = vdwg.mxu0
        %1225 = vrot.lane.b32.xlu0 %v803, 8
        %v1226 = vpop.permute.xlu0 %1225
        %1227 = vrot.lane.b32.xlu0 %v808, 8
        %v1228 = vpop.permute.xlu0 %1227
        %1233 = vrot.lane.b32.xlu0 %v1009, 16
        %v1234 = vpop.permute.xlu0 %1233
        %1235 = vrot.lane.b32.xlu0 %v1014, 16
        %v1236 = vpop.permute.xlu0 %1235
        %1241 = vrot.lane.b32.xlu0 %v1215, 24
        %v1242 = vpop.permute.xlu0 %1241
        %1243 = vrot.lane.b32.xlu0 %v1220, 24
        %v1244 = vpop.permute.xlu0 %1243
        %v1247 = vsel %vm405, %v597, %v1226
        %v1248 = vsel %vm405, %v602, %v1228
        %v1249 = vsel %vm495, %v1247, %v1234
        %v1250 = vsel %vm495, %v1248, %v1236
        %vm1251 = vcmask 195584
        %v1252 = vsel %vm1251, %v1249, %v1242
        %v1253 = vsel %vm1251, %v1250, %v1244
        %v1254 = vld [vmem:[%s3] sm:$0xff]
        %v1255 = vld [vmem:[%s3 + $0x8] sm:$0xff]
        %v1256 = vld [vmem:[%s3 + $0x10] sm:$0xff]
        %v1257 = vld [vmem:[%s3 + $0x18] sm:$0xff]
        %v1258 = vld [vmem:[%s4] sm:$0x1]
        %v1260 = vlaneseq
        %v1261 = vshrl.u32 %v1260, 7
        %v1262 = vsub.s32 0, %v1261
        %v1263 = vrot.slane %v1258, %v1262
        %v1266 = vsel %vm266, %v1252, 0
        %v1269 = vsel %vm266, %v1253, 0
        %v1272 = vsel %vm266, %v1254, 0
        %v1275 = vsel %vm266, %v1255, 0
        %v1278 = vsel %vm266, %v1256, 0
        %v1281 = vsel %vm266, %v1257, 0
        %1283 = vmatprep.subr.mxu0 0.0
        %1284 = vmatpush1.xpose.msra.mxu0 0.0
        %1285 = vmatprep.subr.mxu0 0.0
        %1286 = vmatpush1.xpose.msra.mxu0 0.0
        %1287 = vmatprep.subr.mxu0 0.0
        %1288 = vmatpush1.xpose.msra.mxu0 0.0
        %1289 = vmatprep.subr.mxu0 0.0
        %1290 = vmatpush1.xpose.msra.mxu0 0.0
        %1291 = vmatprep.subr.mxu0 0.0
        %1292 = vmatpush1.xpose.msra.mxu0 0.0
        %1293 = vmatprep.subr.mxu0 0.0
        %1294 = vmatpush1.xpose.msra.mxu0 0.0
        %1295 = vmatprep.subr.mxu0 0.0
        %1296 = vmatpush1.xpose.msra.mxu0 0.0
        %1297 = vmatprep.subr.mxu0 0.0
        %1298 = vmatpush1.xpose.msra.mxu0 0.0
        %1299 = vmatprep.subr.mxu0 0.0
        %1300 = vmatpush1.xpose.msra.mxu0 0.0
        %1301 = vmatprep.subr.mxu0 0.0
        %1302 = vmatpush1.xpose.msra.mxu0 0.0
        %1303 = vmatprep.subr.mxu0 0.0
        %1304 = vmatpush1.xpose.msra.mxu0 0.0
        %1305 = vmatprep.subr.mxu0 0.0
        %1306 = vmatpush1.xpose.msra.mxu0 0.0
        %1307 = vmatprep.subr.mxu0 0.0
        %1308 = vmatpush1.xpose.msra.mxu0 %v1281
        %1309 = vmatprep.subr.mxu0 0.0
        %1310 = vmatpush1.xpose.msra.mxu0 %v1278
        %1311 = vmatprep.subr.mxu0 0.0
        %1312 = vmatpush1.xpose.msra.mxu0 %v1275
        %1313 = vmatprep.subr.mxu0 0.0
        %1314 = vmatpush1.xpose.msra.mxu0 %v1272
        %1315 = vmatprep.subr.mxu0 0.0
        %1316 = vmatpush2.xpose.msra.mxu0 0.0
        %1317 = vmatprep.subr.mxu0 0.0
        %1318 = vmatpush2.xpose.msra.mxu0 0.0
        %1319 = vmatprep.subr.mxu0 0.0
        %1320 = vmatpush2.xpose.msra.mxu0 0.0
        %1321 = vmatprep.subr.mxu0 0.0
        %1322 = vmatpush2.xpose.msra.mxu0 0.0
        %1323 = vmatprep.subr.mxu0 0.0
        %1324 = vmatpush2.xpose.msra.mxu0 0.0
        %1325 = vmatprep.subr.mxu0 0.0
        %1326 = vmatpush2.xpose.msra.mxu0 0.0
        %1327 = vmatprep.subr.mxu0 0.0
        %1328 = vmatpush2.xpose.msra.mxu0 0.0
        %1329 = vmatprep.subr.mxu0 0.0
        %1330 = vmatpush2.xpose.msra.mxu0 0.0
        %1331 = vmatprep.subr.mxu0 0.0
        %1332 = vmatpush2.xpose.msra.mxu0 0.0
        %1333 = vmatprep.subr.mxu0 0.0
        %1334 = vmatpush2.xpose.msra.mxu0 0.0
        %1335 = vmatprep.subr.mxu0 0.0
        %1336 = vmatpush2.xpose.msra.mxu0 0.0
        %1337 = vmatprep.subr.mxu0 0.0
        %1338 = vmatpush2.xpose.msra.mxu0 0.0
        %1339 = vmatprep.subr.mxu0 0.0
        %1340 = vmatpush2.xpose.msra.mxu0 0.0
        %1341 = vmatprep.subr.mxu0 0.0
        %1342 = vmatpush2.xpose.msra.mxu0 0.0
        %1343 = vmatprep.subr.mxu0 0.0
        %1344 = vmatpush2.xpose.msra.mxu0 0.0
        %1345 = vmatprep.subr.mxu0 0.0
        %1346 = vmatpush2.xpose.msra.mxu0 0.0
        %1347 = vmatprep.mubr.f32.mxu0 0.0
        %1348 = vmatmul.mubr.f32.gmra.mxu0 %v1266
        %v1349 = vpop.f32.mrf.mxu0
        %v1350 = vadd.f32 %v1263, %v1349
        %v1351 = vpop.f32.mrf.mxu0
        %1352 = vmatprep.mubr.f32.mxu0 0.0
        %1353 = vmatmul.mubr.f32.gmra.mxu0 %v1269
        %v1354 = vpop.f32.mrf.mxu0
        %v1355 = vadd.f32 %v1263, %v1354
        %v1356 = vpop.f32.mrf.mxu0
        %1357 = vdwg.mxu0
        %1358 = vst.msk [vmem:[%s244] sm:$0xff] %vm266, %v1350
        %1359 = vst.msk [vmem:[%s244 + $0x8] sm:$0xff] %vm266, %v1355
        %p1360 = scmp.lt.s32.totalorder %s19, 1
        %s1361 = scalar_select %p1360, %s19, 1
        %s1362 = smul.addr %s1361, 2
        %s1363 = smul.addr %s1362, 8
        %s1364 = scalar_lea.vmem %s5, %s1363
        // Predicated region
        $region45: #{_lambda_.4} parent=39 // pred_check
          %p1365 = pneg %p147
        $region46: #{_lambda_.4} parent=39 // pred_check_branch
          %1367 = sbr.rel (%p1365) target = $region48
        $region47: #{_lambda_.4} parent=39 // pred_region
          _
        $region48: #{_lambda_.4} parent=39 // pred_fallthru
          _
      $region40: #{_lambda_.4} parent=5 // pred_fallthru
        _
      %p1368 = scmp.le.s32.totalorder 2, %s14
      // Predicated region
      $region49: #{_lambda_.4} parent=5 // pred_check
        %p1369 = pneg %p1368
      $region50: #{_lambda_.4} parent=5 // pred_check_branch
        %1371 = sbr.rel (%p1369) target = $region52
      $region51: #{_lambda_.4} parent=5 // pred_region
        %s1372 = ssub.s32 %s14, 2
        // Predicated region
        $region53: #{_lambda_.4} parent=51 // pred_check
          %p1373 = pneg %p153
        $region54: #{_lambda_.4} parent=51 // pred_check_branch
          %1375 = sbr.rel (%p1373) target = $region56
        $region55: #{_lambda_.4} parent=51 // pred_region
          %p1376 = scmp.lt.s32.totalorder %s20, 1
          %s1377 = scalar_select %p1376, %s20, 1
          %s1378 = smul.addr %s1377, 2
          %s1379 = smul.addr %s1378, 8
          %s1380 = scalar_lea.vmem %s5, %s1379
        $region56: #{_lambda_.4} parent=51 // pred_fallthru
          _
      $region52: #{_lambda_.4} parent=5 // pred_fallthru
        _
    $region6: #{_lambda_.4} parent=1 // loop_footer
      %s18 = sadd.s32 1, %s14
    $region7: #{_lambda_.4} parent=1 // loop_footer_branch
      %13 = sbr.rel target = $region3
    $region8: #{_lambda_.4} parent=1 // loop_exit
      _
    %1381 = vsyncpa [#allocation3], 1
    %s1382 = scalar_lea.sflag [#allocation3], 1
    %1383 = vsyncpa %s1382, 1

// kernel: _lambda_.6
$region0: #{_lambda_.6}
  #allocation0 [shape = 'u32[]', space=smem, size = 0x4, offset = 0x4, fixed_abs, tag = 'smem constant byte address 0x4 - core index']
  #allocation1 [shape = 'u32[144,128]{1,0:T(1,128)}', space=vmem, size = 0x12000, scoped, tag = 'internal scratch']
  %s0 = inlined_call_operand.vmem [shape: f32[2,16,32], index: 0, kind: input, shape index: {}]
  %s1 = inlined_call_operand.vmem [shape: f32[96,32], index: 1, kind: input, shape index: {}]
  %s2 = inlined_call_operand.vmem [shape: f32[1,96], index: 2, kind: input, shape index: {}]
  %s3 = inlined_call_operand.vmem [shape: f32[32,32], index: 3, kind: input, shape index: {}]
  %s4 = inlined_call_operand.vmem [shape: f32[1,32], index: 4, kind: input, shape index: {}]
  %s5 = inlined_call_operand.vmem [shape: f32[2,16,32], index: 5, kind: output, shape index: {}]
  %s6 = sld [smem:[#allocation0]]
  $region53: #{_lambda_.6} parent=0
    _
  %s8 = ssub.s32 1, %s6
  %s9 = scalar_select 0, %s8, %s6
  loop: start=0, step=1, limit=4
  $region2: #{_lambda_.6} parent=0 // loop_pre_header
    _
  $region3: #{_lambda_.6} parent=0 // loop_header
    %s11 = sphi 0, %s15
    %p12 = scmp.ge.s32.totalorder %s11, 4
    %s21 = sphi 0, %s23
    %s24 = sphi 0, %s21
    %s25 = sphi 0, %s24
    %s41 = sphi 0, %s25
    %s45 = sphi 0, %s45
    %s47 = sphi 0, %s45
    %s48 = sphi 0, %s47
    %s62 = sphi 0, %s48
    %s66 = sphi 0, %s66
    %s68 = sphi 0, %s66
    %s69 = sphi 0, %s68
    %s83 = sphi 0, %s69
    %s87 = sphi 0, %s87
    %s89 = sphi 0, %s87
    %s90 = sphi 0, %s89
    %s104 = sphi 0, %s90
    %s108 = sphi 0, %s108
    %s110 = sphi 0, %s108
    %s111 = sphi 0, %s110
    %s125 = sphi 0, %s111
    %s131 = sphi 0, %s133
    %s134 = sphi 0, %s131
    %s135 = sphi 0, %s134
    %s151 = sphi 0, %s135
  $region4: #{_lambda_.6} parent=0 // loop_header_branch
    %14 = sbr.rel (%p12) target = $region8
  $region5: #{_lambda_.6} parent=0 // loop_body
    %s16 = ssub.s32 %s11, 1
    %s17 = ssub.s32 %s11, 2
    %s18 = sadd.s32 %s11, 1
    %s19 = ssub.s32 %s11, %s18
    %p20 = scmp.eq.s32.totalorder %s19, 0
    %s22 = sadd.s32 %s21, 1
    %s23 = scalar_select %p20, %s21, %s22
    %p26 = pneg %p20
    %p27 = scmp.eq.s32.totalorder %s11, 1
    %p28 = por %p26, %p27
    %p29 = scmp.ne.s32.totalorder %s21, %s24
    %p30 = scmp.eq.s32.totalorder %s11, 0
    %p31 = por %p29, %p30
    %p32 = scmp.ne.s32.totalorder %s21, %s24
    %p33 = scmp.eq.s32.totalorder %s16, 1
    %p34 = por %p32, %p33
    %p35 = scmp.ne.s32.totalorder %s24, %s25
    %p36 = scmp.eq.s32.totalorder %s16, 0
    %p37 = por %p35, %p36
    %p38 = scmp.ne.s32.totalorder %s24, %s25
    %p39 = scmp.eq.s32.totalorder %s17, 1
    %p40 = por %p38, %p39
    %p42 = scmp.ne.s32.totalorder %s25, %s41
    %p43 = scmp.eq.s32.totalorder %s17, 0
    %p44 = por %p42, %p43
    %s46 = sadd.s32 %s45, 1
    %p49 = scmp.eq.s32.totalorder %s11, 1
    %p50 = scmp.ne.s32.totalorder %s45, %s47
    %p51 = scmp.eq.s32.totalorder %s11, 0
    %p52 = por %p50, %p51
    %p53 = scmp.ne.s32.totalorder %s45, %s47
    %p54 = scmp.eq.s32.totalorder %s16, 1
    %p55 = por %p53, %p54
    %p56 = scmp.ne.s32.totalorder %s47, %s48
    %p57 = scmp.eq.s32.totalorder %s16, 0
    %p58 = por %p56, %p57
    %p59 = scmp.ne.s32.totalorder %s47, %s48
    %p60 = scmp.eq.s32.totalorder %s17, 1
    %p61 = por %p59, %p60
    %p63 = scmp.ne.s32.totalorder %s48, %s62
    %p64 = scmp.eq.s32.totalorder %s17, 0
    %p65 = por %p63, %p64
    %s67 = sadd.s32 %s66, 1
    %p70 = scmp.eq.s32.totalorder %s11, 1
    %p71 = scmp.ne.s32.totalorder %s66, %s68
    %p72 = scmp.eq.s32.totalorder %s11, 0
    %p73 = por %p71, %p72
    %p74 = scmp.ne.s32.totalorder %s66, %s68
    %p75 = scmp.eq.s32.totalorder %s16, 1
    %p76 = por %p74, %p75
    %p77 = scmp.ne.s32.totalorder %s68, %s69
    %p78 = scmp.eq.s32.totalorder %s16, 0
    %p79 = por %p77, %p78
    %p80 = scmp.ne.s32.totalorder %s68, %s69
    %p81 = scmp.eq.s32.totalorder %s17, 1
    %p82 = por %p80, %p81
    %p84 = scmp.ne.s32.totalorder %s69, %s83
    %p85 = scmp.eq.s32.totalorder %s17, 0
    %p86 = por %p84, %p85
    %s88 = sadd.s32 %s87, 1
    %p91 = scmp.eq.s32.totalorder %s11, 1
    %p92 = scmp.ne.s32.totalorder %s87, %s89
    %p93 = scmp.eq.s32.totalorder %s11, 0
    %p94 = por %p92, %p93
    %p95 = scmp.ne.s32.totalorder %s87, %s89
    %p96 = scmp.eq.s32.totalorder %s16, 1
    %p97 = por %p95, %p96
    %p98 = scmp.ne.s32.totalorder %s89, %s90
    %p99 = scmp.eq.s32.totalorder %s16, 0
    %p100 = por %p98, %p99
    %p101 = scmp.ne.s32.totalorder %s89, %s90
    %p102 = scmp.eq.s32.totalorder %s17, 1
    %p103 = por %p101, %p102
    %p105 = scmp.ne.s32.totalorder %s90, %s104
    %p106 = scmp.eq.s32.totalorder %s17, 0
    %p107 = por %p105, %p106
    %s109 = sadd.s32 %s108, 1
    %p112 = scmp.eq.s32.totalorder %s11, 1
    %p113 = scmp.ne.s32.totalorder %s108, %s110
    %p114 = scmp.eq.s32.totalorder %s11, 0
    %p115 = por %p113, %p114
    %p116 = scmp.ne.s32.totalorder %s108, %s110
    %p117 = scmp.eq.s32.totalorder %s16, 1
    %p118 = por %p116, %p117
    %p119 = scmp.ne.s32.totalorder %s110, %s111
    %p120 = scmp.eq.s32.totalorder %s16, 0
    %p121 = por %p119, %p120
    %p122 = scmp.ne.s32.totalorder %s110, %s111
    %p123 = scmp.eq.s32.totalorder %s17, 1
    %p124 = por %p122, %p123
    %p126 = scmp.ne.s32.totalorder %s111, %s125
    %p127 = scmp.eq.s32.totalorder %s17, 0
    %p128 = por %p126, %p127
    %s129 = ssub.s32 %s11, %s18
    %p130 = scmp.eq.s32.totalorder %s129, 0
    %s132 = sadd.s32 %s131, 1
    %s133 = scalar_select %p130, %s131, %s132
    %p136 = pneg %p130
    %p137 = scmp.eq.s32.totalorder %s11, 1
    %p138 = por %p136, %p137
    %p139 = scmp.ne.s32.totalorder %s131, %s134
    %p140 = scmp.eq.s32.totalorder %s11, 0
    %p141 = por %p139, %p140
    %p142 = scmp.ne.s32.totalorder %s131, %s134
    %p143 = scmp.eq.s32.totalorder %s16, 1
    %p144 = por %p142, %p143
    %p145 = scmp.ne.s32.totalorder %s134, %s135
    %p146 = scmp.eq.s32.totalorder %s16, 0
    %p147 = por %p145, %p146
    %p148 = scmp.ne.s32.totalorder %s134, %s135
    %p149 = scmp.eq.s32.totalorder %s17, 1
    %p150 = por %p148, %p149
    %p152 = scmp.ne.s32.totalorder %s135, %s151
    %p153 = scmp.eq.s32.totalorder %s17, 0
    %p154 = por %p152, %p153
    %p155 = scmp.le.s32.totalorder 1, %s11
    %p156 = scmp.lt.s32.totalorder %s11, 3
    %p157 = pnand %p155, %p156
    %p158 = pneg %p157
    // Predicated region
    $region9: #{_lambda_.6} parent=5 // pred_check
      _
    $region10: #{_lambda_.6} parent=5 // pred_check_branch
      %160 = sbr.rel (%p157) target = $region12
    $region11: #{_lambda_.6} parent=5 // pred_region
      %s161 = ssub.s32 %s11, 1
      // Predicated region
      $region13: #{_lambda_.6} parent=11 // pred_check
        %p162 = pneg %p58
      $region14: #{_lambda_.6} parent=11 // pred_check_branch
        %164 = sbr.rel (%p162) target = $region16
      $region15: #{_lambda_.6} parent=11 // pred_region
        _
      $region16: #{_lambda_.6} parent=11 // pred_fallthru
        _
      // Predicated region
      $region17: #{_lambda_.6} parent=11 // pred_check
        %p165 = pneg %p79
      $region18: #{_lambda_.6} parent=11 // pred_check_branch
        %167 = sbr.rel (%p165) target = $region20
      $region19: #{_lambda_.6} parent=11 // pred_region
        _
      $region20: #{_lambda_.6} parent=11 // pred_fallthru
        _
      // Predicated region
      $region21: #{_lambda_.6} parent=11 // pred_check
        %p168 = pneg %p100
      $region22: #{_lambda_.6} parent=11 // pred_check_branch
        %170 = sbr.rel (%p168) target = $region24
      $region23: #{_lambda_.6} parent=11 // pred_region
        _
      $region24: #{_lambda_.6} parent=11 // pred_fallthru
        _
      // Predicated region
      $region25: #{_lambda_.6} parent=11 // pred_check
        %p171 = pneg %p121
      $region26: #{_lambda_.6} parent=11 // pred_check_branch
        %173 = sbr.rel (%p171) target = $region28
      $region27: #{_lambda_.6} parent=11 // pred_region
        _
      $region28: #{_lambda_.6} parent=11 // pred_fallthru
        _
    $region12: #{_lambda_.6} parent=5 // pred_fallthru
      _
    %p174 = scmp.lt.s32.totalorder %s11, 2
    // Predicated region
    $region29: #{_lambda_.6} parent=5 // pred_check
      %p175 = pneg %p174
    $region30: #{_lambda_.6} parent=5 // pred_check_branch
      %177 = sbr.rel (%p175) target = $region32
    $region31: #{_lambda_.6} parent=5 // pred_region
      // Predicated region
      $region33: #{_lambda_.6} parent=31 // pred_check
        %p178 = pneg %p31
      $region34: #{_lambda_.6} parent=31 // pred_check_branch
        %180 = sbr.rel (%p178) target = $region36
      $region35: #{_lambda_.6} parent=31 // pred_region
        %p181 = scmp.lt.s32.totalorder %s11, 1
        %s182 = scalar_select %p181, %s11, 1
        %s183 = smul.addr %s182, 2
        %s184 = smul.addr %s183, 8
        %s185 = scalar_lea.vmem %s0, %s184
      $region36: #{_lambda_.6} parent=31 // pred_fallthru
        _
    $region32: #{_lambda_.6} parent=5 // pred_fallthru
      _
    %p186 = scmp.le.s32.totalorder 1, %s11
    %p187 = scmp.lt.s32.totalorder %s11, 3
    %p188 = pnand %p186, %p187
    %p189 = pneg %p188
    // Predicated region
    $region37: #{_lambda_.6} parent=5 // pred_check
      _
    $region38: #{_lambda_.6} parent=5 // pred_check_branch
      %191 = sbr.rel (%p188) target = $region40
    $region39: #{_lambda_.6} parent=5 // pred_region
      %s192 = ssub.s32 %s11, 1
      %p193 = scmp.lt.s32.totalorder %s16, 1
      %s194 = scalar_select %p193, %s16, 1
      %s195 = smul.addr %s194, 2
      %s196 = smul.addr %s195, 8
      %s197 = scalar_lea.vmem %s0, %s196
      %p198 = pneg %p37
      %p199 = pneg %p34
      %p200 = pneg %p58
      %p201 = pneg %p55
      %p202 = pneg %p79
      %p203 = pneg %p76
      %p204 = pneg %p100
      %p205 = pneg %p97
      %p206 = pneg %p121
      %p207 = pneg %p118
      %p208 = pneg %p147
      %p209 = pneg %p144
      %p210 = scmp.lt.s32.totalorder %s16, 1
      %s211 = scalar_select %p210, %s16, 1
      %s212 = smul.addr %s211, 2
      %s213 = smul.addr %s212, 8
      %s214 = scalar_lea.vmem %s5, %s213
      %p215 = scmp.lt.s32.totalorder %s16, 1
      %s216 = scalar_select %p215, %s16, 1
      %s217 = smul.addr %s216, 2
      %s218 = smul.addr %s217, 8
      %s219 = scalar_lea.vmem %s0, %s218
      %p220 = scmp.lt.s32.totalorder %s16, 1
      %s221 = scalar_select %p220, %s16, 1
      %s222 = smul.addr %s221, 2
      %s223 = smul.addr %s222, 8
      %s224 = scalar_lea.vmem %s5, %s223
      %v225 = vld [vmem:[%s219] sm:$0xff]
      %v226 = vld [vmem:[%s219 + $0x8] sm:$0xff]
      %v227 = vld [vmem:[%s1] sm:$0xff]
      %v228 = vld [vmem:[%s1 + $0x8] sm:$0xff]
      %v229 = vld [vmem:[%s1 + $0x10] sm:$0xff]
      %v230 = vld [vmem:[%s1 + $0x18] sm:$0xff]
      %v231 = vld [vmem:[%s1 + $0x20] sm:$0xff]
      %v232 = vld [vmem:[%s1 + $0x28] sm:$0xff]
      %v233 = vld [vmem:[%s1 + $0x30] sm:$0xff]
      %v234 = vld [vmem:[%s1 + $0x38] sm:$0xff]
      %v235 = vld [vmem:[%s1 + $0x40] sm:$0xff]
      %v236 = vld [vmem:[%s1 + $0x48] sm:$0xff]
      %v237 = vld [vmem:[%s1 + $0x50] sm:$0xff]
      %v238 = vld [vmem:[%s1 + $0x58] sm:$0xff]
      %v239 = vld [vmem:[%s2] sm:$0x1]
      %v241 = vlaneseq
      %v242 = vshrl.u32 %v241, 7
      %v243 = vsub.s32 0, %v242
      %v244 = vrot.slane %v239, %v243
      %vm246 = vcmask 261120
      %v248 = vsel %vm246, %v225, 0
      %v251 = vsel %vm246, %v226, 0
      %v254 = vsel %vm246, %v227, 0
      %v257 = vsel %vm246, %v228, 0
      %v260 = vsel %vm246, %v229, 0
      %v263 = vsel %vm246, %v230, 0
      %v266 = vsel %vm246, %v231, 0
      %v269 = vsel %vm246, %v232, 0
      %v272 = vsel %vm246, %v233, 0
      %v275 = vsel %vm246, %v234, 0
      %v278 = vsel %vm246, %v235, 0
      %v281 = vsel %vm246, %v236, 0
      %v284 = vsel %vm246, %v237, 0
      %v287 = vsel %vm246, %v238, 0
      %289 = vmatprep.subr.mxu0 0.0
      %290 = vmatpush1.xpose.msra.mxu0 0.0
      %291 = vmatprep.subr.mxu0 0.0
      %292 = vmatpush1.xpose.msra.mxu0 0.0
      %293 = vmatprep.subr.mxu0 0.0
      %294 = vmatpush1.xpose.msra.mxu0 0.0
      %295 = vmatprep.subr.mxu0 0.0
      %296 = vmatpush1.xpose.msra.mxu0 0.0
      %297 = vmatprep.subr.mxu0 0.0
      %298 = vmatpush1.xpose.msra.mxu0 %v287
      %299 = vmatprep.subr.mxu0 0.0
      %300 = vmatpush1.xpose.msra.mxu0 %v284
      %301 = vmatprep.subr.mxu0 0.0
      %302 = vmatpush1.xpose.msra.mxu0 %v281
      %303 = vmatprep.subr.mxu0 0.0
      %304 = vmatpush1.xpose.msra.mxu0 %v278
      %305 = vmatprep.subr.mxu0 0.0
      %306 = vmatpush1.xpose.msra.mxu0 %v275
      %307 = vmatprep.subr.mxu0 0.0
      %308 = vmatpush1.xpose.msra.mxu0 %v272
      %309 = vmatprep.subr.mxu0 0.0
      %310 = vmatpush1.xpose.msra.mxu0 %v269
      %311 = vmatprep.subr.mxu0 0.0
      %312 = vmatpush1.xpose.msra.mxu0 %v266
      %313 = vmatprep.subr.mxu0 0.0
      %314 = vmatpush1.xpose.msra.mxu0 %v263
      %315 = vmatprep.subr.mxu0 0.0
      %316 = vmatpush1.xpose.msra.mxu0 %v260
      %317 = vmatprep.subr.mxu0 0.0
      %318 = vmatpush1.xpose.msra.mxu0 %v257
      %319 = vmatprep.subr.mxu0 0.0
      %320 = vmatpush1.xpose.msra.mxu0 %v254
      %321 = vmatprep.subr.mxu0 0.0
      %322 = vmatpush2.xpose.msra.mxu0 0.0
      %323 = vmatprep.subr.mxu0 0.0
      %324 = vmatpush2.xpose.msra.mxu0 0.0
      %325 = vmatprep.subr.mxu0 0.0
      %326 = vmatpush2.xpose.msra.mxu0 0.0
      %327 = vmatprep.subr.mxu0 0.0
      %328 = vmatpush2.xpose.msra.mxu0 0.0
      %329 = vmatprep.subr.mxu0 0.0
      %330 = vmatpush2.xpose.msra.mxu0 0.0
      %331 = vmatprep.subr.mxu0 0.0
      %332 = vmatpush2.xpose.msra.mxu0 0.0
      %333 = vmatprep.subr.mxu0 0.0
      %334 = vmatpush2.xpose.msra.mxu0 0.0
      %335 = vmatprep.subr.mxu0 0.0
      %336 = vmatpush2.xpose.msra.mxu0 0.0
      %337 = vmatprep.subr.mxu0 0.0
      %338 = vmatpush2.xpose.msra.mxu0 0.0
      %339 = vmatprep.subr.mxu0 0.0
      %340 = vmatpush2.xpose.msra.mxu0 0.0
      %341 = vmatprep.subr.mxu0 0.0
      %342 = vmatpush2.xpose.msra.mxu0 0.0
      %343 = vmatprep.subr.mxu0 0.0
      %344 = vmatpush2.xpose.msra.mxu0 0.0
      %345 = vmatprep.subr.mxu0 0.0
      %346 = vmatpush2.xpose.msra.mxu0 0.0
      %347 = vmatprep.subr.mxu0 0.0
      %348 = vmatpush2.xpose.msra.mxu0 0.0
      %349 = vmatprep.subr.mxu0 0.0
      %350 = vmatpush2.xpose.msra.mxu0 0.0
      %351 = vmatprep.subr.mxu0 0.0
      %352 = vmatpush2.xpose.msra.mxu0 0.0
      %353 = vmatprep.mubr.f32.mxu0 0.0
      %354 = vmatmul.mubr.f32.gmra.mxu0 %v248
      %v355 = vpop.f32.mrf.mxu0
      %v356 = vadd.f32 %v244, %v355
      %v357 = vpop.f32.mrf.mxu0
      %358 = vmatprep.mubr.f32.mxu0 0.0
      %359 = vmatmul.mubr.f32.gmra.mxu0 %v251
      %v360 = vpop.f32.mrf.mxu0
      %v361 = vadd.f32 %v244, %v360
      %v362 = vpop.f32.mrf.mxu0
      %363 = vdwg.mxu0
      %v364 = vlaneseq
      %v365 = vshrl.u32 %v364, 7
      %v366 = vadd.s32 %v365, 8
      %v367 = vlaneseq
      %v368 = vand.u32 %v367, 127
      %v369 = vsub.s32 %v365, %v368
      %v370 = vsub.s32 %v366, %v368
      %vm371 = vcmp.lt.s32.totalorder %v369, 0
      %v372 = vsub.s32 0, %v369
      %v373 = vsel %vm371, %v372, %v369
      %vm374 = vcmp.lt.s32.totalorder %v370, 0
      %v375 = vsub.s32 0, %v370
      %v376 = vsel %vm374, %v375, %v370
      %v377 = vcvt.s32.f32 %v373
      %v378 = vcvt.s32.f32 %v376
      %381 = vrot.lane.b32.xlu0 %v356, 96
      %v382 = vpop.permute.xlu0 %381
      %383 = vrot.lane.b32.xlu0 %v361, 96
      %v384 = vpop.permute.xlu0 %383
      %vm385 = vcmask 64512
      %v386 = vsel %vm385, %v356, 0
      %v388 = vsel %vm385, %v361, 0
      %v390 = vsel %vm385, %v382, 0
      %v392 = vsel %vm385, %v384, 0
      %394 = vmatprep.subr.mxu0 0.0
      %395 = vmatpush1.xpose.msra.mxu0 0.0
      %396 = vmatprep.subr.mxu0 0.0
      %397 = vmatpush1.xpose.msra.mxu0 0.0
      %398 = vmatprep.subr.mxu0 0.0
      %399 = vmatpush1.xpose.msra.mxu0 0.0
      %400 = vmatprep.subr.mxu0 0.0
      %401 = vmatpush1.xpose.msra.mxu0 0.0
      %402 = vmatprep.subr.mxu0 0.0
      %403 = vmatpush1.xpose.msra.mxu0 0.0
      %404 = vmatprep.subr.mxu0 0.0
      %405 = vmatpush1.xpose.msra.mxu0 0.0
      %406 = vmatprep.subr.mxu0 0.0
      %407 = vmatpush1.xpose.msra.mxu0 0.0
      %408 = vmatprep.subr.mxu0 0.0
      %409 = vmatpush1.xpose.msra.mxu0 0.0
      %410 = vmatprep.subr.mxu0 0.0
      %411 = vmatpush1.xpose.msra.mxu0 0.0
      %412 = vmatprep.subr.mxu0 0.0
      %413 = vmatpush1.xpose.msra.mxu0 0.0
      %414 = vmatprep.subr.mxu0 0.0
      %415 = vmatpush1.xpose.msra.mxu0 0.0
      %416 = vmatprep.subr.mxu0 0.0
      %417 = vmatpush1.xpose.msra.mxu0 0.0
      %418 = vmatprep.subr.mxu0 0.0
      %419 = vmatpush1.xpose.msra.mxu0 0.0
      %420 = vmatprep.subr.mxu0 0.0
      %421 = vmatpush1.xpose.msra.mxu0 0.0
      %422 = vmatprep.subr.mxu0 0.0
      %423 = vmatpush1.xpose.msra.mxu0 %v392
      %424 = vmatprep.subr.mxu0 0.0
      %425 = vmatpush1.xpose.msra.mxu0 %v390
      %426 = vmatprep.subr.mxu0 0.0
      %427 = vmatpush2.xpose.msra.mxu0 0.0
      %428 = vmatprep.subr.mxu0 0.0
      %429 = vmatpush2.xpose.msra.mxu0 0.0
      %430 = vmatprep.subr.mxu0 0.0
      %431 = vmatpush2.xpose.msra.mxu0 0.0
      %432 = vmatprep.subr.mxu0 0.0
      %433 = vmatpush2.xpose.msra.mxu0 0.0
      %434 = vmatprep.subr.mxu0 0.0
      %435 = vmatpush2.xpose.msra.mxu0 0.0
      %436 = vmatprep.subr.mxu0 0.0
      %437 = vmatpush2.xpose.msra.mxu0 0.0
      %438 = vmatprep.subr.mxu0 0.0
      %439 = vmatpush2.xpose.msra.mxu0 0.0
      %440 = vmatprep.subr.mxu0 0.0
      %441 = vmatpush2.xpose.msra.mxu0 0.0
      %442 = vmatprep.subr.mxu0 0.0
      %443 = vmatpush2.xpose.msra.mxu0 0.0
      %444 = vmatprep.subr.mxu0 0.0
      %445 = vmatpush2.xpose.msra.mxu0 0.0
      %446 = vmatprep.subr.mxu0 0.0
      %447 = vmatpush2.xpose.msra.mxu0 0.0
      %448 = vmatprep.subr.mxu0 0.0
      %449 = vmatpush2.xpose.msra.mxu0 0.0
      %450 = vmatprep.subr.mxu0 0.0
      %451 = vmatpush2.xpose.msra.mxu0 0.0
      %452 = vmatprep.subr.mxu0 0.0
      %453 = vmatpush2.xpose.msra.mxu0 0.0
      %454 = vmatprep.subr.mxu0 0.0
      %455 = vmatpush2.xpose.msra.mxu0 0.0
      %456 = vmatprep.subr.mxu0 0.0
      %457 = vmatpush2.xpose.msra.mxu0 0.0
      %458 = vmatprep.mubr.f32.mxu0 0.0
      %459 = vmatmul.mubr.f32.gmra.mxu0 %v386
      %v460 = vpop.f32.mrf.mxu0
      %v461 = vadd.f32 0.0, %v460
      %v462 = vpop.f32.mrf.mxu0
      %463 = vmatprep.mubr.f32.mxu0 0.0
      %464 = vmatmul.mubr.f32.gmra.mxu0 %v388
      %v465 = vpop.f32.mrf.mxu0
      %v466 = vadd.f32 0.0, %v465
      %v467 = vpop.f32.mrf.mxu0
      %468 = vdwg.mxu0
      %v469 = vmul.f32 %v377, 0.25
      %v470 = vmul.f32 %v378, 0.25
      %v471 = vsub.f32 %v461, %v469
      %v472 = vsub.f32 %v466, %v470
      %v473 = vmul.f32 %v471, 0.35355338
      %v474 = vmul.f32 %v472, 0.35355338
      %vm475 = vcmask 130048
      %v476 = vsel %vm475, %v473, -inf
      %477 = vmax.xlane.f32.xlu0 %v476
      %v478 = vpop.xlane.xlu0 %477
      %v479 = vsel %vm475, %v474, -inf
      %480 = vmax.xlane.f32.xlu0 %v479
      %v481 = vpop.xlane.xlu0 %480
      %v482 = vsub.f32 %v473, %v478
      %v483 = vsub.f32 %v474, %v481
      %v484 = vmul.f32 %v482, 1.442695
      %v485 = vpow.pop %v484
      %v486 = vmul.f32 %v483, 1.442695
      %v487 = vpow.pop %v486
      %v488 = vsel %vm475, %v485, 0.0
      %489 = vadd.xlane.f32.xlu0 %v488
      %v490 = vpop.xlane.xlu0 %489
      %v491 = vsel %vm475, %v487, 0.0
      %492 = vadd.xlane.f32.xlu0 %v491
      %v493 = vpop.xlane.xlu0 %492
      %v494 = vrcp.pop %v490
      %v495 = vrcp.pop %v493
      %v496 = vmul.f32 %v485, %v494
      %v497 = vmul.f32 %v487, %v495
      %498 = vrot.lane.b32.xlu0 %v356, 64
      %v499 = vpop.permute.xlu0 %498
      %500 = vrot.lane.b32.xlu0 %v361, 64
      %v501 = vpop.permute.xlu0 %500
      %v505 = vsel %vm475, %v496, 0
      %v508 = vsel %vm475, %v497, 0
      %510 = vmatprep.subr.mxu0 0.0
      %511 = vmatpush1.msra.mxu0 0.0
      %512 = vmatprep.subr.mxu0 0.0
      %513 = vmatpush1.msra.mxu0 0.0
      %514 = vmatprep.subr.mxu0 0.0
      %515 = vmatpush1.msra.mxu0 0.0
      %516 = vmatprep.subr.mxu0 0.0
      %517 = vmatpush1.msra.mxu0 0.0
      %518 = vmatprep.subr.mxu0 0.0
      %519 = vmatpush1.msra.mxu0 0.0
      %520 = vmatprep.subr.mxu0 0.0
      %521 = vmatpush1.msra.mxu0 0.0
      %522 = vmatprep.subr.mxu0 0.0
      %523 = vmatpush1.msra.mxu0 0.0
      %524 = vmatprep.subr.mxu0 0.0
      %525 = vmatpush1.msra.mxu0 0.0
      %526 = vmatprep.subr.mxu0 0.0
      %527 = vmatpush1.msra.mxu0 0.0
      %528 = vmatprep.subr.mxu0 0.0
      %529 = vmatpush1.msra.mxu0 0.0
      %530 = vmatprep.subr.mxu0 0.0
      %531 = vmatpush1.msra.mxu0 0.0
      %532 = vmatprep.subr.mxu0 0.0
      %533 = vmatpush1.msra.mxu0 0.0
      %534 = vmatprep.subr.mxu0 0.0
      %535 = vmatpush1.msra.mxu0 0.0
      %536 = vmatprep.subr.mxu0 0.0
      %537 = vmatpush1.msra.mxu0 0.0
      %538 = vmatprep.subr.mxu0 0.0
      %539 = vmatpush1.msra.mxu0 %v501
      %540 = vmatprep.subr.mxu0 0.0
      %541 = vmatpush1.msra.mxu0 %v499
      %542 = vmatprep.subr.mxu0 0.0
      %543 = vmatpush2.msra.mxu0 0.0
      %544 = vmatprep.subr.mxu0 0.0
      %545 = vmatpush2.msra.mxu0 0.0
      %546 = vmatprep.subr.mxu0 0.0
      %547 = vmatpush2.msra.mxu0 0.0
      %548 = vmatprep.subr.mxu0 0.0
      %549 = vmatpush2.msra.mxu0 0.0
      %550 = vmatprep.subr.mxu0 0.0
      %551 = vmatpush2.msra.mxu0 0.0
      %552 = vmatprep.subr.mxu0 0.0
      %553 = vmatpush2.msra.mxu0 0.0
      %554 = vmatprep.subr.mxu0 0.0
      %555 = vmatpush2.msra.mxu0 0.0
      %556 = vmatprep.subr.mxu0 0.0
      %557 = vmatpush2.msra.mxu0 0.0
      %558 = vmatprep.subr.mxu0 0.0
      %559 = vmatpush2.msra.mxu0 0.0
      %560 = vmatprep.subr.mxu0 0.0
      %561 = vmatpush2.msra.mxu0 0.0
      %562 = vmatprep.subr.mxu0 0.0
      %563 = vmatpush2.msra.mxu0 0.0
      %564 = vmatprep.subr.mxu0 0.0
      %565 = vmatpush2.msra.mxu0 0.0
      %566 = vmatprep.subr.mxu0 0.0
      %567 = vmatpush2.msra.mxu0 0.0
      %568 = vmatprep.subr.mxu0 0.0
      %569 = vmatpush2.msra.mxu0 0.0
      %570 = vmatprep.subr.mxu0 0.0
      %571 = vmatpush2.msra.mxu0 0.0
      %572 = vmatprep.subr.mxu0 0.0
      %573 = vmatpush2.msra.mxu0 0.0
      %574 = vmatprep.mubr.f32.mxu0 0.0
      %575 = vmatmul.mubr.f32.gmra.mxu0 %v505
      %v576 = vpop.f32.mrf.mxu0
      %v577 = vadd.f32 0.0, %v576
      %v578 = vpop.f32.mrf.mxu0
      %579 = vmatprep.mubr.f32.mxu0 0.0
      %580 = vmatmul.mubr.f32.gmra.mxu0 %v508
      %v581 = vpop.f32.mrf.mxu0
      %v582 = vadd.f32 0.0, %v581
      %v583 = vpop.f32.mrf.mxu0
      %584 = vdwg.mxu0
      %585 = vrot.lane.b32.xlu0 %v356, 120
      %v586 = vpop.permute.xlu0 %585
      %587 = vrot.lane.b32.xlu0 %v361, 120
      %v588 = vpop.permute.xlu0 %587
      %589 = vrot.lane.b32.xlu0 %v356, 88
      %v590 = vpop.permute.xlu0 %589
      %591 = vrot.lane.b32.xlu0 %v361, 88
      %v592 = vpop.permute.xlu0 %591
      %v593 = vsel %vm385, %v586, 0
      %v595 = vsel %vm385, %v588, 0
      %v597 = vsel %vm385, %v590, 0
      %v599 = vsel %vm385, %v592, 0
      %601 = vmatprep.subr.mxu0 0.0
      %602 = vmatpush1.xpose.msra.mxu0 0.0
      %603 = vmatprep.subr.mxu0 0.0
      %604 = vmatpush1.xpose.msra.mxu0 0.0
      %605 = vmatprep.subr.mxu0 0.0
      %606 = vmatpush1.xpose.msra.mxu0 0.0
      %607 = vmatprep.subr.mxu0 0.0
      %608 = vmatpush1.xpose.msra.mxu0 0.0
      %609 = vmatprep.subr.mxu0 0.0
      %610 = vmatpush1.xpose.msra.mxu0 0.0
      %611 = vmatprep.subr.mxu0 0.0
      %612 = vmatpush1.xpose.msra.mxu0 0.0
      %613 = vmatprep.subr.mxu0 0.0
      %614 = vmatpush1.xpose.msra.mxu0 0.0
      %615 = vmatprep.subr.mxu0 0.0
      %616 = vmatpush1.xpose.msra.mxu0 0.0
      %617 = vmatprep.subr.mxu0 0.0
      %618 = vmatpush1.xpose.msra.mxu0 0.0
      %619 = vmatprep.subr.mxu0 0.0
      %620 = vmatpush1.xpose.msra.mxu0 0.0
      %621 = vmatprep.subr.mxu0 0.0
      %622 = vmatpush1.xpose.msra.mxu0 0.0
      %623 = vmatprep.subr.mxu0 0.0
      %624 = vmatpush1.xpose.msra.mxu0 0.0
      %625 = vmatprep.subr.mxu0 0.0
      %626 = vmatpush1.xpose.msra.mxu0 0.0
      %627 = vmatprep.subr.mxu0 0.0
      %628 = vmatpush1.xpose.msra.mxu0 0.0
      %629 = vmatprep.subr.mxu0 0.0
      %630 = vmatpush1.xpose.msra.mxu0 %v599
      %631 = vmatprep.subr.mxu0 0.0
      %632 = vmatpush1.xpose.msra.mxu0 %v597
      %633 = vmatprep.subr.mxu0 0.0
      %634 = vmatpush2.xpose.msra.mxu0 0.0
      %635 = vmatprep.subr.mxu0 0.0
      %636 = vmatpush2.xpose.msra.mxu0 0.0
      %637 = vmatprep.subr.mxu0 0.0
      %638 = vmatpush2.xpose.msra.mxu0 0.0
      %639 = vmatprep.subr.mxu0 0.0
      %640 = vmatpush2.xpose.msra.mxu0 0.0
      %641 = vmatprep.subr.mxu0 0.0
      %642 = vmatpush2.xpose.msra.mxu0 0.0
      %643 = vmatprep.subr.mxu0 0.0
      %644 = vmatpush2.xpose.msra.mxu0 0.0
      %645 = vmatprep.subr.mxu0 0.0
      %646 = vmatpush2.xpose.msra.mxu0 0.0
      %647 = vmatprep.subr.mxu0 0.0
      %648 = vmatpush2.xpose.msra.mxu0 0.0
      %649 = vmatprep.subr.mxu0 0.0
      %650 = vmatpush2.xpose.msra.mxu0 0.0
      %651 = vmatprep.subr.mxu0 0.0
      %652 = vmatpush2.xpose.msra.mxu0 0.0
      %653 = vmatprep.subr.mxu0 0.0
      %654 = vmatpush2.xpose.msra.mxu0 0.0
      %655 = vmatprep.subr.mxu0 0.0
      %656 = vmatpush2.xpose.msra.mxu0 0.0
      %657 = vmatprep.subr.mxu0 0.0
      %658 = vmatpush2.xpose.msra.mxu0 0.0
      %659 = vmatprep.subr.mxu0 0.0
      %660 = vmatpush2.xpose.msra.mxu0 0.0
      %661 = vmatprep.subr.mxu0 0.0
      %662 = vmatpush2.xpose.msra.mxu0 0.0
      %663 = vmatprep.subr.mxu0 0.0
      %664 = vmatpush2.xpose.msra.mxu0 0.0
      %665 = vmatprep.mubr.f32.mxu0 0.0
      %666 = vmatmul.mubr.f32.gmra.mxu0 %v593
      %v667 = vpop.f32.mrf.mxu0
      %v668 = vadd.f32 0.0, %v667
      %v669 = vpop.f32.mrf.mxu0
      %670 = vmatprep.mubr.f32.mxu0 0.0
      %671 = vmatmul.mubr.f32.gmra.mxu0 %v595
      %v672 = vpop.f32.mrf.mxu0
      %v673 = vadd.f32 0.0, %v672
      %v674 = vpop.f32.mrf.mxu0
      %675 = vdwg.mxu0
      %v676 = vmul.f32 %v377, 0.0625
      %v677 = vmul.f32 %v378, 0.0625
      %v678 = vsub.f32 %v668, %v676
      %v679 = vsub.f32 %v673, %v677
      %v680 = vmul.f32 %v678, 0.35355338
      %v681 = vmul.f32 %v679, 0.35355338
      %v682 = vsel %vm475, %v680, -inf
      %683 = vmax.xlane.f32.xlu0 %v682
      %v684 = vpop.xlane.xlu0 %683
      %v685 = vsel %vm475, %v681, -inf
      %686 = vmax.xlane.f32.xlu0 %v685
      %v687 = vpop.xlane.xlu0 %686
      %v688 = vsub.f32 %v680, %v684
      %v689 = vsub.f32 %v681, %v687
      %v690 = vmul.f32 %v688, 1.442695
      %v691 = vpow.pop %v690
      %v692 = vmul.f32 %v689, 1.442695
      %v693 = vpow.pop %v692
      %v694 = vsel %vm475, %v691, 0.0
      %695 = vadd.xlane.f32.xlu0 %v694
      %v696 = vpop.xlane.xlu0 %695
      %v697 = vsel %vm475, %v693, 0.0
      %698 = vadd.xlane.f32.xlu0 %v697
      %v699 = vpop.xlane.xlu0 %698
      %v700 = vrcp.pop %v696
      %v701 = vrcp.pop %v699
      %v702 = vmul.f32 %v691, %v700
      %v703 = vmul.f32 %v693, %v701
      %704 = vrot.lane.b32.xlu0 %v356, 56
      %v705 = vpop.permute.xlu0 %704
      %706 = vrot.lane.b32.xlu0 %v361, 56
      %v707 = vpop.permute.xlu0 %706
      %v711 = vsel %vm475, %v702, 0
      %v714 = vsel %vm475, %v703, 0
      %716 = vmatprep.subr.mxu0 0.0
      %717 = vmatpush1.msra.mxu0 0.0
      %718 = vmatprep.subr.mxu0 0.0
      %719 = vmatpush1.msra.mxu0 0.0
      %720 = vmatprep.subr.mxu0 0.0
      %721 = vmatpush1.msra.mxu0 0.0
      %722 = vmatprep.subr.mxu0 0.0
      %723 = vmatpush1.msra.mxu0 0.0
      %724 = vmatprep.subr.mxu0 0.0
      %725 = vmatpush1.msra.mxu0 0.0
      %726 = vmatprep.subr.mxu0 0.0
      %727 = vmatpush1.msra.mxu0 0.0
      %728 = vmatprep.subr.mxu0 0.0
      %729 = vmatpush1.msra.mxu0 0.0
      %730 = vmatprep.subr.mxu0 0.0
      %731 = vmatpush1.msra.mxu0 0.0
      %732 = vmatprep.subr.mxu0 0.0
      %733 = vmatpush1.msra.mxu0 0.0
      %734 = vmatprep.subr.mxu0 0.0
      %735 = vmatpush1.msra.mxu0 0.0
      %736 = vmatprep.subr.mxu0 0.0
      %737 = vmatpush1.msra.mxu0 0.0
      %738 = vmatprep.subr.mxu0 0.0
      %739 = vmatpush1.msra.mxu0 0.0
      %740 = vmatprep.subr.mxu0 0.0
      %741 = vmatpush1.msra.mxu0 0.0
      %742 = vmatprep.subr.mxu0 0.0
      %743 = vmatpush1.msra.mxu0 0.0
      %744 = vmatprep.subr.mxu0 0.0
      %745 = vmatpush1.msra.mxu0 %v707
      %746 = vmatprep.subr.mxu0 0.0
      %747 = vmatpush1.msra.mxu0 %v705
      %748 = vmatprep.subr.mxu0 0.0
      %749 = vmatpush2.msra.mxu0 0.0
      %750 = vmatprep.subr.mxu0 0.0
      %751 = vmatpush2.msra.mxu0 0.0
      %752 = vmatprep.subr.mxu0 0.0
      %753 = vmatpush2.msra.mxu0 0.0
      %754 = vmatprep.subr.mxu0 0.0
      %755 = vmatpush2.msra.mxu0 0.0
      %756 = vmatprep.subr.mxu0 0.0
      %757 = vmatpush2.msra.mxu0 0.0
      %758 = vmatprep.subr.mxu0 0.0
      %759 = vmatpush2.msra.mxu0 0.0
      %760 = vmatprep.subr.mxu0 0.0
      %761 = vmatpush2.msra.mxu0 0.0
      %762 = vmatprep.subr.mxu0 0.0
      %763 = vmatpush2.msra.mxu0 0.0
      %764 = vmatprep.subr.mxu0 0.0
      %765 = vmatpush2.msra.mxu0 0.0
      %766 = vmatprep.subr.mxu0 0.0
      %767 = vmatpush2.msra.mxu0 0.0
      %768 = vmatprep.subr.mxu0 0.0
      %769 = vmatpush2.msra.mxu0 0.0
      %770 = vmatprep.subr.mxu0 0.0
      %771 = vmatpush2.msra.mxu0 0.0
      %772 = vmatprep.subr.mxu0 0.0
      %773 = vmatpush2.msra.mxu0 0.0
      %774 = vmatprep.subr.mxu0 0.0
      %775 = vmatpush2.msra.mxu0 0.0
      %776 = vmatprep.subr.mxu0 0.0
      %777 = vmatpush2.msra.mxu0 0.0
      %778 = vmatprep.subr.mxu0 0.0
      %779 = vmatpush2.msra.mxu0 0.0
      %780 = vmatprep.mubr.f32.mxu0 0.0
      %781 = vmatmul.mubr.f32.gmra.mxu0 %v711
      %v782 = vpop.f32.mrf.mxu0
      %v783 = vadd.f32 0.0, %v782
      %v784 = vpop.f32.mrf.mxu0
      %785 = vmatprep.mubr.f32.mxu0 0.0
      %786 = vmatmul.mubr.f32.gmra.mxu0 %v714
      %v787 = vpop.f32.mrf.mxu0
      %v788 = vadd.f32 0.0, %v787
      %v789 = vpop.f32.mrf.mxu0
      %790 = vdwg.mxu0
      %791 = vrot.lane.b32.xlu0 %v356, 112
      %v792 = vpop.permute.xlu0 %791
      %793 = vrot.lane.b32.xlu0 %v361, 112
      %v794 = vpop.permute.xlu0 %793
      %795 = vrot.lane.b32.xlu0 %v356, 80
      %v796 = vpop.permute.xlu0 %795
      %797 = vrot.lane.b32.xlu0 %v361, 80
      %v798 = vpop.permute.xlu0 %797
      %v799 = vsel %vm385, %v792, 0
      %v801 = vsel %vm385, %v794, 0
      %v803 = vsel %vm385, %v796, 0
      %v805 = vsel %vm385, %v798, 0
      %807 = vmatprep.subr.mxu0 0.0
      %808 = vmatpush1.xpose.msra.mxu0 0.0
      %809 = vmatprep.subr.mxu0 0.0
      %810 = vmatpush1.xpose.msra.mxu0 0.0
      %811 = vmatprep.subr.mxu0 0.0
      %812 = vmatpush1.xpose.msra.mxu0 0.0
      %813 = vmatprep.subr.mxu0 0.0
      %814 = vmatpush1.xpose.msra.mxu0 0.0
      %815 = vmatprep.subr.mxu0 0.0
      %816 = vmatpush1.xpose.msra.mxu0 0.0
      %817 = vmatprep.subr.mxu0 0.0
      %818 = vmatpush1.xpose.msra.mxu0 0.0
      %819 = vmatprep.subr.mxu0 0.0
      %820 = vmatpush1.xpose.msra.mxu0 0.0
      %821 = vmatprep.subr.mxu0 0.0
      %822 = vmatpush1.xpose.msra.mxu0 0.0
      %823 = vmatprep.subr.mxu0 0.0
      %824 = vmatpush1.xpose.msra.mxu0 0.0
      %825 = vmatprep.subr.mxu0 0.0
      %826 = vmatpush1.xpose.msra.mxu0 0.0
      %827 = vmatprep.subr.mxu0 0.0
      %828 = vmatpush1.xpose.msra.mxu0 0.0
      %829 = vmatprep.subr.mxu0 0.0
      %830 = vmatpush1.xpose.msra.mxu0 0.0
      %831 = vmatprep.subr.mxu0 0.0
      %832 = vmatpush1.xpose.msra.mxu0 0.0
      %833 = vmatprep.subr.mxu0 0.0
      %834 = vmatpush1.xpose.msra.mxu0 0.0
      %835 = vmatprep.subr.mxu0 0.0
      %836 = vmatpush1.xpose.msra.mxu0 %v805
      %837 = vmatprep.subr.mxu0 0.0
      %838 = vmatpush1.xpose.msra.mxu0 %v803
      %839 = vmatprep.subr.mxu0 0.0
      %840 = vmatpush2.xpose.msra.mxu0 0.0
      %841 = vmatprep.subr.mxu0 0.0
      %842 = vmatpush2.xpose.msra.mxu0 0.0
      %843 = vmatprep.subr.mxu0 0.0
      %844 = vmatpush2.xpose.msra.mxu0 0.0
      %845 = vmatprep.subr.mxu0 0.0
      %846 = vmatpush2.xpose.msra.mxu0 0.0
      %847 = vmatprep.subr.mxu0 0.0
      %848 = vmatpush2.xpose.msra.mxu0 0.0
      %849 = vmatprep.subr.mxu0 0.0
      %850 = vmatpush2.xpose.msra.mxu0 0.0
      %851 = vmatprep.subr.mxu0 0.0
      %852 = vmatpush2.xpose.msra.mxu0 0.0
      %853 = vmatprep.subr.mxu0 0.0
      %854 = vmatpush2.xpose.msra.mxu0 0.0
      %855 = vmatprep.subr.mxu0 0.0
      %856 = vmatpush2.xpose.msra.mxu0 0.0
      %857 = vmatprep.subr.mxu0 0.0
      %858 = vmatpush2.xpose.msra.mxu0 0.0
      %859 = vmatprep.subr.mxu0 0.0
      %860 = vmatpush2.xpose.msra.mxu0 0.0
      %861 = vmatprep.subr.mxu0 0.0
      %862 = vmatpush2.xpose.msra.mxu0 0.0
      %863 = vmatprep.subr.mxu0 0.0
      %864 = vmatpush2.xpose.msra.mxu0 0.0
      %865 = vmatprep.subr.mxu0 0.0
      %866 = vmatpush2.xpose.msra.mxu0 0.0
      %867 = vmatprep.subr.mxu0 0.0
      %868 = vmatpush2.xpose.msra.mxu0 0.0
      %869 = vmatprep.subr.mxu0 0.0
      %870 = vmatpush2.xpose.msra.mxu0 0.0
      %871 = vmatprep.mubr.f32.mxu0 0.0
      %872 = vmatmul.mubr.f32.gmra.mxu0 %v799
      %v873 = vpop.f32.mrf.mxu0
      %v874 = vadd.f32 0.0, %v873
      %v875 = vpop.f32.mrf.mxu0
      %876 = vmatprep.mubr.f32.mxu0 0.0
      %877 = vmatmul.mubr.f32.gmra.mxu0 %v801
      %v878 = vpop.f32.mrf.mxu0
      %v879 = vadd.f32 0.0, %v878
      %v880 = vpop.f32.mrf.mxu0
      %881 = vdwg.mxu0
      %v882 = vmul.f32 %v377, 0.015625
      %v883 = vmul.f32 %v378, 0.015625
      %v884 = vsub.f32 %v874, %v882
      %v885 = vsub.f32 %v879, %v883
      %v886 = vmul.f32 %v884, 0.35355338
      %v887 = vmul.f32 %v885, 0.35355338
      %v888 = vsel %vm475, %v886, -inf
      %889 = vmax.xlane.f32.xlu0 %v888
      %v890 = vpop.xlane.xlu0 %889
      %v891 = vsel %vm475, %v887, -inf
      %892 = vmax.xlane.f32.xlu0 %v891
      %v893 = vpop.xlane.xlu0 %892
      %v894 = vsub.f32 %v886, %v890
      %v895 = vsub.f32 %v887, %v893
      %v896 = vmul.f32 %v894, 1.442695
      %v897 = vpow.pop %v896
      %v898 = vmul.f32 %v895, 1.442695
      %v899 = vpow.pop %v898
      %v900 = vsel %vm475, %v897, 0.0
      %901 = vadd.xlane.f32.xlu0 %v900
      %v902 = vpop.xlane.xlu0 %901
      %v903 = vsel %vm475, %v899, 0.0
      %904 = vadd.xlane.f32.xlu0 %v903
      %v905 = vpop.xlane.xlu0 %904
      %v906 = vrcp.pop %v902
      %v907 = vrcp.pop %v905
      %v908 = vmul.f32 %v897, %v906
      %v909 = vmul.f32 %v899, %v907
      %910 = vrot.lane.b32.xlu0 %v356, 48
      %v911 = vpop.permute.xlu0 %910
      %912 = vrot.lane.b32.xlu0 %v361, 48
      %v913 = vpop.permute.xlu0 %912
      %v917 = vsel %vm475, %v908, 0
      %v920 = vsel %vm475, %v909, 0
      %922 = vmatprep.subr.mxu0 0.0
      %923 = vmatpush1.msra.mxu0 0.0
      %924 = vmatprep.subr.mxu0 0.0
      %925 = vmatpush1.msra.mxu0 0.0
      %926 = vmatprep.subr.mxu0 0.0
      %927 = vmatpush1.msra.mxu0 0.0
      %928 = vmatprep.subr.mxu0 0.0
      %929 = vmatpush1.msra.mxu0 0.0
      %930 = vmatprep.subr.mxu0 0.0
      %931 = vmatpush1.msra.mxu0 0.0
      %932 = vmatprep.subr.mxu0 0.0
      %933 = vmatpush1.msra.mxu0 0.0
      %934 = vmatprep.subr.mxu0 0.0
      %935 = vmatpush1.msra.mxu0 0.0
      %936 = vmatprep.subr.mxu0 0.0
      %937 = vmatpush1.msra.mxu0 0.0
      %938 = vmatprep.subr.mxu0 0.0
      %939 = vmatpush1.msra.mxu0 0.0
      %940 = vmatprep.subr.mxu0 0.0
      %941 = vmatpush1.msra.mxu0 0.0
      %942 = vmatprep.subr.mxu0 0.0
      %943 = vmatpush1.msra.mxu0 0.0
      %944 = vmatprep.subr.mxu0 0.0
      %945 = vmatpush1.msra.mxu0 0.0
      %946 = vmatprep.subr.mxu0 0.0
      %947 = vmatpush1.msra.mxu0 0.0
      %948 = vmatprep.subr.mxu0 0.0
      %949 = vmatpush1.msra.mxu0 0.0
      %950 = vmatprep.subr.mxu0 0.0
      %951 = vmatpush1.msra.mxu0 %v913
      %952 = vmatprep.subr.mxu0 0.0
      %953 = vmatpush1.msra.mxu0 %v911
      %954 = vmatprep.subr.mxu0 0.0
      %955 = vmatpush2.msra.mxu0 0.0
      %956 = vmatprep.subr.mxu0 0.0
      %957 = vmatpush2.msra.mxu0 0.0
      %958 = vmatprep.subr.mxu0 0.0
      %959 = vmatpush2.msra.mxu0 0.0
      %960 = vmatprep.subr.mxu0 0.0
      %961 = vmatpush2.msra.mxu0 0.0
      %962 = vmatprep.subr.mxu0 0.0
      %963 = vmatpush2.msra.mxu0 0.0
      %964 = vmatprep.subr.mxu0 0.0
      %965 = vmatpush2.msra.mxu0 0.0
      %966 = vmatprep.subr.mxu0 0.0
      %967 = vmatpush2.msra.mxu0 0.0
      %968 = vmatprep.subr.mxu0 0.0
      %969 = vmatpush2.msra.mxu0 0.0
      %970 = vmatprep.subr.mxu0 0.0
      %971 = vmatpush2.msra.mxu0 0.0
      %972 = vmatprep.subr.mxu0 0.0
      %973 = vmatpush2.msra.mxu0 0.0
      %974 = vmatprep.subr.mxu0 0.0
      %975 = vmatpush2.msra.mxu0 0.0
      %976 = vmatprep.subr.mxu0 0.0
      %977 = vmatpush2.msra.mxu0 0.0
      %978 = vmatprep.subr.mxu0 0.0
      %979 = vmatpush2.msra.mxu0 0.0
      %980 = vmatprep.subr.mxu0 0.0
      %981 = vmatpush2.msra.mxu0 0.0
      %982 = vmatprep.subr.mxu0 0.0
      %983 = vmatpush2.msra.mxu0 0.0
      %984 = vmatprep.subr.mxu0 0.0
      %985 = vmatpush2.msra.mxu0 0.0
      %986 = vmatprep.mubr.f32.mxu0 0.0
      %987 = vmatmul.mubr.f32.gmra.mxu0 %v917
      %v988 = vpop.f32.mrf.mxu0
      %v989 = vadd.f32 0.0, %v988
      %v990 = vpop.f32.mrf.mxu0
      %991 = vmatprep.mubr.f32.mxu0 0.0
      %992 = vmatmul.mubr.f32.gmra.mxu0 %v920
      %v993 = vpop.f32.mrf.mxu0
      %v994 = vadd.f32 0.0, %v993
      %v995 = vpop.f32.mrf.mxu0
      %996 = vdwg.mxu0
      %997 = vrot.lane.b32.xlu0 %v356, 104
      %v998 = vpop.permute.xlu0 %997
      %999 = vrot.lane.b32.xlu0 %v361, 104
      %v1000 = vpop.permute.xlu0 %999
      %1001 = vrot.lane.b32.xlu0 %v356, 72
      %v1002 = vpop.permute.xlu0 %1001
      %1003 = vrot.lane.b32.xlu0 %v361, 72
      %v1004 = vpop.permute.xlu0 %1003
      %v1005 = vsel %vm385, %v998, 0
      %v1007 = vsel %vm385, %v1000, 0
      %v1009 = vsel %vm385, %v1002, 0
      %v1011 = vsel %vm385, %v1004, 0
      %1013 = vmatprep.subr.mxu0 0.0
      %1014 = vmatpush1.xpose.msra.mxu0 0.0
      %1015 = vmatprep.subr.mxu0 0.0
      %1016 = vmatpush1.xpose.msra.mxu0 0.0
      %1017 = vmatprep.subr.mxu0 0.0
      %1018 = vmatpush1.xpose.msra.mxu0 0.0
      %1019 = vmatprep.subr.mxu0 0.0
      %1020 = vmatpush1.xpose.msra.mxu0 0.0
      %1021 = vmatprep.subr.mxu0 0.0
      %1022 = vmatpush1.xpose.msra.mxu0 0.0
      %1023 = vmatprep.subr.mxu0 0.0
      %1024 = vmatpush1.xpose.msra.mxu0 0.0
      %1025 = vmatprep.subr.mxu0 0.0
      %1026 = vmatpush1.xpose.msra.mxu0 0.0
      %1027 = vmatprep.subr.mxu0 0.0
      %1028 = vmatpush1.xpose.msra.mxu0 0.0
      %1029 = vmatprep.subr.mxu0 0.0
      %1030 = vmatpush1.xpose.msra.mxu0 0.0
      %1031 = vmatprep.subr.mxu0 0.0
      %1032 = vmatpush1.xpose.msra.mxu0 0.0
      %1033 = vmatprep.subr.mxu0 0.0
      %1034 = vmatpush1.xpose.msra.mxu0 0.0
      %1035 = vmatprep.subr.mxu0 0.0
      %1036 = vmatpush1.xpose.msra.mxu0 0.0
      %1037 = vmatprep.subr.mxu0 0.0
      %1038 = vmatpush1.xpose.msra.mxu0 0.0
      %1039 = vmatprep.subr.mxu0 0.0
      %1040 = vmatpush1.xpose.msra.mxu0 0.0
      %1041 = vmatprep.subr.mxu0 0.0
      %1042 = vmatpush1.xpose.msra.mxu0 %v1011
      %1043 = vmatprep.subr.mxu0 0.0
      %1044 = vmatpush1.xpose.msra.mxu0 %v1009
      %1045 = vmatprep.subr.mxu0 0.0
      %1046 = vmatpush2.xpose.msra.mxu0 0.0
      %1047 = vmatprep.subr.mxu0 0.0
      %1048 = vmatpush2.xpose.msra.mxu0 0.0
      %1049 = vmatprep.subr.mxu0 0.0
      %1050 = vmatpush2.xpose.msra.mxu0 0.0
      %1051 = vmatprep.subr.mxu0 0.0
      %1052 = vmatpush2.xpose.msra.mxu0 0.0
      %1053 = vmatprep.subr.mxu0 0.0
      %1054 = vmatpush2.xpose.msra.mxu0 0.0
      %1055 = vmatprep.subr.mxu0 0.0
      %1056 = vmatpush2.xpose.msra.mxu0 0.0
      %1057 = vmatprep.subr.mxu0 0.0
      %1058 = vmatpush2.xpose.msra.mxu0 0.0
      %1059 = vmatprep.subr.mxu0 0.0
      %1060 = vmatpush2.xpose.msra.mxu0 0.0
      %1061 = vmatprep.subr.mxu0 0.0
      %1062 = vmatpush2.xpose.msra.mxu0 0.0
      %1063 = vmatprep.subr.mxu0 0.0
      %1064 = vmatpush2.xpose.msra.mxu0 0.0
      %1065 = vmatprep.subr.mxu0 0.0
      %1066 = vmatpush2.xpose.msra.mxu0 0.0
      %1067 = vmatprep.subr.mxu0 0.0
      %1068 = vmatpush2.xpose.msra.mxu0 0.0
      %1069 = vmatprep.subr.mxu0 0.0
      %1070 = vmatpush2.xpose.msra.mxu0 0.0
      %1071 = vmatprep.subr.mxu0 0.0
      %1072 = vmatpush2.xpose.msra.mxu0 0.0
      %1073 = vmatprep.subr.mxu0 0.0
      %1074 = vmatpush2.xpose.msra.mxu0 0.0
      %1075 = vmatprep.subr.mxu0 0.0
      %1076 = vmatpush2.xpose.msra.mxu0 0.0
      %1077 = vmatprep.mubr.f32.mxu0 0.0
      %1078 = vmatmul.mubr.f32.gmra.mxu0 %v1005
      %v1079 = vpop.f32.mrf.mxu0
      %v1080 = vadd.f32 0.0, %v1079
      %v1081 = vpop.f32.mrf.mxu0
      %1082 = vmatprep.mubr.f32.mxu0 0.0
      %1083 = vmatmul.mubr.f32.gmra.mxu0 %v1007
      %v1084 = vpop.f32.mrf.mxu0
      %v1085 = vadd.f32 0.0, %v1084
      %v1086 = vpop.f32.mrf.mxu0
      %1087 = vdwg.mxu0
      %v1088 = vmul.f32 %v377, 0.00390625
      %v1089 = vmul.f32 %v378, 0.00390625
      %v1090 = vsub.f32 %v1080, %v1088
      %v1091 = vsub.f32 %v1085, %v1089
      %v1092 = vmul.f32 %v1090, 0.35355338
      %v1093 = vmul.f32 %v1091, 0.35355338
      %v1094 = vsel %vm475, %v1092, -inf
      %1095 = vmax.xlane.f32.xlu0 %v1094
      %v1096 = vpop.xlane.xlu0 %1095
      %v1097 = vsel %vm475, %v1093, -inf
      %1098 = vmax.xlane.f32.xlu0 %v1097
      %v1099 = vpop.xlane.xlu0 %1098
      %v1100 = vsub.f32 %v1092, %v1096
      %v1101 = vsub.f32 %v1093, %v1099
      %v1102 = vmul.f32 %v1100, 1.442695
      %v1103 = vpow.pop %v1102
      %v1104 = vmul.f32 %v1101, 1.442695
      %v1105 = vpow.pop %v1104
      %v1106 = vsel %vm475, %v1103, 0.0
      %1107 = vadd.xlane.f32.xlu0 %v1106
      %v1108 = vpop.xlane.xlu0 %1107
      %v1109 = vsel %vm475, %v1105, 0.0
      %1110 = vadd.xlane.f32.xlu0 %v1109
      %v1111 = vpop.xlane.xlu0 %1110
      %v1112 = vrcp.pop %v1108
      %v1113 = vrcp.pop %v1111
      %v1114 = vmul.f32 %v1103, %v1112
      %v1115 = vmul.f32 %v1105, %v1113
      %1116 = vrot.lane.b32.xlu0 %v356, 40
      %v1117 = vpop.permute.xlu0 %1116
      %1118 = vrot.lane.b32.xlu0 %v361, 40
      %v1119 = vpop.permute.xlu0 %1118
      %v1123 = vsel %vm475, %v1114, 0
      %v1126 = vsel %vm475, %v1115, 0
      %1128 = vmatprep.subr.mxu0 0.0
      %1129 = vmatpush1.msra.mxu0 0.0
      %1130 = vmatprep.subr.mxu0 0.0
      %1131 = vmatpush1.msra.mxu0 0.0
      %1132 = vmatprep.subr.mxu0 0.0
      %1133 = vmatpush1.msra.mxu0 0.0
      %1134 = vmatprep.subr.mxu0 0.0
      %1135 = vmatpush1.msra.mxu0 0.0
      %1136 = vmatprep.subr.mxu0 0.0
      %1137 = vmatpush1.msra.mxu0 0.0
      %1138 = vmatprep.subr.mxu0 0.0
      %1139 = vmatpush1.msra.mxu0 0.0
      %1140 = vmatprep.subr.mxu0 0.0
      %1141 = vmatpush1.msra.mxu0 0.0
      %1142 = vmatprep.subr.mxu0 0.0
      %1143 = vmatpush1.msra.mxu0 0.0
      %1144 = vmatprep.subr.mxu0 0.0
      %1145 = vmatpush1.msra.mxu0 0.0
      %1146 = vmatprep.subr.mxu0 0.0
      %1147 = vmatpush1.msra.mxu0 0.0
      %1148 = vmatprep.subr.mxu0 0.0
      %1149 = vmatpush1.msra.mxu0 0.0
      %1150 = vmatprep.subr.mxu0 0.0
      %1151 = vmatpush1.msra.mxu0 0.0
      %1152 = vmatprep.subr.mxu0 0.0
      %1153 = vmatpush1.msra.mxu0 0.0
      %1154 = vmatprep.subr.mxu0 0.0
      %1155 = vmatpush1.msra.mxu0 0.0
      %1156 = vmatprep.subr.mxu0 0.0
      %1157 = vmatpush1.msra.mxu0 %v1119
      %1158 = vmatprep.subr.mxu0 0.0
      %1159 = vmatpush1.msra.mxu0 %v1117
      %1160 = vmatprep.subr.mxu0 0.0
      %1161 = vmatpush2.msra.mxu0 0.0
      %1162 = vmatprep.subr.mxu0 0.0
      %1163 = vmatpush2.msra.mxu0 0.0
      %1164 = vmatprep.subr.mxu0 0.0
      %1165 = vmatpush2.msra.mxu0 0.0
      %1166 = vmatprep.subr.mxu0 0.0
      %1167 = vmatpush2.msra.mxu0 0.0
      %1168 = vmatprep.subr.mxu0 0.0
      %1169 = vmatpush2.msra.mxu0 0.0
      %1170 = vmatprep.subr.mxu0 0.0
      %1171 = vmatpush2.msra.mxu0 0.0
      %1172 = vmatprep.subr.mxu0 0.0
      %1173 = vmatpush2.msra.mxu0 0.0
      %1174 = vmatprep.subr.mxu0 0.0
      %1175 = vmatpush2.msra.mxu0 0.0
      %1176 = vmatprep.subr.mxu0 0.0
      %1177 = vmatpush2.msra.mxu0 0.0
      %1178 = vmatprep.subr.mxu0 0.0
      %1179 = vmatpush2.msra.mxu0 0.0
      %1180 = vmatprep.subr.mxu0 0.0
      %1181 = vmatpush2.msra.mxu0 0.0
      %1182 = vmatprep.subr.mxu0 0.0
      %1183 = vmatpush2.msra.mxu0 0.0
      %1184 = vmatprep.subr.mxu0 0.0
      %1185 = vmatpush2.msra.mxu0 0.0
      %1186 = vmatprep.subr.mxu0 0.0
      %1187 = vmatpush2.msra.mxu0 0.0
      %1188 = vmatprep.subr.mxu0 0.0
      %1189 = vmatpush2.msra.mxu0 0.0
      %1190 = vmatprep.subr.mxu0 0.0
      %1191 = vmatpush2.msra.mxu0 0.0
      %1192 = vmatprep.mubr.f32.mxu0 0.0
      %1193 = vmatmul.mubr.f32.gmra.mxu0 %v1123
      %v1194 = vpop.f32.mrf.mxu0
      %v1195 = vadd.f32 0.0, %v1194
      %v1196 = vpop.f32.mrf.mxu0
      %1197 = vmatprep.mubr.f32.mxu0 0.0
      %1198 = vmatmul.mubr.f32.gmra.mxu0 %v1126
      %v1199 = vpop.f32.mrf.mxu0
      %v1200 = vadd.f32 0.0, %v1199
      %v1201 = vpop.f32.mrf.mxu0
      %1202 = vdwg.mxu0
      %1205 = vrot.lane.b32.xlu0 %v783, 8
      %v1206 = vpop.permute.xlu0 %1205
      %1207 = vrot.lane.b32.xlu0 %v788, 8
      %v1208 = vpop.permute.xlu0 %1207
      %1213 = vrot.lane.b32.xlu0 %v989, 16
      %v1214 = vpop.permute.xlu0 %1213
      %1215 = vrot.lane.b32.xlu0 %v994, 16
      %v1216 = vpop.permute.xlu0 %1215
      %1221 = vrot.lane.b32.xlu0 %v1195, 24
      %v1222 = vpop.permute.xlu0 %1221
      %1223 = vrot.lane.b32.xlu0 %v1200, 24
      %v1224 = vpop.permute.xlu0 %1223
      %v1227 = vsel %vm385, %v577, %v1206
      %v1228 = vsel %vm385, %v582, %v1208
      %v1229 = vsel %vm475, %v1227, %v1214
      %v1230 = vsel %vm475, %v1228, %v1216
      %vm1231 = vcmask 195584
      %v1232 = vsel %vm1231, %v1229, %v1222
      %v1233 = vsel %vm1231, %v1230, %v1224
      %v1234 = vld [vmem:[%s3] sm:$0xff]
      %v1235 = vld [vmem:[%s3 + $0x8] sm:$0xff]
      %v1236 = vld [vmem:[%s3 + $0x10] sm:$0xff]
      %v1237 = vld [vmem:[%s3 + $0x18] sm:$0xff]
      %v1238 = vld [vmem:[%s4] sm:$0x1]
      %v1240 = vlaneseq
      %v1241 = vshrl.u32 %v1240, 7
      %v1242 = vsub.s32 0, %v1241
      %v1243 = vrot.slane %v1238, %v1242
      %v1246 = vsel %vm246, %v1232, 0
      %v1249 = vsel %vm246, %v1233, 0
      %v1252 = vsel %vm246, %v1234, 0
      %v1255 = vsel %vm246, %v1235, 0
      %v1258 = vsel %vm246, %v1236, 0
      %v1261 = vsel %vm246, %v1237, 0
      %1263 = vmatprep.subr.mxu0 0.0
      %1264 = vmatpush1.xpose.msra.mxu0 0.0
      %1265 = vmatprep.subr.mxu0 0.0
      %1266 = vmatpush1.xpose.msra.mxu0 0.0
      %1267 = vmatprep.subr.mxu0 0.0
      %1268 = vmatpush1.xpose.msra.mxu0 0.0
      %1269 = vmatprep.subr.mxu0 0.0
      %1270 = vmatpush1.xpose.msra.mxu0 0.0
      %1271 = vmatprep.subr.mxu0 0.0
      %1272 = vmatpush1.xpose.msra.mxu0 0.0
      %1273 = vmatprep.subr.mxu0 0.0
      %1274 = vmatpush1.xpose.msra.mxu0 0.0
      %1275 = vmatprep.subr.mxu0 0.0
      %1276 = vmatpush1.xpose.msra.mxu0 0.0
      %1277 = vmatprep.subr.mxu0 0.0
      %1278 = vmatpush1.xpose.msra.mxu0 0.0
      %1279 = vmatprep.subr.mxu0 0.0
      %1280 = vmatpush1.xpose.msra.mxu0 0.0
      %1281 = vmatprep.subr.mxu0 0.0
      %1282 = vmatpush1.xpose.msra.mxu0 0.0
      %1283 = vmatprep.subr.mxu0 0.0
      %1284 = vmatpush1.xpose.msra.mxu0 0.0
      %1285 = vmatprep.subr.mxu0 0.0
      %1286 = vmatpush1.xpose.msra.mxu0 0.0
      %1287 = vmatprep.subr.mxu0 0.0
      %1288 = vmatpush1.xpose.msra.mxu0 %v1261
      %1289 = vmatprep.subr.mxu0 0.0
      %1290 = vmatpush1.xpose.msra.mxu0 %v1258
      %1291 = vmatprep.subr.mxu0 0.0
      %1292 = vmatpush1.xpose.msra.mxu0 %v1255
      %1293 = vmatprep.subr.mxu0 0.0
      %1294 = vmatpush1.xpose.msra.mxu0 %v1252
      %1295 = vmatprep.subr.mxu0 0.0
      %1296 = vmatpush2.xpose.msra.mxu0 0.0
      %1297 = vmatprep.subr.mxu0 0.0
      %1298 = vmatpush2.xpose.msra.mxu0 0.0
      %1299 = vmatprep.subr.mxu0 0.0
      %1300 = vmatpush2.xpose.msra.mxu0 0.0
      %1301 = vmatprep.subr.mxu0 0.0
      %1302 = vmatpush2.xpose.msra.mxu0 0.0
      %1303 = vmatprep.subr.mxu0 0.0
      %1304 = vmatpush2.xpose.msra.mxu0 0.0
      %1305 = vmatprep.subr.mxu0 0.0
      %1306 = vmatpush2.xpose.msra.mxu0 0.0
      %1307 = vmatprep.subr.mxu0 0.0
      %1308 = vmatpush2.xpose.msra.mxu0 0.0
      %1309 = vmatprep.subr.mxu0 0.0
      %1310 = vmatpush2.xpose.msra.mxu0 0.0
      %1311 = vmatprep.subr.mxu0 0.0
      %1312 = vmatpush2.xpose.msra.mxu0 0.0
      %1313 = vmatprep.subr.mxu0 0.0
      %1314 = vmatpush2.xpose.msra.mxu0 0.0
      %1315 = vmatprep.subr.mxu0 0.0
      %1316 = vmatpush2.xpose.msra.mxu0 0.0
      %1317 = vmatprep.subr.mxu0 0.0
      %1318 = vmatpush2.xpose.msra.mxu0 0.0
      %1319 = vmatprep.subr.mxu0 0.0
      %1320 = vmatpush2.xpose.msra.mxu0 0.0
      %1321 = vmatprep.subr.mxu0 0.0
      %1322 = vmatpush2.xpose.msra.mxu0 0.0
      %1323 = vmatprep.subr.mxu0 0.0
      %1324 = vmatpush2.xpose.msra.mxu0 0.0
      %1325 = vmatprep.subr.mxu0 0.0
      %1326 = vmatpush2.xpose.msra.mxu0 0.0
      %1327 = vmatprep.mubr.f32.mxu0 0.0
      %1328 = vmatmul.mubr.f32.gmra.mxu0 %v1246
      %v1329 = vpop.f32.mrf.mxu0
      %v1330 = vadd.f32 %v1243, %v1329
      %v1331 = vpop.f32.mrf.mxu0
      %1332 = vmatprep.mubr.f32.mxu0 0.0
      %1333 = vmatmul.mubr.f32.gmra.mxu0 %v1249
      %v1334 = vpop.f32.mrf.mxu0
      %v1335 = vadd.f32 %v1243, %v1334
      %v1336 = vpop.f32.mrf.mxu0
      %1337 = vdwg.mxu0
      %1338 = vst.msk [vmem:[%s224] sm:$0xff] %vm246, %v1330
      %1339 = vst.msk [vmem:[%s224 + $0x8] sm:$0xff] %vm246, %v1335
      %p1340 = scmp.lt.s32.totalorder %s16, 1
      %s1341 = scalar_select %p1340, %s16, 1
      %s1342 = smul.addr %s1341, 2
      %s1343 = smul.addr %s1342, 8
      %s1344 = scalar_lea.vmem %s5, %s1343
      // Predicated region
      $region41: #{_lambda_.6} parent=39 // pred_check
        %p1345 = pneg %p144
      $region42: #{_lambda_.6} parent=39 // pred_check_branch
        %1347 = sbr.rel (%p1345) target = $region44
      $region43: #{_lambda_.6} parent=39 // pred_region
        _
      $region44: #{_lambda_.6} parent=39 // pred_fallthru
        _
    $region40: #{_lambda_.6} parent=5 // pred_fallthru
      _
    %p1348 = scmp.le.s32.totalorder 2, %s11
    // Predicated region
    $region45: #{_lambda_.6} parent=5 // pred_check
      %p1349 = pneg %p1348
    $region46: #{_lambda_.6} parent=5 // pred_check_branch
      %1351 = sbr.rel (%p1349) target = $region48
    $region47: #{_lambda_.6} parent=5 // pred_region
      %s1352 = ssub.s32 %s11, 2
      // Predicated region
      $region49: #{_lambda_.6} parent=47 // pred_check
        %p1353 = pneg %p150
      $region50: #{_lambda_.6} parent=47 // pred_check_branch
        %1355 = sbr.rel (%p1353) target = $region52
      $region51: #{_lambda_.6} parent=47 // pred_region
        %p1356 = scmp.lt.s32.totalorder %s17, 1
        %s1357 = scalar_select %p1356, %s17, 1
        %s1358 = smul.addr %s1357, 2
        %s1359 = smul.addr %s1358, 8
        %s1360 = scalar_lea.vmem %s5, %s1359
      $region52: #{_lambda_.6} parent=47 // pred_fallthru
        _
    $region48: #{_lambda_.6} parent=5 // pred_fallthru
      _
  $region6: #{_lambda_.6} parent=0 // loop_footer
    %s15 = sadd.s32 1, %s11
  $region7: #{_lambda_.6} parent=0 // loop_footer_branch
    %10 = sbr.rel target = $region3
  $region8: #{_lambda_.6} parent=0 // loop_exit
    _

// kernel: _lambda_.7
$region0: #{_lambda_.7}
  #allocation0 [shape = 'u32[]', space=smem, size = 0x4, offset = 0x4, fixed_abs, tag = 'smem constant byte address 0x4 - core index']
  #allocation1 [shape = 'u32[144,128]{1,0:T(1,128)}', space=vmem, size = 0x12000, scoped, tag = 'internal scratch']
  %s0 = inlined_call_operand.vmem [shape: f32[2,16,32], index: 0, kind: input, shape index: {}]
  %s1 = inlined_call_operand.vmem [shape: f32[2,8,32], index: 1, kind: input, shape index: {}]
  %s2 = inlined_call_operand.vmem [shape: f32[2,1,8], index: 2, kind: input, shape index: {}]
  %s3 = inlined_call_operand.vmem [shape: f32[7,32,32], index: 3, kind: input, shape index: {}]
  %s4 = inlined_call_operand.vmem [shape: f32[7,1,32], index: 4, kind: input, shape index: {}]
  %s5 = inlined_call_operand.hbm [shape: f32[2,16,32], index: 5, kind: output, shape index: {}]
  %s6 = sld [smem:[#allocation0]]
  $region53: #{_lambda_.7} parent=0
    _
  %s8 = ssub.s32 1, %s6
  %s9 = scalar_select 0, %s8, %s6
  $region1: #{_lambda_.7} parent=0
    #allocation2 [shape = 'u8[16384]{0}', space=vmem, size = 0x4000, scoped, tag = 'output window, operand 0']
    #allocation3 [shape = 's32[2]{0}', space=sflag, size = 0x8, scoped, tag = 'scoped memory for _lambda_.7']
    %10 = vsyncpa [#allocation3], 0
    %s11 = scalar_lea.sflag [#allocation3], 1
    %12 = vsyncpa %s11, 0
    loop: start=0, step=1, limit=4
    $region2: #{_lambda_.7} parent=1 // loop_pre_header
      _
    $region3: #{_lambda_.7} parent=1 // loop_header
      %s14 = sphi 0, %s18
      %p15 = scmp.ge.s32.totalorder %s14, 4
      %s24 = sphi 0, %s26
      %s27 = sphi 0, %s24
      %s28 = sphi 0, %s27
      %s44 = sphi 0, %s28
      %s50 = sphi 0, %s52
      %s53 = sphi 0, %s50
      %s54 = sphi 0, %s53
      %s70 = sphi 0, %s54
      %s76 = sphi 0, %s78
      %s79 = sphi 0, %s76
      %s80 = sphi 0, %s79
      %s96 = sphi 0, %s80
      %s100 = sphi 0, %s100
      %s102 = sphi 0, %s100
      %s103 = sphi 0, %s102
      %s117 = sphi 0, %s103
      %s121 = sphi 0, %s121
      %s123 = sphi 0, %s121
      %s124 = sphi 0, %s123
      %s138 = sphi 0, %s124
      %s144 = sphi 0, %s146
      %s147 = sphi 0, %s144
      %s148 = sphi 0, %s147
      %s164 = sphi 0, %s148
    $region4: #{_lambda_.7} parent=1 // loop_header_branch
      %17 = sbr.rel (%p15) target = $region8
    $region5: #{_lambda_.7} parent=1 // loop_body
      %s19 = ssub.s32 %s14, 1
      %s20 = ssub.s32 %s14, 2
      %s21 = sadd.s32 %s14, 1
      %s22 = ssub.s32 %s14, %s21
      %p23 = scmp.eq.s32.totalorder %s22, 0
      %s25 = sadd.s32 %s24, 1
      %s26 = scalar_select %p23, %s24, %s25
      %p29 = pneg %p23
      %p30 = scmp.eq.s32.totalorder %s14, 1
      %p31 = por %p29, %p30
      %p32 = scmp.ne.s32.totalorder %s24, %s27
      %p33 = scmp.eq.s32.totalorder %s14, 0
      %p34 = por %p32, %p33
      %p35 = scmp.ne.s32.totalorder %s24, %s27
      %p36 = scmp.eq.s32.totalorder %s19, 1
      %p37 = por %p35, %p36
      %p38 = scmp.ne.s32.totalorder %s27, %s28
      %p39 = scmp.eq.s32.totalorder %s19, 0
      %p40 = por %p38, %p39
      %p41 = scmp.ne.s32.totalorder %s27, %s28
      %p42 = scmp.eq.s32.totalorder %s20, 1
      %p43 = por %p41, %p42
      %p45 = scmp.ne.s32.totalorder %s28, %s44
      %p46 = scmp.eq.s32.totalorder %s20, 0
      %p47 = por %p45, %p46
      %s48 = ssub.s32 %s14, %s21
      %p49 = scmp.eq.s32.totalorder %s48, 0
      %s51 = sadd.s32 %s50, 1
      %s52 = scalar_select %p49, %s50, %s51
      %p55 = pneg %p49
      %p56 = scmp.eq.s32.totalorder %s14, 1
      %p57 = por %p55, %p56
      %p58 = scmp.ne.s32.totalorder %s50, %s53
      %p59 = scmp.eq.s32.totalorder %s14, 0
      %p60 = por %p58, %p59
      %p61 = scmp.ne.s32.totalorder %s50, %s53
      %p62 = scmp.eq.s32.totalorder %s19, 1
      %p63 = por %p61, %p62
      %p64 = scmp.ne.s32.totalorder %s53, %s54
      %p65 = scmp.eq.s32.totalorder %s19, 0
      %p66 = por %p64, %p65
      %p67 = scmp.ne.s32.totalorder %s53, %s54
      %p68 = scmp.eq.s32.totalorder %s20, 1
      %p69 = por %p67, %p68
      %p71 = scmp.ne.s32.totalorder %s54, %s70
      %p72 = scmp.eq.s32.totalorder %s20, 0
      %p73 = por %p71, %p72
      %s74 = ssub.s32 %s14, %s21
      %p75 = scmp.eq.s32.totalorder %s74, 0
      %s77 = sadd.s32 %s76, 1
      %s78 = scalar_select %p75, %s76, %s77
      %p81 = pneg %p75
      %p82 = scmp.eq.s32.totalorder %s14, 1
      %p83 = por %p81, %p82
      %p84 = scmp.ne.s32.totalorder %s76, %s79
      %p85 = scmp.eq.s32.totalorder %s14, 0
      %p86 = por %p84, %p85
      %p87 = scmp.ne.s32.totalorder %s76, %s79
      %p88 = scmp.eq.s32.totalorder %s19, 1
      %p89 = por %p87, %p88
      %p90 = scmp.ne.s32.totalorder %s79, %s80
      %p91 = scmp.eq.s32.totalorder %s19, 0
      %p92 = por %p90, %p91
      %p93 = scmp.ne.s32.totalorder %s79, %s80
      %p94 = scmp.eq.s32.totalorder %s20, 1
      %p95 = por %p93, %p94
      %p97 = scmp.ne.s32.totalorder %s80, %s96
      %p98 = scmp.eq.s32.totalorder %s20, 0
      %p99 = por %p97, %p98
      %s101 = sadd.s32 %s100, 1
      %p104 = scmp.eq.s32.totalorder %s14, 1
      %p105 = scmp.ne.s32.totalorder %s100, %s102
      %p106 = scmp.eq.s32.totalorder %s14, 0
      %p107 = por %p105, %p106
      %p108 = scmp.ne.s32.totalorder %s100, %s102
      %p109 = scmp.eq.s32.totalorder %s19, 1
      %p110 = por %p108, %p109
      %p111 = scmp.ne.s32.totalorder %s102, %s103
      %p112 = scmp.eq.s32.totalorder %s19, 0
      %p113 = por %p111, %p112
      %p114 = scmp.ne.s32.totalorder %s102, %s103
      %p115 = scmp.eq.s32.totalorder %s20, 1
      %p116 = por %p114, %p115
      %p118 = scmp.ne.s32.totalorder %s103, %s117
      %p119 = scmp.eq.s32.totalorder %s20, 0
      %p120 = por %p118, %p119
      %s122 = sadd.s32 %s121, 1
      %p125 = scmp.eq.s32.totalorder %s14, 1
      %p126 = scmp.ne.s32.totalorder %s121, %s123
      %p127 = scmp.eq.s32.totalorder %s14, 0
      %p128 = por %p126, %p127
      %p129 = scmp.ne.s32.totalorder %s121, %s123
      %p130 = scmp.eq.s32.totalorder %s19, 1
      %p131 = por %p129, %p130
      %p132 = scmp.ne.s32.totalorder %s123, %s124
      %p133 = scmp.eq.s32.totalorder %s19, 0
      %p134 = por %p132, %p133
      %p135 = scmp.ne.s32.totalorder %s123, %s124
      %p136 = scmp.eq.s32.totalorder %s20, 1
      %p137 = por %p135, %p136
      %p139 = scmp.ne.s32.totalorder %s124, %s138
      %p140 = scmp.eq.s32.totalorder %s20, 0
      %p141 = por %p139, %p140
      %s142 = ssub.s32 %s14, %s21
      %p143 = scmp.eq.s32.totalorder %s142, 0
      %s145 = sadd.s32 %s144, 1
      %s146 = scalar_select %p143, %s144, %s145
      %p149 = pneg %p143
      %p150 = scmp.eq.s32.totalorder %s14, 1
      %p151 = por %p149, %p150
      %p152 = scmp.ne.s32.totalorder %s144, %s147
      %p153 = scmp.eq.s32.totalorder %s14, 0
      %p154 = por %p152, %p153
      %p155 = scmp.ne.s32.totalorder %s144, %s147
      %p156 = scmp.eq.s32.totalorder %s19, 1
      %p157 = por %p155, %p156
      %p158 = scmp.ne.s32.totalorder %s147, %s148
      %p159 = scmp.eq.s32.totalorder %s19, 0
      %p160 = por %p158, %p159
      %p161 = scmp.ne.s32.totalorder %s147, %s148
      %p162 = scmp.eq.s32.totalorder %s20, 1
      %p163 = por %p161, %p162
      %p165 = scmp.ne.s32.totalorder %s148, %s164
      %p166 = scmp.eq.s32.totalorder %s20, 0
      %p167 = por %p165, %p166
      %p168 = scmp.le.s32.totalorder 1, %s14
      %p169 = scmp.lt.s32.totalorder %s14, 3
      %p170 = pnand %p168, %p169
      %p171 = pneg %p170
      // Predicated region
      $region9: #{_lambda_.7} parent=5 // pred_check
        _
      $region10: #{_lambda_.7} parent=5 // pred_check_branch
        %173 = sbr.rel (%p170) target = $region12
      $region11: #{_lambda_.7} parent=5 // pred_region
        %s174 = ssub.s32 %s14, 1
        // Predicated region
        $region13: #{_lambda_.7} parent=11 // pred_check
          %p175 = pneg %p113
        $region14: #{_lambda_.7} parent=11 // pred_check_branch
          %177 = sbr.rel (%p175) target = $region16
        $region15: #{_lambda_.7} parent=11 // pred_region
          _
        $region16: #{_lambda_.7} parent=11 // pred_fallthru
          _
        // Predicated region
        $region17: #{_lambda_.7} parent=11 // pred_check
          %p178 = pneg %p134
        $region18: #{_lambda_.7} parent=11 // pred_check_branch
          %180 = sbr.rel (%p178) target = $region20
        $region19: #{_lambda_.7} parent=11 // pred_region
          _
        $region20: #{_lambda_.7} parent=11 // pred_fallthru
          _
      $region12: #{_lambda_.7} parent=5 // pred_fallthru
        _
      %p181 = scmp.lt.s32.totalorder %s14, 2
      // Predicated region
      $region21: #{_lambda_.7} parent=5 // pred_check
        %p182 = pneg %p181
      $region22: #{_lambda_.7} parent=5 // pred_check_branch
        %184 = sbr.rel (%p182) target = $region24
      $region23: #{_lambda_.7} parent=5 // pred_region
        // Predicated region
        $region25: #{_lambda_.7} parent=23 // pred_check
          %p185 = pneg %p34
        $region26: #{_lambda_.7} parent=23 // pred_check_branch
          %187 = sbr.rel (%p185) target = $region28
        $region27: #{_lambda_.7} parent=23 // pred_region
          %p188 = scmp.lt.s32.totalorder %s14, 1
          %s189 = scalar_select %p188, %s14, 1
          %s190 = smul.addr %s189, 2
          %s191 = smul.addr %s190, 8
          %s192 = scalar_lea.vmem %s0, %s191
        $region28: #{_lambda_.7} parent=23 // pred_fallthru
          _
        // Predicated region
        $region29: #{_lambda_.7} parent=23 // pred_check
          %p193 = pneg %p60
        $region30: #{_lambda_.7} parent=23 // pred_check_branch
          %195 = sbr.rel (%p193) target = $region32
        $region31: #{_lambda_.7} parent=23 // pred_region
          %p196 = scmp.lt.s32.totalorder %s14, 1
          %s197 = scalar_select %p196, %s14, 1
          %s198 = smul.addr %s197, 8
          %s199 = scalar_lea.vmem %s1, %s198
        $region32: #{_lambda_.7} parent=23 // pred_fallthru
          _
        // Predicated region
        $region33: #{_lambda_.7} parent=23 // pred_check
          %p200 = pneg %p86
        $region34: #{_lambda_.7} parent=23 // pred_check_branch
          %202 = sbr.rel (%p200) target = $region36
        $region35: #{_lambda_.7} parent=23 // pred_region
          %p203 = scmp.lt.s32.totalorder %s14, 1
          %s204 = scalar_select %p203, %s14, 1
          %s205 = scalar_lea.vmem %s2, %s204
        $region36: #{_lambda_.7} parent=23 // pred_fallthru
          _
      $region24: #{_lambda_.7} parent=5 // pred_fallthru
        _
      %p206 = scmp.le.s32.totalorder 1, %s14
      %p207 = scmp.lt.s32.totalorder %s14, 3
      %p208 = pnand %p206, %p207
      %p209 = pneg %p208
      // Predicated region
      $region37: #{_lambda_.7} parent=5 // pred_check
        _
      $region38: #{_lambda_.7} parent=5 // pred_check_branch
        %211 = sbr.rel (%p208) target = $region40
      $region39: #{_lambda_.7} parent=5 // pred_region
        %s212 = ssub.s32 %s14, 1
        %p213 = scmp.lt.s32.totalorder %s19, 1
        %s214 = scalar_select %p213, %s19, 1
        %s215 = smul.addr %s214, 2
        %s216 = smul.addr %s215, 8
        %s217 = scalar_lea.vmem %s0, %s216
        %p218 = pneg %p40
        %p219 = pneg %p37
        %p220 = scmp.lt.s32.totalorder %s19, 1
        %s221 = scalar_select %p220, %s19, 1
        %s222 = smul.addr %s221, 8
        %s223 = scalar_lea.vmem %s1, %s222
        %p224 = pneg %p66
        %p225 = pneg %p63
        %p226 = scmp.lt.s32.totalorder %s19, 1
        %s227 = scalar_select %p226, %s19, 1
        %s228 = scalar_lea.vmem %s2, %s227
        %p229 = pneg %p92
        %p230 = pneg %p89
        %p231 = pneg %p113
        %p232 = pneg %p110
        %p233 = pneg %p134
        %p234 = pneg %p131
        %p235 = pneg %p160
        %p236 = pneg %p157
        %s237 = sand.u32 %s147, 1
        %s238 = scalar_lea.sflag [#allocation3], %s237
        %s239 = sand.u32 %s147, 1
        %s240 = smul.addr %s239, 16
        %s241 = scalar_lea.vmem [#allocation2], %s240
        %p242 = scmp.lt.s32.totalorder %s19, 1
        %s243 = scalar_select %p242, %s19, 1
        %s244 = smul.addr %s243, 2
        %s245 = smul.addr %s244, 8
        %s246 = scalar_lea.vmem %s0, %s245
        %p247 = scmp.lt.s32.totalorder %s19, 1
        %s248 = scalar_select %p247, %s19, 1
        %s249 = smul.addr %s248, 8
        %s250 = scalar_lea.vmem %s1, %s249
        %p251 = scmp.lt.s32.totalorder %s19, 1
        %s252 = scalar_select %p251, %s19, 1
        %s253 = scalar_lea.vmem %s2, %s252
        %v254 = vld [vmem:[%s246] sm:$0xff]
        %v255 = vld [vmem:[%s246 + $0x8] sm:$0xff]
        %v256 = vld [vmem:[%s250] sm:$0xff]
        %v257 = vld [vmem:[%s253] sm:$0x1]
        %v258 = vld [vmem:[%s3] sm:$0xff]
        %v259 = vld [vmem:[%s3 + $0x8] sm:$0xff]
        %v260 = vld [vmem:[%s3 + $0x10] sm:$0xff]
        %v261 = vld [vmem:[%s3 + $0x18] sm:$0xff]
        %v262 = vld [vmem:[%s4] sm:$0x1]
        %v264 = vlaneseq
        %v265 = vshrl.u32 %v264, 7
        %v266 = vsub.s32 0, %v265
        %v267 = vrot.slane %v262, %v266
        %vm269 = vcmask 261120
        %v271 = vsel %vm269, %v254, 0
        %v274 = vsel %vm269, %v255, 0
        %v277 = vsel %vm269, %v258, 0
        %v280 = vsel %vm269, %v259, 0
        %v283 = vsel %vm269, %v260, 0
        %v286 = vsel %vm269, %v261, 0
        %288 = vmatprep.subr.mxu0 0.0
        %289 = vmatpush1.xpose.msra.mxu0 0.0
        %290 = vmatprep.subr.mxu0 0.0
        %291 = vmatpush1.xpose.msra.mxu0 0.0
        %292 = vmatprep.subr.mxu0 0.0
        %293 = vmatpush1.xpose.msra.mxu0 0.0
        %294 = vmatprep.subr.mxu0 0.0
        %295 = vmatpush1.xpose.msra.mxu0 0.0
        %296 = vmatprep.subr.mxu0 0.0
        %297 = vmatpush1.xpose.msra.mxu0 0.0
        %298 = vmatprep.subr.mxu0 0.0
        %299 = vmatpush1.xpose.msra.mxu0 0.0
        %300 = vmatprep.subr.mxu0 0.0
        %301 = vmatpush1.xpose.msra.mxu0 0.0
        %302 = vmatprep.subr.mxu0 0.0
        %303 = vmatpush1.xpose.msra.mxu0 0.0
        %304 = vmatprep.subr.mxu0 0.0
        %305 = vmatpush1.xpose.msra.mxu0 0.0
        %306 = vmatprep.subr.mxu0 0.0
        %307 = vmatpush1.xpose.msra.mxu0 0.0
        %308 = vmatprep.subr.mxu0 0.0
        %309 = vmatpush1.xpose.msra.mxu0 0.0
        %310 = vmatprep.subr.mxu0 0.0
        %311 = vmatpush1.xpose.msra.mxu0 0.0
        %312 = vmatprep.subr.mxu0 0.0
        %313 = vmatpush1.xpose.msra.mxu0 %v286
        %314 = vmatprep.subr.mxu0 0.0
        %315 = vmatpush1.xpose.msra.mxu0 %v283
        %316 = vmatprep.subr.mxu0 0.0
        %317 = vmatpush1.xpose.msra.mxu0 %v280
        %318 = vmatprep.subr.mxu0 0.0
        %319 = vmatpush1.xpose.msra.mxu0 %v277
        %320 = vmatprep.subr.mxu0 0.0
        %321 = vmatpush2.xpose.msra.mxu0 0.0
        %322 = vmatprep.subr.mxu0 0.0
        %323 = vmatpush2.xpose.msra.mxu0 0.0
        %324 = vmatprep.subr.mxu0 0.0
        %325 = vmatpush2.xpose.msra.mxu0 0.0
        %326 = vmatprep.subr.mxu0 0.0
        %327 = vmatpush2.xpose.msra.mxu0 0.0
        %328 = vmatprep.subr.mxu0 0.0
        %329 = vmatpush2.xpose.msra.mxu0 0.0
        %330 = vmatprep.subr.mxu0 0.0
        %331 = vmatpush2.xpose.msra.mxu0 0.0
        %332 = vmatprep.subr.mxu0 0.0
        %333 = vmatpush2.xpose.msra.mxu0 0.0
        %334 = vmatprep.subr.mxu0 0.0
        %335 = vmatpush2.xpose.msra.mxu0 0.0
        %336 = vmatprep.subr.mxu0 0.0
        %337 = vmatpush2.xpose.msra.mxu0 0.0
        %338 = vmatprep.subr.mxu0 0.0
        %339 = vmatpush2.xpose.msra.mxu0 0.0
        %340 = vmatprep.subr.mxu0 0.0
        %341 = vmatpush2.xpose.msra.mxu0 0.0
        %342 = vmatprep.subr.mxu0 0.0
        %343 = vmatpush2.xpose.msra.mxu0 0.0
        %344 = vmatprep.subr.mxu0 0.0
        %345 = vmatpush2.xpose.msra.mxu0 0.0
        %346 = vmatprep.subr.mxu0 0.0
        %347 = vmatpush2.xpose.msra.mxu0 0.0
        %348 = vmatprep.subr.mxu0 0.0
        %349 = vmatpush2.xpose.msra.mxu0 0.0
        %350 = vmatprep.subr.mxu0 0.0
        %351 = vmatpush2.xpose.msra.mxu0 0.0
        %352 = vmatprep.mubr.f32.mxu0 0.0
        %353 = vmatmul.mubr.f32.gmra.mxu0 %v271
        %v354 = vpop.f32.mrf.mxu0
        %v355 = vadd.f32 %v267, %v354
        %v356 = vpop.f32.mrf.mxu0
        %357 = vmatprep.mubr.f32.mxu0 0.0
        %358 = vmatmul.mubr.f32.gmra.mxu0 %v274
        %v359 = vpop.f32.mrf.mxu0
        %v360 = vadd.f32 %v267, %v359
        %v361 = vpop.f32.mrf.mxu0
        %362 = vdwg.mxu0
        %s363 = scalar_lea.vmem %s3, 96
        %v364 = vld [vmem:[%s363] sm:$0xff]
        %v365 = vld [vmem:[%s363 + $0x8] sm:$0xff]
        %v366 = vld [vmem:[%s363 + $0x10] sm:$0xff]
        %v367 = vld [vmem:[%s363 + $0x18] sm:$0xff]
        %s368 = scalar_lea.vmem %s4, 3
        %v369 = vld [vmem:[%s368] sm:$0x1]
        %v371 = vlaneseq
        %v372 = vshrl.u32 %v371, 7
        %v373 = vsub.s32 0, %v372
        %v374 = vrot.slane %v369, %v373
        %v377 = vsel %vm269, %v355, 0
        %v380 = vsel %vm269, %v360, 0
        %v383 = vsel %vm269, %v364, 0
        %v386 = vsel %vm269, %v365, 0
        %v389 = vsel %vm269, %v366, 0
        %v392 = vsel %vm269, %v367, 0
        %394 = vmatprep.subr.mxu0 0.0
        %395 = vmatpush1.xpose.msra.mxu0 0.0
        %396 = vmatprep.subr.mxu0 0.0
        %397 = vmatpush1.xpose.msra.mxu0 0.0
        %398 = vmatprep.subr.mxu0 0.0
        %399 = vmatpush1.xpose.msra.mxu0 0.0
        %400 = vmatprep.subr.mxu0 0.0
        %401 = vmatpush1.xpose.msra.mxu0 0.0
        %402 = vmatprep.subr.mxu0 0.0
        %403 = vmatpush1.xpose.msra.mxu0 0.0
        %404 = vmatprep.subr.mxu0 0.0
        %405 = vmatpush1.xpose.msra.mxu0 0.0
        %406 = vmatprep.subr.mxu0 0.0
        %407 = vmatpush1.xpose.msra.mxu0 0.0
        %408 = vmatprep.subr.mxu0 0.0
        %409 = vmatpush1.xpose.msra.mxu0 0.0
        %410 = vmatprep.subr.mxu0 0.0
        %411 = vmatpush1.xpose.msra.mxu0 0.0
        %412 = vmatprep.subr.mxu0 0.0
        %413 = vmatpush1.xpose.msra.mxu0 0.0
        %414 = vmatprep.subr.mxu0 0.0
        %415 = vmatpush1.xpose.msra.mxu0 0.0
        %416 = vmatprep.subr.mxu0 0.0
        %417 = vmatpush1.xpose.msra.mxu0 0.0
        %418 = vmatprep.subr.mxu0 0.0
        %419 = vmatpush1.xpose.msra.mxu0 %v392
        %420 = vmatprep.subr.mxu0 0.0
        %421 = vmatpush1.xpose.msra.mxu0 %v389
        %422 = vmatprep.subr.mxu0 0.0
        %423 = vmatpush1.xpose.msra.mxu0 %v386
        %424 = vmatprep.subr.mxu0 0.0
        %425 = vmatpush1.xpose.msra.mxu0 %v383
        %426 = vmatprep.subr.mxu0 0.0
        %427 = vmatpush2.xpose.msra.mxu0 0.0
        %428 = vmatprep.subr.mxu0 0.0
        %429 = vmatpush2.xpose.msra.mxu0 0.0
        %430 = vmatprep.subr.mxu0 0.0
        %431 = vmatpush2.xpose.msra.mxu0 0.0
        %432 = vmatprep.subr.mxu0 0.0
        %433 = vmatpush2.xpose.msra.mxu0 0.0
        %434 = vmatprep.subr.mxu0 0.0
        %435 = vmatpush2.xpose.msra.mxu0 0.0
        %436 = vmatprep.subr.mxu0 0.0
        %437 = vmatpush2.xpose.msra.mxu0 0.0
        %438 = vmatprep.subr.mxu0 0.0
        %439 = vmatpush2.xpose.msra.mxu0 0.0
        %440 = vmatprep.subr.mxu0 0.0
        %441 = vmatpush2.xpose.msra.mxu0 0.0
        %442 = vmatprep.subr.mxu0 0.0
        %443 = vmatpush2.xpose.msra.mxu0 0.0
        %444 = vmatprep.subr.mxu0 0.0
        %445 = vmatpush2.xpose.msra.mxu0 0.0
        %446 = vmatprep.subr.mxu0 0.0
        %447 = vmatpush2.xpose.msra.mxu0 0.0
        %448 = vmatprep.subr.mxu0 0.0
        %449 = vmatpush2.xpose.msra.mxu0 0.0
        %450 = vmatprep.subr.mxu0 0.0
        %451 = vmatpush2.xpose.msra.mxu0 0.0
        %452 = vmatprep.subr.mxu0 0.0
        %453 = vmatpush2.xpose.msra.mxu0 0.0
        %454 = vmatprep.subr.mxu0 0.0
        %455 = vmatpush2.xpose.msra.mxu0 0.0
        %456 = vmatprep.subr.mxu0 0.0
        %457 = vmatpush2.xpose.msra.mxu0 0.0
        %458 = vmatprep.mubr.f32.mxu0 0.0
        %459 = vmatmul.mubr.f32.gmra.mxu0 %v377
        %v460 = vpop.f32.mrf.mxu0
        %v461 = vadd.f32 %v374, %v460
        %v462 = vpop.f32.mrf.mxu0
        %463 = vmatprep.mubr.f32.mxu0 0.0
        %464 = vmatmul.mubr.f32.gmra.mxu0 %v380
        %v465 = vpop.f32.mrf.mxu0
        %v466 = vadd.f32 %v374, %v465
        %v467 = vpop.f32.mrf.mxu0
        %468 = vdwg.mxu0
        %s469 = scalar_lea.vmem %s3, 32
        %v470 = vld [vmem:[%s469] sm:$0xff]
        %v471 = vld [vmem:[%s469 + $0x8] sm:$0xff]
        %v472 = vld [vmem:[%s469 + $0x10] sm:$0xff]
        %v473 = vld [vmem:[%s469 + $0x18] sm:$0xff]
        %s474 = scalar_lea.vmem %s4, 1
        %v475 = vld [vmem:[%s474] sm:$0x1]
        %v477 = vlaneseq
        %v478 = vshrl.u32 %v477, 7
        %v479 = vsub.s32 0, %v478
        %v480 = vrot.slane %v475, %v479
        %v483 = vsel %vm269, %v256, 0
        %v486 = vsel %vm269, %v470, 0
        %v489 = vsel %vm269, %v471, 0
        %v492 = vsel %vm269, %v472, 0
        %v495 = vsel %vm269, %v473, 0
        %497 = vmatprep.subr.mxu0 0.0
        %498 = vmatpush1.xpose.msra.mxu0 0.0
        %499 = vmatprep.subr.mxu0 0.0
        %500 = vmatpush1.xpose.msra.mxu0 0.0
        %501 = vmatprep.subr.mxu0 0.0
        %502 = vmatpush1.xpose.msra.mxu0 0.0
        %503 = vmatprep.subr.mxu0 0.0
        %504 = vmatpush1.xpose.msra.mxu0 0.0
        %505 = vmatprep.subr.mxu0 0.0
        %506 = vmatpush1.xpose.msra.mxu0 0.0
        %507 = vmatprep.subr.mxu0 0.0
        %508 = vmatpush1.xpose.msra.mxu0 0.0
        %509 = vmatprep.subr.mxu0 0.0
        %510 = vmatpush1.xpose.msra.mxu0 0.0
        %511 = vmatprep.subr.mxu0 0.0
        %512 = vmatpush1.xpose.msra.mxu0 0.0
        %513 = vmatprep.subr.mxu0 0.0
        %514 = vmatpush1.xpose.msra.mxu0 0.0
        %515 = vmatprep.subr.mxu0 0.0
        %516 = vmatpush1.xpose.msra.mxu0 0.0
        %517 = vmatprep.subr.mxu0 0.0
        %518 = vmatpush1.xpose.msra.mxu0 0.0
        %519 = vmatprep.subr.mxu0 0.0
        %520 = vmatpush1.xpose.msra.mxu0 0.0
        %521 = vmatprep.subr.mxu0 0.0
        %522 = vmatpush1.xpose.msra.mxu0 %v495
        %523 = vmatprep.subr.mxu0 0.0
        %524 = vmatpush1.xpose.msra.mxu0 %v492
        %525 = vmatprep.subr.mxu0 0.0
        %526 = vmatpush1.xpose.msra.mxu0 %v489
        %527 = vmatprep.subr.mxu0 0.0
        %528 = vmatpush1.xpose.msra.mxu0 %v486
        %529 = vmatprep.subr.mxu0 0.0
        %530 = vmatpush2.xpose.msra.mxu0 0.0
        %531 = vmatprep.subr.mxu0 0.0
        %532 = vmatpush2.xpose.msra.mxu0 0.0
        %533 = vmatprep.subr.mxu0 0.0
        %534 = vmatpush2.xpose.msra.mxu0 0.0
        %535 = vmatprep.subr.mxu0 0.0
        %536 = vmatpush2.xpose.msra.mxu0 0.0
        %537 = vmatprep.subr.mxu0 0.0
        %538 = vmatpush2.xpose.msra.mxu0 0.0
        %539 = vmatprep.subr.mxu0 0.0
        %540 = vmatpush2.xpose.msra.mxu0 0.0
        %541 = vmatprep.subr.mxu0 0.0
        %542 = vmatpush2.xpose.msra.mxu0 0.0
        %543 = vmatprep.subr.mxu0 0.0
        %544 = vmatpush2.xpose.msra.mxu0 0.0
        %545 = vmatprep.subr.mxu0 0.0
        %546 = vmatpush2.xpose.msra.mxu0 0.0
        %547 = vmatprep.subr.mxu0 0.0
        %548 = vmatpush2.xpose.msra.mxu0 0.0
        %549 = vmatprep.subr.mxu0 0.0
        %550 = vmatpush2.xpose.msra.mxu0 0.0
        %551 = vmatprep.subr.mxu0 0.0
        %552 = vmatpush2.xpose.msra.mxu0 0.0
        %553 = vmatprep.subr.mxu0 0.0
        %554 = vmatpush2.xpose.msra.mxu0 0.0
        %555 = vmatprep.subr.mxu0 0.0
        %556 = vmatpush2.xpose.msra.mxu0 0.0
        %557 = vmatprep.subr.mxu0 0.0
        %558 = vmatpush2.xpose.msra.mxu0 0.0
        %559 = vmatprep.subr.mxu0 0.0
        %560 = vmatpush2.xpose.msra.mxu0 0.0
        %561 = vmatprep.mubr.f32.mxu0 0.0
        %562 = vmatmul.mubr.f32.gmra.mxu0 %v483
        %v563 = vpop.f32.mrf.mxu0
        %v564 = vadd.f32 %v480, %v563
        %v565 = vpop.f32.mrf.mxu0
        %566 = vdwg.mxu0
        %s567 = scalar_lea.vmem %s3, 128
        %v568 = vld [vmem:[%s567] sm:$0xff]
        %v569 = vld [vmem:[%s567 + $0x8] sm:$0xff]
        %v570 = vld [vmem:[%s567 + $0x10] sm:$0xff]
        %v571 = vld [vmem:[%s567 + $0x18] sm:$0xff]
        %s572 = scalar_lea.vmem %s4, 4
        %v573 = vld [vmem:[%s572] sm:$0x1]
        %v575 = vlaneseq
        %v576 = vshrl.u32 %v575, 7
        %v577 = vsub.s32 0, %v576
        %v578 = vrot.slane %v573, %v577
        %v581 = vsel %vm269, %v564, 0
        %v584 = vsel %vm269, %v568, 0
        %v587 = vsel %vm269, %v569, 0
        %v590 = vsel %vm269, %v570, 0
        %v593 = vsel %vm269, %v571, 0
        %595 = vmatprep.subr.mxu0 0.0
        %596 = vmatpush1.xpose.msra.mxu0 0.0
        %597 = vmatprep.subr.mxu0 0.0
        %598 = vmatpush1.xpose.msra.mxu0 0.0
        %599 = vmatprep.subr.mxu0 0.0
        %600 = vmatpush1.xpose.msra.mxu0 0.0
        %601 = vmatprep.subr.mxu0 0.0
        %602 = vmatpush1.xpose.msra.mxu0 0.0
        %603 = vmatprep.subr.mxu0 0.0
        %604 = vmatpush1.xpose.msra.mxu0 0.0
        %605 = vmatprep.subr.mxu0 0.0
        %606 = vmatpush1.xpose.msra.mxu0 0.0
        %607 = vmatprep.subr.mxu0 0.0
        %608 = vmatpush1.xpose.msra.mxu0 0.0
        %609 = vmatprep.subr.mxu0 0.0
        %610 = vmatpush1.xpose.msra.mxu0 0.0
        %611 = vmatprep.subr.mxu0 0.0
        %612 = vmatpush1.xpose.msra.mxu0 0.0
        %613 = vmatprep.subr.mxu0 0.0
        %614 = vmatpush1.xpose.msra.mxu0 0.0
        %615 = vmatprep.subr.mxu0 0.0
        %616 = vmatpush1.xpose.msra.mxu0 0.0
        %617 = vmatprep.subr.mxu0 0.0
        %618 = vmatpush1.xpose.msra.mxu0 0.0
        %619 = vmatprep.subr.mxu0 0.0
        %620 = vmatpush1.xpose.msra.mxu0 %v593
        %621 = vmatprep.subr.mxu0 0.0
        %622 = vmatpush1.xpose.msra.mxu0 %v590
        %623 = vmatprep.subr.mxu0 0.0
        %624 = vmatpush1.xpose.msra.mxu0 %v587
        %625 = vmatprep.subr.mxu0 0.0
        %626 = vmatpush1.xpose.msra.mxu0 %v584
        %627 = vmatprep.subr.mxu0 0.0
        %628 = vmatpush2.xpose.msra.mxu0 0.0
        %629 = vmatprep.subr.mxu0 0.0
        %630 = vmatpush2.xpose.msra.mxu0 0.0
        %631 = vmatprep.subr.mxu0 0.0
        %632 = vmatpush2.xpose.msra.mxu0 0.0
        %633 = vmatprep.subr.mxu0 0.0
        %634 = vmatpush2.xpose.msra.mxu0 0.0
        %635 = vmatprep.subr.mxu0 0.0
        %636 = vmatpush2.xpose.msra.mxu0 0.0
        %637 = vmatprep.subr.mxu0 0.0
        %638 = vmatpush2.xpose.msra.mxu0 0.0
        %639 = vmatprep.subr.mxu0 0.0
        %640 = vmatpush2.xpose.msra.mxu0 0.0
        %641 = vmatprep.subr.mxu0 0.0
        %642 = vmatpush2.xpose.msra.mxu0 0.0
        %643 = vmatprep.subr.mxu0 0.0
        %644 = vmatpush2.xpose.msra.mxu0 0.0
        %645 = vmatprep.subr.mxu0 0.0
        %646 = vmatpush2.xpose.msra.mxu0 0.0
        %647 = vmatprep.subr.mxu0 0.0
        %648 = vmatpush2.xpose.msra.mxu0 0.0
        %649 = vmatprep.subr.mxu0 0.0
        %650 = vmatpush2.xpose.msra.mxu0 0.0
        %651 = vmatprep.subr.mxu0 0.0
        %652 = vmatpush2.xpose.msra.mxu0 0.0
        %653 = vmatprep.subr.mxu0 0.0
        %654 = vmatpush2.xpose.msra.mxu0 0.0
        %655 = vmatprep.subr.mxu0 0.0
        %656 = vmatpush2.xpose.msra.mxu0 0.0
        %657 = vmatprep.subr.mxu0 0.0
        %658 = vmatpush2.xpose.msra.mxu0 0.0
        %659 = vmatprep.mubr.f32.mxu0 0.0
        %660 = vmatmul.mubr.f32.gmra.mxu0 %v581
        %v661 = vpop.f32.mrf.mxu0
        %v662 = vadd.f32 %v578, %v661
        %v663 = vpop.f32.mrf.mxu0
        %664 = vdwg.mxu0
        %s665 = scalar_lea.vmem %s3, 64
        %v666 = vld [vmem:[%s665] sm:$0xff]
        %v667 = vld [vmem:[%s665 + $0x8] sm:$0xff]
        %v668 = vld [vmem:[%s665 + $0x10] sm:$0xff]
        %v669 = vld [vmem:[%s665 + $0x18] sm:$0xff]
        %s670 = scalar_lea.vmem %s4, 2
        %v671 = vld [vmem:[%s670] sm:$0x1]
        %v673 = vlaneseq
        %v674 = vshrl.u32 %v673, 7
        %v675 = vsub.s32 0, %v674
        %v676 = vrot.slane %v671, %v675
        %v679 = vsel %vm269, %v666, 0
        %v682 = vsel %vm269, %v667, 0
        %v685 = vsel %vm269, %v668, 0
        %v688 = vsel %vm269, %v669, 0
        %690 = vmatprep.subr.mxu0 0.0
        %691 = vmatpush1.xpose.msra.mxu0 0.0
        %692 = vmatprep.subr.mxu0 0.0
        %693 = vmatpush1.xpose.msra.mxu0 0.0
        %694 = vmatprep.subr.mxu0 0.0
        %695 = vmatpush1.xpose.msra.mxu0 0.0
        %696 = vmatprep.subr.mxu0 0.0
        %697 = vmatpush1.xpose.msra.mxu0 0.0
        %698 = vmatprep.subr.mxu0 0.0
        %699 = vmatpush1.xpose.msra.mxu0 0.0
        %700 = vmatprep.subr.mxu0 0.0
        %701 = vmatpush1.xpose.msra.mxu0 0.0
        %702 = vmatprep.subr.mxu0 0.0
        %703 = vmatpush1.xpose.msra.mxu0 0.0
        %704 = vmatprep.subr.mxu0 0.0
        %705 = vmatpush1.xpose.msra.mxu0 0.0
        %706 = vmatprep.subr.mxu0 0.0
        %707 = vmatpush1.xpose.msra.mxu0 0.0
        %708 = vmatprep.subr.mxu0 0.0
        %709 = vmatpush1.xpose.msra.mxu0 0.0
        %710 = vmatprep.subr.mxu0 0.0
        %711 = vmatpush1.xpose.msra.mxu0 0.0
        %712 = vmatprep.subr.mxu0 0.0
        %713 = vmatpush1.xpose.msra.mxu0 0.0
        %714 = vmatprep.subr.mxu0 0.0
        %715 = vmatpush1.xpose.msra.mxu0 %v688
        %716 = vmatprep.subr.mxu0 0.0
        %717 = vmatpush1.xpose.msra.mxu0 %v685
        %718 = vmatprep.subr.mxu0 0.0
        %719 = vmatpush1.xpose.msra.mxu0 %v682
        %720 = vmatprep.subr.mxu0 0.0
        %721 = vmatpush1.xpose.msra.mxu0 %v679
        %722 = vmatprep.subr.mxu0 0.0
        %723 = vmatpush2.xpose.msra.mxu0 0.0
        %724 = vmatprep.subr.mxu0 0.0
        %725 = vmatpush2.xpose.msra.mxu0 0.0
        %726 = vmatprep.subr.mxu0 0.0
        %727 = vmatpush2.xpose.msra.mxu0 0.0
        %728 = vmatprep.subr.mxu0 0.0
        %729 = vmatpush2.xpose.msra.mxu0 0.0
        %730 = vmatprep.subr.mxu0 0.0
        %731 = vmatpush2.xpose.msra.mxu0 0.0
        %732 = vmatprep.subr.mxu0 0.0
        %733 = vmatpush2.xpose.msra.mxu0 0.0
        %734 = vmatprep.subr.mxu0 0.0
        %735 = vmatpush2.xpose.msra.mxu0 0.0
        %736 = vmatprep.subr.mxu0 0.0
        %737 = vmatpush2.xpose.msra.mxu0 0.0
        %738 = vmatprep.subr.mxu0 0.0
        %739 = vmatpush2.xpose.msra.mxu0 0.0
        %740 = vmatprep.subr.mxu0 0.0
        %741 = vmatpush2.xpose.msra.mxu0 0.0
        %742 = vmatprep.subr.mxu0 0.0
        %743 = vmatpush2.xpose.msra.mxu0 0.0
        %744 = vmatprep.subr.mxu0 0.0
        %745 = vmatpush2.xpose.msra.mxu0 0.0
        %746 = vmatprep.subr.mxu0 0.0
        %747 = vmatpush2.xpose.msra.mxu0 0.0
        %748 = vmatprep.subr.mxu0 0.0
        %749 = vmatpush2.xpose.msra.mxu0 0.0
        %750 = vmatprep.subr.mxu0 0.0
        %751 = vmatpush2.xpose.msra.mxu0 0.0
        %752 = vmatprep.subr.mxu0 0.0
        %753 = vmatpush2.xpose.msra.mxu0 0.0
        %754 = vmatprep.mubr.f32.mxu0 0.0
        %755 = vmatmul.mubr.f32.gmra.mxu0 %v483
        %v756 = vpop.f32.mrf.mxu0
        %v757 = vadd.f32 %v676, %v756
        %v758 = vpop.f32.mrf.mxu0
        %759 = vdwg.mxu0
        %s760 = scalar_lea.vmem %s3, 160
        %v761 = vld [vmem:[%s760] sm:$0xff]
        %v762 = vld [vmem:[%s760 + $0x8] sm:$0xff]
        %v763 = vld [vmem:[%s760 + $0x10] sm:$0xff]
        %v764 = vld [vmem:[%s760 + $0x18] sm:$0xff]
        %s765 = scalar_lea.vmem %s4, 5
        %v766 = vld [vmem:[%s765] sm:$0x1]
        %v768 = vlaneseq
        %v769 = vshrl.u32 %v768, 7
        %v770 = vsub.s32 0, %v769
        %v771 = vrot.slane %v766, %v770
        %v774 = vsel %vm269, %v757, 0
        %v777 = vsel %vm269, %v761, 0
        %v780 = vsel %vm269, %v762, 0
        %v783 = vsel %vm269, %v763, 0
        %v786 = vsel %vm269, %v764, 0
        %788 = vmatprep.subr.mxu0 0.0
        %789 = vmatpush1.xpose.msra.mxu0 0.0
        %790 = vmatprep.subr.mxu0 0.0
        %791 = vmatpush1.xpose.msra.mxu0 0.0
        %792 = vmatprep.subr.mxu0 0.0
        %793 = vmatpush1.xpose.msra.mxu0 0.0
        %794 = vmatprep.subr.mxu0 0.0
        %795 = vmatpush1.xpose.msra.mxu0 0.0
        %796 = vmatprep.subr.mxu0 0.0
        %797 = vmatpush1.xpose.msra.mxu0 0.0
        %798 = vmatprep.subr.mxu0 0.0
        %799 = vmatpush1.xpose.msra.mxu0 0.0
        %800 = vmatprep.subr.mxu0 0.0
        %801 = vmatpush1.xpose.msra.mxu0 0.0
        %802 = vmatprep.subr.mxu0 0.0
        %803 = vmatpush1.xpose.msra.mxu0 0.0
        %804 = vmatprep.subr.mxu0 0.0
        %805 = vmatpush1.xpose.msra.mxu0 0.0
        %806 = vmatprep.subr.mxu0 0.0
        %807 = vmatpush1.xpose.msra.mxu0 0.0
        %808 = vmatprep.subr.mxu0 0.0
        %809 = vmatpush1.xpose.msra.mxu0 0.0
        %810 = vmatprep.subr.mxu0 0.0
        %811 = vmatpush1.xpose.msra.mxu0 0.0
        %812 = vmatprep.subr.mxu0 0.0
        %813 = vmatpush1.xpose.msra.mxu0 %v786
        %814 = vmatprep.subr.mxu0 0.0
        %815 = vmatpush1.xpose.msra.mxu0 %v783
        %816 = vmatprep.subr.mxu0 0.0
        %817 = vmatpush1.xpose.msra.mxu0 %v780
        %818 = vmatprep.subr.mxu0 0.0
        %819 = vmatpush1.xpose.msra.mxu0 %v777
        %820 = vmatprep.subr.mxu0 0.0
        %821 = vmatpush2.xpose.msra.mxu0 0.0
        %822 = vmatprep.subr.mxu0 0.0
        %823 = vmatpush2.xpose.msra.mxu0 0.0
        %824 = vmatprep.subr.mxu0 0.0
        %825 = vmatpush2.xpose.msra.mxu0 0.0
        %826 = vmatprep.subr.mxu0 0.0
        %827 = vmatpush2.xpose.msra.mxu0 0.0
        %828 = vmatprep.subr.mxu0 0.0
        %829 = vmatpush2.xpose.msra.mxu0 0.0
        %830 = vmatprep.subr.mxu0 0.0
        %831 = vmatpush2.xpose.msra.mxu0 0.0
        %832 = vmatprep.subr.mxu0 0.0
        %833 = vmatpush2.xpose.msra.mxu0 0.0
        %834 = vmatprep.subr.mxu0 0.0
        %835 = vmatpush2.xpose.msra.mxu0 0.0
        %836 = vmatprep.subr.mxu0 0.0
        %837 = vmatpush2.xpose.msra.mxu0 0.0
        %838 = vmatprep.subr.mxu0 0.0
        %839 = vmatpush2.xpose.msra.mxu0 0.0
        %840 = vmatprep.subr.mxu0 0.0
        %841 = vmatpush2.xpose.msra.mxu0 0.0
        %842 = vmatprep.subr.mxu0 0.0
        %843 = vmatpush2.xpose.msra.mxu0 0.0
        %844 = vmatprep.subr.mxu0 0.0
        %845 = vmatpush2.xpose.msra.mxu0 0.0
        %846 = vmatprep.subr.mxu0 0.0
        %847 = vmatpush2.xpose.msra.mxu0 0.0
        %848 = vmatprep.subr.mxu0 0.0
        %849 = vmatpush2.xpose.msra.mxu0 0.0
        %850 = vmatprep.subr.mxu0 0.0
        %851 = vmatpush2.xpose.msra.mxu0 0.0
        %852 = vmatprep.mubr.f32.mxu0 0.0
        %853 = vmatmul.mubr.f32.gmra.mxu0 %v774
        %v854 = vpop.f32.mrf.mxu0
        %v855 = vadd.f32 %v771, %v854
        %v856 = vpop.f32.mrf.mxu0
        %857 = vdwg.mxu0
        %v858 = vmul.f32 %v461, 0.35355338
        %v859 = vmul.f32 %v466, 0.35355338
        %v861 = vlaneseq
        %v862 = vshrl.u32 %v861, 7
        %v863 = vsub.s32 0, %v862
        %v864 = vrot.slane %v257, %v863
        %vm866 = vcmask 64512
        %v868 = vsel %vm866, %v858, 0
        %v871 = vsel %vm866, %v859, 0
        %v874 = vsel %vm866, %v662, 0
        %876 = vmatprep.subr.mxu0 0.0
        %877 = vmatpush1.xpose.msra.mxu0 0.0
        %878 = vmatprep.subr.mxu0 0.0
        %879 = vmatpush1.xpose.msra.mxu0 0.0
        %880 = vmatprep.subr.mxu0 0.0
        %881 = vmatpush1.xpose.msra.mxu0 0.0
        %882 = vmatprep.subr.mxu0 0.0
        %883 = vmatpush1.xpose.msra.mxu0 0.0
        %884 = vmatprep.subr.mxu0 0.0
        %885 = vmatpush1.xpose.msra.mxu0 0.0
        %886 = vmatprep.subr.mxu0 0.0
        %887 = vmatpush1.xpose.msra.mxu0 0.0
        %888 = vmatprep.subr.mxu0 0.0
        %889 = vmatpush1.xpose.msra.mxu0 0.0
        %890 = vmatprep.subr.mxu0 0.0
        %891 = vmatpush1.xpose.msra.mxu0 0.0
        %892 = vmatprep.subr.mxu0 0.0
        %893 = vmatpush1.xpose.msra.mxu0 0.0
        %894 = vmatprep.subr.mxu0 0.0
        %895 = vmatpush1.xpose.msra.mxu0 0.0
        %896 = vmatprep.subr.mxu0 0.0
        %897 = vmatpush1.xpose.msra.mxu0 0.0
        %898 = vmatprep.subr.mxu0 0.0
        %899 = vmatpush1.xpose.msra.mxu0 0.0
        %900 = vmatprep.subr.mxu0 0.0
        %901 = vmatpush1.xpose.msra.mxu0 0.0
        %902 = vmatprep.subr.mxu0 0.0
        %903 = vmatpush1.xpose.msra.mxu0 0.0
        %904 = vmatprep.subr.mxu0 0.0
        %905 = vmatpush1.xpose.msra.mxu0 0.0
        %906 = vmatprep.subr.mxu0 0.0
        %907 = vmatpush1.xpose.msra.mxu0 %v874
        %908 = vmatprep.subr.mxu0 0.0
        %909 = vmatpush2.xpose.msra.mxu0 0.0
        %910 = vmatprep.subr.mxu0 0.0
        %911 = vmatpush2.xpose.msra.mxu0 0.0
        %912 = vmatprep.subr.mxu0 0.0
        %913 = vmatpush2.xpose.msra.mxu0 0.0
        %914 = vmatprep.subr.mxu0 0.0
        %915 = vmatpush2.xpose.msra.mxu0 0.0
        %916 = vmatprep.subr.mxu0 0.0
        %917 = vmatpush2.xpose.msra.mxu0 0.0
        %918 = vmatprep.subr.mxu0 0.0
        %919 = vmatpush2.xpose.msra.mxu0 0.0
        %920 = vmatprep.subr.mxu0 0.0
        %921 = vmatpush2.xpose.msra.mxu0 0.0
        %922 = vmatprep.subr.mxu0 0.0
        %923 = vmatpush2.xpose.msra.mxu0 0.0
        %924 = vmatprep.subr.mxu0 0.0
        %925 = vmatpush2.xpose.msra.mxu0 0.0
        %926 = vmatprep.subr.mxu0 0.0
        %927 = vmatpush2.xpose.msra.mxu0 0.0
        %928 = vmatprep.subr.mxu0 0.0
        %929 = vmatpush2.xpose.msra.mxu0 0.0
        %930 = vmatprep.subr.mxu0 0.0
        %931 = vmatpush2.xpose.msra.mxu0 0.0
        %932 = vmatprep.subr.mxu0 0.0
        %933 = vmatpush2.xpose.msra.mxu0 0.0
        %934 = vmatprep.subr.mxu0 0.0
        %935 = vmatpush2.xpose.msra.mxu0 0.0
        %936 = vmatprep.subr.mxu0 0.0
        %937 = vmatpush2.xpose.msra.mxu0 0.0
        %938 = vmatprep.subr.mxu0 0.0
        %939 = vmatpush2.xpose.msra.mxu0 0.0
        %940 = vmatprep.mubr.f32.mxu0 0.0
        %941 = vmatmul.mubr.f32.gmra.mxu0 %v868
        %v942 = vpop.f32.mrf.mxu0
        %v943 = vadd.f32 %v864, %v942
        %v944 = vpop.f32.mrf.mxu0
        %945 = vmatprep.mubr.f32.mxu0 0.0
        %946 = vmatmul.mubr.f32.gmra.mxu0 %v871
        %v947 = vpop.f32.mrf.mxu0
        %v948 = vadd.f32 %v864, %v947
        %v949 = vpop.f32.mrf.mxu0
        %950 = vdwg.mxu0
        %v951 = vsel %vm866, %v943, -inf
        %952 = vmax.xlane.f32.xlu0 %v951
        %v953 = vpop.xlane.xlu0 %952
        %v954 = vsel %vm866, %v948, -inf
        %955 = vmax.xlane.f32.xlu0 %v954
        %v956 = vpop.xlane.xlu0 %955
        %v957 = vsub.f32 %v943, %v953
        %v958 = vsub.f32 %v948, %v956
        %v959 = vmul.f32 %v957, 1.442695
        %v960 = vpow.pop %v959
        %v961 = vmul.f32 %v958, 1.442695
        %v962 = vpow.pop %v961
        %v963 = vsel %vm866, %v960, 0.0
        %964 = vadd.xlane.f32.xlu0 %v963
        %v965 = vpop.xlane.xlu0 %964
        %v966 = vsel %vm866, %v962, 0.0
        %967 = vadd.xlane.f32.xlu0 %v966
        %v968 = vpop.xlane.xlu0 %967
        %v969 = vrcp.pop %v965
        %v970 = vrcp.pop %v968
        %v971 = vmul.f32 %v960, %v969
        %v972 = vmul.f32 %v962, %v970
        %v974 = vsel %vm866, %v971, 0
        %v977 = vsel %vm866, %v972, 0
        %979 = vmatprep.subr.mxu0 0.0
        %980 = vmatpush1.msra.mxu0 0.0
        %981 = vmatprep.subr.mxu0 0.0
        %982 = vmatpush1.msra.mxu0 0.0
        %983 = vmatprep.subr.mxu0 0.0
        %984 = vmatpush1.msra.mxu0 0.0
        %985 = vmatprep.subr.mxu0 0.0
        %986 = vmatpush1.msra.mxu0 0.0
        %987 = vmatprep.subr.mxu0 0.0
        %988 = vmatpush1.msra.mxu0 0.0
        %989 = vmatprep.subr.mxu0 0.0
        %990 = vmatpush1.msra.mxu0 0.0
        %991 = vmatprep.subr.mxu0 0.0
        %992 = vmatpush1.msra.mxu0 0.0
        %993 = vmatprep.subr.mxu0 0.0
        %994 = vmatpush1.msra.mxu0 0.0
        %995 = vmatprep.subr.mxu0 0.0
        %996 = vmatpush1.msra.mxu0 0.0
        %997 = vmatprep.subr.mxu0 0.0
        %998 = vmatpush1.msra.mxu0 0.0
        %999 = vmatprep.subr.mxu0 0.0
        %1000 = vmatpush1.msra.mxu0 0.0
        %1001 = vmatprep.subr.mxu0 0.0
        %1002 = vmatpush1.msra.mxu0 0.0
        %1003 = vmatprep.subr.mxu0 0.0
        %1004 = vmatpush1.msra.mxu0 0.0
        %1005 = vmatprep.subr.mxu0 0.0
        %1006 = vmatpush1.msra.mxu0 0.0
        %1007 = vmatprep.subr.mxu0 0.0
        %1008 = vmatpush1.msra.mxu0 0.0
        %1009 = vmatprep.subr.mxu0 0.0
        %1010 = vmatpush1.msra.mxu0 %v855
        %1011 = vmatprep.subr.mxu0 0.0
        %1012 = vmatpush2.msra.mxu0 0.0
        %1013 = vmatprep.subr.mxu0 0.0
        %1014 = vmatpush2.msra.mxu0 0.0
        %1015 = vmatprep.subr.mxu0 0.0
        %1016 = vmatpush2.msra.mxu0 0.0
        %1017 = vmatprep.subr.mxu0 0.0
        %1018 = vmatpush2.msra.mxu0 0.0
        %1019 = vmatprep.subr.mxu0 0.0
        %1020 = vmatpush2.msra.mxu0 0.0
        %1021 = vmatprep.subr.mxu0 0.0
        %1022 = vmatpush2.msra.mxu0 0.0
        %1023 = vmatprep.subr.mxu0 0.0
        %1024 = vmatpush2.msra.mxu0 0.0
        %1025 = vmatprep.subr.mxu0 0.0
        %1026 = vmatpush2.msra.mxu0 0.0
        %1027 = vmatprep.subr.mxu0 0.0
        %1028 = vmatpush2.msra.mxu0 0.0
        %1029 = vmatprep.subr.mxu0 0.0
        %1030 = vmatpush2.msra.mxu0 0.0
        %1031 = vmatprep.subr.mxu0 0.0
        %1032 = vmatpush2.msra.mxu0 0.0
        %1033 = vmatprep.subr.mxu0 0.0
        %1034 = vmatpush2.msra.mxu0 0.0
        %1035 = vmatprep.subr.mxu0 0.0
        %1036 = vmatpush2.msra.mxu0 0.0
        %1037 = vmatprep.subr.mxu0 0.0
        %1038 = vmatpush2.msra.mxu0 0.0
        %1039 = vmatprep.subr.mxu0 0.0
        %1040 = vmatpush2.msra.mxu0 0.0
        %1041 = vmatprep.subr.mxu0 0.0
        %1042 = vmatpush2.msra.mxu0 0.0
        %1043 = vmatprep.mubr.f32.mxu0 0.0
        %1044 = vmatmul.mubr.f32.gmra.mxu0 %v974
        %v1045 = vpop.f32.mrf.mxu0
        %v1046 = vadd.f32 0.0, %v1045
        %v1047 = vpop.f32.mrf.mxu0
        %1048 = vmatprep.mubr.f32.mxu0 0.0
        %1049 = vmatmul.mubr.f32.gmra.mxu0 %v977
        %v1050 = vpop.f32.mrf.mxu0
        %v1051 = vadd.f32 0.0, %v1050
        %v1052 = vpop.f32.mrf.mxu0
        %1053 = vdwg.mxu0
        %1054 = vrot.lane.b32.xlu0 %v858, 120
        %v1055 = vpop.permute.xlu0 %1054
        %1056 = vrot.lane.b32.xlu0 %v859, 120
        %v1057 = vpop.permute.xlu0 %1056
        %1058 = vrot.lane.b32.xlu0 %v662, 120
        %v1059 = vpop.permute.xlu0 %1058
        %v1060 = vsel %vm866, %v1055, 0
        %v1062 = vsel %vm866, %v1057, 0
        %v1064 = vsel %vm866, %v1059, 0
        %1066 = vmatprep.subr.mxu0 0.0
        %1067 = vmatpush1.xpose.msra.mxu0 0.0
        %1068 = vmatprep.subr.mxu0 0.0
        %1069 = vmatpush1.xpose.msra.mxu0 0.0
        %1070 = vmatprep.subr.mxu0 0.0
        %1071 = vmatpush1.xpose.msra.mxu0 0.0
        %1072 = vmatprep.subr.mxu0 0.0
        %1073 = vmatpush1.xpose.msra.mxu0 0.0
        %1074 = vmatprep.subr.mxu0 0.0
        %1075 = vmatpush1.xpose.msra.mxu0 0.0
        %1076 = vmatprep.subr.mxu0 0.0
        %1077 = vmatpush1.xpose.msra.mxu0 0.0
        %1078 = vmatprep.subr.mxu0 0.0
        %1079 = vmatpush1.xpose.msra.mxu0 0.0
        %1080 = vmatprep.subr.mxu0 0.0
        %1081 = vmatpush1.xpose.msra.mxu0 0.0
        %1082 = vmatprep.subr.mxu0 0.0
        %1083 = vmatpush1.xpose.msra.mxu0 0.0
        %1084 = vmatprep.subr.mxu0 0.0
        %1085 = vmatpush1.xpose.msra.mxu0 0.0
        %1086 = vmatprep.subr.mxu0 0.0
        %1087 = vmatpush1.xpose.msra.mxu0 0.0
        %1088 = vmatprep.subr.mxu0 0.0
        %1089 = vmatpush1.xpose.msra.mxu0 0.0
        %1090 = vmatprep.subr.mxu0 0.0
        %1091 = vmatpush1.xpose.msra.mxu0 0.0
        %1092 = vmatprep.subr.mxu0 0.0
        %1093 = vmatpush1.xpose.msra.mxu0 0.0
        %1094 = vmatprep.subr.mxu0 0.0
        %1095 = vmatpush1.xpose.msra.mxu0 0.0
        %1096 = vmatprep.subr.mxu0 0.0
        %1097 = vmatpush1.xpose.msra.mxu0 %v1064
        %1098 = vmatprep.subr.mxu0 0.0
        %1099 = vmatpush2.xpose.msra.mxu0 0.0
        %1100 = vmatprep.subr.mxu0 0.0
        %1101 = vmatpush2.xpose.msra.mxu0 0.0
        %1102 = vmatprep.subr.mxu0 0.0
        %1103 = vmatpush2.xpose.msra.mxu0 0.0
        %1104 = vmatprep.subr.mxu0 0.0
        %1105 = vmatpush2.xpose.msra.mxu0 0.0
        %1106 = vmatprep.subr.mxu0 0.0
        %1107 = vmatpush2.xpose.msra.mxu0 0.0
        %1108 = vmatprep.subr.mxu0 0.0
        %1109 = vmatpush2.xpose.msra.mxu0 0.0
        %1110 = vmatprep.subr.mxu0 0.0
        %1111 = vmatpush2.xpose.msra.mxu0 0.0
        %1112 = vmatprep.subr.mxu0 0.0
        %1113 = vmatpush2.xpose.msra.mxu0 0.0
        %1114 = vmatprep.subr.mxu0 0.0
        %1115 = vmatpush2.xpose.msra.mxu0 0.0
        %1116 = vmatprep.subr.mxu0 0.0
        %1117 = vmatpush2.xpose.msra.mxu0 0.0
        %1118 = vmatprep.subr.mxu0 0.0
        %1119 = vmatpush2.xpose.msra.mxu0 0.0
        %1120 = vmatprep.subr.mxu0 0.0
        %1121 = vmatpush2.xpose.msra.mxu0 0.0
        %1122 = vmatprep.subr.mxu0 0.0
        %1123 = vmatpush2.xpose.msra.mxu0 0.0
        %1124 = vmatprep.subr.mxu0 0.0
        %1125 = vmatpush2.xpose.msra.mxu0 0.0
        %1126 = vmatprep.subr.mxu0 0.0
        %1127 = vmatpush2.xpose.msra.mxu0 0.0
        %1128 = vmatprep.subr.mxu0 0.0
        %1129 = vmatpush2.xpose.msra.mxu0 0.0
        %1130 = vmatprep.mubr.f32.mxu0 0.0
        %1131 = vmatmul.mubr.f32.gmra.mxu0 %v1060
        %v1132 = vpop.f32.mrf.mxu0
        %v1133 = vadd.f32 %v864, %v1132
        %v1134 = vpop.f32.mrf.mxu0
        %1135 = vmatprep.mubr.f32.mxu0 0.0
        %1136 = vmatmul.mubr.f32.gmra.mxu0 %v1062
        %v1137 = vpop.f32.mrf.mxu0
        %v1138 = vadd.f32 %v864, %v1137
        %v1139 = vpop.f32.mrf.mxu0
        %1140 = vdwg.mxu0
        %v1141 = vsel %vm866, %v1133, -inf
        %1142 = vmax.xlane.f32.xlu0 %v1141
        %v1143 = vpop.xlane.xlu0 %1142
        %v1144 = vsel %vm866, %v1138, -inf
        %1145 = vmax.xlane.f32.xlu0 %v1144
        %v1146 = vpop.xlane.xlu0 %1145
        %v1147 = vsub.f32 %v1133, %v1143
        %v1148 = vsub.f32 %v1138, %v1146
        %v1149 = vmul.f32 %v1147, 1.442695
        %v1150 = vpow.pop %v1149
        %v1151 = vmul.f32 %v1148, 1.442695
        %v1152 = vpow.pop %v1151
        %v1153 = vsel %vm866, %v1150, 0.0
        %1154 = vadd.xlane.f32.xlu0 %v1153
        %v1155 = vpop.xlane.xlu0 %1154
        %v1156 = vsel %vm866, %v1152, 0.0
        %1157 = vadd.xlane.f32.xlu0 %v1156
        %v1158 = vpop.xlane.xlu0 %1157
        %v1159 = vrcp.pop %v1155
        %v1160 = vrcp.pop %v1158
        %v1161 = vmul.f32 %v1150, %v1159
        %v1162 = vmul.f32 %v1152, %v1160
        %1164 = vrot.lane.b32.xlu0 %v855, 120
        %v1165 = vpop.permute.xlu0 %1164
        %v1168 = vsel %vm866, %v1161, 0
        %v1171 = vsel %vm866, %v1162, 0
        %1173 = vmatprep.subr.mxu0 0.0
        %1174 = vmatpush1.msra.mxu0 0.0
        %1175 = vmatprep.subr.mxu0 0.0
        %1176 = vmatpush1.msra.mxu0 0.0
        %1177 = vmatprep.subr.mxu0 0.0
        %1178 = vmatpush1.msra.mxu0 0.0
        %1179 = vmatprep.subr.mxu0 0.0
        %1180 = vmatpush1.msra.mxu0 0.0
        %1181 = vmatprep.subr.mxu0 0.0
        %1182 = vmatpush1.msra.mxu0 0.0
        %1183 = vmatprep.subr.mxu0 0.0
        %1184 = vmatpush1.msra.mxu0 0.0
        %1185 = vmatprep.subr.mxu0 0.0
        %1186 = vmatpush1.msra.mxu0 0.0
        %1187 = vmatprep.subr.mxu0 0.0
        %1188 = vmatpush1.msra.mxu0 0.0
        %1189 = vmatprep.subr.mxu0 0.0
        %1190 = vmatpush1.msra.mxu0 0.0
        %1191 = vmatprep.subr.mxu0 0.0
        %1192 = vmatpush1.msra.mxu0 0.0
        %1193 = vmatprep.subr.mxu0 0.0
        %1194 = vmatpush1.msra.mxu0 0.0
        %1195 = vmatprep.subr.mxu0 0.0
        %1196 = vmatpush1.msra.mxu0 0.0
        %1197 = vmatprep.subr.mxu0 0.0
        %1198 = vmatpush1.msra.mxu0 0.0
        %1199 = vmatprep.subr.mxu0 0.0
        %1200 = vmatpush1.msra.mxu0 0.0
        %1201 = vmatprep.subr.mxu0 0.0
        %1202 = vmatpush1.msra.mxu0 0.0
        %1203 = vmatprep.subr.mxu0 0.0
        %1204 = vmatpush1.msra.mxu0 %v1165
        %1205 = vmatprep.subr.mxu0 0.0
        %1206 = vmatpush2.msra.mxu0 0.0
        %1207 = vmatprep.subr.mxu0 0.0
        %1208 = vmatpush2.msra.mxu0 0.0
        %1209 = vmatprep.subr.mxu0 0.0
        %1210 = vmatpush2.msra.mxu0 0.0
        %1211 = vmatprep.subr.mxu0 0.0
        %1212 = vmatpush2.msra.mxu0 0.0
        %1213 = vmatprep.subr.mxu0 0.0
        %1214 = vmatpush2.msra.mxu0 0.0
        %1215 = vmatprep.subr.mxu0 0.0
        %1216 = vmatpush2.msra.mxu0 0.0
        %1217 = vmatprep.subr.mxu0 0.0
        %1218 = vmatpush2.msra.mxu0 0.0
        %1219 = vmatprep.subr.mxu0 0.0
        %1220 = vmatpush2.msra.mxu0 0.0
        %1221 = vmatprep.subr.mxu0 0.0
        %1222 = vmatpush2.msra.mxu0 0.0
        %1223 = vmatprep.subr.mxu0 0.0
        %1224 = vmatpush2.msra.mxu0 0.0
        %1225 = vmatprep.subr.mxu0 0.0
        %1226 = vmatpush2.msra.mxu0 0.0
        %1227 = vmatprep.subr.mxu0 0.0
        %1228 = vmatpush2.msra.mxu0 0.0
        %1229 = vmatprep.subr.mxu0 0.0
        %1230 = vmatpush2.msra.mxu0 0.0
        %1231 = vmatprep.subr.mxu0 0.0
        %1232 = vmatpush2.msra.mxu0 0.0
        %1233 = vmatprep.subr.mxu0 0.0
        %1234 = vmatpush2.msra.mxu0 0.0
        %1235 = vmatprep.subr.mxu0 0.0
        %1236 = vmatpush2.msra.mxu0 0.0
        %1237 = vmatprep.mubr.f32.mxu0 0.0
        %1238 = vmatmul.mubr.f32.gmra.mxu0 %v1168
        %v1239 = vpop.f32.mrf.mxu0
        %v1240 = vadd.f32 0.0, %v1239
        %v1241 = vpop.f32.mrf.mxu0
        %1242 = vmatprep.mubr.f32.mxu0 0.0
        %1243 = vmatmul.mubr.f32.gmra.mxu0 %v1171
        %v1244 = vpop.f32.mrf.mxu0
        %v1245 = vadd.f32 0.0, %v1244
        %v1246 = vpop.f32.mrf.mxu0
        %1247 = vdwg.mxu0
        %1248 = vrot.lane.b32.xlu0 %v858, 112
        %v1249 = vpop.permute.xlu0 %1248
        %1250 = vrot.lane.b32.xlu0 %v859, 112
        %v1251 = vpop.permute.xlu0 %1250
        %1252 = vrot.lane.b32.xlu0 %v662, 112
        %v1253 = vpop.permute.xlu0 %1252
        %v1254 = vsel %vm866, %v1249, 0
        %v1256 = vsel %vm866, %v1251, 0
        %v1258 = vsel %vm866, %v1253, 0
        %1260 = vmatprep.subr.mxu0 0.0
        %1261 = vmatpush1.xpose.msra.mxu0 0.0
        %1262 = vmatprep.subr.mxu0 0.0
        %1263 = vmatpush1.xpose.msra.mxu0 0.0
        %1264 = vmatprep.subr.mxu0 0.0
        %1265 = vmatpush1.xpose.msra.mxu0 0.0
        %1266 = vmatprep.subr.mxu0 0.0
        %1267 = vmatpush1.xpose.msra.mxu0 0.0
        %1268 = vmatprep.subr.mxu0 0.0
        %1269 = vmatpush1.xpose.msra.mxu0 0.0
        %1270 = vmatprep.subr.mxu0 0.0
        %1271 = vmatpush1.xpose.msra.mxu0 0.0
        %1272 = vmatprep.subr.mxu0 0.0
        %1273 = vmatpush1.xpose.msra.mxu0 0.0
        %1274 = vmatprep.subr.mxu0 0.0
        %1275 = vmatpush1.xpose.msra.mxu0 0.0
        %1276 = vmatprep.subr.mxu0 0.0
        %1277 = vmatpush1.xpose.msra.mxu0 0.0
        %1278 = vmatprep.subr.mxu0 0.0
        %1279 = vmatpush1.xpose.msra.mxu0 0.0
        %1280 = vmatprep.subr.mxu0 0.0
        %1281 = vmatpush1.xpose.msra.mxu0 0.0
        %1282 = vmatprep.subr.mxu0 0.0
        %1283 = vmatpush1.xpose.msra.mxu0 0.0
        %1284 = vmatprep.subr.mxu0 0.0
        %1285 = vmatpush1.xpose.msra.mxu0 0.0
        %1286 = vmatprep.subr.mxu0 0.0
        %1287 = vmatpush1.xpose.msra.mxu0 0.0
        %1288 = vmatprep.subr.mxu0 0.0
        %1289 = vmatpush1.xpose.msra.mxu0 0.0
        %1290 = vmatprep.subr.mxu0 0.0
        %1291 = vmatpush1.xpose.msra.mxu0 %v1258
        %1292 = vmatprep.subr.mxu0 0.0
        %1293 = vmatpush2.xpose.msra.mxu0 0.0
        %1294 = vmatprep.subr.mxu0 0.0
        %1295 = vmatpush2.xpose.msra.mxu0 0.0
        %1296 = vmatprep.subr.mxu0 0.0
        %1297 = vmatpush2.xpose.msra.mxu0 0.0
        %1298 = vmatprep.subr.mxu0 0.0
        %1299 = vmatpush2.xpose.msra.mxu0 0.0
        %1300 = vmatprep.subr.mxu0 0.0
        %1301 = vmatpush2.xpose.msra.mxu0 0.0
        %1302 = vmatprep.subr.mxu0 0.0
        %1303 = vmatpush2.xpose.msra.mxu0 0.0
        %1304 = vmatprep.subr.mxu0 0.0
        %1305 = vmatpush2.xpose.msra.mxu0 0.0
        %1306 = vmatprep.subr.mxu0 0.0
        %1307 = vmatpush2.xpose.msra.mxu0 0.0
        %1308 = vmatprep.subr.mxu0 0.0
        %1309 = vmatpush2.xpose.msra.mxu0 0.0
        %1310 = vmatprep.subr.mxu0 0.0
        %1311 = vmatpush2.xpose.msra.mxu0 0.0
        %1312 = vmatprep.subr.mxu0 0.0
        %1313 = vmatpush2.xpose.msra.mxu0 0.0
        %1314 = vmatprep.subr.mxu0 0.0
        %1315 = vmatpush2.xpose.msra.mxu0 0.0
        %1316 = vmatprep.subr.mxu0 0.0
        %1317 = vmatpush2.xpose.msra.mxu0 0.0
        %1318 = vmatprep.subr.mxu0 0.0
        %1319 = vmatpush2.xpose.msra.mxu0 0.0
        %1320 = vmatprep.subr.mxu0 0.0
        %1321 = vmatpush2.xpose.msra.mxu0 0.0
        %1322 = vmatprep.subr.mxu0 0.0
        %1323 = vmatpush2.xpose.msra.mxu0 0.0
        %1324 = vmatprep.mubr.f32.mxu0 0.0
        %1325 = vmatmul.mubr.f32.gmra.mxu0 %v1254
        %v1326 = vpop.f32.mrf.mxu0
        %v1327 = vadd.f32 %v864, %v1326
        %v1328 = vpop.f32.mrf.mxu0
        %1329 = vmatprep.mubr.f32.mxu0 0.0
        %1330 = vmatmul.mubr.f32.gmra.mxu0 %v1256
        %v1331 = vpop.f32.mrf.mxu0
        %v1332 = vadd.f32 %v864, %v1331
        %v1333 = vpop.f32.mrf.mxu0
        %1334 = vdwg.mxu0
        %v1335 = vsel %vm866, %v1327, -inf
        %1336 = vmax.xlane.f32.xlu0 %v1335
        %v1337 = vpop.xlane.xlu0 %1336
        %v1338 = vsel %vm866, %v1332, -inf
        %1339 = vmax.xlane.f32.xlu0 %v1338
        %v1340 = vpop.xlane.xlu0 %1339
        %v1341 = vsub.f32 %v1327, %v1337
        %v1342 = vsub.f32 %v1332, %v1340
        %v1343 = vmul.f32 %v1341, 1.442695
        %v1344 = vpow.pop %v1343
        %v1345 = vmul.f32 %v1342, 1.442695
        %v1346 = vpow.pop %v1345
        %v1347 = vsel %vm866, %v1344, 0.0
        %1348 = vadd.xlane.f32.xlu0 %v1347
        %v1349 = vpop.xlane.xlu0 %1348
        %v1350 = vsel %vm866, %v1346, 0.0
        %1351 = vadd.xlane.f32.xlu0 %v1350
        %v1352 = vpop.xlane.xlu0 %1351
        %v1353 = vrcp.pop %v1349
        %v1354 = vrcp.pop %v1352
        %v1355 = vmul.f32 %v1344, %v1353
        %v1356 = vmul.f32 %v1346, %v1354
        %1357 = vrot.lane.b32.xlu0 %v855, 112
        %v1358 = vpop.permute.xlu0 %1357
        %v1361 = vsel %vm866, %v1355, 0
        %v1364 = vsel %vm866, %v1356, 0
        %1366 = vmatprep.subr.mxu0 0.0
        %1367 = vmatpush1.msra.mxu0 0.0
        %1368 = vmatprep.subr.mxu0 0.0
        %1369 = vmatpush1.msra.mxu0 0.0
        %1370 = vmatprep.subr.mxu0 0.0
        %1371 = vmatpush1.msra.mxu0 0.0
        %1372 = vmatprep.subr.mxu0 0.0
        %1373 = vmatpush1.msra.mxu0 0.0
        %1374 = vmatprep.subr.mxu0 0.0
        %1375 = vmatpush1.msra.mxu0 0.0
        %1376 = vmatprep.subr.mxu0 0.0
        %1377 = vmatpush1.msra.mxu0 0.0
        %1378 = vmatprep.subr.mxu0 0.0
        %1379 = vmatpush1.msra.mxu0 0.0
        %1380 = vmatprep.subr.mxu0 0.0
        %1381 = vmatpush1.msra.mxu0 0.0
        %1382 = vmatprep.subr.mxu0 0.0
        %1383 = vmatpush1.msra.mxu0 0.0
        %1384 = vmatprep.subr.mxu0 0.0
        %1385 = vmatpush1.msra.mxu0 0.0
        %1386 = vmatprep.subr.mxu0 0.0
        %1387 = vmatpush1.msra.mxu0 0.0
        %1388 = vmatprep.subr.mxu0 0.0
        %1389 = vmatpush1.msra.mxu0 0.0
        %1390 = vmatprep.subr.mxu0 0.0
        %1391 = vmatpush1.msra.mxu0 0.0
        %1392 = vmatprep.subr.mxu0 0.0
        %1393 = vmatpush1.msra.mxu0 0.0
        %1394 = vmatprep.subr.mxu0 0.0
        %1395 = vmatpush1.msra.mxu0 0.0
        %1396 = vmatprep.subr.mxu0 0.0
        %1397 = vmatpush1.msra.mxu0 %v1358
        %1398 = vmatprep.subr.mxu0 0.0
        %1399 = vmatpush2.msra.mxu0 0.0
        %1400 = vmatprep.subr.mxu0 0.0
        %1401 = vmatpush2.msra.mxu0 0.0
        %1402 = vmatprep.subr.mxu0 0.0
        %1403 = vmatpush2.msra.mxu0 0.0
        %1404 = vmatprep.subr.mxu0 0.0
        %1405 = vmatpush2.msra.mxu0 0.0
        %1406 = vmatprep.subr.mxu0 0.0
        %1407 = vmatpush2.msra.mxu0 0.0
        %1408 = vmatprep.subr.mxu0 0.0
        %1409 = vmatpush2.msra.mxu0 0.0
        %1410 = vmatprep.subr.mxu0 0.0
        %1411 = vmatpush2.msra.mxu0 0.0
        %1412 = vmatprep.subr.mxu0 0.0
        %1413 = vmatpush2.msra.mxu0 0.0
        %1414 = vmatprep.subr.mxu0 0.0
        %1415 = vmatpush2.msra.mxu0 0.0
        %1416 = vmatprep.subr.mxu0 0.0
        %1417 = vmatpush2.msra.mxu0 0.0
        %1418 = vmatprep.subr.mxu0 0.0
        %1419 = vmatpush2.msra.mxu0 0.0
        %1420 = vmatprep.subr.mxu0 0.0
        %1421 = vmatpush2.msra.mxu0 0.0
        %1422 = vmatprep.subr.mxu0 0.0
        %1423 = vmatpush2.msra.mxu0 0.0
        %1424 = vmatprep.subr.mxu0 0.0
        %1425 = vmatpush2.msra.mxu0 0.0
        %1426 = vmatprep.subr.mxu0 0.0
        %1427 = vmatpush2.msra.mxu0 0.0
        %1428 = vmatprep.subr.mxu0 0.0
        %1429 = vmatpush2.msra.mxu0 0.0
        %1430 = vmatprep.mubr.f32.mxu0 0.0
        %1431 = vmatmul.mubr.f32.gmra.mxu0 %v1361
        %v1432 = vpop.f32.mrf.mxu0
        %v1433 = vadd.f32 0.0, %v1432
        %v1434 = vpop.f32.mrf.mxu0
        %1435 = vmatprep.mubr.f32.mxu0 0.0
        %1436 = vmatmul.mubr.f32.gmra.mxu0 %v1364
        %v1437 = vpop.f32.mrf.mxu0
        %v1438 = vadd.f32 0.0, %v1437
        %v1439 = vpop.f32.mrf.mxu0
        %1440 = vdwg.mxu0
        %1441 = vrot.lane.b32.xlu0 %v858, 104
        %v1442 = vpop.permute.xlu0 %1441
        %1443 = vrot.lane.b32.xlu0 %v859, 104
        %v1444 = vpop.permute.xlu0 %1443
        %1445 = vrot.lane.b32.xlu0 %v662, 104
        %v1446 = vpop.permute.xlu0 %1445
        %v1447 = vsel %vm866, %v1442, 0
        %v1449 = vsel %vm866, %v1444, 0
        %v1451 = vsel %vm866, %v1446, 0
        %1453 = vmatprep.subr.mxu0 0.0
        %1454 = vmatpush1.xpose.msra.mxu0 0.0
        %1455 = vmatprep.subr.mxu0 0.0
        %1456 = vmatpush1.xpose.msra.mxu0 0.0
        %1457 = vmatprep.subr.mxu0 0.0
        %1458 = vmatpush1.xpose.msra.mxu0 0.0
        %1459 = vmatprep.subr.mxu0 0.0
        %1460 = vmatpush1.xpose.msra.mxu0 0.0
        %1461 = vmatprep.subr.mxu0 0.0
        %1462 = vmatpush1.xpose.msra.mxu0 0.0
        %1463 = vmatprep.subr.mxu0 0.0
        %1464 = vmatpush1.xpose.msra.mxu0 0.0
        %1465 = vmatprep.subr.mxu0 0.0
        %1466 = vmatpush1.xpose.msra.mxu0 0.0
        %1467 = vmatprep.subr.mxu0 0.0
        %1468 = vmatpush1.xpose.msra.mxu0 0.0
        %1469 = vmatprep.subr.mxu0 0.0
        %1470 = vmatpush1.xpose.msra.mxu0 0.0
        %1471 = vmatprep.subr.mxu0 0.0
        %1472 = vmatpush1.xpose.msra.mxu0 0.0
        %1473 = vmatprep.subr.mxu0 0.0
        %1474 = vmatpush1.xpose.msra.mxu0 0.0
        %1475 = vmatprep.subr.mxu0 0.0
        %1476 = vmatpush1.xpose.msra.mxu0 0.0
        %1477 = vmatprep.subr.mxu0 0.0
        %1478 = vmatpush1.xpose.msra.mxu0 0.0
        %1479 = vmatprep.subr.mxu0 0.0
        %1480 = vmatpush1.xpose.msra.mxu0 0.0
        %1481 = vmatprep.subr.mxu0 0.0
        %1482 = vmatpush1.xpose.msra.mxu0 0.0
        %1483 = vmatprep.subr.mxu0 0.0
        %1484 = vmatpush1.xpose.msra.mxu0 %v1451
        %1485 = vmatprep.subr.mxu0 0.0
        %1486 = vmatpush2.xpose.msra.mxu0 0.0
        %1487 = vmatprep.subr.mxu0 0.0
        %1488 = vmatpush2.xpose.msra.mxu0 0.0
        %1489 = vmatprep.subr.mxu0 0.0
        %1490 = vmatpush2.xpose.msra.mxu0 0.0
        %1491 = vmatprep.subr.mxu0 0.0
        %1492 = vmatpush2.xpose.msra.mxu0 0.0
        %1493 = vmatprep.subr.mxu0 0.0
        %1494 = vmatpush2.xpose.msra.mxu0 0.0
        %1495 = vmatprep.subr.mxu0 0.0
        %1496 = vmatpush2.xpose.msra.mxu0 0.0
        %1497 = vmatprep.subr.mxu0 0.0
        %1498 = vmatpush2.xpose.msra.mxu0 0.0
        %1499 = vmatprep.subr.mxu0 0.0
        %1500 = vmatpush2.xpose.msra.mxu0 0.0
        %1501 = vmatprep.subr.mxu0 0.0
        %1502 = vmatpush2.xpose.msra.mxu0 0.0
        %1503 = vmatprep.subr.mxu0 0.0
        %1504 = vmatpush2.xpose.msra.mxu0 0.0
        %1505 = vmatprep.subr.mxu0 0.0
        %1506 = vmatpush2.xpose.msra.mxu0 0.0
        %1507 = vmatprep.subr.mxu0 0.0
        %1508 = vmatpush2.xpose.msra.mxu0 0.0
        %1509 = vmatprep.subr.mxu0 0.0
        %1510 = vmatpush2.xpose.msra.mxu0 0.0
        %1511 = vmatprep.subr.mxu0 0.0
        %1512 = vmatpush2.xpose.msra.mxu0 0.0
        %1513 = vmatprep.subr.mxu0 0.0
        %1514 = vmatpush2.xpose.msra.mxu0 0.0
        %1515 = vmatprep.subr.mxu0 0.0
        %1516 = vmatpush2.xpose.msra.mxu0 0.0
        %1517 = vmatprep.mubr.f32.mxu0 0.0
        %1518 = vmatmul.mubr.f32.gmra.mxu0 %v1447
        %v1519 = vpop.f32.mrf.mxu0
        %v1520 = vadd.f32 %v864, %v1519
        %v1521 = vpop.f32.mrf.mxu0
        %1522 = vmatprep.mubr.f32.mxu0 0.0
        %1523 = vmatmul.mubr.f32.gmra.mxu0 %v1449
        %v1524 = vpop.f32.mrf.mxu0
        %v1525 = vadd.f32 %v864, %v1524
        %v1526 = vpop.f32.mrf.mxu0
        %1527 = vdwg.mxu0
        %v1528 = vsel %vm866, %v1520, -inf
        %1529 = vmax.xlane.f32.xlu0 %v1528
        %v1530 = vpop.xlane.xlu0 %1529
        %v1531 = vsel %vm866, %v1525, -inf
        %1532 = vmax.xlane.f32.xlu0 %v1531
        %v1533 = vpop.xlane.xlu0 %1532
        %v1534 = vsub.f32 %v1520, %v1530
        %v1535 = vsub.f32 %v1525, %v1533
        %v1536 = vmul.f32 %v1534, 1.442695
        %v1537 = vpow.pop %v1536
        %v1538 = vmul.f32 %v1535, 1.442695
        %v1539 = vpow.pop %v1538
        %v1540 = vsel %vm866, %v1537, 0.0
        %1541 = vadd.xlane.f32.xlu0 %v1540
        %v1542 = vpop.xlane.xlu0 %1541
        %v1543 = vsel %vm866, %v1539, 0.0
        %1544 = vadd.xlane.f32.xlu0 %v1543
        %v1545 = vpop.xlane.xlu0 %1544
        %v1546 = vrcp.pop %v1542
        %v1547 = vrcp.pop %v1545
        %v1548 = vmul.f32 %v1537, %v1546
        %v1549 = vmul.f32 %v1539, %v1547
        %1550 = vrot.lane.b32.xlu0 %v855, 104
        %v1551 = vpop.permute.xlu0 %1550
        %v1554 = vsel %vm866, %v1548, 0
        %v1557 = vsel %vm866, %v1549, 0
        %1559 = vmatprep.subr.mxu0 0.0
        %1560 = vmatpush1.msra.mxu0 0.0
        %1561 = vmatprep.subr.mxu0 0.0
        %1562 = vmatpush1.msra.mxu0 0.0
        %1563 = vmatprep.subr.mxu0 0.0
        %1564 = vmatpush1.msra.mxu0 0.0
        %1565 = vmatprep.subr.mxu0 0.0
        %1566 = vmatpush1.msra.mxu0 0.0
        %1567 = vmatprep.subr.mxu0 0.0
        %1568 = vmatpush1.msra.mxu0 0.0
        %1569 = vmatprep.subr.mxu0 0.0
        %1570 = vmatpush1.msra.mxu0 0.0
        %1571 = vmatprep.subr.mxu0 0.0
        %1572 = vmatpush1.msra.mxu0 0.0
        %1573 = vmatprep.subr.mxu0 0.0
        %1574 = vmatpush1.msra.mxu0 0.0
        %1575 = vmatprep.subr.mxu0 0.0
        %1576 = vmatpush1.msra.mxu0 0.0
        %1577 = vmatprep.subr.mxu0 0.0
        %1578 = vmatpush1.msra.mxu0 0.0
        %1579 = vmatprep.subr.mxu0 0.0
        %1580 = vmatpush1.msra.mxu0 0.0
        %1581 = vmatprep.subr.mxu0 0.0
        %1582 = vmatpush1.msra.mxu0 0.0
        %1583 = vmatprep.subr.mxu0 0.0
        %1584 = vmatpush1.msra.mxu0 0.0
        %1585 = vmatprep.subr.mxu0 0.0
        %1586 = vmatpush1.msra.mxu0 0.0
        %1587 = vmatprep.subr.mxu0 0.0
        %1588 = vmatpush1.msra.mxu0 0.0
        %1589 = vmatprep.subr.mxu0 0.0
        %1590 = vmatpush1.msra.mxu0 %v1551
        %1591 = vmatprep.subr.mxu0 0.0
        %1592 = vmatpush2.msra.mxu0 0.0
        %1593 = vmatprep.subr.mxu0 0.0
        %1594 = vmatpush2.msra.mxu0 0.0
        %1595 = vmatprep.subr.mxu0 0.0
        %1596 = vmatpush2.msra.mxu0 0.0
        %1597 = vmatprep.subr.mxu0 0.0
        %1598 = vmatpush2.msra.mxu0 0.0
        %1599 = vmatprep.subr.mxu0 0.0
        %1600 = vmatpush2.msra.mxu0 0.0
        %1601 = vmatprep.subr.mxu0 0.0
        %1602 = vmatpush2.msra.mxu0 0.0
        %1603 = vmatprep.subr.mxu0 0.0
        %1604 = vmatpush2.msra.mxu0 0.0
        %1605 = vmatprep.subr.mxu0 0.0
        %1606 = vmatpush2.msra.mxu0 0.0
        %1607 = vmatprep.subr.mxu0 0.0
        %1608 = vmatpush2.msra.mxu0 0.0
        %1609 = vmatprep.subr.mxu0 0.0
        %1610 = vmatpush2.msra.mxu0 0.0
        %1611 = vmatprep.subr.mxu0 0.0
        %1612 = vmatpush2.msra.mxu0 0.0
        %1613 = vmatprep.subr.mxu0 0.0
        %1614 = vmatpush2.msra.mxu0 0.0
        %1615 = vmatprep.subr.mxu0 0.0
        %1616 = vmatpush2.msra.mxu0 0.0
        %1617 = vmatprep.subr.mxu0 0.0
        %1618 = vmatpush2.msra.mxu0 0.0
        %1619 = vmatprep.subr.mxu0 0.0
        %1620 = vmatpush2.msra.mxu0 0.0
        %1621 = vmatprep.subr.mxu0 0.0
        %1622 = vmatpush2.msra.mxu0 0.0
        %1623 = vmatprep.mubr.f32.mxu0 0.0
        %1624 = vmatmul.mubr.f32.gmra.mxu0 %v1554
        %v1625 = vpop.f32.mrf.mxu0
        %v1626 = vadd.f32 0.0, %v1625
        %v1627 = vpop.f32.mrf.mxu0
        %1628 = vmatprep.mubr.f32.mxu0 0.0
        %1629 = vmatmul.mubr.f32.gmra.mxu0 %v1557
        %v1630 = vpop.f32.mrf.mxu0
        %v1631 = vadd.f32 0.0, %v1630
        %v1632 = vpop.f32.mrf.mxu0
        %1633 = vdwg.mxu0
        %1636 = vrot.lane.b32.xlu0 %v1240, 8
        %v1637 = vpop.permute.xlu0 %1636
        %1638 = vrot.lane.b32.xlu0 %v1245, 8
        %v1639 = vpop.permute.xlu0 %1638
        %1644 = vrot.lane.b32.xlu0 %v1433, 16
        %v1645 = vpop.permute.xlu0 %1644
        %1646 = vrot.lane.b32.xlu0 %v1438, 16
        %v1647 = vpop.permute.xlu0 %1646
        %1652 = vrot.lane.b32.xlu0 %v1626, 24
        %v1653 = vpop.permute.xlu0 %1652
        %1654 = vrot.lane.b32.xlu0 %v1631, 24
        %v1655 = vpop.permute.xlu0 %1654
        %v1658 = vsel %vm866, %v1046, %v1637
        %v1659 = vsel %vm866, %v1051, %v1639
        %vm1660 = vcmask 130048
        %v1661 = vsel %vm1660, %v1658, %v1645
        %v1662 = vsel %vm1660, %v1659, %v1647
        %vm1663 = vcmask 195584
        %v1664 = vsel %vm1663, %v1661, %v1653
        %v1665 = vsel %vm1663, %v1662, %v1655
        %s1666 = scalar_lea.vmem %s3, 192
        %v1667 = vld [vmem:[%s1666] sm:$0xff]
        %v1668 = vld [vmem:[%s1666 + $0x8] sm:$0xff]
        %v1669 = vld [vmem:[%s1666 + $0x10] sm:$0xff]
        %v1670 = vld [vmem:[%s1666 + $0x18] sm:$0xff]
        %s1671 = scalar_lea.vmem %s4, 6
        %v1672 = vld [vmem:[%s1671] sm:$0x1]
        %v1674 = vlaneseq
        %v1675 = vshrl.u32 %v1674, 7
        %v1676 = vsub.s32 0, %v1675
        %v1677 = vrot.slane %v1672, %v1676
        %v1680 = vsel %vm269, %v1664, 0
        %v1683 = vsel %vm269, %v1665, 0
        %v1686 = vsel %vm269, %v1667, 0
        %v1689 = vsel %vm269, %v1668, 0
        %v1692 = vsel %vm269, %v1669, 0
        %v1695 = vsel %vm269, %v1670, 0
        %1697 = vmatprep.subr.mxu0 0.0
        %1698 = vmatpush1.xpose.msra.mxu0 0.0
        %1699 = vmatprep.subr.mxu0 0.0
        %1700 = vmatpush1.xpose.msra.mxu0 0.0
        %1701 = vmatprep.subr.mxu0 0.0
        %1702 = vmatpush1.xpose.msra.mxu0 0.0
        %1703 = vmatprep.subr.mxu0 0.0
        %1704 = vmatpush1.xpose.msra.mxu0 0.0
        %1705 = vmatprep.subr.mxu0 0.0
        %1706 = vmatpush1.xpose.msra.mxu0 0.0
        %1707 = vmatprep.subr.mxu0 0.0
        %1708 = vmatpush1.xpose.msra.mxu0 0.0
        %1709 = vmatprep.subr.mxu0 0.0
        %1710 = vmatpush1.xpose.msra.mxu0 0.0
        %1711 = vmatprep.subr.mxu0 0.0
        %1712 = vmatpush1.xpose.msra.mxu0 0.0
        %1713 = vmatprep.subr.mxu0 0.0
        %1714 = vmatpush1.xpose.msra.mxu0 0.0
        %1715 = vmatprep.subr.mxu0 0.0
        %1716 = vmatpush1.xpose.msra.mxu0 0.0
        %1717 = vmatprep.subr.mxu0 0.0
        %1718 = vmatpush1.xpose.msra.mxu0 0.0
        %1719 = vmatprep.subr.mxu0 0.0
        %1720 = vmatpush1.xpose.msra.mxu0 0.0
        %1721 = vmatprep.subr.mxu0 0.0
        %1722 = vmatpush1.xpose.msra.mxu0 %v1695
        %1723 = vmatprep.subr.mxu0 0.0
        %1724 = vmatpush1.xpose.msra.mxu0 %v1692
        %1725 = vmatprep.subr.mxu0 0.0
        %1726 = vmatpush1.xpose.msra.mxu0 %v1689
        %1727 = vmatprep.subr.mxu0 0.0
        %1728 = vmatpush1.xpose.msra.mxu0 %v1686
        %1729 = vmatprep.subr.mxu0 0.0
        %1730 = vmatpush2.xpose.msra.mxu0 0.0
        %1731 = vmatprep.subr.mxu0 0.0
        %1732 = vmatpush2.xpose.msra.mxu0 0.0
        %1733 = vmatprep.subr.mxu0 0.0
        %1734 = vmatpush2.xpose.msra.mxu0 0.0
        %1735 = vmatprep.subr.mxu0 0.0
        %1736 = vmatpush2.xpose.msra.mxu0 0.0
        %1737 = vmatprep.subr.mxu0 0.0
        %1738 = vmatpush2.xpose.msra.mxu0 0.0
        %1739 = vmatprep.subr.mxu0 0.0
        %1740 = vmatpush2.xpose.msra.mxu0 0.0
        %1741 = vmatprep.subr.mxu0 0.0
        %1742 = vmatpush2.xpose.msra.mxu0 0.0
        %1743 = vmatprep.subr.mxu0 0.0
        %1744 = vmatpush2.xpose.msra.mxu0 0.0
        %1745 = vmatprep.subr.mxu0 0.0
        %1746 = vmatpush2.xpose.msra.mxu0 0.0
        %1747 = vmatprep.subr.mxu0 0.0
        %1748 = vmatpush2.xpose.msra.mxu0 0.0
        %1749 = vmatprep.subr.mxu0 0.0
        %1750 = vmatpush2.xpose.msra.mxu0 0.0
        %1751 = vmatprep.subr.mxu0 0.0
        %1752 = vmatpush2.xpose.msra.mxu0 0.0
        %1753 = vmatprep.subr.mxu0 0.0
        %1754 = vmatpush2.xpose.msra.mxu0 0.0
        %1755 = vmatprep.subr.mxu0 0.0
        %1756 = vmatpush2.xpose.msra.mxu0 0.0
        %1757 = vmatprep.subr.mxu0 0.0
        %1758 = vmatpush2.xpose.msra.mxu0 0.0
        %1759 = vmatprep.subr.mxu0 0.0
        %1760 = vmatpush2.xpose.msra.mxu0 0.0
        %1761 = vmatprep.mubr.f32.mxu0 0.0
        %1762 = vmatmul.mubr.f32.gmra.mxu0 %v1680
        %v1763 = vpop.f32.mrf.mxu0
        %v1764 = vadd.f32 %v1677, %v1763
        %v1765 = vpop.f32.mrf.mxu0
        %1766 = vmatprep.mubr.f32.mxu0 0.0
        %1767 = vmatmul.mubr.f32.gmra.mxu0 %v1683
        %v1768 = vpop.f32.mrf.mxu0
        %v1769 = vadd.f32 %v1677, %v1768
        %v1770 = vpop.f32.mrf.mxu0
        %1771 = vdwg.mxu0
        %1772 = vst.msk [vmem:[%s241] sm:$0xff] %vm269, %v1764
        %1773 = vst.msk [vmem:[%s241 + $0x8] sm:$0xff] %vm269, %v1769
        %s1774 = sand.u32 %s147, 1
        %s1775 = scalar_lea.sflag [#allocation3], %s1774
        %s1776 = sand.u32 %s147, 1
        %s1777 = smul.addr %s1776, 16
        %s1778 = scalar_lea.vmem [#allocation2], %s1777
        // Predicated region
        $region41: #{_lambda_.7} parent=39 // pred_check
          %p1779 = pneg %p157
        $region42: #{_lambda_.7} parent=39 // pred_check_branch
          %1781 = sbr.rel (%p1779) target = $region44
        $region43: #{_lambda_.7} parent=39 // pred_region
          %s1783 = ssub.s32 256, 256
          %1784 = vsyncadd %s1775, %s1783
          %s1785 = smul.addr %s19, 2
          %s1786 = smul.addr %s1785, 128
          %s1787 = scalar_lea.hbm %s5, %s1786
          %s1788 = sshll.u32 %s1778, 4
          %s1789 = int_to_ptr.vmem [resolvable:$true] %s1788
          %1794 = dma.vmem_to_hbm [thread:$0]  %s1789, 256, %s1787, %s1775, 128, 128, 8
        $region44: #{_lambda_.7} parent=39 // pred_fallthru
          _
      $region40: #{_lambda_.7} parent=5 // pred_fallthru
        _
      %p1795 = scmp.le.s32.totalorder 2, %s14
      // Predicated region
      $region45: #{_lambda_.7} parent=5 // pred_check
        %p1796 = pneg %p1795
      $region46: #{_lambda_.7} parent=5 // pred_check_branch
        %1798 = sbr.rel (%p1796) target = $region48
      $region47: #{_lambda_.7} parent=5 // pred_region
        %s1799 = ssub.s32 %s14, 2
        // Predicated region
        $region49: #{_lambda_.7} parent=47 // pred_check
          %p1800 = pneg %p163
        $region50: #{_lambda_.7} parent=47 // pred_check_branch
          %1802 = sbr.rel (%p1800) target = $region52
        $region51: #{_lambda_.7} parent=47 // pred_region
          %s1803 = sand.u32 %s148, 1
          %s1804 = scalar_lea.sflag [#allocation3], %s1803
          %s1805 = sand.u32 %s148, 1
          %s1806 = smul.addr %s1805, 16
          %s1807 = scalar_lea.vmem [#allocation2], %s1806
          %1808 = dma.done %s1804, 256
        $region52: #{_lambda_.7} parent=47 // pred_fallthru
          _
      $region48: #{_lambda_.7} parent=5 // pred_fallthru
        _
    $region6: #{_lambda_.7} parent=1 // loop_footer
      %s18 = sadd.s32 1, %s14
    $region7: #{_lambda_.7} parent=1 // loop_footer_branch
      %13 = sbr.rel target = $region3
    $region8: #{_lambda_.7} parent=1 // loop_exit
      _
    %1809 = vsyncpa [#allocation3], 1
    %s1810 = scalar_lea.sflag [#allocation3], 1
    %1811 = vsyncpa %s1810, 1

// kernel: _lambda_.5
$region0: #{_lambda_.5}
  #allocation0 [shape = 'u32[]', space=smem, size = 0x4, offset = 0x4, fixed_abs, tag = 'smem constant byte address 0x4 - core index']
  #allocation1 [shape = 'u32[144,128]{1,0:T(1,128)}', space=vmem, size = 0x12000, scoped, tag = 'internal scratch']
  %s0 = inlined_call_operand.vmem [shape: f32[2,16,32], index: 0, kind: input, shape index: {}]
  %s1 = inlined_call_operand.vmem [shape: f32[2,8,32], index: 1, kind: input, shape index: {}]
  %s2 = inlined_call_operand.vmem [shape: f32[2,1,8], index: 2, kind: input, shape index: {}]
  %s3 = inlined_call_operand.vmem [shape: f32[7,32,32], index: 3, kind: input, shape index: {}]
  %s4 = inlined_call_operand.vmem [shape: f32[7,1,32], index: 4, kind: input, shape index: {}]
  %s5 = inlined_call_operand.vmem [shape: f32[2,16,32], index: 5, kind: output, shape index: {}]
  %s6 = sld [smem:[#allocation0]]
  $region53: #{_lambda_.5} parent=0
    _
  %s8 = ssub.s32 1, %s6
  %s9 = scalar_select 0, %s8, %s6
  loop: start=0, step=1, limit=4
  $region2: #{_lambda_.5} parent=0 // loop_pre_header
    _
  $region3: #{_lambda_.5} parent=0 // loop_header
    %s11 = sphi 0, %s15
    %p12 = scmp.ge.s32.totalorder %s11, 4
    %s21 = sphi 0, %s23
    %s24 = sphi 0, %s21
    %s25 = sphi 0, %s24
    %s41 = sphi 0, %s25
    %s47 = sphi 0, %s49
    %s50 = sphi 0, %s47
    %s51 = sphi 0, %s50
    %s67 = sphi 0, %s51
    %s73 = sphi 0, %s75
    %s76 = sphi 0, %s73
    %s77 = sphi 0, %s76
    %s93 = sphi 0, %s77
    %s97 = sphi 0, %s97
    %s99 = sphi 0, %s97
    %s100 = sphi 0, %s99
    %s114 = sphi 0, %s100
    %s118 = sphi 0, %s118
    %s120 = sphi 0, %s118
    %s121 = sphi 0, %s120
    %s135 = sphi 0, %s121
    %s141 = sphi 0, %s143
    %s144 = sphi 0, %s141
    %s145 = sphi 0, %s144
    %s161 = sphi 0, %s145
  $region4: #{_lambda_.5} parent=0 // loop_header_branch
    %14 = sbr.rel (%p12) target = $region8
  $region5: #{_lambda_.5} parent=0 // loop_body
    %s16 = ssub.s32 %s11, 1
    %s17 = ssub.s32 %s11, 2
    %s18 = sadd.s32 %s11, 1
    %s19 = ssub.s32 %s11, %s18
    %p20 = scmp.eq.s32.totalorder %s19, 0
    %s22 = sadd.s32 %s21, 1
    %s23 = scalar_select %p20, %s21, %s22
    %p26 = pneg %p20
    %p27 = scmp.eq.s32.totalorder %s11, 1
    %p28 = por %p26, %p27
    %p29 = scmp.ne.s32.totalorder %s21, %s24
    %p30 = scmp.eq.s32.totalorder %s11, 0
    %p31 = por %p29, %p30
    %p32 = scmp.ne.s32.totalorder %s21, %s24
    %p33 = scmp.eq.s32.totalorder %s16, 1
    %p34 = por %p32, %p33
    %p35 = scmp.ne.s32.totalorder %s24, %s25
    %p36 = scmp.eq.s32.totalorder %s16, 0
    %p37 = por %p35, %p36
    %p38 = scmp.ne.s32.totalorder %s24, %s25
    %p39 = scmp.eq.s32.totalorder %s17, 1
    %p40 = por %p38, %p39
    %p42 = scmp.ne.s32.totalorder %s25, %s41
    %p43 = scmp.eq.s32.totalorder %s17, 0
    %p44 = por %p42, %p43
    %s45 = ssub.s32 %s11, %s18
    %p46 = scmp.eq.s32.totalorder %s45, 0
    %s48 = sadd.s32 %s47, 1
    %s49 = scalar_select %p46, %s47, %s48
    %p52 = pneg %p46
    %p53 = scmp.eq.s32.totalorder %s11, 1
    %p54 = por %p52, %p53
    %p55 = scmp.ne.s32.totalorder %s47, %s50
    %p56 = scmp.eq.s32.totalorder %s11, 0
    %p57 = por %p55, %p56
    %p58 = scmp.ne.s32.totalorder %s47, %s50
    %p59 = scmp.eq.s32.totalorder %s16, 1
    %p60 = por %p58, %p59
    %p61 = scmp.ne.s32.totalorder %s50, %s51
    %p62 = scmp.eq.s32.totalorder %s16, 0
    %p63 = por %p61, %p62
    %p64 = scmp.ne.s32.totalorder %s50, %s51
    %p65 = scmp.eq.s32.totalorder %s17, 1
    %p66 = por %p64, %p65
    %p68 = scmp.ne.s32.totalorder %s51, %s67
    %p69 = scmp.eq.s32.totalorder %s17, 0
    %p70 = por %p68, %p69
    %s71 = ssub.s32 %s11, %s18
    %p72 = scmp.eq.s32.totalorder %s71, 0
    %s74 = sadd.s32 %s73, 1
    %s75 = scalar_select %p72, %s73, %s74
    %p78 = pneg %p72
    %p79 = scmp.eq.s32.totalorder %s11, 1
    %p80 = por %p78, %p79
    %p81 = scmp.ne.s32.totalorder %s73, %s76
    %p82 = scmp.eq.s32.totalorder %s11, 0
    %p83 = por %p81, %p82
    %p84 = scmp.ne.s32.totalorder %s73, %s76
    %p85 = scmp.eq.s32.totalorder %s16, 1
    %p86 = por %p84, %p85
    %p87 = scmp.ne.s32.totalorder %s76, %s77
    %p88 = scmp.eq.s32.totalorder %s16, 0
    %p89 = por %p87, %p88
    %p90 = scmp.ne.s32.totalorder %s76, %s77
    %p91 = scmp.eq.s32.totalorder %s17, 1
    %p92 = por %p90, %p91
    %p94 = scmp.ne.s32.totalorder %s77, %s93
    %p95 = scmp.eq.s32.totalorder %s17, 0
    %p96 = por %p94, %p95
    %s98 = sadd.s32 %s97, 1
    %p101 = scmp.eq.s32.totalorder %s11, 1
    %p102 = scmp.ne.s32.totalorder %s97, %s99
    %p103 = scmp.eq.s32.totalorder %s11, 0
    %p104 = por %p102, %p103
    %p105 = scmp.ne.s32.totalorder %s97, %s99
    %p106 = scmp.eq.s32.totalorder %s16, 1
    %p107 = por %p105, %p106
    %p108 = scmp.ne.s32.totalorder %s99, %s100
    %p109 = scmp.eq.s32.totalorder %s16, 0
    %p110 = por %p108, %p109
    %p111 = scmp.ne.s32.totalorder %s99, %s100
    %p112 = scmp.eq.s32.totalorder %s17, 1
    %p113 = por %p111, %p112
    %p115 = scmp.ne.s32.totalorder %s100, %s114
    %p116 = scmp.eq.s32.totalorder %s17, 0
    %p117 = por %p115, %p116
    %s119 = sadd.s32 %s118, 1
    %p122 = scmp.eq.s32.totalorder %s11, 1
    %p123 = scmp.ne.s32.totalorder %s118, %s120
    %p124 = scmp.eq.s32.totalorder %s11, 0
    %p125 = por %p123, %p124
    %p126 = scmp.ne.s32.totalorder %s118, %s120
    %p127 = scmp.eq.s32.totalorder %s16, 1
    %p128 = por %p126, %p127
    %p129 = scmp.ne.s32.totalorder %s120, %s121
    %p130 = scmp.eq.s32.totalorder %s16, 0
    %p131 = por %p129, %p130
    %p132 = scmp.ne.s32.totalorder %s120, %s121
    %p133 = scmp.eq.s32.totalorder %s17, 1
    %p134 = por %p132, %p133
    %p136 = scmp.ne.s32.totalorder %s121, %s135
    %p137 = scmp.eq.s32.totalorder %s17, 0
    %p138 = por %p136, %p137
    %s139 = ssub.s32 %s11, %s18
    %p140 = scmp.eq.s32.totalorder %s139, 0
    %s142 = sadd.s32 %s141, 1
    %s143 = scalar_select %p140, %s141, %s142
    %p146 = pneg %p140
    %p147 = scmp.eq.s32.totalorder %s11, 1
    %p148 = por %p146, %p147
    %p149 = scmp.ne.s32.totalorder %s141, %s144
    %p150 = scmp.eq.s32.totalorder %s11, 0
    %p151 = por %p149, %p150
    %p152 = scmp.ne.s32.totalorder %s141, %s144
    %p153 = scmp.eq.s32.totalorder %s16, 1
    %p154 = por %p152, %p153
    %p155 = scmp.ne.s32.totalorder %s144, %s145
    %p156 = scmp.eq.s32.totalorder %s16, 0
    %p157 = por %p155, %p156
    %p158 = scmp.ne.s32.totalorder %s144, %s145
    %p159 = scmp.eq.s32.totalorder %s17, 1
    %p160 = por %p158, %p159
    %p162 = scmp.ne.s32.totalorder %s145, %s161
    %p163 = scmp.eq.s32.totalorder %s17, 0
    %p164 = por %p162, %p163
    %p165 = scmp.le.s32.totalorder 1, %s11
    %p166 = scmp.lt.s32.totalorder %s11, 3
    %p167 = pnand %p165, %p166
    %p168 = pneg %p167
    // Predicated region
    $region9: #{_lambda_.5} parent=5 // pred_check
      _
    $region10: #{_lambda_.5} parent=5 // pred_check_branch
      %170 = sbr.rel (%p167) target = $region12
    $region11: #{_lambda_.5} parent=5 // pred_region
      %s171 = ssub.s32 %s11, 1
      // Predicated region
      $region13: #{_lambda_.5} parent=11 // pred_check
        %p172 = pneg %p110
      $region14: #{_lambda_.5} parent=11 // pred_check_branch
        %174 = sbr.rel (%p172) target = $region16
      $region15: #{_lambda_.5} parent=11 // pred_region
        _
      $region16: #{_lambda_.5} parent=11 // pred_fallthru
        _
      // Predicated region
      $region17: #{_lambda_.5} parent=11 // pred_check
        %p175 = pneg %p131
      $region18: #{_lambda_.5} parent=11 // pred_check_branch
        %177 = sbr.rel (%p175) target = $region20
      $region19: #{_lambda_.5} parent=11 // pred_region
        _
      $region20: #{_lambda_.5} parent=11 // pred_fallthru
        _
    $region12: #{_lambda_.5} parent=5 // pred_fallthru
      _
    %p178 = scmp.lt.s32.totalorder %s11, 2
    // Predicated region
    $region21: #{_lambda_.5} parent=5 // pred_check
      %p179 = pneg %p178
    $region22: #{_lambda_.5} parent=5 // pred_check_branch
      %181 = sbr.rel (%p179) target = $region24
    $region23: #{_lambda_.5} parent=5 // pred_region
      // Predicated region
      $region25: #{_lambda_.5} parent=23 // pred_check
        %p182 = pneg %p31
      $region26: #{_lambda_.5} parent=23 // pred_check_branch
        %184 = sbr.rel (%p182) target = $region28
      $region27: #{_lambda_.5} parent=23 // pred_region
        %p185 = scmp.lt.s32.totalorder %s11, 1
        %s186 = scalar_select %p185, %s11, 1
        %s187 = smul.addr %s186, 2
        %s188 = smul.addr %s187, 8
        %s189 = scalar_lea.vmem %s0, %s188
      $region28: #{_lambda_.5} parent=23 // pred_fallthru
        _
      // Predicated region
      $region29: #{_lambda_.5} parent=23 // pred_check
        %p190 = pneg %p57
      $region30: #{_lambda_.5} parent=23 // pred_check_branch
        %192 = sbr.rel (%p190) target = $region32
      $region31: #{_lambda_.5} parent=23 // pred_region
        %p193 = scmp.lt.s32.totalorder %s11, 1
        %s194 = scalar_select %p193, %s11, 1
        %s195 = smul.addr %s194, 8
        %s196 = scalar_lea.vmem %s1, %s195
      $region32: #{_lambda_.5} parent=23 // pred_fallthru
        _
      // Predicated region
      $region33: #{_lambda_.5} parent=23 // pred_check
        %p197 = pneg %p83
      $region34: #{_lambda_.5} parent=23 // pred_check_branch
        %199 = sbr.rel (%p197) target = $region36
      $region35: #{_lambda_.5} parent=23 // pred_region
        %p200 = scmp.lt.s32.totalorder %s11, 1
        %s201 = scalar_select %p200, %s11, 1
        %s202 = scalar_lea.vmem %s2, %s201
      $region36: #{_lambda_.5} parent=23 // pred_fallthru
        _
    $region24: #{_lambda_.5} parent=5 // pred_fallthru
      _
    %p203 = scmp.le.s32.totalorder 1, %s11
    %p204 = scmp.lt.s32.totalorder %s11, 3
    %p205 = pnand %p203, %p204
    %p206 = pneg %p205
    // Predicated region
    $region37: #{_lambda_.5} parent=5 // pred_check
      _
    $region38: #{_lambda_.5} parent=5 // pred_check_branch
      %208 = sbr.rel (%p205) target = $region40
    $region39: #{_lambda_.5} parent=5 // pred_region
      %s209 = ssub.s32 %s11, 1
      %p210 = scmp.lt.s32.totalorder %s16, 1
      %s211 = scalar_select %p210, %s16, 1
      %s212 = smul.addr %s211, 2
      %s213 = smul.addr %s212, 8
      %s214 = scalar_lea.vmem %s0, %s213
      %p215 = pneg %p37
      %p216 = pneg %p34
      %p217 = scmp.lt.s32.totalorder %s16, 1
      %s218 = scalar_select %p217, %s16, 1
      %s219 = smul.addr %s218, 8
      %s220 = scalar_lea.vmem %s1, %s219
      %p221 = pneg %p63
      %p222 = pneg %p60
      %p223 = scmp.lt.s32.totalorder %s16, 1
      %s224 = scalar_select %p223, %s16, 1
      %s225 = scalar_lea.vmem %s2, %s224
      %p226 = pneg %p89
      %p227 = pneg %p86
      %p228 = pneg %p110
      %p229 = pneg %p107
      %p230 = pneg %p131
      %p231 = pneg %p128
      %p232 = pneg %p157
      %p233 = pneg %p154
      %p234 = scmp.lt.s32.totalorder %s16, 1
      %s235 = scalar_select %p234, %s16, 1
      %s236 = smul.addr %s235, 2
      %s237 = smul.addr %s236, 8
      %s238 = scalar_lea.vmem %s5, %s237
      %p239 = scmp.lt.s32.totalorder %s16, 1
      %s240 = scalar_select %p239, %s16, 1
      %s241 = smul.addr %s240, 2
      %s242 = smul.addr %s241, 8
      %s243 = scalar_lea.vmem %s0, %s242
      %p244 = scmp.lt.s32.totalorder %s16, 1
      %s245 = scalar_select %p244, %s16, 1
      %s246 = smul.addr %s245, 8
      %s247 = scalar_lea.vmem %s1, %s246
      %p248 = scmp.lt.s32.totalorder %s16, 1
      %s249 = scalar_select %p248, %s16, 1
      %s250 = scalar_lea.vmem %s2, %s249
      %p251 = scmp.lt.s32.totalorder %s16, 1
      %s252 = scalar_select %p251, %s16, 1
      %s253 = smul.addr %s252, 2
      %s254 = smul.addr %s253, 8
      %s255 = scalar_lea.vmem %s5, %s254
      %v256 = vld [vmem:[%s243] sm:$0xff]
      %v257 = vld [vmem:[%s243 + $0x8] sm:$0xff]
      %v258 = vld [vmem:[%s247] sm:$0xff]
      %v259 = vld [vmem:[%s250] sm:$0x1]
      %v260 = vld [vmem:[%s3] sm:$0xff]
      %v261 = vld [vmem:[%s3 + $0x8] sm:$0xff]
      %v262 = vld [vmem:[%s3 + $0x10] sm:$0xff]
      %v263 = vld [vmem:[%s3 + $0x18] sm:$0xff]
      %v264 = vld [vmem:[%s4] sm:$0x1]
      %v266 = vlaneseq
      %v267 = vshrl.u32 %v266, 7
      %v268 = vsub.s32 0, %v267
      %v269 = vrot.slane %v264, %v268
      %vm271 = vcmask 261120
      %v273 = vsel %vm271, %v256, 0
      %v276 = vsel %vm271, %v257, 0
      %v279 = vsel %vm271, %v260, 0
      %v282 = vsel %vm271, %v261, 0
      %v285 = vsel %vm271, %v262, 0
      %v288 = vsel %vm271, %v263, 0
      %290 = vmatprep.subr.mxu0 0.0
      %291 = vmatpush1.xpose.msra.mxu0 0.0
      %292 = vmatprep.subr.mxu0 0.0
      %293 = vmatpush1.xpose.msra.mxu0 0.0
      %294 = vmatprep.subr.mxu0 0.0
      %295 = vmatpush1.xpose.msra.mxu0 0.0
      %296 = vmatprep.subr.mxu0 0.0
      %297 = vmatpush1.xpose.msra.mxu0 0.0
      %298 = vmatprep.subr.mxu0 0.0
      %299 = vmatpush1.xpose.msra.mxu0 0.0
      %300 = vmatprep.subr.mxu0 0.0
      %301 = vmatpush1.xpose.msra.mxu0 0.0
      %302 = vmatprep.subr.mxu0 0.0
      %303 = vmatpush1.xpose.msra.mxu0 0.0
      %304 = vmatprep.subr.mxu0 0.0
      %305 = vmatpush1.xpose.msra.mxu0 0.0
      %306 = vmatprep.subr.mxu0 0.0
      %307 = vmatpush1.xpose.msra.mxu0 0.0
      %308 = vmatprep.subr.mxu0 0.0
      %309 = vmatpush1.xpose.msra.mxu0 0.0
      %310 = vmatprep.subr.mxu0 0.0
      %311 = vmatpush1.xpose.msra.mxu0 0.0
      %312 = vmatprep.subr.mxu0 0.0
      %313 = vmatpush1.xpose.msra.mxu0 0.0
      %314 = vmatprep.subr.mxu0 0.0
      %315 = vmatpush1.xpose.msra.mxu0 %v288
      %316 = vmatprep.subr.mxu0 0.0
      %317 = vmatpush1.xpose.msra.mxu0 %v285
      %318 = vmatprep.subr.mxu0 0.0
      %319 = vmatpush1.xpose.msra.mxu0 %v282
      %320 = vmatprep.subr.mxu0 0.0
      %321 = vmatpush1.xpose.msra.mxu0 %v279
      %322 = vmatprep.subr.mxu0 0.0
      %323 = vmatpush2.xpose.msra.mxu0 0.0
      %324 = vmatprep.subr.mxu0 0.0
      %325 = vmatpush2.xpose.msra.mxu0 0.0
      %326 = vmatprep.subr.mxu0 0.0
      %327 = vmatpush2.xpose.msra.mxu0 0.0
      %328 = vmatprep.subr.mxu0 0.0
      %329 = vmatpush2.xpose.msra.mxu0 0.0
      %330 = vmatprep.subr.mxu0 0.0
      %331 = vmatpush2.xpose.msra.mxu0 0.0
      %332 = vmatprep.subr.mxu0 0.0
      %333 = vmatpush2.xpose.msra.mxu0 0.0
      %334 = vmatprep.subr.mxu0 0.0
      %335 = vmatpush2.xpose.msra.mxu0 0.0
      %336 = vmatprep.subr.mxu0 0.0
      %337 = vmatpush2.xpose.msra.mxu0 0.0
      %338 = vmatprep.subr.mxu0 0.0
      %339 = vmatpush2.xpose.msra.mxu0 0.0
      %340 = vmatprep.subr.mxu0 0.0
      %341 = vmatpush2.xpose.msra.mxu0 0.0
      %342 = vmatprep.subr.mxu0 0.0
      %343 = vmatpush2.xpose.msra.mxu0 0.0
      %344 = vmatprep.subr.mxu0 0.0
      %345 = vmatpush2.xpose.msra.mxu0 0.0
      %346 = vmatprep.subr.mxu0 0.0
      %347 = vmatpush2.xpose.msra.mxu0 0.0
      %348 = vmatprep.subr.mxu0 0.0
      %349 = vmatpush2.xpose.msra.mxu0 0.0
      %350 = vmatprep.subr.mxu0 0.0
      %351 = vmatpush2.xpose.msra.mxu0 0.0
      %352 = vmatprep.subr.mxu0 0.0
      %353 = vmatpush2.xpose.msra.mxu0 0.0
      %354 = vmatprep.mubr.f32.mxu0 0.0
      %355 = vmatmul.mubr.f32.gmra.mxu0 %v273
      %v356 = vpop.f32.mrf.mxu0
      %v357 = vadd.f32 %v269, %v356
      %v358 = vpop.f32.mrf.mxu0
      %359 = vmatprep.mubr.f32.mxu0 0.0
      %360 = vmatmul.mubr.f32.gmra.mxu0 %v276
      %v361 = vpop.f32.mrf.mxu0
      %v362 = vadd.f32 %v269, %v361
      %v363 = vpop.f32.mrf.mxu0
      %364 = vdwg.mxu0
      %s365 = scalar_lea.vmem %s3, 96
      %v366 = vld [vmem:[%s365] sm:$0xff]
      %v367 = vld [vmem:[%s365 + $0x8] sm:$0xff]
      %v368 = vld [vmem:[%s365 + $0x10] sm:$0xff]
      %v369 = vld [vmem:[%s365 + $0x18] sm:$0xff]
      %s370 = scalar_lea.vmem %s4, 3
      %v371 = vld [vmem:[%s370] sm:$0x1]
      %v373 = vlaneseq
      %v374 = vshrl.u32 %v373, 7
      %v375 = vsub.s32 0, %v374
      %v376 = vrot.slane %v371, %v375
      %v379 = vsel %vm271, %v357, 0
      %v382 = vsel %vm271, %v362, 0
      %v385 = vsel %vm271, %v366, 0
      %v388 = vsel %vm271, %v367, 0
      %v391 = vsel %vm271, %v368, 0
      %v394 = vsel %vm271, %v369, 0
      %396 = vmatprep.subr.mxu0 0.0
      %397 = vmatpush1.xpose.msra.mxu0 0.0
      %398 = vmatprep.subr.mxu0 0.0
      %399 = vmatpush1.xpose.msra.mxu0 0.0
      %400 = vmatprep.subr.mxu0 0.0
      %401 = vmatpush1.xpose.msra.mxu0 0.0
      %402 = vmatprep.subr.mxu0 0.0
      %403 = vmatpush1.xpose.msra.mxu0 0.0
      %404 = vmatprep.subr.mxu0 0.0
      %405 = vmatpush1.xpose.msra.mxu0 0.0
      %406 = vmatprep.subr.mxu0 0.0
      %407 = vmatpush1.xpose.msra.mxu0 0.0
      %408 = vmatprep.subr.mxu0 0.0
      %409 = vmatpush1.xpose.msra.mxu0 0.0
      %410 = vmatprep.subr.mxu0 0.0
      %411 = vmatpush1.xpose.msra.mxu0 0.0
      %412 = vmatprep.subr.mxu0 0.0
      %413 = vmatpush1.xpose.msra.mxu0 0.0
      %414 = vmatprep.subr.mxu0 0.0
      %415 = vmatpush1.xpose.msra.mxu0 0.0
      %416 = vmatprep.subr.mxu0 0.0
      %417 = vmatpush1.xpose.msra.mxu0 0.0
      %418 = vmatprep.subr.mxu0 0.0
      %419 = vmatpush1.xpose.msra.mxu0 0.0
      %420 = vmatprep.subr.mxu0 0.0
      %421 = vmatpush1.xpose.msra.mxu0 %v394
      %422 = vmatprep.subr.mxu0 0.0
      %423 = vmatpush1.xpose.msra.mxu0 %v391
      %424 = vmatprep.subr.mxu0 0.0
      %425 = vmatpush1.xpose.msra.mxu0 %v388
      %426 = vmatprep.subr.mxu0 0.0
      %427 = vmatpush1.xpose.msra.mxu0 %v385
      %428 = vmatprep.subr.mxu0 0.0
      %429 = vmatpush2.xpose.msra.mxu0 0.0
      %430 = vmatprep.subr.mxu0 0.0
      %431 = vmatpush2.xpose.msra.mxu0 0.0
      %432 = vmatprep.subr.mxu0 0.0
      %433 = vmatpush2.xpose.msra.mxu0 0.0
      %434 = vmatprep.subr.mxu0 0.0
      %435 = vmatpush2.xpose.msra.mxu0 0.0
      %436 = vmatprep.subr.mxu0 0.0
      %437 = vmatpush2.xpose.msra.mxu0 0.0
      %438 = vmatprep.subr.mxu0 0.0
      %439 = vmatpush2.xpose.msra.mxu0 0.0
      %440 = vmatprep.subr.mxu0 0.0
      %441 = vmatpush2.xpose.msra.mxu0 0.0
      %442 = vmatprep.subr.mxu0 0.0
      %443 = vmatpush2.xpose.msra.mxu0 0.0
      %444 = vmatprep.subr.mxu0 0.0
      %445 = vmatpush2.xpose.msra.mxu0 0.0
      %446 = vmatprep.subr.mxu0 0.0
      %447 = vmatpush2.xpose.msra.mxu0 0.0
      %448 = vmatprep.subr.mxu0 0.0
      %449 = vmatpush2.xpose.msra.mxu0 0.0
      %450 = vmatprep.subr.mxu0 0.0
      %451 = vmatpush2.xpose.msra.mxu0 0.0
      %452 = vmatprep.subr.mxu0 0.0
      %453 = vmatpush2.xpose.msra.mxu0 0.0
      %454 = vmatprep.subr.mxu0 0.0
      %455 = vmatpush2.xpose.msra.mxu0 0.0
      %456 = vmatprep.subr.mxu0 0.0
      %457 = vmatpush2.xpose.msra.mxu0 0.0
      %458 = vmatprep.subr.mxu0 0.0
      %459 = vmatpush2.xpose.msra.mxu0 0.0
      %460 = vmatprep.mubr.f32.mxu0 0.0
      %461 = vmatmul.mubr.f32.gmra.mxu0 %v379
      %v462 = vpop.f32.mrf.mxu0
      %v463 = vadd.f32 %v376, %v462
      %v464 = vpop.f32.mrf.mxu0
      %465 = vmatprep.mubr.f32.mxu0 0.0
      %466 = vmatmul.mubr.f32.gmra.mxu0 %v382
      %v467 = vpop.f32.mrf.mxu0
      %v468 = vadd.f32 %v376, %v467
      %v469 = vpop.f32.mrf.mxu0
      %470 = vdwg.mxu0
      %s471 = scalar_lea.vmem %s3, 32
      %v472 = vld [vmem:[%s471] sm:$0xff]
      %v473 = vld [vmem:[%s471 + $0x8] sm:$0xff]
      %v474 = vld [vmem:[%s471 + $0x10] sm:$0xff]
      %v475 = vld [vmem:[%s471 + $0x18] sm:$0xff]
      %s476 = scalar_lea.vmem %s4, 1
      %v477 = vld [vmem:[%s476] sm:$0x1]
      %v479 = vlaneseq
      %v480 = vshrl.u32 %v479, 7
      %v481 = vsub.s32 0, %v480
      %v482 = vrot.slane %v477, %v481
      %v485 = vsel %vm271, %v258, 0
      %v488 = vsel %vm271, %v472, 0
      %v491 = vsel %vm271, %v473, 0
      %v494 = vsel %vm271, %v474, 0
      %v497 = vsel %vm271, %v475, 0
      %499 = vmatprep.subr.mxu0 0.0
      %500 = vmatpush1.xpose.msra.mxu0 0.0
      %501 = vmatprep.subr.mxu0 0.0
      %502 = vmatpush1.xpose.msra.mxu0 0.0
      %503 = vmatprep.subr.mxu0 0.0
      %504 = vmatpush1.xpose.msra.mxu0 0.0
      %505 = vmatprep.subr.mxu0 0.0
      %506 = vmatpush1.xpose.msra.mxu0 0.0
      %507 = vmatprep.subr.mxu0 0.0
      %508 = vmatpush1.xpose.msra.mxu0 0.0
      %509 = vmatprep.subr.mxu0 0.0
      %510 = vmatpush1.xpose.msra.mxu0 0.0
      %511 = vmatprep.subr.mxu0 0.0
      %512 = vmatpush1.xpose.msra.mxu0 0.0
      %513 = vmatprep.subr.mxu0 0.0
      %514 = vmatpush1.xpose.msra.mxu0 0.0
      %515 = vmatprep.subr.mxu0 0.0
      %516 = vmatpush1.xpose.msra.mxu0 0.0
      %517 = vmatprep.subr.mxu0 0.0
      %518 = vmatpush1.xpose.msra.mxu0 0.0
      %519 = vmatprep.subr.mxu0 0.0
      %520 = vmatpush1.xpose.msra.mxu0 0.0
      %521 = vmatprep.subr.mxu0 0.0
      %522 = vmatpush1.xpose.msra.mxu0 0.0
      %523 = vmatprep.subr.mxu0 0.0
      %524 = vmatpush1.xpose.msra.mxu0 %v497
      %525 = vmatprep.subr.mxu0 0.0
      %526 = vmatpush1.xpose.msra.mxu0 %v494
      %527 = vmatprep.subr.mxu0 0.0
      %528 = vmatpush1.xpose.msra.mxu0 %v491
      %529 = vmatprep.subr.mxu0 0.0
      %530 = vmatpush1.xpose.msra.mxu0 %v488
      %531 = vmatprep.subr.mxu0 0.0
      %532 = vmatpush2.xpose.msra.mxu0 0.0
      %533 = vmatprep.subr.mxu0 0.0
      %534 = vmatpush2.xpose.msra.mxu0 0.0
      %535 = vmatprep.subr.mxu0 0.0
      %536 = vmatpush2.xpose.msra.mxu0 0.0
      %537 = vmatprep.subr.mxu0 0.0
      %538 = vmatpush2.xpose.msra.mxu0 0.0
      %539 = vmatprep.subr.mxu0 0.0
      %540 = vmatpush2.xpose.msra.mxu0 0.0
      %541 = vmatprep.subr.mxu0 0.0
      %542 = vmatpush2.xpose.msra.mxu0 0.0
      %543 = vmatprep.subr.mxu0 0.0
      %544 = vmatpush2.xpose.msra.mxu0 0.0
      %545 = vmatprep.subr.mxu0 0.0
      %546 = vmatpush2.xpose.msra.mxu0 0.0
      %547 = vmatprep.subr.mxu0 0.0
      %548 = vmatpush2.xpose.msra.mxu0 0.0
      %549 = vmatprep.subr.mxu0 0.0
      %550 = vmatpush2.xpose.msra.mxu0 0.0
      %551 = vmatprep.subr.mxu0 0.0
      %552 = vmatpush2.xpose.msra.mxu0 0.0
      %553 = vmatprep.subr.mxu0 0.0
      %554 = vmatpush2.xpose.msra.mxu0 0.0
      %555 = vmatprep.subr.mxu0 0.0
      %556 = vmatpush2.xpose.msra.mxu0 0.0
      %557 = vmatprep.subr.mxu0 0.0
      %558 = vmatpush2.xpose.msra.mxu0 0.0
      %559 = vmatprep.subr.mxu0 0.0
      %560 = vmatpush2.xpose.msra.mxu0 0.0
      %561 = vmatprep.subr.mxu0 0.0
      %562 = vmatpush2.xpose.msra.mxu0 0.0
      %563 = vmatprep.mubr.f32.mxu0 0.0
      %564 = vmatmul.mubr.f32.gmra.mxu0 %v485
      %v565 = vpop.f32.mrf.mxu0
      %v566 = vadd.f32 %v482, %v565
      %v567 = vpop.f32.mrf.mxu0
      %568 = vdwg.mxu0
      %s569 = scalar_lea.vmem %s3, 128
      %v570 = vld [vmem:[%s569] sm:$0xff]
      %v571 = vld [vmem:[%s569 + $0x8] sm:$0xff]
      %v572 = vld [vmem:[%s569 + $0x10] sm:$0xff]
      %v573 = vld [vmem:[%s569 + $0x18] sm:$0xff]
      %s574 = scalar_lea.vmem %s4, 4
      %v575 = vld [vmem:[%s574] sm:$0x1]
      %v577 = vlaneseq
      %v578 = vshrl.u32 %v577, 7
      %v579 = vsub.s32 0, %v578
      %v580 = vrot.slane %v575, %v579
      %v583 = vsel %vm271, %v566, 0
      %v586 = vsel %vm271, %v570, 0
      %v589 = vsel %vm271, %v571, 0
      %v592 = vsel %vm271, %v572, 0
      %v595 = vsel %vm271, %v573, 0
      %597 = vmatprep.subr.mxu0 0.0
      %598 = vmatpush1.xpose.msra.mxu0 0.0
      %599 = vmatprep.subr.mxu0 0.0
      %600 = vmatpush1.xpose.msra.mxu0 0.0
      %601 = vmatprep.subr.mxu0 0.0
      %602 = vmatpush1.xpose.msra.mxu0 0.0
      %603 = vmatprep.subr.mxu0 0.0
      %604 = vmatpush1.xpose.msra.mxu0 0.0
      %605 = vmatprep.subr.mxu0 0.0
      %606 = vmatpush1.xpose.msra.mxu0 0.0
      %607 = vmatprep.subr.mxu0 0.0
      %608 = vmatpush1.xpose.msra.mxu0 0.0
      %609 = vmatprep.subr.mxu0 0.0
      %610 = vmatpush1.xpose.msra.mxu0 0.0
      %611 = vmatprep.subr.mxu0 0.0
      %612 = vmatpush1.xpose.msra.mxu0 0.0
      %613 = vmatprep.subr.mxu0 0.0
      %614 = vmatpush1.xpose.msra.mxu0 0.0
      %615 = vmatprep.subr.mxu0 0.0
      %616 = vmatpush1.xpose.msra.mxu0 0.0
      %617 = vmatprep.subr.mxu0 0.0
      %618 = vmatpush1.xpose.msra.mxu0 0.0
      %619 = vmatprep.subr.mxu0 0.0
      %620 = vmatpush1.xpose.msra.mxu0 0.0
      %621 = vmatprep.subr.mxu0 0.0
      %622 = vmatpush1.xpose.msra.mxu0 %v595
      %623 = vmatprep.subr.mxu0 0.0
      %624 = vmatpush1.xpose.msra.mxu0 %v592
      %625 = vmatprep.subr.mxu0 0.0
      %626 = vmatpush1.xpose.msra.mxu0 %v589
      %627 = vmatprep.subr.mxu0 0.0
      %628 = vmatpush1.xpose.msra.mxu0 %v586
      %629 = vmatprep.subr.mxu0 0.0
      %630 = vmatpush2.xpose.msra.mxu0 0.0
      %631 = vmatprep.subr.mxu0 0.0
      %632 = vmatpush2.xpose.msra.mxu0 0.0
      %633 = vmatprep.subr.mxu0 0.0
      %634 = vmatpush2.xpose.msra.mxu0 0.0
      %635 = vmatprep.subr.mxu0 0.0
      %636 = vmatpush2.xpose.msra.mxu0 0.0
      %637 = vmatprep.subr.mxu0 0.0
      %638 = vmatpush2.xpose.msra.mxu0 0.0
      %639 = vmatprep.subr.mxu0 0.0
      %640 = vmatpush2.xpose.msra.mxu0 0.0
      %641 = vmatprep.subr.mxu0 0.0
      %642 = vmatpush2.xpose.msra.mxu0 0.0
      %643 = vmatprep.subr.mxu0 0.0
      %644 = vmatpush2.xpose.msra.mxu0 0.0
      %645 = vmatprep.subr.mxu0 0.0
      %646 = vmatpush2.xpose.msra.mxu0 0.0
      %647 = vmatprep.subr.mxu0 0.0
      %648 = vmatpush2.xpose.msra.mxu0 0.0
      %649 = vmatprep.subr.mxu0 0.0
      %650 = vmatpush2.xpose.msra.mxu0 0.0
      %651 = vmatprep.subr.mxu0 0.0
      %652 = vmatpush2.xpose.msra.mxu0 0.0
      %653 = vmatprep.subr.mxu0 0.0
      %654 = vmatpush2.xpose.msra.mxu0 0.0
      %655 = vmatprep.subr.mxu0 0.0
      %656 = vmatpush2.xpose.msra.mxu0 0.0
      %657 = vmatprep.subr.mxu0 0.0
      %658 = vmatpush2.xpose.msra.mxu0 0.0
      %659 = vmatprep.subr.mxu0 0.0
      %660 = vmatpush2.xpose.msra.mxu0 0.0
      %661 = vmatprep.mubr.f32.mxu0 0.0
      %662 = vmatmul.mubr.f32.gmra.mxu0 %v583
      %v663 = vpop.f32.mrf.mxu0
      %v664 = vadd.f32 %v580, %v663
      %v665 = vpop.f32.mrf.mxu0
      %666 = vdwg.mxu0
      %s667 = scalar_lea.vmem %s3, 64
      %v668 = vld [vmem:[%s667] sm:$0xff]
      %v669 = vld [vmem:[%s667 + $0x8] sm:$0xff]
      %v670 = vld [vmem:[%s667 + $0x10] sm:$0xff]
      %v671 = vld [vmem:[%s667 + $0x18] sm:$0xff]
      %s672 = scalar_lea.vmem %s4, 2
      %v673 = vld [vmem:[%s672] sm:$0x1]
      %v675 = vlaneseq
      %v676 = vshrl.u32 %v675, 7
      %v677 = vsub.s32 0, %v676
      %v678 = vrot.slane %v673, %v677
      %v681 = vsel %vm271, %v668, 0
      %v684 = vsel %vm271, %v669, 0
      %v687 = vsel %vm271, %v670, 0
      %v690 = vsel %vm271, %v671, 0
      %692 = vmatprep.subr.mxu0 0.0
      %693 = vmatpush1.xpose.msra.mxu0 0.0
      %694 = vmatprep.subr.mxu0 0.0
      %695 = vmatpush1.xpose.msra.mxu0 0.0
      %696 = vmatprep.subr.mxu0 0.0
      %697 = vmatpush1.xpose.msra.mxu0 0.0
      %698 = vmatprep.subr.mxu0 0.0
      %699 = vmatpush1.xpose.msra.mxu0 0.0
      %700 = vmatprep.subr.mxu0 0.0
      %701 = vmatpush1.xpose.msra.mxu0 0.0
      %702 = vmatprep.subr.mxu0 0.0
      %703 = vmatpush1.xpose.msra.mxu0 0.0
      %704 = vmatprep.subr.mxu0 0.0
      %705 = vmatpush1.xpose.msra.mxu0 0.0
      %706 = vmatprep.subr.mxu0 0.0
      %707 = vmatpush1.xpose.msra.mxu0 0.0
      %708 = vmatprep.subr.mxu0 0.0
      %709 = vmatpush1.xpose.msra.mxu0 0.0
      %710 = vmatprep.subr.mxu0 0.0
      %711 = vmatpush1.xpose.msra.mxu0 0.0
      %712 = vmatprep.subr.mxu0 0.0
      %713 = vmatpush1.xpose.msra.mxu0 0.0
      %714 = vmatprep.subr.mxu0 0.0
      %715 = vmatpush1.xpose.msra.mxu0 0.0
      %716 = vmatprep.subr.mxu0 0.0
      %717 = vmatpush1.xpose.msra.mxu0 %v690
      %718 = vmatprep.subr.mxu0 0.0
      %719 = vmatpush1.xpose.msra.mxu0 %v687
      %720 = vmatprep.subr.mxu0 0.0
      %721 = vmatpush1.xpose.msra.mxu0 %v684
      %722 = vmatprep.subr.mxu0 0.0
      %723 = vmatpush1.xpose.msra.mxu0 %v681
      %724 = vmatprep.subr.mxu0 0.0
      %725 = vmatpush2.xpose.msra.mxu0 0.0
      %726 = vmatprep.subr.mxu0 0.0
      %727 = vmatpush2.xpose.msra.mxu0 0.0
      %728 = vmatprep.subr.mxu0 0.0
      %729 = vmatpush2.xpose.msra.mxu0 0.0
      %730 = vmatprep.subr.mxu0 0.0
      %731 = vmatpush2.xpose.msra.mxu0 0.0
      %732 = vmatprep.subr.mxu0 0.0
      %733 = vmatpush2.xpose.msra.mxu0 0.0
      %734 = vmatprep.subr.mxu0 0.0
      %735 = vmatpush2.xpose.msra.mxu0 0.0
      %736 = vmatprep.subr.mxu0 0.0
      %737 = vmatpush2.xpose.msra.mxu0 0.0
      %738 = vmatprep.subr.mxu0 0.0
      %739 = vmatpush2.xpose.msra.mxu0 0.0
      %740 = vmatprep.subr.mxu0 0.0
      %741 = vmatpush2.xpose.msra.mxu0 0.0
      %742 = vmatprep.subr.mxu0 0.0
      %743 = vmatpush2.xpose.msra.mxu0 0.0
      %744 = vmatprep.subr.mxu0 0.0
      %745 = vmatpush2.xpose.msra.mxu0 0.0
      %746 = vmatprep.subr.mxu0 0.0
      %747 = vmatpush2.xpose.msra.mxu0 0.0
      %748 = vmatprep.subr.mxu0 0.0
      %749 = vmatpush2.xpose.msra.mxu0 0.0
      %750 = vmatprep.subr.mxu0 0.0
      %751 = vmatpush2.xpose.msra.mxu0 0.0
      %752 = vmatprep.subr.mxu0 0.0
      %753 = vmatpush2.xpose.msra.mxu0 0.0
      %754 = vmatprep.subr.mxu0 0.0
      %755 = vmatpush2.xpose.msra.mxu0 0.0
      %756 = vmatprep.mubr.f32.mxu0 0.0
      %757 = vmatmul.mubr.f32.gmra.mxu0 %v485
      %v758 = vpop.f32.mrf.mxu0
      %v759 = vadd.f32 %v678, %v758
      %v760 = vpop.f32.mrf.mxu0
      %761 = vdwg.mxu0
      %s762 = scalar_lea.vmem %s3, 160
      %v763 = vld [vmem:[%s762] sm:$0xff]
      %v764 = vld [vmem:[%s762 + $0x8] sm:$0xff]
      %v765 = vld [vmem:[%s762 + $0x10] sm:$0xff]
      %v766 = vld [vmem:[%s762 + $0x18] sm:$0xff]
      %s767 = scalar_lea.vmem %s4, 5
      %v768 = vld [vmem:[%s767] sm:$0x1]
      %v770 = vlaneseq
      %v771 = vshrl.u32 %v770, 7
      %v772 = vsub.s32 0, %v771
      %v773 = vrot.slane %v768, %v772
      %v776 = vsel %vm271, %v759, 0
      %v779 = vsel %vm271, %v763, 0
      %v782 = vsel %vm271, %v764, 0
      %v785 = vsel %vm271, %v765, 0
      %v788 = vsel %vm271, %v766, 0
      %790 = vmatprep.subr.mxu0 0.0
      %791 = vmatpush1.xpose.msra.mxu0 0.0
      %792 = vmatprep.subr.mxu0 0.0
      %793 = vmatpush1.xpose.msra.mxu0 0.0
      %794 = vmatprep.subr.mxu0 0.0
      %795 = vmatpush1.xpose.msra.mxu0 0.0
      %796 = vmatprep.subr.mxu0 0.0
      %797 = vmatpush1.xpose.msra.mxu0 0.0
      %798 = vmatprep.subr.mxu0 0.0
      %799 = vmatpush1.xpose.msra.mxu0 0.0
      %800 = vmatprep.subr.mxu0 0.0
      %801 = vmatpush1.xpose.msra.mxu0 0.0
      %802 = vmatprep.subr.mxu0 0.0
      %803 = vmatpush1.xpose.msra.mxu0 0.0
      %804 = vmatprep.subr.mxu0 0.0
      %805 = vmatpush1.xpose.msra.mxu0 0.0
      %806 = vmatprep.subr.mxu0 0.0
      %807 = vmatpush1.xpose.msra.mxu0 0.0
      %808 = vmatprep.subr.mxu0 0.0
      %809 = vmatpush1.xpose.msra.mxu0 0.0
      %810 = vmatprep.subr.mxu0 0.0
      %811 = vmatpush1.xpose.msra.mxu0 0.0
      %812 = vmatprep.subr.mxu0 0.0
      %813 = vmatpush1.xpose.msra.mxu0 0.0
      %814 = vmatprep.subr.mxu0 0.0
      %815 = vmatpush1.xpose.msra.mxu0 %v788
      %816 = vmatprep.subr.mxu0 0.0
      %817 = vmatpush1.xpose.msra.mxu0 %v785
      %818 = vmatprep.subr.mxu0 0.0
      %819 = vmatpush1.xpose.msra.mxu0 %v782
      %820 = vmatprep.subr.mxu0 0.0
      %821 = vmatpush1.xpose.msra.mxu0 %v779
      %822 = vmatprep.subr.mxu0 0.0
      %823 = vmatpush2.xpose.msra.mxu0 0.0
      %824 = vmatprep.subr.mxu0 0.0
      %825 = vmatpush2.xpose.msra.mxu0 0.0
      %826 = vmatprep.subr.mxu0 0.0
      %827 = vmatpush2.xpose.msra.mxu0 0.0
      %828 = vmatprep.subr.mxu0 0.0
      %829 = vmatpush2.xpose.msra.mxu0 0.0
      %830 = vmatprep.subr.mxu0 0.0
      %831 = vmatpush2.xpose.msra.mxu0 0.0
      %832 = vmatprep.subr.mxu0 0.0
      %833 = vmatpush2.xpose.msra.mxu0 0.0
      %834 = vmatprep.subr.mxu0 0.0
      %835 = vmatpush2.xpose.msra.mxu0 0.0
      %836 = vmatprep.subr.mxu0 0.0
      %837 = vmatpush2.xpose.msra.mxu0 0.0
      %838 = vmatprep.subr.mxu0 0.0
      %839 = vmatpush2.xpose.msra.mxu0 0.0
      %840 = vmatprep.subr.mxu0 0.0
      %841 = vmatpush2.xpose.msra.mxu0 0.0
      %842 = vmatprep.subr.mxu0 0.0
      %843 = vmatpush2.xpose.msra.mxu0 0.0
      %844 = vmatprep.subr.mxu0 0.0
      %845 = vmatpush2.xpose.msra.mxu0 0.0
      %846 = vmatprep.subr.mxu0 0.0
      %847 = vmatpush2.xpose.msra.mxu0 0.0
      %848 = vmatprep.subr.mxu0 0.0
      %849 = vmatpush2.xpose.msra.mxu0 0.0
      %850 = vmatprep.subr.mxu0 0.0
      %851 = vmatpush2.xpose.msra.mxu0 0.0
      %852 = vmatprep.subr.mxu0 0.0
      %853 = vmatpush2.xpose.msra.mxu0 0.0
      %854 = vmatprep.mubr.f32.mxu0 0.0
      %855 = vmatmul.mubr.f32.gmra.mxu0 %v776
      %v856 = vpop.f32.mrf.mxu0
      %v857 = vadd.f32 %v773, %v856
      %v858 = vpop.f32.mrf.mxu0
      %859 = vdwg.mxu0
      %v860 = vmul.f32 %v463, 0.35355338
      %v861 = vmul.f32 %v468, 0.35355338
      %v863 = vlaneseq
      %v864 = vshrl.u32 %v863, 7
      %v865 = vsub.s32 0, %v864
      %v866 = vrot.slane %v259, %v865
      %vm868 = vcmask 64512
      %v870 = vsel %vm868, %v860, 0
      %v873 = vsel %vm868, %v861, 0
      %v876 = vsel %vm868, %v664, 0
      %878 = vmatprep.subr.mxu0 0.0
      %879 = vmatpush1.xpose.msra.mxu0 0.0
      %880 = vmatprep.subr.mxu0 0.0
      %881 = vmatpush1.xpose.msra.mxu0 0.0
      %882 = vmatprep.subr.mxu0 0.0
      %883 = vmatpush1.xpose.msra.mxu0 0.0
      %884 = vmatprep.subr.mxu0 0.0
      %885 = vmatpush1.xpose.msra.mxu0 0.0
      %886 = vmatprep.subr.mxu0 0.0
      %887 = vmatpush1.xpose.msra.mxu0 0.0
      %888 = vmatprep.subr.mxu0 0.0
      %889 = vmatpush1.xpose.msra.mxu0 0.0
      %890 = vmatprep.subr.mxu0 0.0
      %891 = vmatpush1.xpose.msra.mxu0 0.0
      %892 = vmatprep.subr.mxu0 0.0
      %893 = vmatpush1.xpose.msra.mxu0 0.0
      %894 = vmatprep.subr.mxu0 0.0
      %895 = vmatpush1.xpose.msra.mxu0 0.0
      %896 = vmatprep.subr.mxu0 0.0
      %897 = vmatpush1.xpose.msra.mxu0 0.0
      %898 = vmatprep.subr.mxu0 0.0
      %899 = vmatpush1.xpose.msra.mxu0 0.0
      %900 = vmatprep.subr.mxu0 0.0
      %901 = vmatpush1.xpose.msra.mxu0 0.0
      %902 = vmatprep.subr.mxu0 0.0
      %903 = vmatpush1.xpose.msra.mxu0 0.0
      %904 = vmatprep.subr.mxu0 0.0
      %905 = vmatpush1.xpose.msra.mxu0 0.0
      %906 = vmatprep.subr.mxu0 0.0
      %907 = vmatpush1.xpose.msra.mxu0 0.0
      %908 = vmatprep.subr.mxu0 0.0
      %909 = vmatpush1.xpose.msra.mxu0 %v876
      %910 = vmatprep.subr.mxu0 0.0
      %911 = vmatpush2.xpose.msra.mxu0 0.0
      %912 = vmatprep.subr.mxu0 0.0
      %913 = vmatpush2.xpose.msra.mxu0 0.0
      %914 = vmatprep.subr.mxu0 0.0
      %915 = vmatpush2.xpose.msra.mxu0 0.0
      %916 = vmatprep.subr.mxu0 0.0
      %917 = vmatpush2.xpose.msra.mxu0 0.0
      %918 = vmatprep.subr.mxu0 0.0
      %919 = vmatpush2.xpose.msra.mxu0 0.0
      %920 = vmatprep.subr.mxu0 0.0
      %921 = vmatpush2.xpose.msra.mxu0 0.0
      %922 = vmatprep.subr.mxu0 0.0
      %923 = vmatpush2.xpose.msra.mxu0 0.0
      %924 = vmatprep.subr.mxu0 0.0
      %925 = vmatpush2.xpose.msra.mxu0 0.0
      %926 = vmatprep.subr.mxu0 0.0
      %927 = vmatpush2.xpose.msra.mxu0 0.0
      %928 = vmatprep.subr.mxu0 0.0
      %929 = vmatpush2.xpose.msra.mxu0 0.0
      %930 = vmatprep.subr.mxu0 0.0
      %931 = vmatpush2.xpose.msra.mxu0 0.0
      %932 = vmatprep.subr.mxu0 0.0
      %933 = vmatpush2.xpose.msra.mxu0 0.0
      %934 = vmatprep.subr.mxu0 0.0
      %935 = vmatpush2.xpose.msra.mxu0 0.0
      %936 = vmatprep.subr.mxu0 0.0
      %937 = vmatpush2.xpose.msra.mxu0 0.0
      %938 = vmatprep.subr.mxu0 0.0
      %939 = vmatpush2.xpose.msra.mxu0 0.0
      %940 = vmatprep.subr.mxu0 0.0
      %941 = vmatpush2.xpose.msra.mxu0 0.0
      %942 = vmatprep.mubr.f32.mxu0 0.0
      %943 = vmatmul.mubr.f32.gmra.mxu0 %v870
      %v944 = vpop.f32.mrf.mxu0
      %v945 = vadd.f32 %v866, %v944
      %v946 = vpop.f32.mrf.mxu0
      %947 = vmatprep.mubr.f32.mxu0 0.0
      %948 = vmatmul.mubr.f32.gmra.mxu0 %v873
      %v949 = vpop.f32.mrf.mxu0
      %v950 = vadd.f32 %v866, %v949
      %v951 = vpop.f32.mrf.mxu0
      %952 = vdwg.mxu0
      %v953 = vsel %vm868, %v945, -inf
      %954 = vmax.xlane.f32.xlu0 %v953
      %v955 = vpop.xlane.xlu0 %954
      %v956 = vsel %vm868, %v950, -inf
      %957 = vmax.xlane.f32.xlu0 %v956
      %v958 = vpop.xlane.xlu0 %957
      %v959 = vsub.f32 %v945, %v955
      %v960 = vsub.f32 %v950, %v958
      %v961 = vmul.f32 %v959, 1.442695
      %v962 = vpow.pop %v961
      %v963 = vmul.f32 %v960, 1.442695
      %v964 = vpow.pop %v963
      %v965 = vsel %vm868, %v962, 0.0
      %966 = vadd.xlane.f32.xlu0 %v965
      %v967 = vpop.xlane.xlu0 %966
      %v968 = vsel %vm868, %v964, 0.0
      %969 = vadd.xlane.f32.xlu0 %v968
      %v970 = vpop.xlane.xlu0 %969
      %v971 = vrcp.pop %v967
      %v972 = vrcp.pop %v970
      %v973 = vmul.f32 %v962, %v971
      %v974 = vmul.f32 %v964, %v972
      %v976 = vsel %vm868, %v973, 0
      %v979 = vsel %vm868, %v974, 0
      %981 = vmatprep.subr.mxu0 0.0
      %982 = vmatpush1.msra.mxu0 0.0
      %983 = vmatprep.subr.mxu0 0.0
      %984 = vmatpush1.msra.mxu0 0.0
      %985 = vmatprep.subr.mxu0 0.0
      %986 = vmatpush1.msra.mxu0 0.0
      %987 = vmatprep.subr.mxu0 0.0
      %988 = vmatpush1.msra.mxu0 0.0
      %989 = vmatprep.subr.mxu0 0.0
      %990 = vmatpush1.msra.mxu0 0.0
      %991 = vmatprep.subr.mxu0 0.0
      %992 = vmatpush1.msra.mxu0 0.0
      %993 = vmatprep.subr.mxu0 0.0
      %994 = vmatpush1.msra.mxu0 0.0
      %995 = vmatprep.subr.mxu0 0.0
      %996 = vmatpush1.msra.mxu0 0.0
      %997 = vmatprep.subr.mxu0 0.0
      %998 = vmatpush1.msra.mxu0 0.0
      %999 = vmatprep.subr.mxu0 0.0
      %1000 = vmatpush1.msra.mxu0 0.0
      %1001 = vmatprep.subr.mxu0 0.0
      %1002 = vmatpush1.msra.mxu0 0.0
      %1003 = vmatprep.subr.mxu0 0.0
      %1004 = vmatpush1.msra.mxu0 0.0
      %1005 = vmatprep.subr.mxu0 0.0
      %1006 = vmatpush1.msra.mxu0 0.0
      %1007 = vmatprep.subr.mxu0 0.0
      %1008 = vmatpush1.msra.mxu0 0.0
      %1009 = vmatprep.subr.mxu0 0.0
      %1010 = vmatpush1.msra.mxu0 0.0
      %1011 = vmatprep.subr.mxu0 0.0
      %1012 = vmatpush1.msra.mxu0 %v857
      %1013 = vmatprep.subr.mxu0 0.0
      %1014 = vmatpush2.msra.mxu0 0.0
      %1015 = vmatprep.subr.mxu0 0.0
      %1016 = vmatpush2.msra.mxu0 0.0
      %1017 = vmatprep.subr.mxu0 0.0
      %1018 = vmatpush2.msra.mxu0 0.0
      %1019 = vmatprep.subr.mxu0 0.0
      %1020 = vmatpush2.msra.mxu0 0.0
      %1021 = vmatprep.subr.mxu0 0.0
      %1022 = vmatpush2.msra.mxu0 0.0
      %1023 = vmatprep.subr.mxu0 0.0
      %1024 = vmatpush2.msra.mxu0 0.0
      %1025 = vmatprep.subr.mxu0 0.0
      %1026 = vmatpush2.msra.mxu0 0.0
      %1027 = vmatprep.subr.mxu0 0.0
      %1028 = vmatpush2.msra.mxu0 0.0
      %1029 = vmatprep.subr.mxu0 0.0
      %1030 = vmatpush2.msra.mxu0 0.0
      %1031 = vmatprep.subr.mxu0 0.0
      %1032 = vmatpush2.msra.mxu0 0.0
      %1033 = vmatprep.subr.mxu0 0.0
      %1034 = vmatpush2.msra.mxu0 0.0
      %1035 = vmatprep.subr.mxu0 0.0
      %1036 = vmatpush2.msra.mxu0 0.0
      %1037 = vmatprep.subr.mxu0 0.0
      %1038 = vmatpush2.msra.mxu0 0.0
      %1039 = vmatprep.subr.mxu0 0.0
      %1040 = vmatpush2.msra.mxu0 0.0
      %1041 = vmatprep.subr.mxu0 0.0
      %1042 = vmatpush2.msra.mxu0 0.0
      %1043 = vmatprep.subr.mxu0 0.0
      %1044 = vmatpush2.msra.mxu0 0.0
      %1045 = vmatprep.mubr.f32.mxu0 0.0
      %1046 = vmatmul.mubr.f32.gmra.mxu0 %v976
      %v1047 = vpop.f32.mrf.mxu0
      %v1048 = vadd.f32 0.0, %v1047
      %v1049 = vpop.f32.mrf.mxu0
      %1050 = vmatprep.mubr.f32.mxu0 0.0
      %1051 = vmatmul.mubr.f32.gmra.mxu0 %v979
      %v1052 = vpop.f32.mrf.mxu0
      %v1053 = vadd.f32 0.0, %v1052
      %v1054 = vpop.f32.mrf.mxu0
      %1055 = vdwg.mxu0
      %1056 = vrot.lane.b32.xlu0 %v860, 120
      %v1057 = vpop.permute.xlu0 %1056
      %1058 = vrot.lane.b32.xlu0 %v861, 120
      %v1059 = vpop.permute.xlu0 %1058
      %1060 = vrot.lane.b32.xlu0 %v664, 120
      %v1061 = vpop.permute.xlu0 %1060
      %v1062 = vsel %vm868, %v1057, 0
      %v1064 = vsel %vm868, %v1059, 0
      %v1066 = vsel %vm868, %v1061, 0
      %1068 = vmatprep.subr.mxu0 0.0
      %1069 = vmatpush1.xpose.msra.mxu0 0.0
      %1070 = vmatprep.subr.mxu0 0.0
      %1071 = vmatpush1.xpose.msra.mxu0 0.0
      %1072 = vmatprep.subr.mxu0 0.0
      %1073 = vmatpush1.xpose.msra.mxu0 0.0
      %1074 = vmatprep.subr.mxu0 0.0
      %1075 = vmatpush1.xpose.msra.mxu0 0.0
      %1076 = vmatprep.subr.mxu0 0.0
      %1077 = vmatpush1.xpose.msra.mxu0 0.0
      %1078 = vmatprep.subr.mxu0 0.0
      %1079 = vmatpush1.xpose.msra.mxu0 0.0
      %1080 = vmatprep.subr.mxu0 0.0
      %1081 = vmatpush1.xpose.msra.mxu0 0.0
      %1082 = vmatprep.subr.mxu0 0.0
      %1083 = vmatpush1.xpose.msra.mxu0 0.0
      %1084 = vmatprep.subr.mxu0 0.0
      %1085 = vmatpush1.xpose.msra.mxu0 0.0
      %1086 = vmatprep.subr.mxu0 0.0
      %1087 = vmatpush1.xpose.msra.mxu0 0.0
      %1088 = vmatprep.subr.mxu0 0.0
      %1089 = vmatpush1.xpose.msra.mxu0 0.0
      %1090 = vmatprep.subr.mxu0 0.0
      %1091 = vmatpush1.xpose.msra.mxu0 0.0
      %1092 = vmatprep.subr.mxu0 0.0
      %1093 = vmatpush1.xpose.msra.mxu0 0.0
      %1094 = vmatprep.subr.mxu0 0.0
      %1095 = vmatpush1.xpose.msra.mxu0 0.0
      %1096 = vmatprep.subr.mxu0 0.0
      %1097 = vmatpush1.xpose.msra.mxu0 0.0
      %1098 = vmatprep.subr.mxu0 0.0
      %1099 = vmatpush1.xpose.msra.mxu0 %v1066
      %1100 = vmatprep.subr.mxu0 0.0
      %1101 = vmatpush2.xpose.msra.mxu0 0.0
      %1102 = vmatprep.subr.mxu0 0.0
      %1103 = vmatpush2.xpose.msra.mxu0 0.0
      %1104 = vmatprep.subr.mxu0 0.0
      %1105 = vmatpush2.xpose.msra.mxu0 0.0
      %1106 = vmatprep.subr.mxu0 0.0
      %1107 = vmatpush2.xpose.msra.mxu0 0.0
      %1108 = vmatprep.subr.mxu0 0.0
      %1109 = vmatpush2.xpose.msra.mxu0 0.0
      %1110 = vmatprep.subr.mxu0 0.0
      %1111 = vmatpush2.xpose.msra.mxu0 0.0
      %1112 = vmatprep.subr.mxu0 0.0
      %1113 = vmatpush2.xpose.msra.mxu0 0.0
      %1114 = vmatprep.subr.mxu0 0.0
      %1115 = vmatpush2.xpose.msra.mxu0 0.0
      %1116 = vmatprep.subr.mxu0 0.0
      %1117 = vmatpush2.xpose.msra.mxu0 0.0
      %1118 = vmatprep.subr.mxu0 0.0
      %1119 = vmatpush2.xpose.msra.mxu0 0.0
      %1120 = vmatprep.subr.mxu0 0.0
      %1121 = vmatpush2.xpose.msra.mxu0 0.0
      %1122 = vmatprep.subr.mxu0 0.0
      %1123 = vmatpush2.xpose.msra.mxu0 0.0
      %1124 = vmatprep.subr.mxu0 0.0
      %1125 = vmatpush2.xpose.msra.mxu0 0.0
      %1126 = vmatprep.subr.mxu0 0.0
      %1127 = vmatpush2.xpose.msra.mxu0 0.0
      %1128 = vmatprep.subr.mxu0 0.0
      %1129 = vmatpush2.xpose.msra.mxu0 0.0
      %1130 = vmatprep.subr.mxu0 0.0
      %1131 = vmatpush2.xpose.msra.mxu0 0.0
      %1132 = vmatprep.mubr.f32.mxu0 0.0
      %1133 = vmatmul.mubr.f32.gmra.mxu0 %v1062
      %v1134 = vpop.f32.mrf.mxu0
      %v1135 = vadd.f32 %v866, %v1134
      %v1136 = vpop.f32.mrf.mxu0
      %1137 = vmatprep.mubr.f32.mxu0 0.0
      %1138 = vmatmul.mubr.f32.gmra.mxu0 %v1064
      %v1139 = vpop.f32.mrf.mxu0
      %v1140 = vadd.f32 %v866, %v1139
      %v1141 = vpop.f32.mrf.mxu0
      %1142 = vdwg.mxu0
      %v1143 = vsel %vm868, %v1135, -inf
      %1144 = vmax.xlane.f32.xlu0 %v1143
      %v1145 = vpop.xlane.xlu0 %1144
      %v1146 = vsel %vm868, %v1140, -inf
      %1147 = vmax.xlane.f32.xlu0 %v1146
      %v1148 = vpop.xlane.xlu0 %1147
      %v1149 = vsub.f32 %v1135, %v1145
      %v1150 = vsub.f32 %v1140, %v1148
      %v1151 = vmul.f32 %v1149, 1.442695
      %v1152 = vpow.pop %v1151
      %v1153 = vmul.f32 %v1150, 1.442695
      %v1154 = vpow.pop %v1153
      %v1155 = vsel %vm868, %v1152, 0.0
      %1156 = vadd.xlane.f32.xlu0 %v1155
      %v1157 = vpop.xlane.xlu0 %1156
      %v1158 = vsel %vm868, %v1154, 0.0
      %1159 = vadd.xlane.f32.xlu0 %v1158
      %v1160 = vpop.xlane.xlu0 %1159
      %v1161 = vrcp.pop %v1157
      %v1162 = vrcp.pop %v1160
      %v1163 = vmul.f32 %v1152, %v1161
      %v1164 = vmul.f32 %v1154, %v1162
      %1166 = vrot.lane.b32.xlu0 %v857, 120
      %v1167 = vpop.permute.xlu0 %1166
      %v1170 = vsel %vm868, %v1163, 0
      %v1173 = vsel %vm868, %v1164, 0
      %1175 = vmatprep.subr.mxu0 0.0
      %1176 = vmatpush1.msra.mxu0 0.0
      %1177 = vmatprep.subr.mxu0 0.0
      %1178 = vmatpush1.msra.mxu0 0.0
      %1179 = vmatprep.subr.mxu0 0.0
      %1180 = vmatpush1.msra.mxu0 0.0
      %1181 = vmatprep.subr.mxu0 0.0
      %1182 = vmatpush1.msra.mxu0 0.0
      %1183 = vmatprep.subr.mxu0 0.0
      %1184 = vmatpush1.msra.mxu0 0.0
      %1185 = vmatprep.subr.mxu0 0.0
      %1186 = vmatpush1.msra.mxu0 0.0
      %1187 = vmatprep.subr.mxu0 0.0
      %1188 = vmatpush1.msra.mxu0 0.0
      %1189 = vmatprep.subr.mxu0 0.0
      %1190 = vmatpush1.msra.mxu0 0.0
      %1191 = vmatprep.subr.mxu0 0.0
      %1192 = vmatpush1.msra.mxu0 0.0
      %1193 = vmatprep.subr.mxu0 0.0
      %1194 = vmatpush1.msra.mxu0 0.0
      %1195 = vmatprep.subr.mxu0 0.0
      %1196 = vmatpush1.msra.mxu0 0.0
      %1197 = vmatprep.subr.mxu0 0.0
      %1198 = vmatpush1.msra.mxu0 0.0
      %1199 = vmatprep.subr.mxu0 0.0
      %1200 = vmatpush1.msra.mxu0 0.0
      %1201 = vmatprep.subr.mxu0 0.0
      %1202 = vmatpush1.msra.mxu0 0.0
      %1203 = vmatprep.subr.mxu0 0.0
      %1204 = vmatpush1.msra.mxu0 0.0
      %1205 = vmatprep.subr.mxu0 0.0
      %1206 = vmatpush1.msra.mxu0 %v1167
      %1207 = vmatprep.subr.mxu0 0.0
      %1208 = vmatpush2.msra.mxu0 0.0
      %1209 = vmatprep.subr.mxu0 0.0
      %1210 = vmatpush2.msra.mxu0 0.0
      %1211 = vmatprep.subr.mxu0 0.0
      %1212 = vmatpush2.msra.mxu0 0.0
      %1213 = vmatprep.subr.mxu0 0.0
      %1214 = vmatpush2.msra.mxu0 0.0
      %1215 = vmatprep.subr.mxu0 0.0
      %1216 = vmatpush2.msra.mxu0 0.0
      %1217 = vmatprep.subr.mxu0 0.0
      %1218 = vmatpush2.msra.mxu0 0.0
      %1219 = vmatprep.subr.mxu0 0.0
      %1220 = vmatpush2.msra.mxu0 0.0
      %1221 = vmatprep.subr.mxu0 0.0
      %1222 = vmatpush2.msra.mxu0 0.0
      %1223 = vmatprep.subr.mxu0 0.0
      %1224 = vmatpush2.msra.mxu0 0.0
      %1225 = vmatprep.subr.mxu0 0.0
      %1226 = vmatpush2.msra.mxu0 0.0
      %1227 = vmatprep.subr.mxu0 0.0
      %1228 = vmatpush2.msra.mxu0 0.0
      %1229 = vmatprep.subr.mxu0 0.0
      %1230 = vmatpush2.msra.mxu0 0.0
      %1231 = vmatprep.subr.mxu0 0.0
      %1232 = vmatpush2.msra.mxu0 0.0
      %1233 = vmatprep.subr.mxu0 0.0
      %1234 = vmatpush2.msra.mxu0 0.0
      %1235 = vmatprep.subr.mxu0 0.0
      %1236 = vmatpush2.msra.mxu0 0.0
      %1237 = vmatprep.subr.mxu0 0.0
      %1238 = vmatpush2.msra.mxu0 0.0
      %1239 = vmatprep.mubr.f32.mxu0 0.0
      %1240 = vmatmul.mubr.f32.gmra.mxu0 %v1170
      %v1241 = vpop.f32.mrf.mxu0
      %v1242 = vadd.f32 0.0, %v1241
      %v1243 = vpop.f32.mrf.mxu0
      %1244 = vmatprep.mubr.f32.mxu0 0.0
      %1245 = vmatmul.mubr.f32.gmra.mxu0 %v1173
      %v1246 = vpop.f32.mrf.mxu0
      %v1247 = vadd.f32 0.0, %v1246
      %v1248 = vpop.f32.mrf.mxu0
      %1249 = vdwg.mxu0
      %1250 = vrot.lane.b32.xlu0 %v860, 112
      %v1251 = vpop.permute.xlu0 %1250
      %1252 = vrot.lane.b32.xlu0 %v861, 112
      %v1253 = vpop.permute.xlu0 %1252
      %1254 = vrot.lane.b32.xlu0 %v664, 112
      %v1255 = vpop.permute.xlu0 %1254
      %v1256 = vsel %vm868, %v1251, 0
      %v1258 = vsel %vm868, %v1253, 0
      %v1260 = vsel %vm868, %v1255, 0
      %1262 = vmatprep.subr.mxu0 0.0
      %1263 = vmatpush1.xpose.msra.mxu0 0.0
      %1264 = vmatprep.subr.mxu0 0.0
      %1265 = vmatpush1.xpose.msra.mxu0 0.0
      %1266 = vmatprep.subr.mxu0 0.0
      %1267 = vmatpush1.xpose.msra.mxu0 0.0
      %1268 = vmatprep.subr.mxu0 0.0
      %1269 = vmatpush1.xpose.msra.mxu0 0.0
      %1270 = vmatprep.subr.mxu0 0.0
      %1271 = vmatpush1.xpose.msra.mxu0 0.0
      %1272 = vmatprep.subr.mxu0 0.0
      %1273 = vmatpush1.xpose.msra.mxu0 0.0
      %1274 = vmatprep.subr.mxu0 0.0
      %1275 = vmatpush1.xpose.msra.mxu0 0.0
      %1276 = vmatprep.subr.mxu0 0.0
      %1277 = vmatpush1.xpose.msra.mxu0 0.0
      %1278 = vmatprep.subr.mxu0 0.0
      %1279 = vmatpush1.xpose.msra.mxu0 0.0
      %1280 = vmatprep.subr.mxu0 0.0
      %1281 = vmatpush1.xpose.msra.mxu0 0.0
      %1282 = vmatprep.subr.mxu0 0.0
      %1283 = vmatpush1.xpose.msra.mxu0 0.0
      %1284 = vmatprep.subr.mxu0 0.0
      %1285 = vmatpush1.xpose.msra.mxu0 0.0
      %1286 = vmatprep.subr.mxu0 0.0
      %1287 = vmatpush1.xpose.msra.mxu0 0.0
      %1288 = vmatprep.subr.mxu0 0.0
      %1289 = vmatpush1.xpose.msra.mxu0 0.0
      %1290 = vmatprep.subr.mxu0 0.0
      %1291 = vmatpush1.xpose.msra.mxu0 0.0
      %1292 = vmatprep.subr.mxu0 0.0
      %1293 = vmatpush1.xpose.msra.mxu0 %v1260
      %1294 = vmatprep.subr.mxu0 0.0
      %1295 = vmatpush2.xpose.msra.mxu0 0.0
      %1296 = vmatprep.subr.mxu0 0.0
      %1297 = vmatpush2.xpose.msra.mxu0 0.0
      %1298 = vmatprep.subr.mxu0 0.0
      %1299 = vmatpush2.xpose.msra.mxu0 0.0
      %1300 = vmatprep.subr.mxu0 0.0
      %1301 = vmatpush2.xpose.msra.mxu0 0.0
      %1302 = vmatprep.subr.mxu0 0.0
      %1303 = vmatpush2.xpose.msra.mxu0 0.0
      %1304 = vmatprep.subr.mxu0 0.0
      %1305 = vmatpush2.xpose.msra.mxu0 0.0
      %1306 = vmatprep.subr.mxu0 0.0
      %1307 = vmatpush2.xpose.msra.mxu0 0.0
      %1308 = vmatprep.subr.mxu0 0.0
      %1309 = vmatpush2.xpose.msra.mxu0 0.0
      %1310 = vmatprep.subr.mxu0 0.0
      %1311 = vmatpush2.xpose.msra.mxu0 0.0
      %1312 = vmatprep.subr.mxu0 0.0
      %1313 = vmatpush2.xpose.msra.mxu0 0.0
      %1314 = vmatprep.subr.mxu0 0.0
      %1315 = vmatpush2.xpose.msra.mxu0 0.0
      %1316 = vmatprep.subr.mxu0 0.0
      %1317 = vmatpush2.xpose.msra.mxu0 0.0
      %1318 = vmatprep.subr.mxu0 0.0
      %1319 = vmatpush2.xpose.msra.mxu0 0.0
      %1320 = vmatprep.subr.mxu0 0.0
      %1321 = vmatpush2.xpose.msra.mxu0 0.0
      %1322 = vmatprep.subr.mxu0 0.0
      %1323 = vmatpush2.xpose.msra.mxu0 0.0
      %1324 = vmatprep.subr.mxu0 0.0
      %1325 = vmatpush2.xpose.msra.mxu0 0.0
      %1326 = vmatprep.mubr.f32.mxu0 0.0
      %1327 = vmatmul.mubr.f32.gmra.mxu0 %v1256
      %v1328 = vpop.f32.mrf.mxu0
      %v1329 = vadd.f32 %v866, %v1328
      %v1330 = vpop.f32.mrf.mxu0
      %1331 = vmatprep.mubr.f32.mxu0 0.0
      %1332 = vmatmul.mubr.f32.gmra.mxu0 %v1258
      %v1333 = vpop.f32.mrf.mxu0
      %v1334 = vadd.f32 %v866, %v1333
      %v1335 = vpop.f32.mrf.mxu0
      %1336 = vdwg.mxu0
      %v1337 = vsel %vm868, %v1329, -inf
      %1338 = vmax.xlane.f32.xlu0 %v1337
      %v1339 = vpop.xlane.xlu0 %1338
      %v1340 = vsel %vm868, %v1334, -inf
      %1341 = vmax.xlane.f32.xlu0 %v1340
      %v1342 = vpop.xlane.xlu0 %1341
      %v1343 = vsub.f32 %v1329, %v1339
      %v1344 = vsub.f32 %v1334, %v1342
      %v1345 = vmul.f32 %v1343, 1.442695
      %v1346 = vpow.pop %v1345
      %v1347 = vmul.f32 %v1344, 1.442695
      %v1348 = vpow.pop %v1347
      %v1349 = vsel %vm868, %v1346, 0.0
      %1350 = vadd.xlane.f32.xlu0 %v1349
      %v1351 = vpop.xlane.xlu0 %1350
      %v1352 = vsel %vm868, %v1348, 0.0
      %1353 = vadd.xlane.f32.xlu0 %v1352
      %v1354 = vpop.xlane.xlu0 %1353
      %v1355 = vrcp.pop %v1351
      %v1356 = vrcp.pop %v1354
      %v1357 = vmul.f32 %v1346, %v1355
      %v1358 = vmul.f32 %v1348, %v1356
      %1359 = vrot.lane.b32.xlu0 %v857, 112
      %v1360 = vpop.permute.xlu0 %1359
      %v1363 = vsel %vm868, %v1357, 0
      %v1366 = vsel %vm868, %v1358, 0
      %1368 = vmatprep.subr.mxu0 0.0
      %1369 = vmatpush1.msra.mxu0 0.0
      %1370 = vmatprep.subr.mxu0 0.0
      %1371 = vmatpush1.msra.mxu0 0.0
      %1372 = vmatprep.subr.mxu0 0.0
      %1373 = vmatpush1.msra.mxu0 0.0
      %1374 = vmatprep.subr.mxu0 0.0
      %1375 = vmatpush1.msra.mxu0 0.0
      %1376 = vmatprep.subr.mxu0 0.0
      %1377 = vmatpush1.msra.mxu0 0.0
      %1378 = vmatprep.subr.mxu0 0.0
      %1379 = vmatpush1.msra.mxu0 0.0
      %1380 = vmatprep.subr.mxu0 0.0
      %1381 = vmatpush1.msra.mxu0 0.0
      %1382 = vmatprep.subr.mxu0 0.0
      %1383 = vmatpush1.msra.mxu0 0.0
      %1384 = vmatprep.subr.mxu0 0.0
      %1385 = vmatpush1.msra.mxu0 0.0
      %1386 = vmatprep.subr.mxu0 0.0
      %1387 = vmatpush1.msra.mxu0 0.0
      %1388 = vmatprep.subr.mxu0 0.0
      %1389 = vmatpush1.msra.mxu0 0.0
      %1390 = vmatprep.subr.mxu0 0.0
      %1391 = vmatpush1.msra.mxu0 0.0
      %1392 = vmatprep.subr.mxu0 0.0
      %1393 = vmatpush1.msra.mxu0 0.0
      %1394 = vmatprep.subr.mxu0 0.0
      %1395 = vmatpush1.msra.mxu0 0.0
      %1396 = vmatprep.subr.mxu0 0.0
      %1397 = vmatpush1.msra.mxu0 0.0
      %1398 = vmatprep.subr.mxu0 0.0
      %1399 = vmatpush1.msra.mxu0 %v1360
      %1400 = vmatprep.subr.mxu0 0.0
      %1401 = vmatpush2.msra.mxu0 0.0
      %1402 = vmatprep.subr.mxu0 0.0
      %1403 = vmatpush2.msra.mxu0 0.0
      %1404 = vmatprep.subr.mxu0 0.0
      %1405 = vmatpush2.msra.mxu0 0.0
      %1406 = vmatprep.subr.mxu0 0.0
      %1407 = vmatpush2.msra.mxu0 0.0
      %1408 = vmatprep.subr.mxu0 0.0
      %1409 = vmatpush2.msra.mxu0 0.0
      %1410 = vmatprep.subr.mxu0 0.0
      %1411 = vmatpush2.msra.mxu0 0.0
      %1412 = vmatprep.subr.mxu0 0.0
      %1413 = vmatpush2.msra.mxu0 0.0
      %1414 = vmatprep.subr.mxu0 0.0
      %1415 = vmatpush2.msra.mxu0 0.0
      %1416 = vmatprep.subr.mxu0 0.0
      %1417 = vmatpush2.msra.mxu0 0.0
      %1418 = vmatprep.subr.mxu0 0.0
      %1419 = vmatpush2.msra.mxu0 0.0
      %1420 = vmatprep.subr.mxu0 0.0
      %1421 = vmatpush2.msra.mxu0 0.0
      %1422 = vmatprep.subr.mxu0 0.0
      %1423 = vmatpush2.msra.mxu0 0.0
      %1424 = vmatprep.subr.mxu0 0.0
      %1425 = vmatpush2.msra.mxu0 0.0
      %1426 = vmatprep.subr.mxu0 0.0
      %1427 = vmatpush2.msra.mxu0 0.0
      %1428 = vmatprep.subr.mxu0 0.0
      %1429 = vmatpush2.msra.mxu0 0.0
      %1430 = vmatprep.subr.mxu0 0.0
      %1431 = vmatpush2.msra.mxu0 0.0
      %1432 = vmatprep.mubr.f32.mxu0 0.0
      %1433 = vmatmul.mubr.f32.gmra.mxu0 %v1363
      %v1434 = vpop.f32.mrf.mxu0
      %v1435 = vadd.f32 0.0, %v1434
      %v1436 = vpop.f32.mrf.mxu0
      %1437 = vmatprep.mubr.f32.mxu0 0.0
      %1438 = vmatmul.mubr.f32.gmra.mxu0 %v1366
      %v1439 = vpop.f32.mrf.mxu0
      %v1440 = vadd.f32 0.0, %v1439
      %v1441 = vpop.f32.mrf.mxu0
      %1442 = vdwg.mxu0
      %1443 = vrot.lane.b32.xlu0 %v860, 104
      %v1444 = vpop.permute.xlu0 %1443
      %1445 = vrot.lane.b32.xlu0 %v861, 104
      %v1446 = vpop.permute.xlu0 %1445
      %1447 = vrot.lane.b32.xlu0 %v664, 104
      %v1448 = vpop.permute.xlu0 %1447
      %v1449 = vsel %vm868, %v1444, 0
      %v1451 = vsel %vm868, %v1446, 0
      %v1453 = vsel %vm868, %v1448, 0
      %1455 = vmatprep.subr.mxu0 0.0
      %1456 = vmatpush1.xpose.msra.mxu0 0.0
      %1457 = vmatprep.subr.mxu0 0.0
      %1458 = vmatpush1.xpose.msra.mxu0 0.0
      %1459 = vmatprep.subr.mxu0 0.0
      %1460 = vmatpush1.xpose.msra.mxu0 0.0
      %1461 = vmatprep.subr.mxu0 0.0
      %1462 = vmatpush1.xpose.msra.mxu0 0.0
      %1463 = vmatprep.subr.mxu0 0.0
      %1464 = vmatpush1.xpose.msra.mxu0 0.0
      %1465 = vmatprep.subr.mxu0 0.0
      %1466 = vmatpush1.xpose.msra.mxu0 0.0
      %1467 = vmatprep.subr.mxu0 0.0
      %1468 = vmatpush1.xpose.msra.mxu0 0.0
      %1469 = vmatprep.subr.mxu0 0.0
      %1470 = vmatpush1.xpose.msra.mxu0 0.0
      %1471 = vmatprep.subr.mxu0 0.0
      %1472 = vmatpush1.xpose.msra.mxu0 0.0
      %1473 = vmatprep.subr.mxu0 0.0
      %1474 = vmatpush1.xpose.msra.mxu0 0.0
      %1475 = vmatprep.subr.mxu0 0.0
      %1476 = vmatpush1.xpose.msra.mxu0 0.0
      %1477 = vmatprep.subr.mxu0 0.0
      %1478 = vmatpush1.xpose.msra.mxu0 0.0
      %1479 = vmatprep.subr.mxu0 0.0
      %1480 = vmatpush1.xpose.msra.mxu0 0.0
      %1481 = vmatprep.subr.mxu0 0.0
      %1482 = vmatpush1.xpose.msra.mxu0 0.0
      %1483 = vmatprep.subr.mxu0 0.0
      %1484 = vmatpush1.xpose.msra.mxu0 0.0
      %1485 = vmatprep.subr.mxu0 0.0
      %1486 = vmatpush1.xpose.msra.mxu0 %v1453
      %1487 = vmatprep.subr.mxu0 0.0
      %1488 = vmatpush2.xpose.msra.mxu0 0.0
      %1489 = vmatprep.subr.mxu0 0.0
      %1490 = vmatpush2.xpose.msra.mxu0 0.0
      %1491 = vmatprep.subr.mxu0 0.0
      %1492 = vmatpush2.xpose.msra.mxu0 0.0
      %1493 = vmatprep.subr.mxu0 0.0
      %1494 = vmatpush2.xpose.msra.mxu0 0.0
      %1495 = vmatprep.subr.mxu0 0.0
      %1496 = vmatpush2.xpose.msra.mxu0 0.0
      %1497 = vmatprep.subr.mxu0 0.0
      %1498 = vmatpush2.xpose.msra.mxu0 0.0
      %1499 = vmatprep.subr.mxu0 0.0
      %1500 = vmatpush2.xpose.msra.mxu0 0.0
      %1501 = vmatprep.subr.mxu0 0.0
      %1502 = vmatpush2.xpose.msra.mxu0 0.0
      %1503 = vmatprep.subr.mxu0 0.0
      %1504 = vmatpush2.xpose.msra.mxu0 0.0
      %1505 = vmatprep.subr.mxu0 0.0
      %1506 = vmatpush2.xpose.msra.mxu0 0.0
      %1507 = vmatprep.subr.mxu0 0.0
      %1508 = vmatpush2.xpose.msra.mxu0 0.0
      %1509 = vmatprep.subr.mxu0 0.0
      %1510 = vmatpush2.xpose.msra.mxu0 0.0
      %1511 = vmatprep.subr.mxu0 0.0
      %1512 = vmatpush2.xpose.msra.mxu0 0.0
      %1513 = vmatprep.subr.mxu0 0.0
      %1514 = vmatpush2.xpose.msra.mxu0 0.0
      %1515 = vmatprep.subr.mxu0 0.0
      %1516 = vmatpush2.xpose.msra.mxu0 0.0
      %1517 = vmatprep.subr.mxu0 0.0
      %1518 = vmatpush2.xpose.msra.mxu0 0.0
      %1519 = vmatprep.mubr.f32.mxu0 0.0
      %1520 = vmatmul.mubr.f32.gmra.mxu0 %v1449
      %v1521 = vpop.f32.mrf.mxu0
      %v1522 = vadd.f32 %v866, %v1521
      %v1523 = vpop.f32.mrf.mxu0
      %1524 = vmatprep.mubr.f32.mxu0 0.0
      %1525 = vmatmul.mubr.f32.gmra.mxu0 %v1451
      %v1526 = vpop.f32.mrf.mxu0
      %v1527 = vadd.f32 %v866, %v1526
      %v1528 = vpop.f32.mrf.mxu0
      %1529 = vdwg.mxu0
      %v1530 = vsel %vm868, %v1522, -inf
      %1531 = vmax.xlane.f32.xlu0 %v1530
      %v1532 = vpop.xlane.xlu0 %1531
      %v1533 = vsel %vm868, %v1527, -inf
      %1534 = vmax.xlane.f32.xlu0 %v1533
      %v1535 = vpop.xlane.xlu0 %1534
      %v1536 = vsub.f32 %v1522, %v1532
      %v1537 = vsub.f32 %v1527, %v1535
      %v1538 = vmul.f32 %v1536, 1.442695
      %v1539 = vpow.pop %v1538
      %v1540 = vmul.f32 %v1537, 1.442695
      %v1541 = vpow.pop %v1540
      %v1542 = vsel %vm868, %v1539, 0.0
      %1543 = vadd.xlane.f32.xlu0 %v1542
      %v1544 = vpop.xlane.xlu0 %1543
      %v1545 = vsel %vm868, %v1541, 0.0
      %1546 = vadd.xlane.f32.xlu0 %v1545
      %v1547 = vpop.xlane.xlu0 %1546
      %v1548 = vrcp.pop %v1544
      %v1549 = vrcp.pop %v1547
      %v1550 = vmul.f32 %v1539, %v1548
      %v1551 = vmul.f32 %v1541, %v1549
      %1552 = vrot.lane.b32.xlu0 %v857, 104
      %v1553 = vpop.permute.xlu0 %1552
      %v1556 = vsel %vm868, %v1550, 0
      %v1559 = vsel %vm868, %v1551, 0
      %1561 = vmatprep.subr.mxu0 0.0
      %1562 = vmatpush1.msra.mxu0 0.0
      %1563 = vmatprep.subr.mxu0 0.0
      %1564 = vmatpush1.msra.mxu0 0.0
      %1565 = vmatprep.subr.mxu0 0.0
      %1566 = vmatpush1.msra.mxu0 0.0
      %1567 = vmatprep.subr.mxu0 0.0
      %1568 = vmatpush1.msra.mxu0 0.0
      %1569 = vmatprep.subr.mxu0 0.0
      %1570 = vmatpush1.msra.mxu0 0.0
      %1571 = vmatprep.subr.mxu0 0.0
      %1572 = vmatpush1.msra.mxu0 0.0
      %1573 = vmatprep.subr.mxu0 0.0
      %1574 = vmatpush1.msra.mxu0 0.0
      %1575 = vmatprep.subr.mxu0 0.0
      %1576 = vmatpush1.msra.mxu0 0.0
      %1577 = vmatprep.subr.mxu0 0.0
      %1578 = vmatpush1.msra.mxu0 0.0
      %1579 = vmatprep.subr.mxu0 0.0
      %1580 = vmatpush1.msra.mxu0 0.0
      %1581 = vmatprep.subr.mxu0 0.0
      %1582 = vmatpush1.msra.mxu0 0.0
      %1583 = vmatprep.subr.mxu0 0.0
      %1584 = vmatpush1.msra.mxu0 0.0
      %1585 = vmatprep.subr.mxu0 0.0
      %1586 = vmatpush1.msra.mxu0 0.0
      %1587 = vmatprep.subr.mxu0 0.0
      %1588 = vmatpush1.msra.mxu0 0.0
      %1589 = vmatprep.subr.mxu0 0.0
      %1590 = vmatpush1.msra.mxu0 0.0
      %1591 = vmatprep.subr.mxu0 0.0
      %1592 = vmatpush1.msra.mxu0 %v1553
      %1593 = vmatprep.subr.mxu0 0.0
      %1594 = vmatpush2.msra.mxu0 0.0
      %1595 = vmatprep.subr.mxu0 0.0
      %1596 = vmatpush2.msra.mxu0 0.0
      %1597 = vmatprep.subr.mxu0 0.0
      %1598 = vmatpush2.msra.mxu0 0.0
      %1599 = vmatprep.subr.mxu0 0.0
      %1600 = vmatpush2.msra.mxu0 0.0
      %1601 = vmatprep.subr.mxu0 0.0
      %1602 = vmatpush2.msra.mxu0 0.0
      %1603 = vmatprep.subr.mxu0 0.0
      %1604 = vmatpush2.msra.mxu0 0.0
      %1605 = vmatprep.subr.mxu0 0.0
      %1606 = vmatpush2.msra.mxu0 0.0
      %1607 = vmatprep.subr.mxu0 0.0
      %1608 = vmatpush2.msra.mxu0 0.0
      %1609 = vmatprep.subr.mxu0 0.0
      %1610 = vmatpush2.msra.mxu0 0.0
      %1611 = vmatprep.subr.mxu0 0.0
      %1612 = vmatpush2.msra.mxu0 0.0
      %1613 = vmatprep.subr.mxu0 0.0
      %1614 = vmatpush2.msra.mxu0 0.0
      %1615 = vmatprep.subr.mxu0 0.0
      %1616 = vmatpush2.msra.mxu0 0.0
      %1617 = vmatprep.subr.mxu0 0.0
      %1618 = vmatpush2.msra.mxu0 0.0
      %1619 = vmatprep.subr.mxu0 0.0
      %1620 = vmatpush2.msra.mxu0 0.0
      %1621 = vmatprep.subr.mxu0 0.0
      %1622 = vmatpush2.msra.mxu0 0.0
      %1623 = vmatprep.subr.mxu0 0.0
      %1624 = vmatpush2.msra.mxu0 0.0
      %1625 = vmatprep.mubr.f32.mxu0 0.0
      %1626 = vmatmul.mubr.f32.gmra.mxu0 %v1556
      %v1627 = vpop.f32.mrf.mxu0
      %v1628 = vadd.f32 0.0, %v1627
      %v1629 = vpop.f32.mrf.mxu0
      %1630 = vmatprep.mubr.f32.mxu0 0.0
      %1631 = vmatmul.mubr.f32.gmra.mxu0 %v1559
      %v1632 = vpop.f32.mrf.mxu0
      %v1633 = vadd.f32 0.0, %v1632
      %v1634 = vpop.f32.mrf.mxu0
      %1635 = vdwg.mxu0
      %1638 = vrot.lane.b32.xlu0 %v1242, 8
      %v1639 = vpop.permute.xlu0 %1638
      %1640 = vrot.lane.b32.xlu0 %v1247, 8
      %v1641 = vpop.permute.xlu0 %1640
      %1646 = vrot.lane.b32.xlu0 %v1435, 16
      %v1647 = vpop.permute.xlu0 %1646
      %1648 = vrot.lane.b32.xlu0 %v1440, 16
      %v1649 = vpop.permute.xlu0 %1648
      %1654 = vrot.lane.b32.xlu0 %v1628, 24
      %v1655 = vpop.permute.xlu0 %1654
      %1656 = vrot.lane.b32.xlu0 %v1633, 24
      %v1657 = vpop.permute.xlu0 %1656
      %v1660 = vsel %vm868, %v1048, %v1639
      %v1661 = vsel %vm868, %v1053, %v1641
      %vm1662 = vcmask 130048
      %v1663 = vsel %vm1662, %v1660, %v1647
      %v1664 = vsel %vm1662, %v1661, %v1649
      %vm1665 = vcmask 195584
      %v1666 = vsel %vm1665, %v1663, %v1655
      %v1667 = vsel %vm1665, %v1664, %v1657
      %s1668 = scalar_lea.vmem %s3, 192
      %v1669 = vld [vmem:[%s1668] sm:$0xff]
      %v1670 = vld [vmem:[%s1668 + $0x8] sm:$0xff]
      %v1671 = vld [vmem:[%s1668 + $0x10] sm:$0xff]
      %v1672 = vld [vmem:[%s1668 + $0x18] sm:$0xff]
      %s1673 = scalar_lea.vmem %s4, 6
      %v1674 = vld [vmem:[%s1673] sm:$0x1]
      %v1676 = vlaneseq
      %v1677 = vshrl.u32 %v1676, 7
      %v1678 = vsub.s32 0, %v1677
      %v1679 = vrot.slane %v1674, %v1678
      %v1682 = vsel %vm271, %v1666, 0
      %v1685 = vsel %vm271, %v1667, 0
      %v1688 = vsel %vm271, %v1669, 0
      %v1691 = vsel %vm271, %v1670, 0
      %v1694 = vsel %vm271, %v1671, 0
      %v1697 = vsel %vm271, %v1672, 0
      %1699 = vmatprep.subr.mxu0 0.0
      %1700 = vmatpush1.xpose.msra.mxu0 0.0
      %1701 = vmatprep.subr.mxu0 0.0
      %1702 = vmatpush1.xpose.msra.mxu0 0.0
      %1703 = vmatprep.subr.mxu0 0.0
      %1704 = vmatpush1.xpose.msra.mxu0 0.0
      %1705 = vmatprep.subr.mxu0 0.0
      %1706 = vmatpush1.xpose.msra.mxu0 0.0
      %1707 = vmatprep.subr.mxu0 0.0
      %1708 = vmatpush1.xpose.msra.mxu0 0.0
      %1709 = vmatprep.subr.mxu0 0.0
      %1710 = vmatpush1.xpose.msra.mxu0 0.0
      %1711 = vmatprep.subr.mxu0 0.0
      %1712 = vmatpush1.xpose.msra.mxu0 0.0
      %1713 = vmatprep.subr.mxu0 0.0
      %1714 = vmatpush1.xpose.msra.mxu0 0.0
      %1715 = vmatprep.subr.mxu0 0.0
      %1716 = vmatpush1.xpose.msra.mxu0 0.0
      %1717 = vmatprep.subr.mxu0 0.0
      %1718 = vmatpush1.xpose.msra.mxu0 0.0
      %1719 = vmatprep.subr.mxu0 0.0
      %1720 = vmatpush1.xpose.msra.mxu0 0.0
      %1721 = vmatprep.subr.mxu0 0.0
      %1722 = vmatpush1.xpose.msra.mxu0 0.0
      %1723 = vmatprep.subr.mxu0 0.0
      %1724 = vmatpush1.xpose.msra.mxu0 %v1697
      %1725 = vmatprep.subr.mxu0 0.0
      %1726 = vmatpush1.xpose.msra.mxu0 %v1694
      %1727 = vmatprep.subr.mxu0 0.0
      %1728 = vmatpush1.xpose.msra.mxu0 %v1691
      %1729 = vmatprep.subr.mxu0 0.0
      %1730 = vmatpush1.xpose.msra.mxu0 %v1688
      %1731 = vmatprep.subr.mxu0 0.0
      %1732 = vmatpush2.xpose.msra.mxu0 0.0
      %1733 = vmatprep.subr.mxu0 0.0
      %1734 = vmatpush2.xpose.msra.mxu0 0.0
      %1735 = vmatprep.subr.mxu0 0.0
      %1736 = vmatpush2.xpose.msra.mxu0 0.0
      %1737 = vmatprep.subr.mxu0 0.0
      %1738 = vmatpush2.xpose.msra.mxu0 0.0
      %1739 = vmatprep.subr.mxu0 0.0
      %1740 = vmatpush2.xpose.msra.mxu0 0.0
      %1741 = vmatprep.subr.mxu0 0.0
      %1742 = vmatpush2.xpose.msra.mxu0 0.0
      %1743 = vmatprep.subr.mxu0 0.0
      %1744 = vmatpush2.xpose.msra.mxu0 0.0
      %1745 = vmatprep.subr.mxu0 0.0
      %1746 = vmatpush2.xpose.msra.mxu0 0.0
      %1747 = vmatprep.subr.mxu0 0.0
      %1748 = vmatpush2.xpose.msra.mxu0 0.0
      %1749 = vmatprep.subr.mxu0 0.0
      %1750 = vmatpush2.xpose.msra.mxu0 0.0
      %1751 = vmatprep.subr.mxu0 0.0
      %1752 = vmatpush2.xpose.msra.mxu0 0.0
      %1753 = vmatprep.subr.mxu0 0.0
      %1754 = vmatpush2.xpose.msra.mxu0 0.0
      %1755 = vmatprep.subr.mxu0 0.0
      %1756 = vmatpush2.xpose.msra.mxu0 0.0
      %1757 = vmatprep.subr.mxu0 0.0
      %1758 = vmatpush2.xpose.msra.mxu0 0.0
      %1759 = vmatprep.subr.mxu0 0.0
      %1760 = vmatpush2.xpose.msra.mxu0 0.0
      %1761 = vmatprep.subr.mxu0 0.0
      %1762 = vmatpush2.xpose.msra.mxu0 0.0
      %1763 = vmatprep.mubr.f32.mxu0 0.0
      %1764 = vmatmul.mubr.f32.gmra.mxu0 %v1682
      %v1765 = vpop.f32.mrf.mxu0
      %v1766 = vadd.f32 %v1679, %v1765
      %v1767 = vpop.f32.mrf.mxu0
      %1768 = vmatprep.mubr.f32.mxu0 0.0
      %1769 = vmatmul.mubr.f32.gmra.mxu0 %v1685
      %v1770 = vpop.f32.mrf.mxu0
      %v1771 = vadd.f32 %v1679, %v1770
      %v1772 = vpop.f32.mrf.mxu0
      %1773 = vdwg.mxu0
      %1774 = vst.msk [vmem:[%s255] sm:$0xff] %vm271, %v1766
      %1775 = vst.msk [vmem:[%s255 + $0x8] sm:$0xff] %vm271, %v1771
      %p1776 = scmp.lt.s32.totalorder %s16, 1
      %s1777 = scalar_select %p1776, %s16, 1
      %s1778 = smul.addr %s1777, 2
      %s1779 = smul.addr %s1778, 8
      %s1780 = scalar_lea.vmem %s5, %s1779
      // Predicated region
      $region41: #{_lambda_.5} parent=39 // pred_check
        %p1781 = pneg %p154
      $region42: #{_lambda_.5} parent=39 // pred_check_branch
        %1783 = sbr.rel (%p1781) target = $region44
      $region43: #{_lambda_.5} parent=39 // pred_region
        _
      $region44: #{_lambda_.5} parent=39 // pred_fallthru
        _
    $region40: #{_lambda_.5} parent=5 // pred_fallthru
      _
    %p1784 = scmp.le.s32.totalorder 2, %s11
    // Predicated region
    $region45: #{_lambda_.5} parent=5 // pred_check
      %p1785 = pneg %p1784
    $region46: #{_lambda_.5} parent=5 // pred_check_branch
      %1787 = sbr.rel (%p1785) target = $region48
    $region47: #{_lambda_.5} parent=5 // pred_region
      %s1788 = ssub.s32 %s11, 2
      // Predicated region
      $region49: #{_lambda_.5} parent=47 // pred_check
        %p1789 = pneg %p160
      $region50: #{_lambda_.5} parent=47 // pred_check_branch
        %1791 = sbr.rel (%p1789) target = $region52
      $region51: #{_lambda_.5} parent=47 // pred_region
        %p1792 = scmp.lt.s32.totalorder %s17, 1
        %s1793 = scalar_select %p1792, %s17, 1
        %s1794 = smul.addr %s1793, 2
        %s1795 = smul.addr %s1794, 8
        %s1796 = scalar_lea.vmem %s5, %s1795
      $region52: #{_lambda_.5} parent=47 // pred_fallthru
        _
    $region48: #{_lambda_.5} parent=5 // pred_fallthru
      _
  $region6: #{_lambda_.5} parent=0 // loop_footer
    %s15 = sadd.s32 1, %s11
  $region7: #{_lambda_.5} parent=0 // loop_footer_branch
    %10 = sbr.rel target = $region3
  $region8: #{_lambda_.5} parent=0 // loop_exit
    _

</llo_original>
